<compile_context>
chip_gen: v5e
topology: v5e:2x2
jax: 0.10.0
libtpu: 0.0.40
codegen_flags: <defaults>
</compile_context>

<pallas_src>
import functools

import jax
import jax.numpy as jnp
from jax.experimental import pallas as pl
from jax.experimental.pallas import tpu as pltpu

TILE_M = 28 * 28          # one image's pixels per grid step (784, multiple of 8)


def _round_up(x, m):
    return (x + m - 1) // m * m


# --------------------------------------------------------------------------- #
# Kernel 1: fused  (TILE_M, Kpad) @ (Kpad, Cout) + bias  -> maxout over groups
# --------------------------------------------------------------------------- #
def _conv_maxout_kernel(x_ref, w_ref, b_ref, o_ref, *, J, group):
    x = x_ref[...]                                                    # (TILE_M, Kpad) bf16
    acc = jnp.dot(x, w_ref[...], preferred_element_type=jnp.float32)  # one wide MXU matmul
    acc = acc + b_ref[...]                                            # (TILE_M, Cout) f32
    out = acc[:, 0:J]                                                 # maxout: group g lives in
    for g in range(1, group):                                         # lane slice [g*J, (g+1)*J)
        out = jnp.maximum(out, acc[:, g * J:(g + 1) * J])
    o_ref[...] = out.astype(o_ref.dtype)


def conv_maxout(patches, w_blk, b_blk, group, *, out_dtype=jnp.bfloat16):
    """patches: (M, Kpad) bf16; w_blk: (Kpad, Cout) bf16 block-permuted;
    b_blk: (1, Cout) f32 block-permuted  ->  (M, Cout // group)."""
    M, Kpad = patches.shape
    Cout = w_blk.shape[1]
    J = Cout // group
    kernel = functools.partial(_conv_maxout_kernel, J=J, group=group)
    return pl.pallas_call(
        kernel,
        out_shape=jax.ShapeDtypeStruct((M, J), out_dtype),
        grid_spec=pltpu.PrefetchScalarGridSpec(
            num_scalar_prefetch=0,
            grid=(M // TILE_M,),
            in_specs=[
                pl.BlockSpec((TILE_M, Kpad), lambda i: (i, 0)),   # streamed row tiles
                pl.BlockSpec((Kpad, Cout), lambda i: (0, 0)),     # resident weights
                pl.BlockSpec((1, Cout), lambda i: (0, 0)),        # resident bias
            ],
            out_specs=pl.BlockSpec((TILE_M, J), lambda i: (i, 0)),
        ),
        compiler_params=pltpu.CompilerParams(
            dimension_semantics=("parallel",)),
    )(patches, w_blk, b_blk)


# --------------------------------------------------------------------------- #
# Kernel 2: layer3 (conv 3x3 -> maxout to 1 channel) fused with the Linear.
# One image per grid step; the (784, 1) maxout result stays in registers/VMEM.
# --------------------------------------------------------------------------- #
def _conv3_fc_kernel(p3_ref, w3_ref, b3_ref, wfc_ref, bfc_ref, o_ref):
    acc3 = jnp.dot(p3_ref[...], w3_ref[...],
                   preferred_element_type=jnp.float32)            # (784, 4) f32
    acc3 = acc3 + b3_ref[...]
    h3 = jnp.max(acc3, axis=-1, keepdims=True)                    # maxout/4 -> (784, 1) f32
    # fc: logits[o] = sum_p h3[p] * wfc[p, o] + bfc[o]
    prod = h3 * wfc_ref[...].astype(jnp.float32)                  # (784, 10) f32 (lane bcast)
    logits = jnp.sum(prod, axis=0, keepdims=True) + bfc_ref[...]  # (1, 10) sublane reduce
    o_ref[...] = logits[None]                                     # (1, 1, 10)


def conv3_fc(p3, w3_blk, b3_blk, wfc, bfc, n_images):
    Kpad = p3.shape[1]
    out = pl.pallas_call(
        _conv3_fc_kernel,
        out_shape=jax.ShapeDtypeStruct((n_images, 1, 10), jnp.float32),
        grid_spec=pltpu.PrefetchScalarGridSpec(
            num_scalar_prefetch=0,
            grid=(n_images,),
            in_specs=[
                pl.BlockSpec((TILE_M, Kpad), lambda i: (i, 0)),   # streamed patches
                pl.BlockSpec((Kpad, 4), lambda i: (0, 0)),        # resident conv3 weight
                pl.BlockSpec((1, 4), lambda i: (0, 0)),
                pl.BlockSpec((TILE_M, 10), lambda i: (0, 0)),     # resident fc weight
                pl.BlockSpec((1, 10), lambda i: (0, 0)),
            ],
            out_specs=pl.BlockSpec((1, 1, 10), lambda i: (i, 0, 0)),
        ),
        compiler_params=pltpu.CompilerParams(
            dimension_semantics=("parallel",)),
    )(p3, w3_blk, b3_blk, wfc, bfc)
    return out.reshape(n_images, 10)


# --------------------------------------------------------------------------- #
# im2col (pure data movement / glue, plain JAX) -> bf16, K padded to mult of 128
# --------------------------------------------------------------------------- #
def im2col(x, kh, kw, pad, k_pad):
    """x: (N, H, W, C) -> (N*H*W, k_pad) bf16 same-padded patches.
    Feature order ((dy*kw + dx)*C + ci) matches the weight flattening below."""
    # TODO(synk): fuse patch extraction into the Pallas kernel (tap accumulation
    # over kh*kw shifted matmuls) to remove the im2col HBM read amplification;
    # kept as plain-JAX data movement at this demo scale.
    N, H, W, C = x.shape
    xp = jnp.pad(x, ((0, 0), (pad, pad), (pad, pad), (0, 0)))
    cols = [xp[:, dy:dy + H, dx:dx + W, :] for dy in range(kh) for dx in range(kw)]
    patches = jnp.concatenate(cols, axis=-1).reshape(N * H * W, kh * kw * C)
    patches = jnp.pad(patches, ((0, 0), (0, k_pad - kh * kw * C)))
    return patches.astype(jnp.bfloat16)


# --------------------------------------------------------------------------- #
# Parameters (deterministic synthetic init; weight prep hoisted here)
# --------------------------------------------------------------------------- #
def init_params(key):
    ks = jax.random.split(key, 8)

    def conv_wb(k_w, k_b, cout, cin, kh, kw, group):
        K = kh * kw * cin
        k_pad = _round_up(K, 128)
        w_pt = 0.05 * jax.random.normal(k_w, (cout, cin, kh, kw), jnp.float32)
        b_pt = 0.05 * jax.random.normal(k_b, (cout,), jnp.float32)
        # PyTorch conv weight (O, I, KH, KW) -> im2col weight (KH*KW*I, O)
        w = w_pt.transpose(2, 3, 1, 0).reshape(K, cout)
        J = cout // group
        # block-permute columns: new column g*J + j  <-  old column j*group + g
        # (matches PyTorch view(N, C//4, 4, H, W).max(2) grouping)
        w = w.reshape(K, J, group).transpose(0, 2, 1).reshape(K, cout)
        b = b_pt.reshape(J, group).T.reshape(1, cout)
        # zero-pad contraction dim to a multiple of 128; bf16 weights, f32 bias
        w = jnp.pad(w, ((0, k_pad - K), (0, 0))).astype(jnp.bfloat16)
        return w, b

    w1, b1 = conv_wb(ks[0], ks[1], 64, 1, 9, 9, 4)     # K 81  -> 128
    w2, b2 = conv_wb(ks[2], ks[3], 32, 16, 5, 5, 4)    # K 400 -> 512
    w3, b3 = conv_wb(ks[4], ks[5], 4, 8, 3, 3, 4)      # K 72  -> 128
    # PyTorch Linear weight (10, 784) -> (784, 10)
    wfc = (0.05 * jax.random.normal(ks[6], (10, 28 * 28), jnp.float32)).T
    bfc = (0.05 * jax.random.normal(ks[7], (10,), jnp.float32)).reshape(1, 10)
    return {"w1": w1, "b1": b1, "w2": w2, "b2": b2, "w3": w3, "b3": b3,
            "wfc": wfc.astype(jnp.bfloat16), "bfc": bfc}


# --------------------------------------------------------------------------- #
# Forward pass (mirrors CNN.forward)
# --------------------------------------------------------------------------- #
@jax.jit
def cnn_forward(x, params):
    x = x.reshape(-1, 1, 28, 28)                 # x = x.reshape(-1, 1, 28, 28)
    N = x.shape[0]
    x = jnp.transpose(x, (0, 2, 3, 1))           # NCHW -> NHWC  (C = 1)

    # layer1: Conv2d(1, 64, k=9, p=4) + maxout/4  -> 16 channels
    p1 = im2col(x, 9, 9, 4, 128)                                   # (N*784, 128) bf16
    h1 = conv_maxout(p1, params["w1"], params["b1"], 4)            # (N*784, 16)  bf16
    h1 = h1.reshape(N, 28, 28, 16)

    # layer2: Conv2d(16, 32, k=5, p=2) + maxout/4 -> 8 channels
    p2 = im2col(h1, 5, 5, 2, 512)                                  # (N*784, 512) bf16
    h2 = conv_maxout(p2, params["w2"], params["b2"], 4)            # (N*784, 8)   bf16
    h2 = h2.reshape(N, 28, 28, 8)

    # layer3: Conv2d(8, 4, k=3, p=1) + maxout/4 -> 1 channel, fused with fc
    # (C=1, so NHWC flatten order == NCHW flatten order expected by the Linear)
    p3 = im2col(h2, 3, 3, 1, 128)                                  # (N*784, 128) bf16
    logits = conv3_fc(p3, params["w3"], params["b3"],
                      params["wfc"], params["bfc"], N)             # (N, 10) f32
    return logits


if __name__ == "__main__":
    key = jax.random.PRNGKey(0)
    kx, kp = jax.random.split(key)
    x = jax.random.normal(kx, (2, 1, 28, 28), jnp.float32)   # batch=2, MNIST-sized
    params = init_params(kp)

    out = cnn_forward(x, params)
    jax.block_until_ready(out)
    assert out.shape == (2, 10), out.shape
    print("KERNEL_OK")
</pallas_src>

<mosaic_0001>
module attributes {stable_mosaic.version = 11 : i64} {
  func.func @_conv_maxout_kernel(%arg0: i32, %arg1: memref<784x128xbf16, #tpu.memory_space<vmem>>, %arg2: memref<128x64xbf16, #tpu.memory_space<vmem>>, %arg3: memref<1x64xf32, #tpu.memory_space<vmem>>, %arg4: memref<784x16xbf16, #tpu.memory_space<vmem>>) attributes {dimension_semantics = [#tpu.dimension_semantics<parallel>], iteration_bounds = array<i64: 2>, scalar_prefetch = 0 : i64, scratch_operands = 0 : i64, tpu.core_type = #tpu.core_type<tc>, window_params = [{transform_indices = @transform_0, window_bounds = array<i64: 784, 128>}, {pipeline_mode = #tpu.pipeline_mode<synchronous>, transform_indices = @transform_1, window_bounds = array<i64: 128, 64>}, {pipeline_mode = #tpu.pipeline_mode<synchronous>, transform_indices = @transform_2, window_bounds = array<i64: 1, 64>}, {transform_indices = @transform_3, window_bounds = array<i64: 784, 16>}]} {
    %c0 = arith.constant 0 : index
    %c0_0 = arith.constant 0 : index
    %0 = vector.load %arg1[%c0, %c0_0] : memref<784x128xbf16, #tpu.memory_space<vmem>>, vector<784x128xbf16>
    %c0_1 = arith.constant 0 : index
    %c0_2 = arith.constant 0 : index
    %1 = vector.load %arg2[%c0_1, %c0_2] : memref<128x64xbf16, #tpu.memory_space<vmem>>, vector<128x64xbf16>
    %cst = arith.constant dense<0.000000e+00> : vector<784x64xf32>
    %2 = tpu.matmul %0, %1, %cst {dimension_numbers = #tpu.dot_dimension_numbers<[1], [0], [0], [1], [0, 0, 1, 1], [], []>} : vector<784x128xbf16>, vector<128x64xbf16>, vector<784x64xf32> -> vector<784x64xf32>
    %c0_3 = arith.constant 0 : index
    %c0_4 = arith.constant 0 : index
    %3 = vector.load %arg3[%c0_3, %c0_4] : memref<1x64xf32, #tpu.memory_space<vmem>>, vector<1x64xf32>
    %4 = vector.broadcast %3 : vector<1x64xf32> to vector<784x64xf32>
    %5 = arith.addf %2, %4 : vector<784x64xf32>
    %6 = vector.extract_strided_slice %5 {offsets = [0, 0], sizes = [784, 16], strides = [1, 1]} : vector<784x64xf32> to vector<784x16xf32>
    %7 = vector.extract_strided_slice %5 {offsets = [0, 16], sizes = [784, 16], strides = [1, 1]} : vector<784x64xf32> to vector<784x16xf32>
    %8 = arith.maximumf %6, %7 : vector<784x16xf32>
    %9 = vector.extract_strided_slice %5 {offsets = [0, 32], sizes = [784, 16], strides = [1, 1]} : vector<784x64xf32> to vector<784x16xf32>
    %10 = arith.maximumf %8, %9 : vector<784x16xf32>
    %11 = vector.extract_strided_slice %5 {offsets = [0, 48], sizes = [784, 16], strides = [1, 1]} : vector<784x64xf32> to vector<784x16xf32>
    %12 = arith.maximumf %10, %11 : vector<784x16xf32>
    %13 = arith.truncf %12 : vector<784x16xf32> to vector<784x16xbf16>
    %c0_5 = arith.constant 0 : index
    %c0_6 = arith.constant 0 : index
    %14 = vector.load %arg4[%c0_5, %c0_6] : memref<784x16xbf16, #tpu.memory_space<vmem>>, vector<784x16xbf16>
    tpu.vector_store %arg4[%c0_5, %c0_6], %13 {strides = array<i32>} : memref<784x16xbf16, #tpu.memory_space<vmem>>, vector<784x16xbf16>,
    return
  }
  func.func @transform_0(%arg0: i32) -> (i32, i32) {
    %c0_i32 = arith.constant 0 : i32
    %c0_i32_0 = arith.constant 0 : i32
    return %arg0, %c0_i32 : i32, i32
  }
  func.func @transform_1(%arg0: i32) -> (i32, i32) {
    %c0_i32 = arith.constant 0 : i32
    %c0_i32_0 = arith.constant 0 : i32
    %c0_i32_1 = arith.constant 0 : i32
    return %c0_i32, %c0_i32_0 : i32, i32
  }
  func.func @transform_2(%arg0: i32) -> (i32, i32) {
    %c0_i32 = arith.constant 0 : i32
    %c0_i32_0 = arith.constant 0 : i32
    %c0_i32_1 = arith.constant 0 : i32
    return %c0_i32, %c0_i32_0 : i32, i32
  }
  func.func @transform_3(%arg0: i32) -> (i32, i32) {
    %c0_i32 = arith.constant 0 : i32
    %c0_i32_0 = arith.constant 0 : i32
    return %arg0, %c0_i32 : i32, i32
  }
}

module attributes {stable_mosaic.version = 11 : i64} {
  func.func @_conv_maxout_kernel(%arg0: i32, %arg1: memref<784x512xbf16, #tpu.memory_space<vmem>>, %arg2: memref<512x32xbf16, #tpu.memory_space<vmem>>, %arg3: memref<1x32xf32, #tpu.memory_space<vmem>>, %arg4: memref<784x8xbf16, #tpu.memory_space<vmem>>) attributes {dimension_semantics = [#tpu.dimension_semantics<parallel>], iteration_bounds = array<i64: 2>, scalar_prefetch = 0 : i64, scratch_operands = 0 : i64, tpu.core_type = #tpu.core_type<tc>, window_params = [{transform_indices = @transform_0, window_bounds = array<i64: 784, 512>}, {pipeline_mode = #tpu.pipeline_mode<synchronous>, transform_indices = @transform_1, window_bounds = array<i64: 512, 32>}, {pipeline_mode = #tpu.pipeline_mode<synchronous>, transform_indices = @transform_2, window_bounds = array<i64: 1, 32>}, {transform_indices = @transform_3, window_bounds = array<i64: 784, 8>}]} {
    %c0 = arith.constant 0 : index
    %c0_0 = arith.constant 0 : index
    %0 = vector.load %arg1[%c0, %c0_0] : memref<784x512xbf16, #tpu.memory_space<vmem>>, vector<784x512xbf16>
    %c0_1 = arith.constant 0 : index
    %c0_2 = arith.constant 0 : index
    %1 = vector.load %arg2[%c0_1, %c0_2] : memref<512x32xbf16, #tpu.memory_space<vmem>>, vector<512x32xbf16>
    %cst = arith.constant dense<0.000000e+00> : vector<784x32xf32>
    %2 = tpu.matmul %0, %1, %cst {dimension_numbers = #tpu.dot_dimension_numbers<[1], [0], [0], [1], [0, 0, 1, 1], [], []>} : vector<784x512xbf16>, vector<512x32xbf16>, vector<784x32xf32> -> vector<784x32xf32>
    %c0_3 = arith.constant 0 : index
    %c0_4 = arith.constant 0 : index
    %3 = vector.load %arg3[%c0_3, %c0_4] : memref<1x32xf32, #tpu.memory_space<vmem>>, vector<1x32xf32>
    %4 = vector.broadcast %3 : vector<1x32xf32> to vector<784x32xf32>
    %5 = arith.addf %2, %4 : vector<784x32xf32>
    %6 = vector.extract_strided_slice %5 {offsets = [0, 0], sizes = [784, 8], strides = [1, 1]} : vector<784x32xf32> to vector<784x8xf32>
    %7 = vector.extract_strided_slice %5 {offsets = [0, 8], sizes = [784, 8], strides = [1, 1]} : vector<784x32xf32> to vector<784x8xf32>
    %8 = arith.maximumf %6, %7 : vector<784x8xf32>
    %9 = vector.extract_strided_slice %5 {offsets = [0, 16], sizes = [784, 8], strides = [1, 1]} : vector<784x32xf32> to vector<784x8xf32>
    %10 = arith.maximumf %8, %9 : vector<784x8xf32>
    %11 = vector.extract_strided_slice %5 {offsets = [0, 24], sizes = [784, 8], strides = [1, 1]} : vector<784x32xf32> to vector<784x8xf32>
    %12 = arith.maximumf %10, %11 : vector<784x8xf32>
    %13 = arith.truncf %12 : vector<784x8xf32> to vector<784x8xbf16>
    %c0_5 = arith.constant 0 : index
    %c0_6 = arith.constant 0 : index
    %14 = vector.load %arg4[%c0_5, %c0_6] : memref<784x8xbf16, #tpu.memory_space<vmem>>, vector<784x8xbf16>
    tpu.vector_store %arg4[%c0_5, %c0_6], %13 {strides = array<i32>} : memref<784x8xbf16, #tpu.memory_space<vmem>>, vector<784x8xbf16>,
    return
  }
  func.func @transform_0(%arg0: i32) -> (i32, i32) {
    %c0_i32 = arith.constant 0 : i32
    %c0_i32_0 = arith.constant 0 : i32
    return %arg0, %c0_i32 : i32, i32
  }
  func.func @transform_1(%arg0: i32) -> (i32, i32) {
    %c0_i32 = arith.constant 0 : i32
    %c0_i32_0 = arith.constant 0 : i32
    %c0_i32_1 = arith.constant 0 : i32
    return %c0_i32, %c0_i32_0 : i32, i32
  }
  func.func @transform_2(%arg0: i32) -> (i32, i32) {
    %c0_i32 = arith.constant 0 : i32
    %c0_i32_0 = arith.constant 0 : i32
    %c0_i32_1 = arith.constant 0 : i32
    return %c0_i32, %c0_i32_0 : i32, i32
  }
  func.func @transform_3(%arg0: i32) -> (i32, i32) {
    %c0_i32 = arith.constant 0 : i32
    %c0_i32_0 = arith.constant 0 : i32
    return %arg0, %c0_i32 : i32, i32
  }
}

module attributes {stable_mosaic.version = 11 : i64} {
  func.func @_conv3_fc_kernel(%arg0: i32, %arg1: memref<784x128xbf16, #tpu.memory_space<vmem>>, %arg2: memref<128x4xbf16, #tpu.memory_space<vmem>>, %arg3: memref<1x4xf32, #tpu.memory_space<vmem>>, %arg4: memref<784x10xbf16, #tpu.memory_space<vmem>>, %arg5: memref<1x10xf32, #tpu.memory_space<vmem>>, %arg6: memref<1x1x10xf32, #tpu.memory_space<vmem>>) attributes {dimension_semantics = [#tpu.dimension_semantics<parallel>], iteration_bounds = array<i64: 2>, scalar_prefetch = 0 : i64, scratch_operands = 0 : i64, tpu.core_type = #tpu.core_type<tc>, window_params = [{transform_indices = @transform_0, window_bounds = array<i64: 784, 128>}, {pipeline_mode = #tpu.pipeline_mode<synchronous>, transform_indices = @transform_1, window_bounds = array<i64: 128, 4>}, {pipeline_mode = #tpu.pipeline_mode<synchronous>, transform_indices = @transform_2, window_bounds = array<i64: 1, 4>}, {pipeline_mode = #tpu.pipeline_mode<synchronous>, transform_indices = @transform_3, window_bounds = array<i64: 784, 10>}, {pipeline_mode = #tpu.pipeline_mode<synchronous>, transform_indices = @transform_4, window_bounds = array<i64: 1, 10>}, {transform_indices = @transform_5, window_bounds = array<i64: 1, 1, 10>}]} {
    %c0 = arith.constant 0 : index
    %c0_0 = arith.constant 0 : index
    %0 = vector.load %arg1[%c0, %c0_0] : memref<784x128xbf16, #tpu.memory_space<vmem>>, vector<784x128xbf16>
    %c0_1 = arith.constant 0 : index
    %c0_2 = arith.constant 0 : index
    %1 = vector.load %arg2[%c0_1, %c0_2] : memref<128x4xbf16, #tpu.memory_space<vmem>>, vector<128x4xbf16>
    %cst = arith.constant dense<0.000000e+00> : vector<784x4xf32>
    %2 = tpu.matmul %0, %1, %cst {dimension_numbers = #tpu.dot_dimension_numbers<[1], [0], [0], [1], [0, 0, 1, 1], [], []>} : vector<784x128xbf16>, vector<128x4xbf16>, vector<784x4xf32> -> vector<784x4xf32>
    %c0_3 = arith.constant 0 : index
    %c0_4 = arith.constant 0 : index
    %3 = vector.load %arg3[%c0_3, %c0_4] : memref<1x4xf32, #tpu.memory_space<vmem>>, vector<1x4xf32>
    %4 = vector.broadcast %3 : vector<1x4xf32> to vector<784x4xf32>
    %5 = arith.addf %2, %4 : vector<784x4xf32>
    %cst_5 = arith.constant dense<0xFF800000> : vector<784xf32>
    %6 = vector.multi_reduction <maximumf>, %5, %cst_5 [1] : vector<784x4xf32> to vector<784xf32>
    %7 = vector.shape_cast %6 : vector<784xf32> to vector<784x1xf32>
    %c0_6 = arith.constant 0 : index
    %c0_7 = arith.constant 0 : index
    %8 = vector.load %arg4[%c0_6, %c0_7] : memref<784x10xbf16, #tpu.memory_space<vmem>>, vector<784x10xbf16>
    %9 = arith.extf %8 : vector<784x10xbf16> to vector<784x10xf32>
    %10 = vector.broadcast %7 : vector<784x1xf32> to vector<784x10xf32>
    %11 = arith.mulf %10, %9 : vector<784x10xf32>
    %cst_8 = arith.constant dense<0.000000e+00> : vector<10xf32>
    %12 = vector.multi_reduction <add>, %11, %cst_8 [0] : vector<784x10xf32> to vector<10xf32>
    %13 = vector.shape_cast %12 : vector<10xf32> to vector<1x10xf32>
    %c0_9 = arith.constant 0 : index
    %c0_10 = arith.constant 0 : index
    %14 = vector.load %arg5[%c0_9, %c0_10] : memref<1x10xf32, #tpu.memory_space<vmem>>, vector<1x10xf32>
    %15 = arith.addf %13, %14 : vector<1x10xf32>
    %16 = vector.shape_cast %15 : vector<1x10xf32> to vector<1x1x10xf32>
    %c0_11 = arith.constant 0 : index
    %c0_12 = arith.constant 0 : index
    %c0_13 = arith.constant 0 : index
    %17 = vector.load %arg6[%c0_11, %c0_12, %c0_13] : memref<1x1x10xf32, #tpu.memory_space<vmem>>, vector<1x1x10xf32>
    tpu.vector_store %arg6[%c0_11, %c0_12, %c0_13], %16 {strides = array<i32>} : memref<1x1x10xf32, #tpu.memory_space<vmem>>, vector<1x1x10xf32>,
    return
  }
  func.func @transform_0(%arg0: i32) -> (i32, i32) {
    %c0_i32 = arith.constant 0 : i32
    %c0_i32_0 = arith.constant 0 : i32
    return %arg0, %c0_i32 : i32, i32
  }
  func.func @transform_1(%arg0: i32) -> (i32, i32) {
    %c0_i32 = arith.constant 0 : i32
    %c0_i32_0 = arith.constant 0 : i32
    %c0_i32_1 = arith.constant 0 : i32
    return %c0_i32, %c0_i32_0 : i32, i32
  }
  func.func @transform_2(%arg0: i32) -> (i32, i32) {
    %c0_i32 = arith.constant 0 : i32
    %c0_i32_0 = arith.constant 0 : i32
    %c0_i32_1 = arith.constant 0 : i32
    return %c0_i32, %c0_i32_0 : i32, i32
  }
  func.func @transform_3(%arg0: i32) -> (i32, i32) {
    %c0_i32 = arith.constant 0 : i32
    %c0_i32_0 = arith.constant 0 : i32
    %c0_i32_1 = arith.constant 0 : i32
    return %c0_i32, %c0_i32_0 : i32, i32
  }
  func.func @transform_4(%arg0: i32) -> (i32, i32) {
    %c0_i32 = arith.constant 0 : i32
    %c0_i32_0 = arith.constant 0 : i32
    %c0_i32_1 = arith.constant 0 : i32
    return %c0_i32, %c0_i32_0 : i32, i32
  }
  func.func @transform_5(%arg0: i32) -> (i32, i32, i32) {
    %c0_i32 = arith.constant 0 : i32
    %c0_i32_0 = arith.constant 0 : i32
    %c0_i32_1 = arith.constant 0 : i32
    return %arg0, %c0_i32, %c0_i32_0 : i32, i32, i32
  }
}

</mosaic_0001>

<llo_original>
// kernel: cnn_forward.3
$region0: #{cnn_forward.3}
  #allocation0 [shape = 'u32[]', space=smem, size = 0x4, offset = 0x4, fixed_abs, tag = 'smem constant byte address 0x4 - core index']
  #allocation1 [shape = 'u32[72,128]{1,0:T(1,128)}', space=vmem, size = 0x9000, scoped, tag = 'internal scratch']
  %s0 = inlined_call_operand.vmem [shape: bf16[1568,128], index: 0, kind: input, shape index: {}]
  %s1 = inlined_call_operand.vmem [shape: bf16[128,64], index: 1, kind: input, shape index: {}]
  %s2 = inlined_call_operand.vmem [shape: f32[1,64], index: 2, kind: input, shape index: {}]
  %s3 = inlined_call_operand.vmem [shape: bf16[1568,16], index: 3, kind: output, shape index: {}]
  %s4 = sld [smem:[#allocation0]]
  $region45: #{cnn_forward.3} parent=0
    _
  %s6 = ssub.s32 1, %s4
  %s7 = scalar_select 0, %s6, %s4
  loop: start=0, step=1, limit=4
  $region2: #{cnn_forward.3} parent=0 // loop_pre_header
    _
  $region3: #{cnn_forward.3} parent=0 // loop_header
    %s9 = sphi 0, %s13
    %p10 = scmp.ge.s32.totalorder %s9, 4
    %s19 = sphi 0, %s21
    %s22 = sphi 0, %s19
    %s23 = sphi 0, %s22
    %s39 = sphi 0, %s23
    %s43 = sphi 0, %s43
    %s45 = sphi 0, %s43
    %s46 = sphi 0, %s45
    %s60 = sphi 0, %s46
    %s64 = sphi 0, %s64
    %s66 = sphi 0, %s64
    %s67 = sphi 0, %s66
    %s81 = sphi 0, %s67
    %s87 = sphi 0, %s89
    %s90 = sphi 0, %s87
    %s91 = sphi 0, %s90
    %s107 = sphi 0, %s91
  $region4: #{cnn_forward.3} parent=0 // loop_header_branch
    %12 = sbr.rel (%p10) target = $region8
  $region5: #{cnn_forward.3} parent=0 // loop_body
    %s14 = ssub.s32 %s9, 1
    %s15 = ssub.s32 %s9, 2
    %s16 = sadd.s32 %s9, 1
    %s17 = ssub.s32 %s9, %s16
    %p18 = scmp.eq.s32.totalorder %s17, 0
    %s20 = sadd.s32 %s19, 1
    %s21 = scalar_select %p18, %s19, %s20
    %p24 = pneg %p18
    %p25 = scmp.eq.s32.totalorder %s9, 1
    %p26 = por %p24, %p25
    %p27 = scmp.ne.s32.totalorder %s19, %s22
    %p28 = scmp.eq.s32.totalorder %s9, 0
    %p29 = por %p27, %p28
    %p30 = scmp.ne.s32.totalorder %s19, %s22
    %p31 = scmp.eq.s32.totalorder %s14, 1
    %p32 = por %p30, %p31
    %p33 = scmp.ne.s32.totalorder %s22, %s23
    %p34 = scmp.eq.s32.totalorder %s14, 0
    %p35 = por %p33, %p34
    %p36 = scmp.ne.s32.totalorder %s22, %s23
    %p37 = scmp.eq.s32.totalorder %s15, 1
    %p38 = por %p36, %p37
    %p40 = scmp.ne.s32.totalorder %s23, %s39
    %p41 = scmp.eq.s32.totalorder %s15, 0
    %p42 = por %p40, %p41
    %s44 = sadd.s32 %s43, 1
    %p47 = scmp.eq.s32.totalorder %s9, 1
    %p48 = scmp.ne.s32.totalorder %s43, %s45
    %p49 = scmp.eq.s32.totalorder %s9, 0
    %p50 = por %p48, %p49
    %p51 = scmp.ne.s32.totalorder %s43, %s45
    %p52 = scmp.eq.s32.totalorder %s14, 1
    %p53 = por %p51, %p52
    %p54 = scmp.ne.s32.totalorder %s45, %s46
    %p55 = scmp.eq.s32.totalorder %s14, 0
    %p56 = por %p54, %p55
    %p57 = scmp.ne.s32.totalorder %s45, %s46
    %p58 = scmp.eq.s32.totalorder %s15, 1
    %p59 = por %p57, %p58
    %p61 = scmp.ne.s32.totalorder %s46, %s60
    %p62 = scmp.eq.s32.totalorder %s15, 0
    %p63 = por %p61, %p62
    %s65 = sadd.s32 %s64, 1
    %p68 = scmp.eq.s32.totalorder %s9, 1
    %p69 = scmp.ne.s32.totalorder %s64, %s66
    %p70 = scmp.eq.s32.totalorder %s9, 0
    %p71 = por %p69, %p70
    %p72 = scmp.ne.s32.totalorder %s64, %s66
    %p73 = scmp.eq.s32.totalorder %s14, 1
    %p74 = por %p72, %p73
    %p75 = scmp.ne.s32.totalorder %s66, %s67
    %p76 = scmp.eq.s32.totalorder %s14, 0
    %p77 = por %p75, %p76
    %p78 = scmp.ne.s32.totalorder %s66, %s67
    %p79 = scmp.eq.s32.totalorder %s15, 1
    %p80 = por %p78, %p79
    %p82 = scmp.ne.s32.totalorder %s67, %s81
    %p83 = scmp.eq.s32.totalorder %s15, 0
    %p84 = por %p82, %p83
    %s85 = ssub.s32 %s9, %s16
    %p86 = scmp.eq.s32.totalorder %s85, 0
    %s88 = sadd.s32 %s87, 1
    %s89 = scalar_select %p86, %s87, %s88
    %p92 = pneg %p86
    %p93 = scmp.eq.s32.totalorder %s9, 1
    %p94 = por %p92, %p93
    %p95 = scmp.ne.s32.totalorder %s87, %s90
    %p96 = scmp.eq.s32.totalorder %s9, 0
    %p97 = por %p95, %p96
    %p98 = scmp.ne.s32.totalorder %s87, %s90
    %p99 = scmp.eq.s32.totalorder %s14, 1
    %p100 = por %p98, %p99
    %p101 = scmp.ne.s32.totalorder %s90, %s91
    %p102 = scmp.eq.s32.totalorder %s14, 0
    %p103 = por %p101, %p102
    %p104 = scmp.ne.s32.totalorder %s90, %s91
    %p105 = scmp.eq.s32.totalorder %s15, 1
    %p106 = por %p104, %p105
    %p108 = scmp.ne.s32.totalorder %s91, %s107
    %p109 = scmp.eq.s32.totalorder %s15, 0
    %p110 = por %p108, %p109
    %p111 = scmp.le.s32.totalorder 1, %s9
    %p112 = scmp.lt.s32.totalorder %s9, 3
    %p113 = pnand %p111, %p112
    %p114 = pneg %p113
    // Predicated region
    $region9: #{cnn_forward.3} parent=5 // pred_check
      _
    $region10: #{cnn_forward.3} parent=5 // pred_check_branch
      %116 = sbr.rel (%p113) target = $region12
    $region11: #{cnn_forward.3} parent=5 // pred_region
      %s117 = ssub.s32 %s9, 1
      // Predicated region
      $region13: #{cnn_forward.3} parent=11 // pred_check
        %p118 = pneg %p56
      $region14: #{cnn_forward.3} parent=11 // pred_check_branch
        %120 = sbr.rel (%p118) target = $region16
      $region15: #{cnn_forward.3} parent=11 // pred_region
        _
      $region16: #{cnn_forward.3} parent=11 // pred_fallthru
        _
      // Predicated region
      $region17: #{cnn_forward.3} parent=11 // pred_check
        %p121 = pneg %p77
      $region18: #{cnn_forward.3} parent=11 // pred_check_branch
        %123 = sbr.rel (%p121) target = $region20
      $region19: #{cnn_forward.3} parent=11 // pred_region
        _
      $region20: #{cnn_forward.3} parent=11 // pred_fallthru
        _
    $region12: #{cnn_forward.3} parent=5 // pred_fallthru
      _
    %p124 = scmp.lt.s32.totalorder %s9, 2
    // Predicated region
    $region21: #{cnn_forward.3} parent=5 // pred_check
      %p125 = pneg %p124
    $region22: #{cnn_forward.3} parent=5 // pred_check_branch
      %127 = sbr.rel (%p125) target = $region24
    $region23: #{cnn_forward.3} parent=5 // pred_region
      // Predicated region
      $region25: #{cnn_forward.3} parent=23 // pred_check
        %p128 = pneg %p29
      $region26: #{cnn_forward.3} parent=23 // pred_check_branch
        %130 = sbr.rel (%p128) target = $region28
      $region27: #{cnn_forward.3} parent=23 // pred_region
        %s131 = smul.u32 98, %s9
        %p132 = scmp.lt.s32.totalorder %s131, 195
        %s133 = scalar_select %p132, %s131, 195
        %s134 = smul.addr %s133, 4
        %s135 = scalar_lea.vmem %s0, %s134
        %s136 = smul.u32 98, %s9
      $region28: #{cnn_forward.3} parent=23 // pred_fallthru
        _
    $region24: #{cnn_forward.3} parent=5 // pred_fallthru
      _
    %p137 = scmp.le.s32.totalorder 1, %s9
    %p138 = scmp.lt.s32.totalorder %s9, 3
    %p139 = pnand %p137, %p138
    %p140 = pneg %p139
    // Predicated region
    $region29: #{cnn_forward.3} parent=5 // pred_check
      _
    $region30: #{cnn_forward.3} parent=5 // pred_check_branch
      %142 = sbr.rel (%p139) target = $region32
    $region31: #{cnn_forward.3} parent=5 // pred_region
      %s143 = ssub.s32 %s9, 1
      %s144 = smul.u32 98, %s14
      %p145 = scmp.lt.s32.totalorder %s144, 195
      %s146 = scalar_select %p145, %s144, 195
      %s147 = smul.addr %s146, 4
      %s148 = scalar_lea.vmem %s0, %s147
      %p149 = pneg %p35
      %p150 = pneg %p32
      %p151 = pneg %p56
      %p152 = pneg %p53
      %p153 = pneg %p77
      %p154 = pneg %p74
      %p155 = pneg %p103
      %p156 = pneg %p100
      %s157 = smul.u32 98, %s14
      %p158 = scmp.lt.s32.totalorder %s157, 195
      %s159 = scalar_select %p158, %s157, 195
      %s160 = smul.addr %s159, 4
      %s161 = scalar_lea.vmem %s3, %s160
      %s162 = smul.u32 98, %s14
      %p163 = scmp.lt.s32.totalorder %s162, 195
      %s164 = scalar_select %p163, %s162, 195
      %s165 = smul.addr %s164, 4
      %s166 = scalar_lea.vmem %s0, %s165
      %s167 = smul.u32 98, %s14
      %s168 = smul.u32 98, %s14
      %p169 = scmp.lt.s32.totalorder %s168, 195
      %s170 = scalar_select %p169, %s168, 195
      %s171 = smul.addr %s170, 4
      %s172 = scalar_lea.vmem %s3, %s171
      %s173 = smul.u32 98, %s14
      %v174 = vld [vmem:[%s166] sm:$0xf]
      %v175 = vld [vmem:[%s166 + $0x4] sm:$0xf]
      %v176 = vld [vmem:[%s166 + $0x8] sm:$0xf]
      %v177 = vld [vmem:[%s166 + $0xc] sm:$0xf]
      %v178 = vld [vmem:[%s166 + $0x10] sm:$0xf]
      %v179 = vld [vmem:[%s166 + $0x14] sm:$0xf]
      %v180 = vld [vmem:[%s166 + $0x18] sm:$0xf]
      %v181 = vld [vmem:[%s166 + $0x1c] sm:$0xf]
      %v182 = vld [vmem:[%s166 + $0x20] sm:$0xf]
      %v183 = vld [vmem:[%s166 + $0x24] sm:$0xf]
      %v184 = vld [vmem:[%s166 + $0x28] sm:$0xf]
      %v185 = vld [vmem:[%s166 + $0x2c] sm:$0xf]
      %v186 = vld [vmem:[%s166 + $0x30] sm:$0xf]
      %v187 = vld [vmem:[%s166 + $0x34] sm:$0xf]
      %v188 = vld [vmem:[%s166 + $0x38] sm:$0xf]
      %v189 = vld [vmem:[%s166 + $0x3c] sm:$0xf]
      %v190 = vld [vmem:[%s166 + $0x40] sm:$0xf]
      %v191 = vld [vmem:[%s166 + $0x44] sm:$0xf]
      %v192 = vld [vmem:[%s166 + $0x48] sm:$0xf]
      %v193 = vld [vmem:[%s166 + $0x4c] sm:$0xf]
      %v194 = vld [vmem:[%s166 + $0x50] sm:$0xf]
      %v195 = vld [vmem:[%s166 + $0x54] sm:$0xf]
      %v196 = vld [vmem:[%s166 + $0x58] sm:$0xf]
      %v197 = vld [vmem:[%s166 + $0x5c] sm:$0xf]
      %v198 = vld [vmem:[%s166 + $0x60] sm:$0xf]
      %v199 = vld [vmem:[%s166 + $0x64] sm:$0xf]
      %v200 = vld [vmem:[%s166 + $0x68] sm:$0xf]
      %v201 = vld [vmem:[%s166 + $0x6c] sm:$0xf]
      %v202 = vld [vmem:[%s166 + $0x70] sm:$0xf]
      %v203 = vld [vmem:[%s166 + $0x74] sm:$0xf]
      %v204 = vld [vmem:[%s166 + $0x78] sm:$0xf]
      %v205 = vld [vmem:[%s166 + $0x7c] sm:$0xf]
      %v206 = vld [vmem:[%s166 + $0x80] sm:$0xf]
      %v207 = vld [vmem:[%s166 + $0x84] sm:$0xf]
      %v208 = vld [vmem:[%s166 + $0x88] sm:$0xf]
      %v209 = vld [vmem:[%s166 + $0x8c] sm:$0xf]
      %v210 = vld [vmem:[%s166 + $0x90] sm:$0xf]
      %v211 = vld [vmem:[%s166 + $0x94] sm:$0xf]
      %v212 = vld [vmem:[%s166 + $0x98] sm:$0xf]
      %v213 = vld [vmem:[%s166 + $0x9c] sm:$0xf]
      %v214 = vld [vmem:[%s166 + $0xa0] sm:$0xf]
      %v215 = vld [vmem:[%s166 + $0xa4] sm:$0xf]
      %v216 = vld [vmem:[%s166 + $0xa8] sm:$0xf]
      %v217 = vld [vmem:[%s166 + $0xac] sm:$0xf]
      %v218 = vld [vmem:[%s166 + $0xb0] sm:$0xf]
      %v219 = vld [vmem:[%s166 + $0xb4] sm:$0xf]
      %v220 = vld [vmem:[%s166 + $0xb8] sm:$0xf]
      %v221 = vld [vmem:[%s166 + $0xbc] sm:$0xf]
      %v222 = vld [vmem:[%s166 + $0xc0] sm:$0xf]
      %v223 = vld [vmem:[%s166 + $0xc4] sm:$0xf]
      %v224 = vld [vmem:[%s166 + $0xc8] sm:$0xf]
      %v225 = vld [vmem:[%s166 + $0xcc] sm:$0xf]
      %v226 = vld [vmem:[%s166 + $0xd0] sm:$0xf]
      %v227 = vld [vmem:[%s166 + $0xd4] sm:$0xf]
      %v228 = vld [vmem:[%s166 + $0xd8] sm:$0xf]
      %v229 = vld [vmem:[%s166 + $0xdc] sm:$0xf]
      %v230 = vld [vmem:[%s166 + $0xe0] sm:$0xf]
      %v231 = vld [vmem:[%s166 + $0xe4] sm:$0xf]
      %v232 = vld [vmem:[%s166 + $0xe8] sm:$0xf]
      %v233 = vld [vmem:[%s166 + $0xec] sm:$0xf]
      %v234 = vld [vmem:[%s166 + $0xf0] sm:$0xf]
      %v235 = vld [vmem:[%s166 + $0xf4] sm:$0xf]
      %v236 = vld [vmem:[%s166 + $0xf8] sm:$0xf]
      %v237 = vld [vmem:[%s166 + $0xfc] sm:$0xf]
      %v238 = vld [vmem:[%s166 + $0x100] sm:$0xf]
      %v239 = vld [vmem:[%s166 + $0x104] sm:$0xf]
      %v240 = vld [vmem:[%s166 + $0x108] sm:$0xf]
      %v241 = vld [vmem:[%s166 + $0x10c] sm:$0xf]
      %v242 = vld [vmem:[%s166 + $0x110] sm:$0xf]
      %v243 = vld [vmem:[%s166 + $0x114] sm:$0xf]
      %v244 = vld [vmem:[%s166 + $0x118] sm:$0xf]
      %v245 = vld [vmem:[%s166 + $0x11c] sm:$0xf]
      %v246 = vld [vmem:[%s166 + $0x120] sm:$0xf]
      %v247 = vld [vmem:[%s166 + $0x124] sm:$0xf]
      %v248 = vld [vmem:[%s166 + $0x128] sm:$0xf]
      %v249 = vld [vmem:[%s166 + $0x12c] sm:$0xf]
      %v250 = vld [vmem:[%s166 + $0x130] sm:$0xf]
      %v251 = vld [vmem:[%s166 + $0x134] sm:$0xf]
      %v252 = vld [vmem:[%s166 + $0x138] sm:$0xf]
      %v253 = vld [vmem:[%s166 + $0x13c] sm:$0xf]
      %v254 = vld [vmem:[%s166 + $0x140] sm:$0xf]
      %v255 = vld [vmem:[%s166 + $0x144] sm:$0xf]
      %v256 = vld [vmem:[%s166 + $0x148] sm:$0xf]
      %v257 = vld [vmem:[%s166 + $0x14c] sm:$0xf]
      %v258 = vld [vmem:[%s166 + $0x150] sm:$0xf]
      %v259 = vld [vmem:[%s166 + $0x154] sm:$0xf]
      %v260 = vld [vmem:[%s166 + $0x158] sm:$0xf]
      %v261 = vld [vmem:[%s166 + $0x15c] sm:$0xf]
      %v262 = vld [vmem:[%s166 + $0x160] sm:$0xf]
      %v263 = vld [vmem:[%s166 + $0x164] sm:$0xf]
      %v264 = vld [vmem:[%s166 + $0x168] sm:$0xf]
      %v265 = vld [vmem:[%s166 + $0x16c] sm:$0xf]
      %v266 = vld [vmem:[%s166 + $0x170] sm:$0xf]
      %v267 = vld [vmem:[%s166 + $0x174] sm:$0xf]
      %v268 = vld [vmem:[%s166 + $0x178] sm:$0xf]
      %v269 = vld [vmem:[%s166 + $0x17c] sm:$0xf]
      %v270 = vld [vmem:[%s166 + $0x180] sm:$0xf]
      %v271 = vld [vmem:[%s166 + $0x184] sm:$0xf]
      %v272 = vld [vmem:[%s1] sm:$0xf]
      %v273 = vld [vmem:[%s1 + $0x4] sm:$0xf]
      %v274 = vld [vmem:[%s1 + $0x8] sm:$0xf]
      %v275 = vld [vmem:[%s1 + $0xc] sm:$0xf]
      %v276 = vld [vmem:[%s1 + $0x10] sm:$0xf]
      %v277 = vld [vmem:[%s1 + $0x14] sm:$0xf]
      %v278 = vld [vmem:[%s1 + $0x18] sm:$0xf]
      %v279 = vld [vmem:[%s1 + $0x1c] sm:$0xf]
      %v280 = vld [vmem:[%s1 + $0x20] sm:$0xf]
      %v281 = vld [vmem:[%s1 + $0x24] sm:$0xf]
      %v282 = vld [vmem:[%s1 + $0x28] sm:$0xf]
      %v283 = vld [vmem:[%s1 + $0x2c] sm:$0xf]
      %v284 = vld [vmem:[%s1 + $0x30] sm:$0xf]
      %v285 = vld [vmem:[%s1 + $0x34] sm:$0xf]
      %v286 = vld [vmem:[%s1 + $0x38] sm:$0xf]
      %v287 = vld [vmem:[%s1 + $0x3c] sm:$0xf]
      %v288 = vld [vmem:[%s2] sm:$0x1]
      %v290 = vperm.slane %v288, 0
      %v390 = vunpack.c.l.b16 %v174
      %v391 = vunpack.c.l.b16 %v175
      %v392 = vunpack.c.l.b16 %v176
      %v393 = vunpack.c.l.b16 %v177
      %v394 = vunpack.c.l.b16 %v178
      %v395 = vunpack.c.l.b16 %v179
      %v396 = vunpack.c.l.b16 %v180
      %v397 = vunpack.c.l.b16 %v181
      %v398 = vunpack.c.l.b16 %v182
      %v399 = vunpack.c.l.b16 %v183
      %v400 = vunpack.c.l.b16 %v184
      %v401 = vunpack.c.l.b16 %v185
      %v402 = vunpack.c.l.b16 %v186
      %v403 = vunpack.c.l.b16 %v187
      %v404 = vunpack.c.l.b16 %v188
      %v405 = vunpack.c.l.b16 %v189
      %v406 = vunpack.c.l.b16 %v190
      %v407 = vunpack.c.l.b16 %v191
      %v408 = vunpack.c.l.b16 %v192
      %v409 = vunpack.c.l.b16 %v193
      %v410 = vunpack.c.l.b16 %v194
      %v411 = vunpack.c.l.b16 %v195
      %v412 = vunpack.c.l.b16 %v196
      %v413 = vunpack.c.l.b16 %v197
      %v414 = vunpack.c.l.b16 %v198
      %v415 = vunpack.c.l.b16 %v199
      %v416 = vunpack.c.l.b16 %v200
      %v417 = vunpack.c.l.b16 %v201
      %v418 = vunpack.c.l.b16 %v202
      %v419 = vunpack.c.l.b16 %v203
      %v420 = vunpack.c.l.b16 %v204
      %v421 = vunpack.c.l.b16 %v205
      %v422 = vunpack.c.l.b16 %v206
      %v423 = vunpack.c.l.b16 %v207
      %v424 = vunpack.c.l.b16 %v208
      %v425 = vunpack.c.l.b16 %v209
      %v426 = vunpack.c.l.b16 %v210
      %v427 = vunpack.c.l.b16 %v211
      %v428 = vunpack.c.l.b16 %v212
      %v429 = vunpack.c.l.b16 %v213
      %v430 = vunpack.c.l.b16 %v214
      %v431 = vunpack.c.l.b16 %v215
      %v432 = vunpack.c.l.b16 %v216
      %v433 = vunpack.c.l.b16 %v217
      %v434 = vunpack.c.l.b16 %v218
      %v435 = vunpack.c.l.b16 %v219
      %v436 = vunpack.c.l.b16 %v220
      %v437 = vunpack.c.l.b16 %v221
      %v438 = vunpack.c.l.b16 %v222
      %v439 = vunpack.c.l.b16 %v223
      %v440 = vunpack.c.l.b16 %v224
      %v441 = vunpack.c.l.b16 %v225
      %v442 = vunpack.c.l.b16 %v226
      %v443 = vunpack.c.l.b16 %v227
      %v444 = vunpack.c.l.b16 %v228
      %v445 = vunpack.c.l.b16 %v229
      %v446 = vunpack.c.l.b16 %v230
      %v447 = vunpack.c.l.b16 %v231
      %v448 = vunpack.c.l.b16 %v232
      %v449 = vunpack.c.l.b16 %v233
      %v450 = vunpack.c.l.b16 %v234
      %v451 = vunpack.c.l.b16 %v235
      %v452 = vunpack.c.l.b16 %v236
      %v453 = vunpack.c.l.b16 %v237
      %v454 = vunpack.c.l.b16 %v238
      %v455 = vunpack.c.l.b16 %v239
      %v456 = vunpack.c.l.b16 %v240
      %v457 = vunpack.c.l.b16 %v241
      %v458 = vunpack.c.l.b16 %v242
      %v459 = vunpack.c.l.b16 %v243
      %v460 = vunpack.c.l.b16 %v244
      %v461 = vunpack.c.l.b16 %v245
      %v462 = vunpack.c.l.b16 %v246
      %v463 = vunpack.c.l.b16 %v247
      %v464 = vunpack.c.l.b16 %v248
      %v465 = vunpack.c.l.b16 %v249
      %v466 = vunpack.c.l.b16 %v250
      %v467 = vunpack.c.l.b16 %v251
      %v468 = vunpack.c.l.b16 %v252
      %v469 = vunpack.c.l.b16 %v253
      %v470 = vunpack.c.l.b16 %v254
      %v471 = vunpack.c.l.b16 %v255
      %v472 = vunpack.c.l.b16 %v256
      %v473 = vunpack.c.l.b16 %v257
      %v474 = vunpack.c.l.b16 %v258
      %v475 = vunpack.c.l.b16 %v259
      %v476 = vunpack.c.l.b16 %v260
      %v477 = vunpack.c.l.b16 %v261
      %v478 = vunpack.c.l.b16 %v262
      %v479 = vunpack.c.l.b16 %v263
      %v480 = vunpack.c.l.b16 %v264
      %v481 = vunpack.c.l.b16 %v265
      %v482 = vunpack.c.l.b16 %v266
      %v483 = vunpack.c.l.b16 %v267
      %v484 = vunpack.c.l.b16 %v268
      %v485 = vunpack.c.l.b16 %v269
      %v486 = vunpack.c.l.b16 %v270
      %v487 = vunpack.c.l.b16 %v271
      %v488 = vpack.c.b16 %v391, %v390
      %v489 = vpack.c.b16 %v393, %v392
      %v490 = vpack.c.b16 %v395, %v394
      %v491 = vpack.c.b16 %v397, %v396
      %v492 = vpack.c.b16 %v399, %v398
      %v493 = vpack.c.b16 %v401, %v400
      %v494 = vpack.c.b16 %v403, %v402
      %v495 = vpack.c.b16 %v405, %v404
      %v496 = vpack.c.b16 %v407, %v406
      %v497 = vpack.c.b16 %v409, %v408
      %v498 = vpack.c.b16 %v411, %v410
      %v499 = vpack.c.b16 %v413, %v412
      %v500 = vpack.c.b16 %v415, %v414
      %v501 = vpack.c.b16 %v417, %v416
      %v502 = vpack.c.b16 %v419, %v418
      %v503 = vpack.c.b16 %v421, %v420
      %v504 = vpack.c.b16 %v423, %v422
      %v505 = vpack.c.b16 %v425, %v424
      %v506 = vpack.c.b16 %v427, %v426
      %v507 = vpack.c.b16 %v429, %v428
      %v508 = vpack.c.b16 %v431, %v430
      %v509 = vpack.c.b16 %v433, %v432
      %v510 = vpack.c.b16 %v435, %v434
      %v511 = vpack.c.b16 %v437, %v436
      %v512 = vpack.c.b16 %v439, %v438
      %v513 = vpack.c.b16 %v441, %v440
      %v514 = vpack.c.b16 %v443, %v442
      %v515 = vpack.c.b16 %v445, %v444
      %v516 = vpack.c.b16 %v447, %v446
      %v517 = vpack.c.b16 %v449, %v448
      %v518 = vpack.c.b16 %v451, %v450
      %v519 = vpack.c.b16 %v453, %v452
      %v520 = vpack.c.b16 %v455, %v454
      %v521 = vpack.c.b16 %v457, %v456
      %v522 = vpack.c.b16 %v459, %v458
      %v523 = vpack.c.b16 %v461, %v460
      %v524 = vpack.c.b16 %v463, %v462
      %v525 = vpack.c.b16 %v465, %v464
      %v526 = vpack.c.b16 %v467, %v466
      %v527 = vpack.c.b16 %v469, %v468
      %v528 = vpack.c.b16 %v471, %v470
      %v529 = vpack.c.b16 %v473, %v472
      %v530 = vpack.c.b16 %v475, %v474
      %v531 = vpack.c.b16 %v477, %v476
      %v532 = vpack.c.b16 %v479, %v478
      %v533 = vpack.c.b16 %v481, %v480
      %v534 = vpack.c.b16 %v483, %v482
      %v535 = vpack.c.b16 %v485, %v484
      %v536 = vpack.c.b16 %v487, %v486
      %v602 = vunpack.c.l.b16 %v272
      %v603 = vunpack.c.l.b16 %v273
      %v604 = vunpack.c.l.b16 %v274
      %v605 = vunpack.c.l.b16 %v275
      %v606 = vunpack.c.l.b16 %v276
      %v607 = vunpack.c.l.b16 %v277
      %v608 = vunpack.c.l.b16 %v278
      %v609 = vunpack.c.l.b16 %v279
      %v610 = vunpack.c.l.b16 %v280
      %v611 = vunpack.c.l.b16 %v281
      %v612 = vunpack.c.l.b16 %v282
      %v613 = vunpack.c.l.b16 %v283
      %v614 = vunpack.c.l.b16 %v284
      %v615 = vunpack.c.l.b16 %v285
      %v616 = vunpack.c.l.b16 %v286
      %v617 = vunpack.c.l.b16 %v287
      %v618 = vpack.c.b16 %v603, %v602
      %v619 = vpack.c.b16 %v605, %v604
      %v620 = vpack.c.b16 %v607, %v606
      %v621 = vpack.c.b16 %v609, %v608
      %v622 = vpack.c.b16 %v611, %v610
      %v623 = vpack.c.b16 %v613, %v612
      %v624 = vpack.c.b16 %v615, %v614
      %v625 = vpack.c.b16 %v617, %v616
      %634 = vmatpush.bf16.msra.mxu0 %v625
      %635 = vmatpush.bf16.msra.mxu0 %v624
      %636 = vmatpush.bf16.msra.mxu0 %v623
      %637 = vmatpush.bf16.msra.mxu0 %v622
      %638 = vmatpush.bf16.msra.mxu0 %v621
      %639 = vmatpush.bf16.msra.mxu0 %v620
      %640 = vmatpush.bf16.msra.mxu0 %v619
      %641 = vmatpush.bf16.msra.mxu0 %v618
      %642 = vmatmul.bf16.gmra.mxu0 %v488
      %v643 = vpop.f32.mrf.mxu0
      %v644 = vadd.f32 %v290, %v643
      %v645 = vpop.f32.mrf.mxu0
      %v646 = vadd.f32 %v290, %v645
      %647 = vmatmul.bf16.gmra.mxu0 %v489
      %v648 = vpop.f32.mrf.mxu0
      %v649 = vadd.f32 %v290, %v648
      %v650 = vpop.f32.mrf.mxu0
      %v651 = vadd.f32 %v290, %v650
      %652 = vmatmul.bf16.gmra.mxu0 %v490
      %v653 = vpop.f32.mrf.mxu0
      %v654 = vadd.f32 %v290, %v653
      %v655 = vpop.f32.mrf.mxu0
      %v656 = vadd.f32 %v290, %v655
      %657 = vmatmul.bf16.gmra.mxu0 %v491
      %v658 = vpop.f32.mrf.mxu0
      %v659 = vadd.f32 %v290, %v658
      %v660 = vpop.f32.mrf.mxu0
      %v661 = vadd.f32 %v290, %v660
      %662 = vmatmul.bf16.gmra.mxu0 %v492
      %v663 = vpop.f32.mrf.mxu0
      %v664 = vadd.f32 %v290, %v663
      %v665 = vpop.f32.mrf.mxu0
      %v666 = vadd.f32 %v290, %v665
      %667 = vmatmul.bf16.gmra.mxu0 %v493
      %v668 = vpop.f32.mrf.mxu0
      %v669 = vadd.f32 %v290, %v668
      %v670 = vpop.f32.mrf.mxu0
      %v671 = vadd.f32 %v290, %v670
      %672 = vmatmul.bf16.gmra.mxu0 %v494
      %v673 = vpop.f32.mrf.mxu0
      %v674 = vadd.f32 %v290, %v673
      %v675 = vpop.f32.mrf.mxu0
      %v676 = vadd.f32 %v290, %v675
      %677 = vmatmul.bf16.gmra.mxu0 %v495
      %v678 = vpop.f32.mrf.mxu0
      %v679 = vadd.f32 %v290, %v678
      %v680 = vpop.f32.mrf.mxu0
      %v681 = vadd.f32 %v290, %v680
      %682 = vmatmul.bf16.gmra.mxu0 %v496
      %v683 = vpop.f32.mrf.mxu0
      %v684 = vadd.f32 %v290, %v683
      %v685 = vpop.f32.mrf.mxu0
      %v686 = vadd.f32 %v290, %v685
      %687 = vmatmul.bf16.gmra.mxu0 %v497
      %v688 = vpop.f32.mrf.mxu0
      %v689 = vadd.f32 %v290, %v688
      %v690 = vpop.f32.mrf.mxu0
      %v691 = vadd.f32 %v290, %v690
      %692 = vmatmul.bf16.gmra.mxu0 %v498
      %v693 = vpop.f32.mrf.mxu0
      %v694 = vadd.f32 %v290, %v693
      %v695 = vpop.f32.mrf.mxu0
      %v696 = vadd.f32 %v290, %v695
      %697 = vmatmul.bf16.gmra.mxu0 %v499
      %v698 = vpop.f32.mrf.mxu0
      %v699 = vadd.f32 %v290, %v698
      %v700 = vpop.f32.mrf.mxu0
      %v701 = vadd.f32 %v290, %v700
      %702 = vmatmul.bf16.gmra.mxu0 %v500
      %v703 = vpop.f32.mrf.mxu0
      %v704 = vadd.f32 %v290, %v703
      %v705 = vpop.f32.mrf.mxu0
      %v706 = vadd.f32 %v290, %v705
      %707 = vmatmul.bf16.gmra.mxu0 %v501
      %v708 = vpop.f32.mrf.mxu0
      %v709 = vadd.f32 %v290, %v708
      %v710 = vpop.f32.mrf.mxu0
      %v711 = vadd.f32 %v290, %v710
      %712 = vmatmul.bf16.gmra.mxu0 %v502
      %v713 = vpop.f32.mrf.mxu0
      %v714 = vadd.f32 %v290, %v713
      %v715 = vpop.f32.mrf.mxu0
      %v716 = vadd.f32 %v290, %v715
      %717 = vmatmul.bf16.gmra.mxu0 %v503
      %v718 = vpop.f32.mrf.mxu0
      %v719 = vadd.f32 %v290, %v718
      %v720 = vpop.f32.mrf.mxu0
      %v721 = vadd.f32 %v290, %v720
      %722 = vmatmul.bf16.gmra.mxu0 %v504
      %v723 = vpop.f32.mrf.mxu0
      %v724 = vadd.f32 %v290, %v723
      %v725 = vpop.f32.mrf.mxu0
      %v726 = vadd.f32 %v290, %v725
      %727 = vmatmul.bf16.gmra.mxu0 %v505
      %v728 = vpop.f32.mrf.mxu0
      %v729 = vadd.f32 %v290, %v728
      %v730 = vpop.f32.mrf.mxu0
      %v731 = vadd.f32 %v290, %v730
      %732 = vmatmul.bf16.gmra.mxu0 %v506
      %v733 = vpop.f32.mrf.mxu0
      %v734 = vadd.f32 %v290, %v733
      %v735 = vpop.f32.mrf.mxu0
      %v736 = vadd.f32 %v290, %v735
      %737 = vmatmul.bf16.gmra.mxu0 %v507
      %v738 = vpop.f32.mrf.mxu0
      %v739 = vadd.f32 %v290, %v738
      %v740 = vpop.f32.mrf.mxu0
      %v741 = vadd.f32 %v290, %v740
      %742 = vmatmul.bf16.gmra.mxu0 %v508
      %v743 = vpop.f32.mrf.mxu0
      %v744 = vadd.f32 %v290, %v743
      %v745 = vpop.f32.mrf.mxu0
      %v746 = vadd.f32 %v290, %v745
      %747 = vmatmul.bf16.gmra.mxu0 %v509
      %v748 = vpop.f32.mrf.mxu0
      %v749 = vadd.f32 %v290, %v748
      %v750 = vpop.f32.mrf.mxu0
      %v751 = vadd.f32 %v290, %v750
      %752 = vmatmul.bf16.gmra.mxu0 %v510
      %v753 = vpop.f32.mrf.mxu0
      %v754 = vadd.f32 %v290, %v753
      %v755 = vpop.f32.mrf.mxu0
      %v756 = vadd.f32 %v290, %v755
      %757 = vmatmul.bf16.gmra.mxu0 %v511
      %v758 = vpop.f32.mrf.mxu0
      %v759 = vadd.f32 %v290, %v758
      %v760 = vpop.f32.mrf.mxu0
      %v761 = vadd.f32 %v290, %v760
      %762 = vmatmul.bf16.gmra.mxu0 %v512
      %v763 = vpop.f32.mrf.mxu0
      %v764 = vadd.f32 %v290, %v763
      %v765 = vpop.f32.mrf.mxu0
      %v766 = vadd.f32 %v290, %v765
      %767 = vmatmul.bf16.gmra.mxu0 %v513
      %v768 = vpop.f32.mrf.mxu0
      %v769 = vadd.f32 %v290, %v768
      %v770 = vpop.f32.mrf.mxu0
      %v771 = vadd.f32 %v290, %v770
      %772 = vmatmul.bf16.gmra.mxu0 %v514
      %v773 = vpop.f32.mrf.mxu0
      %v774 = vadd.f32 %v290, %v773
      %v775 = vpop.f32.mrf.mxu0
      %v776 = vadd.f32 %v290, %v775
      %777 = vmatmul.bf16.gmra.mxu0 %v515
      %v778 = vpop.f32.mrf.mxu0
      %v779 = vadd.f32 %v290, %v778
      %v780 = vpop.f32.mrf.mxu0
      %v781 = vadd.f32 %v290, %v780
      %782 = vmatmul.bf16.gmra.mxu0 %v516
      %v783 = vpop.f32.mrf.mxu0
      %v784 = vadd.f32 %v290, %v783
      %v785 = vpop.f32.mrf.mxu0
      %v786 = vadd.f32 %v290, %v785
      %787 = vmatmul.bf16.gmra.mxu0 %v517
      %v788 = vpop.f32.mrf.mxu0
      %v789 = vadd.f32 %v290, %v788
      %v790 = vpop.f32.mrf.mxu0
      %v791 = vadd.f32 %v290, %v790
      %792 = vmatmul.bf16.gmra.mxu0 %v518
      %v793 = vpop.f32.mrf.mxu0
      %v794 = vadd.f32 %v290, %v793
      %v795 = vpop.f32.mrf.mxu0
      %v796 = vadd.f32 %v290, %v795
      %797 = vmatmul.bf16.gmra.mxu0 %v519
      %v798 = vpop.f32.mrf.mxu0
      %v799 = vadd.f32 %v290, %v798
      %v800 = vpop.f32.mrf.mxu0
      %v801 = vadd.f32 %v290, %v800
      %802 = vmatmul.bf16.gmra.mxu0 %v520
      %v803 = vpop.f32.mrf.mxu0
      %v804 = vadd.f32 %v290, %v803
      %v805 = vpop.f32.mrf.mxu0
      %v806 = vadd.f32 %v290, %v805
      %807 = vmatmul.bf16.gmra.mxu0 %v521
      %v808 = vpop.f32.mrf.mxu0
      %v809 = vadd.f32 %v290, %v808
      %v810 = vpop.f32.mrf.mxu0
      %v811 = vadd.f32 %v290, %v810
      %812 = vmatmul.bf16.gmra.mxu0 %v522
      %v813 = vpop.f32.mrf.mxu0
      %v814 = vadd.f32 %v290, %v813
      %v815 = vpop.f32.mrf.mxu0
      %v816 = vadd.f32 %v290, %v815
      %817 = vmatmul.bf16.gmra.mxu0 %v523
      %v818 = vpop.f32.mrf.mxu0
      %v819 = vadd.f32 %v290, %v818
      %v820 = vpop.f32.mrf.mxu0
      %v821 = vadd.f32 %v290, %v820
      %822 = vmatmul.bf16.gmra.mxu0 %v524
      %v823 = vpop.f32.mrf.mxu0
      %v824 = vadd.f32 %v290, %v823
      %v825 = vpop.f32.mrf.mxu0
      %v826 = vadd.f32 %v290, %v825
      %827 = vmatmul.bf16.gmra.mxu0 %v525
      %v828 = vpop.f32.mrf.mxu0
      %v829 = vadd.f32 %v290, %v828
      %v830 = vpop.f32.mrf.mxu0
      %v831 = vadd.f32 %v290, %v830
      %832 = vmatmul.bf16.gmra.mxu0 %v526
      %v833 = vpop.f32.mrf.mxu0
      %v834 = vadd.f32 %v290, %v833
      %v835 = vpop.f32.mrf.mxu0
      %v836 = vadd.f32 %v290, %v835
      %837 = vmatmul.bf16.gmra.mxu0 %v527
      %v838 = vpop.f32.mrf.mxu0
      %v839 = vadd.f32 %v290, %v838
      %v840 = vpop.f32.mrf.mxu0
      %v841 = vadd.f32 %v290, %v840
      %842 = vmatmul.bf16.gmra.mxu0 %v528
      %v843 = vpop.f32.mrf.mxu0
      %v844 = vadd.f32 %v290, %v843
      %v845 = vpop.f32.mrf.mxu0
      %v846 = vadd.f32 %v290, %v845
      %847 = vmatmul.bf16.gmra.mxu0 %v529
      %v848 = vpop.f32.mrf.mxu0
      %v849 = vadd.f32 %v290, %v848
      %v850 = vpop.f32.mrf.mxu0
      %v851 = vadd.f32 %v290, %v850
      %852 = vmatmul.bf16.gmra.mxu0 %v530
      %v853 = vpop.f32.mrf.mxu0
      %v854 = vadd.f32 %v290, %v853
      %v855 = vpop.f32.mrf.mxu0
      %v856 = vadd.f32 %v290, %v855
      %857 = vmatmul.bf16.gmra.mxu0 %v531
      %v858 = vpop.f32.mrf.mxu0
      %v859 = vadd.f32 %v290, %v858
      %v860 = vpop.f32.mrf.mxu0
      %v861 = vadd.f32 %v290, %v860
      %862 = vmatmul.bf16.gmra.mxu0 %v532
      %v863 = vpop.f32.mrf.mxu0
      %v864 = vadd.f32 %v290, %v863
      %v865 = vpop.f32.mrf.mxu0
      %v866 = vadd.f32 %v290, %v865
      %867 = vmatmul.bf16.gmra.mxu0 %v533
      %v868 = vpop.f32.mrf.mxu0
      %v869 = vadd.f32 %v290, %v868
      %v870 = vpop.f32.mrf.mxu0
      %v871 = vadd.f32 %v290, %v870
      %872 = vmatmul.bf16.gmra.mxu0 %v534
      %v873 = vpop.f32.mrf.mxu0
      %v874 = vadd.f32 %v290, %v873
      %v875 = vpop.f32.mrf.mxu0
      %v876 = vadd.f32 %v290, %v875
      %877 = vmatmul.bf16.gmra.mxu0 %v535
      %v878 = vpop.f32.mrf.mxu0
      %v879 = vadd.f32 %v290, %v878
      %v880 = vpop.f32.mrf.mxu0
      %v881 = vadd.f32 %v290, %v880
      %882 = vmatmul.bf16.gmra.mxu0 %v536
      %v883 = vpop.f32.mrf.mxu0
      %v884 = vadd.f32 %v290, %v883
      %v885 = vpop.f32.mrf.mxu0
      %v886 = vadd.f32 %v290, %v885
      %887 = vdwg.mxu0
      %986 = vrot.lane.b32.xlu0 %v644, 112
      %v987 = vpop.permute.xlu0 %986
      %988 = vrot.lane.b32.xlu0 %v646, 112
      %v989 = vpop.permute.xlu0 %988
      %990 = vrot.lane.b32.xlu0 %v649, 112
      %v991 = vpop.permute.xlu0 %990
      %992 = vrot.lane.b32.xlu0 %v651, 112
      %v993 = vpop.permute.xlu0 %992
      %994 = vrot.lane.b32.xlu0 %v654, 112
      %v995 = vpop.permute.xlu0 %994
      %996 = vrot.lane.b32.xlu0 %v656, 112
      %v997 = vpop.permute.xlu0 %996
      %998 = vrot.lane.b32.xlu0 %v659, 112
      %v999 = vpop.permute.xlu0 %998
      %1000 = vrot.lane.b32.xlu0 %v661, 112
      %v1001 = vpop.permute.xlu0 %1000
      %1002 = vrot.lane.b32.xlu0 %v664, 112
      %v1003 = vpop.permute.xlu0 %1002
      %1004 = vrot.lane.b32.xlu0 %v666, 112
      %v1005 = vpop.permute.xlu0 %1004
      %1006 = vrot.lane.b32.xlu0 %v669, 112
      %v1007 = vpop.permute.xlu0 %1006
      %1008 = vrot.lane.b32.xlu0 %v671, 112
      %v1009 = vpop.permute.xlu0 %1008
      %1010 = vrot.lane.b32.xlu0 %v674, 112
      %v1011 = vpop.permute.xlu0 %1010
      %1012 = vrot.lane.b32.xlu0 %v676, 112
      %v1013 = vpop.permute.xlu0 %1012
      %1014 = vrot.lane.b32.xlu0 %v679, 112
      %v1015 = vpop.permute.xlu0 %1014
      %1016 = vrot.lane.b32.xlu0 %v681, 112
      %v1017 = vpop.permute.xlu0 %1016
      %1018 = vrot.lane.b32.xlu0 %v684, 112
      %v1019 = vpop.permute.xlu0 %1018
      %1020 = vrot.lane.b32.xlu0 %v686, 112
      %v1021 = vpop.permute.xlu0 %1020
      %1022 = vrot.lane.b32.xlu0 %v689, 112
      %v1023 = vpop.permute.xlu0 %1022
      %1024 = vrot.lane.b32.xlu0 %v691, 112
      %v1025 = vpop.permute.xlu0 %1024
      %1026 = vrot.lane.b32.xlu0 %v694, 112
      %v1027 = vpop.permute.xlu0 %1026
      %1028 = vrot.lane.b32.xlu0 %v696, 112
      %v1029 = vpop.permute.xlu0 %1028
      %1030 = vrot.lane.b32.xlu0 %v699, 112
      %v1031 = vpop.permute.xlu0 %1030
      %1032 = vrot.lane.b32.xlu0 %v701, 112
      %v1033 = vpop.permute.xlu0 %1032
      %1034 = vrot.lane.b32.xlu0 %v704, 112
      %v1035 = vpop.permute.xlu0 %1034
      %1036 = vrot.lane.b32.xlu0 %v706, 112
      %v1037 = vpop.permute.xlu0 %1036
      %1038 = vrot.lane.b32.xlu0 %v709, 112
      %v1039 = vpop.permute.xlu0 %1038
      %1040 = vrot.lane.b32.xlu0 %v711, 112
      %v1041 = vpop.permute.xlu0 %1040
      %1042 = vrot.lane.b32.xlu0 %v714, 112
      %v1043 = vpop.permute.xlu0 %1042
      %1044 = vrot.lane.b32.xlu0 %v716, 112
      %v1045 = vpop.permute.xlu0 %1044
      %1046 = vrot.lane.b32.xlu0 %v719, 112
      %v1047 = vpop.permute.xlu0 %1046
      %1048 = vrot.lane.b32.xlu0 %v721, 112
      %v1049 = vpop.permute.xlu0 %1048
      %1050 = vrot.lane.b32.xlu0 %v724, 112
      %v1051 = vpop.permute.xlu0 %1050
      %1052 = vrot.lane.b32.xlu0 %v726, 112
      %v1053 = vpop.permute.xlu0 %1052
      %1054 = vrot.lane.b32.xlu0 %v729, 112
      %v1055 = vpop.permute.xlu0 %1054
      %1056 = vrot.lane.b32.xlu0 %v731, 112
      %v1057 = vpop.permute.xlu0 %1056
      %1058 = vrot.lane.b32.xlu0 %v734, 112
      %v1059 = vpop.permute.xlu0 %1058
      %1060 = vrot.lane.b32.xlu0 %v736, 112
      %v1061 = vpop.permute.xlu0 %1060
      %1062 = vrot.lane.b32.xlu0 %v739, 112
      %v1063 = vpop.permute.xlu0 %1062
      %1064 = vrot.lane.b32.xlu0 %v741, 112
      %v1065 = vpop.permute.xlu0 %1064
      %1066 = vrot.lane.b32.xlu0 %v744, 112
      %v1067 = vpop.permute.xlu0 %1066
      %1068 = vrot.lane.b32.xlu0 %v746, 112
      %v1069 = vpop.permute.xlu0 %1068
      %1070 = vrot.lane.b32.xlu0 %v749, 112
      %v1071 = vpop.permute.xlu0 %1070
      %1072 = vrot.lane.b32.xlu0 %v751, 112
      %v1073 = vpop.permute.xlu0 %1072
      %1074 = vrot.lane.b32.xlu0 %v754, 112
      %v1075 = vpop.permute.xlu0 %1074
      %1076 = vrot.lane.b32.xlu0 %v756, 112
      %v1077 = vpop.permute.xlu0 %1076
      %1078 = vrot.lane.b32.xlu0 %v759, 112
      %v1079 = vpop.permute.xlu0 %1078
      %1080 = vrot.lane.b32.xlu0 %v761, 112
      %v1081 = vpop.permute.xlu0 %1080
      %1082 = vrot.lane.b32.xlu0 %v764, 112
      %v1083 = vpop.permute.xlu0 %1082
      %1084 = vrot.lane.b32.xlu0 %v766, 112
      %v1085 = vpop.permute.xlu0 %1084
      %1086 = vrot.lane.b32.xlu0 %v769, 112
      %v1087 = vpop.permute.xlu0 %1086
      %1088 = vrot.lane.b32.xlu0 %v771, 112
      %v1089 = vpop.permute.xlu0 %1088
      %1090 = vrot.lane.b32.xlu0 %v774, 112
      %v1091 = vpop.permute.xlu0 %1090
      %1092 = vrot.lane.b32.xlu0 %v776, 112
      %v1093 = vpop.permute.xlu0 %1092
      %1094 = vrot.lane.b32.xlu0 %v779, 112
      %v1095 = vpop.permute.xlu0 %1094
      %1096 = vrot.lane.b32.xlu0 %v781, 112
      %v1097 = vpop.permute.xlu0 %1096
      %1098 = vrot.lane.b32.xlu0 %v784, 112
      %v1099 = vpop.permute.xlu0 %1098
      %1100 = vrot.lane.b32.xlu0 %v786, 112
      %v1101 = vpop.permute.xlu0 %1100
      %1102 = vrot.lane.b32.xlu0 %v789, 112
      %v1103 = vpop.permute.xlu0 %1102
      %1104 = vrot.lane.b32.xlu0 %v791, 112
      %v1105 = vpop.permute.xlu0 %1104
      %1106 = vrot.lane.b32.xlu0 %v794, 112
      %v1107 = vpop.permute.xlu0 %1106
      %1108 = vrot.lane.b32.xlu0 %v796, 112
      %v1109 = vpop.permute.xlu0 %1108
      %1110 = vrot.lane.b32.xlu0 %v799, 112
      %v1111 = vpop.permute.xlu0 %1110
      %1112 = vrot.lane.b32.xlu0 %v801, 112
      %v1113 = vpop.permute.xlu0 %1112
      %1114 = vrot.lane.b32.xlu0 %v804, 112
      %v1115 = vpop.permute.xlu0 %1114
      %1116 = vrot.lane.b32.xlu0 %v806, 112
      %v1117 = vpop.permute.xlu0 %1116
      %1118 = vrot.lane.b32.xlu0 %v809, 112
      %v1119 = vpop.permute.xlu0 %1118
      %1120 = vrot.lane.b32.xlu0 %v811, 112
      %v1121 = vpop.permute.xlu0 %1120
      %1122 = vrot.lane.b32.xlu0 %v814, 112
      %v1123 = vpop.permute.xlu0 %1122
      %1124 = vrot.lane.b32.xlu0 %v816, 112
      %v1125 = vpop.permute.xlu0 %1124
      %1126 = vrot.lane.b32.xlu0 %v819, 112
      %v1127 = vpop.permute.xlu0 %1126
      %1128 = vrot.lane.b32.xlu0 %v821, 112
      %v1129 = vpop.permute.xlu0 %1128
      %1130 = vrot.lane.b32.xlu0 %v824, 112
      %v1131 = vpop.permute.xlu0 %1130
      %1132 = vrot.lane.b32.xlu0 %v826, 112
      %v1133 = vpop.permute.xlu0 %1132
      %1134 = vrot.lane.b32.xlu0 %v829, 112
      %v1135 = vpop.permute.xlu0 %1134
      %1136 = vrot.lane.b32.xlu0 %v831, 112
      %v1137 = vpop.permute.xlu0 %1136
      %1138 = vrot.lane.b32.xlu0 %v834, 112
      %v1139 = vpop.permute.xlu0 %1138
      %1140 = vrot.lane.b32.xlu0 %v836, 112
      %v1141 = vpop.permute.xlu0 %1140
      %1142 = vrot.lane.b32.xlu0 %v839, 112
      %v1143 = vpop.permute.xlu0 %1142
      %1144 = vrot.lane.b32.xlu0 %v841, 112
      %v1145 = vpop.permute.xlu0 %1144
      %1146 = vrot.lane.b32.xlu0 %v844, 112
      %v1147 = vpop.permute.xlu0 %1146
      %1148 = vrot.lane.b32.xlu0 %v846, 112
      %v1149 = vpop.permute.xlu0 %1148
      %1150 = vrot.lane.b32.xlu0 %v849, 112
      %v1151 = vpop.permute.xlu0 %1150
      %1152 = vrot.lane.b32.xlu0 %v851, 112
      %v1153 = vpop.permute.xlu0 %1152
      %1154 = vrot.lane.b32.xlu0 %v854, 112
      %v1155 = vpop.permute.xlu0 %1154
      %1156 = vrot.lane.b32.xlu0 %v856, 112
      %v1157 = vpop.permute.xlu0 %1156
      %1158 = vrot.lane.b32.xlu0 %v859, 112
      %v1159 = vpop.permute.xlu0 %1158
      %1160 = vrot.lane.b32.xlu0 %v861, 112
      %v1161 = vpop.permute.xlu0 %1160
      %1162 = vrot.lane.b32.xlu0 %v864, 112
      %v1163 = vpop.permute.xlu0 %1162
      %1164 = vrot.lane.b32.xlu0 %v866, 112
      %v1165 = vpop.permute.xlu0 %1164
      %1166 = vrot.lane.b32.xlu0 %v869, 112
      %v1167 = vpop.permute.xlu0 %1166
      %1168 = vrot.lane.b32.xlu0 %v871, 112
      %v1169 = vpop.permute.xlu0 %1168
      %1170 = vrot.lane.b32.xlu0 %v874, 112
      %v1171 = vpop.permute.xlu0 %1170
      %1172 = vrot.lane.b32.xlu0 %v876, 112
      %v1173 = vpop.permute.xlu0 %1172
      %1174 = vrot.lane.b32.xlu0 %v879, 112
      %v1175 = vpop.permute.xlu0 %1174
      %1176 = vrot.lane.b32.xlu0 %v881, 112
      %v1177 = vpop.permute.xlu0 %1176
      %1178 = vrot.lane.b32.xlu0 %v884, 112
      %v1179 = vpop.permute.xlu0 %1178
      %1180 = vrot.lane.b32.xlu0 %v886, 112
      %v1181 = vpop.permute.xlu0 %1180
      %v1280 = vmax.f32 %v644, %v987
      %v1281 = vmax.f32 %v646, %v989
      %v1282 = vmax.f32 %v649, %v991
      %v1283 = vmax.f32 %v651, %v993
      %v1284 = vmax.f32 %v654, %v995
      %v1285 = vmax.f32 %v656, %v997
      %v1286 = vmax.f32 %v659, %v999
      %v1287 = vmax.f32 %v661, %v1001
      %v1288 = vmax.f32 %v664, %v1003
      %v1289 = vmax.f32 %v666, %v1005
      %v1290 = vmax.f32 %v669, %v1007
      %v1291 = vmax.f32 %v671, %v1009
      %v1292 = vmax.f32 %v674, %v1011
      %v1293 = vmax.f32 %v676, %v1013
      %v1294 = vmax.f32 %v679, %v1015
      %v1295 = vmax.f32 %v681, %v1017
      %v1296 = vmax.f32 %v684, %v1019
      %v1297 = vmax.f32 %v686, %v1021
      %v1298 = vmax.f32 %v689, %v1023
      %v1299 = vmax.f32 %v691, %v1025
      %v1300 = vmax.f32 %v694, %v1027
      %v1301 = vmax.f32 %v696, %v1029
      %v1302 = vmax.f32 %v699, %v1031
      %v1303 = vmax.f32 %v701, %v1033
      %v1304 = vmax.f32 %v704, %v1035
      %v1305 = vmax.f32 %v706, %v1037
      %v1306 = vmax.f32 %v709, %v1039
      %v1307 = vmax.f32 %v711, %v1041
      %v1308 = vmax.f32 %v714, %v1043
      %v1309 = vmax.f32 %v716, %v1045
      %v1310 = vmax.f32 %v719, %v1047
      %v1311 = vmax.f32 %v721, %v1049
      %v1312 = vmax.f32 %v724, %v1051
      %v1313 = vmax.f32 %v726, %v1053
      %v1314 = vmax.f32 %v729, %v1055
      %v1315 = vmax.f32 %v731, %v1057
      %v1316 = vmax.f32 %v734, %v1059
      %v1317 = vmax.f32 %v736, %v1061
      %v1318 = vmax.f32 %v739, %v1063
      %v1319 = vmax.f32 %v741, %v1065
      %v1320 = vmax.f32 %v744, %v1067
      %v1321 = vmax.f32 %v746, %v1069
      %v1322 = vmax.f32 %v749, %v1071
      %v1323 = vmax.f32 %v751, %v1073
      %v1324 = vmax.f32 %v754, %v1075
      %v1325 = vmax.f32 %v756, %v1077
      %v1326 = vmax.f32 %v759, %v1079
      %v1327 = vmax.f32 %v761, %v1081
      %v1328 = vmax.f32 %v764, %v1083
      %v1329 = vmax.f32 %v766, %v1085
      %v1330 = vmax.f32 %v769, %v1087
      %v1331 = vmax.f32 %v771, %v1089
      %v1332 = vmax.f32 %v774, %v1091
      %v1333 = vmax.f32 %v776, %v1093
      %v1334 = vmax.f32 %v779, %v1095
      %v1335 = vmax.f32 %v781, %v1097
      %v1336 = vmax.f32 %v784, %v1099
      %v1337 = vmax.f32 %v786, %v1101
      %v1338 = vmax.f32 %v789, %v1103
      %v1339 = vmax.f32 %v791, %v1105
      %v1340 = vmax.f32 %v794, %v1107
      %v1341 = vmax.f32 %v796, %v1109
      %v1342 = vmax.f32 %v799, %v1111
      %v1343 = vmax.f32 %v801, %v1113
      %v1344 = vmax.f32 %v804, %v1115
      %v1345 = vmax.f32 %v806, %v1117
      %v1346 = vmax.f32 %v809, %v1119
      %v1347 = vmax.f32 %v811, %v1121
      %v1348 = vmax.f32 %v814, %v1123
      %v1349 = vmax.f32 %v816, %v1125
      %v1350 = vmax.f32 %v819, %v1127
      %v1351 = vmax.f32 %v821, %v1129
      %v1352 = vmax.f32 %v824, %v1131
      %v1353 = vmax.f32 %v826, %v1133
      %v1354 = vmax.f32 %v829, %v1135
      %v1355 = vmax.f32 %v831, %v1137
      %v1356 = vmax.f32 %v834, %v1139
      %v1357 = vmax.f32 %v836, %v1141
      %v1358 = vmax.f32 %v839, %v1143
      %v1359 = vmax.f32 %v841, %v1145
      %v1360 = vmax.f32 %v844, %v1147
      %v1361 = vmax.f32 %v846, %v1149
      %v1362 = vmax.f32 %v849, %v1151
      %v1363 = vmax.f32 %v851, %v1153
      %v1364 = vmax.f32 %v854, %v1155
      %v1365 = vmax.f32 %v856, %v1157
      %v1366 = vmax.f32 %v859, %v1159
      %v1367 = vmax.f32 %v861, %v1161
      %v1368 = vmax.f32 %v864, %v1163
      %v1369 = vmax.f32 %v866, %v1165
      %v1370 = vmax.f32 %v869, %v1167
      %v1371 = vmax.f32 %v871, %v1169
      %v1372 = vmax.f32 %v874, %v1171
      %v1373 = vmax.f32 %v876, %v1173
      %v1374 = vmax.f32 %v879, %v1175
      %v1375 = vmax.f32 %v881, %v1177
      %v1376 = vmax.f32 %v884, %v1179
      %v1377 = vmax.f32 %v886, %v1181
      %1378 = vrot.lane.b32.xlu0 %v644, 96
      %v1379 = vpop.permute.xlu0 %1378
      %1380 = vrot.lane.b32.xlu0 %v646, 96
      %v1381 = vpop.permute.xlu0 %1380
      %1382 = vrot.lane.b32.xlu0 %v649, 96
      %v1383 = vpop.permute.xlu0 %1382
      %1384 = vrot.lane.b32.xlu0 %v651, 96
      %v1385 = vpop.permute.xlu0 %1384
      %1386 = vrot.lane.b32.xlu0 %v654, 96
      %v1387 = vpop.permute.xlu0 %1386
      %1388 = vrot.lane.b32.xlu0 %v656, 96
      %v1389 = vpop.permute.xlu0 %1388
      %1390 = vrot.lane.b32.xlu0 %v659, 96
      %v1391 = vpop.permute.xlu0 %1390
      %1392 = vrot.lane.b32.xlu0 %v661, 96
      %v1393 = vpop.permute.xlu0 %1392
      %1394 = vrot.lane.b32.xlu0 %v664, 96
      %v1395 = vpop.permute.xlu0 %1394
      %1396 = vrot.lane.b32.xlu0 %v666, 96
      %v1397 = vpop.permute.xlu0 %1396
      %1398 = vrot.lane.b32.xlu0 %v669, 96
      %v1399 = vpop.permute.xlu0 %1398
      %1400 = vrot.lane.b32.xlu0 %v671, 96
      %v1401 = vpop.permute.xlu0 %1400
      %1402 = vrot.lane.b32.xlu0 %v674, 96
      %v1403 = vpop.permute.xlu0 %1402
      %1404 = vrot.lane.b32.xlu0 %v676, 96
      %v1405 = vpop.permute.xlu0 %1404
      %1406 = vrot.lane.b32.xlu0 %v679, 96
      %v1407 = vpop.permute.xlu0 %1406
      %1408 = vrot.lane.b32.xlu0 %v681, 96
      %v1409 = vpop.permute.xlu0 %1408
      %1410 = vrot.lane.b32.xlu0 %v684, 96
      %v1411 = vpop.permute.xlu0 %1410
      %1412 = vrot.lane.b32.xlu0 %v686, 96
      %v1413 = vpop.permute.xlu0 %1412
      %1414 = vrot.lane.b32.xlu0 %v689, 96
      %v1415 = vpop.permute.xlu0 %1414
      %1416 = vrot.lane.b32.xlu0 %v691, 96
      %v1417 = vpop.permute.xlu0 %1416
      %1418 = vrot.lane.b32.xlu0 %v694, 96
      %v1419 = vpop.permute.xlu0 %1418
      %1420 = vrot.lane.b32.xlu0 %v696, 96
      %v1421 = vpop.permute.xlu0 %1420
      %1422 = vrot.lane.b32.xlu0 %v699, 96
      %v1423 = vpop.permute.xlu0 %1422
      %1424 = vrot.lane.b32.xlu0 %v701, 96
      %v1425 = vpop.permute.xlu0 %1424
      %1426 = vrot.lane.b32.xlu0 %v704, 96
      %v1427 = vpop.permute.xlu0 %1426
      %1428 = vrot.lane.b32.xlu0 %v706, 96
      %v1429 = vpop.permute.xlu0 %1428
      %1430 = vrot.lane.b32.xlu0 %v709, 96
      %v1431 = vpop.permute.xlu0 %1430
      %1432 = vrot.lane.b32.xlu0 %v711, 96
      %v1433 = vpop.permute.xlu0 %1432
      %1434 = vrot.lane.b32.xlu0 %v714, 96
      %v1435 = vpop.permute.xlu0 %1434
      %1436 = vrot.lane.b32.xlu0 %v716, 96
      %v1437 = vpop.permute.xlu0 %1436
      %1438 = vrot.lane.b32.xlu0 %v719, 96
      %v1439 = vpop.permute.xlu0 %1438
      %1440 = vrot.lane.b32.xlu0 %v721, 96
      %v1441 = vpop.permute.xlu0 %1440
      %1442 = vrot.lane.b32.xlu0 %v724, 96
      %v1443 = vpop.permute.xlu0 %1442
      %1444 = vrot.lane.b32.xlu0 %v726, 96
      %v1445 = vpop.permute.xlu0 %1444
      %1446 = vrot.lane.b32.xlu0 %v729, 96
      %v1447 = vpop.permute.xlu0 %1446
      %1448 = vrot.lane.b32.xlu0 %v731, 96
      %v1449 = vpop.permute.xlu0 %1448
      %1450 = vrot.lane.b32.xlu0 %v734, 96
      %v1451 = vpop.permute.xlu0 %1450
      %1452 = vrot.lane.b32.xlu0 %v736, 96
      %v1453 = vpop.permute.xlu0 %1452
      %1454 = vrot.lane.b32.xlu0 %v739, 96
      %v1455 = vpop.permute.xlu0 %1454
      %1456 = vrot.lane.b32.xlu0 %v741, 96
      %v1457 = vpop.permute.xlu0 %1456
      %1458 = vrot.lane.b32.xlu0 %v744, 96
      %v1459 = vpop.permute.xlu0 %1458
      %1460 = vrot.lane.b32.xlu0 %v746, 96
      %v1461 = vpop.permute.xlu0 %1460
      %1462 = vrot.lane.b32.xlu0 %v749, 96
      %v1463 = vpop.permute.xlu0 %1462
      %1464 = vrot.lane.b32.xlu0 %v751, 96
      %v1465 = vpop.permute.xlu0 %1464
      %1466 = vrot.lane.b32.xlu0 %v754, 96
      %v1467 = vpop.permute.xlu0 %1466
      %1468 = vrot.lane.b32.xlu0 %v756, 96
      %v1469 = vpop.permute.xlu0 %1468
      %1470 = vrot.lane.b32.xlu0 %v759, 96
      %v1471 = vpop.permute.xlu0 %1470
      %1472 = vrot.lane.b32.xlu0 %v761, 96
      %v1473 = vpop.permute.xlu0 %1472
      %1474 = vrot.lane.b32.xlu0 %v764, 96
      %v1475 = vpop.permute.xlu0 %1474
      %1476 = vrot.lane.b32.xlu0 %v766, 96
      %v1477 = vpop.permute.xlu0 %1476
      %1478 = vrot.lane.b32.xlu0 %v769, 96
      %v1479 = vpop.permute.xlu0 %1478
      %1480 = vrot.lane.b32.xlu0 %v771, 96
      %v1481 = vpop.permute.xlu0 %1480
      %1482 = vrot.lane.b32.xlu0 %v774, 96
      %v1483 = vpop.permute.xlu0 %1482
      %1484 = vrot.lane.b32.xlu0 %v776, 96
      %v1485 = vpop.permute.xlu0 %1484
      %1486 = vrot.lane.b32.xlu0 %v779, 96
      %v1487 = vpop.permute.xlu0 %1486
      %1488 = vrot.lane.b32.xlu0 %v781, 96
      %v1489 = vpop.permute.xlu0 %1488
      %1490 = vrot.lane.b32.xlu0 %v784, 96
      %v1491 = vpop.permute.xlu0 %1490
      %1492 = vrot.lane.b32.xlu0 %v786, 96
      %v1493 = vpop.permute.xlu0 %1492
      %1494 = vrot.lane.b32.xlu0 %v789, 96
      %v1495 = vpop.permute.xlu0 %1494
      %1496 = vrot.lane.b32.xlu0 %v791, 96
      %v1497 = vpop.permute.xlu0 %1496
      %1498 = vrot.lane.b32.xlu0 %v794, 96
      %v1499 = vpop.permute.xlu0 %1498
      %1500 = vrot.lane.b32.xlu0 %v796, 96
      %v1501 = vpop.permute.xlu0 %1500
      %1502 = vrot.lane.b32.xlu0 %v799, 96
      %v1503 = vpop.permute.xlu0 %1502
      %1504 = vrot.lane.b32.xlu0 %v801, 96
      %v1505 = vpop.permute.xlu0 %1504
      %1506 = vrot.lane.b32.xlu0 %v804, 96
      %v1507 = vpop.permute.xlu0 %1506
      %1508 = vrot.lane.b32.xlu0 %v806, 96
      %v1509 = vpop.permute.xlu0 %1508
      %1510 = vrot.lane.b32.xlu0 %v809, 96
      %v1511 = vpop.permute.xlu0 %1510
      %1512 = vrot.lane.b32.xlu0 %v811, 96
      %v1513 = vpop.permute.xlu0 %1512
      %1514 = vrot.lane.b32.xlu0 %v814, 96
      %v1515 = vpop.permute.xlu0 %1514
      %1516 = vrot.lane.b32.xlu0 %v816, 96
      %v1517 = vpop.permute.xlu0 %1516
      %1518 = vrot.lane.b32.xlu0 %v819, 96
      %v1519 = vpop.permute.xlu0 %1518
      %1520 = vrot.lane.b32.xlu0 %v821, 96
      %v1521 = vpop.permute.xlu0 %1520
      %1522 = vrot.lane.b32.xlu0 %v824, 96
      %v1523 = vpop.permute.xlu0 %1522
      %1524 = vrot.lane.b32.xlu0 %v826, 96
      %v1525 = vpop.permute.xlu0 %1524
      %1526 = vrot.lane.b32.xlu0 %v829, 96
      %v1527 = vpop.permute.xlu0 %1526
      %1528 = vrot.lane.b32.xlu0 %v831, 96
      %v1529 = vpop.permute.xlu0 %1528
      %1530 = vrot.lane.b32.xlu0 %v834, 96
      %v1531 = vpop.permute.xlu0 %1530
      %1532 = vrot.lane.b32.xlu0 %v836, 96
      %v1533 = vpop.permute.xlu0 %1532
      %1534 = vrot.lane.b32.xlu0 %v839, 96
      %v1535 = vpop.permute.xlu0 %1534
      %1536 = vrot.lane.b32.xlu0 %v841, 96
      %v1537 = vpop.permute.xlu0 %1536
      %1538 = vrot.lane.b32.xlu0 %v844, 96
      %v1539 = vpop.permute.xlu0 %1538
      %1540 = vrot.lane.b32.xlu0 %v846, 96
      %v1541 = vpop.permute.xlu0 %1540
      %1542 = vrot.lane.b32.xlu0 %v849, 96
      %v1543 = vpop.permute.xlu0 %1542
      %1544 = vrot.lane.b32.xlu0 %v851, 96
      %v1545 = vpop.permute.xlu0 %1544
      %1546 = vrot.lane.b32.xlu0 %v854, 96
      %v1547 = vpop.permute.xlu0 %1546
      %1548 = vrot.lane.b32.xlu0 %v856, 96
      %v1549 = vpop.permute.xlu0 %1548
      %1550 = vrot.lane.b32.xlu0 %v859, 96
      %v1551 = vpop.permute.xlu0 %1550
      %1552 = vrot.lane.b32.xlu0 %v861, 96
      %v1553 = vpop.permute.xlu0 %1552
      %1554 = vrot.lane.b32.xlu0 %v864, 96
      %v1555 = vpop.permute.xlu0 %1554
      %1556 = vrot.lane.b32.xlu0 %v866, 96
      %v1557 = vpop.permute.xlu0 %1556
      %1558 = vrot.lane.b32.xlu0 %v869, 96
      %v1559 = vpop.permute.xlu0 %1558
      %1560 = vrot.lane.b32.xlu0 %v871, 96
      %v1561 = vpop.permute.xlu0 %1560
      %1562 = vrot.lane.b32.xlu0 %v874, 96
      %v1563 = vpop.permute.xlu0 %1562
      %1564 = vrot.lane.b32.xlu0 %v876, 96
      %v1565 = vpop.permute.xlu0 %1564
      %1566 = vrot.lane.b32.xlu0 %v879, 96
      %v1567 = vpop.permute.xlu0 %1566
      %1568 = vrot.lane.b32.xlu0 %v881, 96
      %v1569 = vpop.permute.xlu0 %1568
      %1570 = vrot.lane.b32.xlu0 %v884, 96
      %v1571 = vpop.permute.xlu0 %1570
      %1572 = vrot.lane.b32.xlu0 %v886, 96
      %v1573 = vpop.permute.xlu0 %1572
      %v1672 = vmax.f32 %v1280, %v1379
      %v1673 = vmax.f32 %v1281, %v1381
      %v1674 = vmax.f32 %v1282, %v1383
      %v1675 = vmax.f32 %v1283, %v1385
      %v1676 = vmax.f32 %v1284, %v1387
      %v1677 = vmax.f32 %v1285, %v1389
      %v1678 = vmax.f32 %v1286, %v1391
      %v1679 = vmax.f32 %v1287, %v1393
      %v1680 = vmax.f32 %v1288, %v1395
      %v1681 = vmax.f32 %v1289, %v1397
      %v1682 = vmax.f32 %v1290, %v1399
      %v1683 = vmax.f32 %v1291, %v1401
      %v1684 = vmax.f32 %v1292, %v1403
      %v1685 = vmax.f32 %v1293, %v1405
      %v1686 = vmax.f32 %v1294, %v1407
      %v1687 = vmax.f32 %v1295, %v1409
      %v1688 = vmax.f32 %v1296, %v1411
      %v1689 = vmax.f32 %v1297, %v1413
      %v1690 = vmax.f32 %v1298, %v1415
      %v1691 = vmax.f32 %v1299, %v1417
      %v1692 = vmax.f32 %v1300, %v1419
      %v1693 = vmax.f32 %v1301, %v1421
      %v1694 = vmax.f32 %v1302, %v1423
      %v1695 = vmax.f32 %v1303, %v1425
      %v1696 = vmax.f32 %v1304, %v1427
      %v1697 = vmax.f32 %v1305, %v1429
      %v1698 = vmax.f32 %v1306, %v1431
      %v1699 = vmax.f32 %v1307, %v1433
      %v1700 = vmax.f32 %v1308, %v1435
      %v1701 = vmax.f32 %v1309, %v1437
      %v1702 = vmax.f32 %v1310, %v1439
      %v1703 = vmax.f32 %v1311, %v1441
      %v1704 = vmax.f32 %v1312, %v1443
      %v1705 = vmax.f32 %v1313, %v1445
      %v1706 = vmax.f32 %v1314, %v1447
      %v1707 = vmax.f32 %v1315, %v1449
      %v1708 = vmax.f32 %v1316, %v1451
      %v1709 = vmax.f32 %v1317, %v1453
      %v1710 = vmax.f32 %v1318, %v1455
      %v1711 = vmax.f32 %v1319, %v1457
      %v1712 = vmax.f32 %v1320, %v1459
      %v1713 = vmax.f32 %v1321, %v1461
      %v1714 = vmax.f32 %v1322, %v1463
      %v1715 = vmax.f32 %v1323, %v1465
      %v1716 = vmax.f32 %v1324, %v1467
      %v1717 = vmax.f32 %v1325, %v1469
      %v1718 = vmax.f32 %v1326, %v1471
      %v1719 = vmax.f32 %v1327, %v1473
      %v1720 = vmax.f32 %v1328, %v1475
      %v1721 = vmax.f32 %v1329, %v1477
      %v1722 = vmax.f32 %v1330, %v1479
      %v1723 = vmax.f32 %v1331, %v1481
      %v1724 = vmax.f32 %v1332, %v1483
      %v1725 = vmax.f32 %v1333, %v1485
      %v1726 = vmax.f32 %v1334, %v1487
      %v1727 = vmax.f32 %v1335, %v1489
      %v1728 = vmax.f32 %v1336, %v1491
      %v1729 = vmax.f32 %v1337, %v1493
      %v1730 = vmax.f32 %v1338, %v1495
      %v1731 = vmax.f32 %v1339, %v1497
      %v1732 = vmax.f32 %v1340, %v1499
      %v1733 = vmax.f32 %v1341, %v1501
      %v1734 = vmax.f32 %v1342, %v1503
      %v1735 = vmax.f32 %v1343, %v1505
      %v1736 = vmax.f32 %v1344, %v1507
      %v1737 = vmax.f32 %v1345, %v1509
      %v1738 = vmax.f32 %v1346, %v1511
      %v1739 = vmax.f32 %v1347, %v1513
      %v1740 = vmax.f32 %v1348, %v1515
      %v1741 = vmax.f32 %v1349, %v1517
      %v1742 = vmax.f32 %v1350, %v1519
      %v1743 = vmax.f32 %v1351, %v1521
      %v1744 = vmax.f32 %v1352, %v1523
      %v1745 = vmax.f32 %v1353, %v1525
      %v1746 = vmax.f32 %v1354, %v1527
      %v1747 = vmax.f32 %v1355, %v1529
      %v1748 = vmax.f32 %v1356, %v1531
      %v1749 = vmax.f32 %v1357, %v1533
      %v1750 = vmax.f32 %v1358, %v1535
      %v1751 = vmax.f32 %v1359, %v1537
      %v1752 = vmax.f32 %v1360, %v1539
      %v1753 = vmax.f32 %v1361, %v1541
      %v1754 = vmax.f32 %v1362, %v1543
      %v1755 = vmax.f32 %v1363, %v1545
      %v1756 = vmax.f32 %v1364, %v1547
      %v1757 = vmax.f32 %v1365, %v1549
      %v1758 = vmax.f32 %v1366, %v1551
      %v1759 = vmax.f32 %v1367, %v1553
      %v1760 = vmax.f32 %v1368, %v1555
      %v1761 = vmax.f32 %v1369, %v1557
      %v1762 = vmax.f32 %v1370, %v1559
      %v1763 = vmax.f32 %v1371, %v1561
      %v1764 = vmax.f32 %v1372, %v1563
      %v1765 = vmax.f32 %v1373, %v1565
      %v1766 = vmax.f32 %v1374, %v1567
      %v1767 = vmax.f32 %v1375, %v1569
      %v1768 = vmax.f32 %v1376, %v1571
      %v1769 = vmax.f32 %v1377, %v1573
      %1770 = vrot.lane.b32.xlu0 %v644, 80
      %v1771 = vpop.permute.xlu0 %1770
      %1772 = vrot.lane.b32.xlu0 %v646, 80
      %v1773 = vpop.permute.xlu0 %1772
      %1774 = vrot.lane.b32.xlu0 %v649, 80
      %v1775 = vpop.permute.xlu0 %1774
      %1776 = vrot.lane.b32.xlu0 %v651, 80
      %v1777 = vpop.permute.xlu0 %1776
      %1778 = vrot.lane.b32.xlu0 %v654, 80
      %v1779 = vpop.permute.xlu0 %1778
      %1780 = vrot.lane.b32.xlu0 %v656, 80
      %v1781 = vpop.permute.xlu0 %1780
      %1782 = vrot.lane.b32.xlu0 %v659, 80
      %v1783 = vpop.permute.xlu0 %1782
      %1784 = vrot.lane.b32.xlu0 %v661, 80
      %v1785 = vpop.permute.xlu0 %1784
      %1786 = vrot.lane.b32.xlu0 %v664, 80
      %v1787 = vpop.permute.xlu0 %1786
      %1788 = vrot.lane.b32.xlu0 %v666, 80
      %v1789 = vpop.permute.xlu0 %1788
      %1790 = vrot.lane.b32.xlu0 %v669, 80
      %v1791 = vpop.permute.xlu0 %1790
      %1792 = vrot.lane.b32.xlu0 %v671, 80
      %v1793 = vpop.permute.xlu0 %1792
      %1794 = vrot.lane.b32.xlu0 %v674, 80
      %v1795 = vpop.permute.xlu0 %1794
      %1796 = vrot.lane.b32.xlu0 %v676, 80
      %v1797 = vpop.permute.xlu0 %1796
      %1798 = vrot.lane.b32.xlu0 %v679, 80
      %v1799 = vpop.permute.xlu0 %1798
      %1800 = vrot.lane.b32.xlu0 %v681, 80
      %v1801 = vpop.permute.xlu0 %1800
      %1802 = vrot.lane.b32.xlu0 %v684, 80
      %v1803 = vpop.permute.xlu0 %1802
      %1804 = vrot.lane.b32.xlu0 %v686, 80
      %v1805 = vpop.permute.xlu0 %1804
      %1806 = vrot.lane.b32.xlu0 %v689, 80
      %v1807 = vpop.permute.xlu0 %1806
      %1808 = vrot.lane.b32.xlu0 %v691, 80
      %v1809 = vpop.permute.xlu0 %1808
      %1810 = vrot.lane.b32.xlu0 %v694, 80
      %v1811 = vpop.permute.xlu0 %1810
      %1812 = vrot.lane.b32.xlu0 %v696, 80
      %v1813 = vpop.permute.xlu0 %1812
      %1814 = vrot.lane.b32.xlu0 %v699, 80
      %v1815 = vpop.permute.xlu0 %1814
      %1816 = vrot.lane.b32.xlu0 %v701, 80
      %v1817 = vpop.permute.xlu0 %1816
      %1818 = vrot.lane.b32.xlu0 %v704, 80
      %v1819 = vpop.permute.xlu0 %1818
      %1820 = vrot.lane.b32.xlu0 %v706, 80
      %v1821 = vpop.permute.xlu0 %1820
      %1822 = vrot.lane.b32.xlu0 %v709, 80
      %v1823 = vpop.permute.xlu0 %1822
      %1824 = vrot.lane.b32.xlu0 %v711, 80
      %v1825 = vpop.permute.xlu0 %1824
      %1826 = vrot.lane.b32.xlu0 %v714, 80
      %v1827 = vpop.permute.xlu0 %1826
      %1828 = vrot.lane.b32.xlu0 %v716, 80
      %v1829 = vpop.permute.xlu0 %1828
      %1830 = vrot.lane.b32.xlu0 %v719, 80
      %v1831 = vpop.permute.xlu0 %1830
      %1832 = vrot.lane.b32.xlu0 %v721, 80
      %v1833 = vpop.permute.xlu0 %1832
      %1834 = vrot.lane.b32.xlu0 %v724, 80
      %v1835 = vpop.permute.xlu0 %1834
      %1836 = vrot.lane.b32.xlu0 %v726, 80
      %v1837 = vpop.permute.xlu0 %1836
      %1838 = vrot.lane.b32.xlu0 %v729, 80
      %v1839 = vpop.permute.xlu0 %1838
      %1840 = vrot.lane.b32.xlu0 %v731, 80
      %v1841 = vpop.permute.xlu0 %1840
      %1842 = vrot.lane.b32.xlu0 %v734, 80
      %v1843 = vpop.permute.xlu0 %1842
      %1844 = vrot.lane.b32.xlu0 %v736, 80
      %v1845 = vpop.permute.xlu0 %1844
      %1846 = vrot.lane.b32.xlu0 %v739, 80
      %v1847 = vpop.permute.xlu0 %1846
      %1848 = vrot.lane.b32.xlu0 %v741, 80
      %v1849 = vpop.permute.xlu0 %1848
      %1850 = vrot.lane.b32.xlu0 %v744, 80
      %v1851 = vpop.permute.xlu0 %1850
      %1852 = vrot.lane.b32.xlu0 %v746, 80
      %v1853 = vpop.permute.xlu0 %1852
      %1854 = vrot.lane.b32.xlu0 %v749, 80
      %v1855 = vpop.permute.xlu0 %1854
      %1856 = vrot.lane.b32.xlu0 %v751, 80
      %v1857 = vpop.permute.xlu0 %1856
      %1858 = vrot.lane.b32.xlu0 %v754, 80
      %v1859 = vpop.permute.xlu0 %1858
      %1860 = vrot.lane.b32.xlu0 %v756, 80
      %v1861 = vpop.permute.xlu0 %1860
      %1862 = vrot.lane.b32.xlu0 %v759, 80
      %v1863 = vpop.permute.xlu0 %1862
      %1864 = vrot.lane.b32.xlu0 %v761, 80
      %v1865 = vpop.permute.xlu0 %1864
      %1866 = vrot.lane.b32.xlu0 %v764, 80
      %v1867 = vpop.permute.xlu0 %1866
      %1868 = vrot.lane.b32.xlu0 %v766, 80
      %v1869 = vpop.permute.xlu0 %1868
      %1870 = vrot.lane.b32.xlu0 %v769, 80
      %v1871 = vpop.permute.xlu0 %1870
      %1872 = vrot.lane.b32.xlu0 %v771, 80
      %v1873 = vpop.permute.xlu0 %1872
      %1874 = vrot.lane.b32.xlu0 %v774, 80
      %v1875 = vpop.permute.xlu0 %1874
      %1876 = vrot.lane.b32.xlu0 %v776, 80
      %v1877 = vpop.permute.xlu0 %1876
      %1878 = vrot.lane.b32.xlu0 %v779, 80
      %v1879 = vpop.permute.xlu0 %1878
      %1880 = vrot.lane.b32.xlu0 %v781, 80
      %v1881 = vpop.permute.xlu0 %1880
      %1882 = vrot.lane.b32.xlu0 %v784, 80
      %v1883 = vpop.permute.xlu0 %1882
      %1884 = vrot.lane.b32.xlu0 %v786, 80
      %v1885 = vpop.permute.xlu0 %1884
      %1886 = vrot.lane.b32.xlu0 %v789, 80
      %v1887 = vpop.permute.xlu0 %1886
      %1888 = vrot.lane.b32.xlu0 %v791, 80
      %v1889 = vpop.permute.xlu0 %1888
      %1890 = vrot.lane.b32.xlu0 %v794, 80
      %v1891 = vpop.permute.xlu0 %1890
      %1892 = vrot.lane.b32.xlu0 %v796, 80
      %v1893 = vpop.permute.xlu0 %1892
      %1894 = vrot.lane.b32.xlu0 %v799, 80
      %v1895 = vpop.permute.xlu0 %1894
      %1896 = vrot.lane.b32.xlu0 %v801, 80
      %v1897 = vpop.permute.xlu0 %1896
      %1898 = vrot.lane.b32.xlu0 %v804, 80
      %v1899 = vpop.permute.xlu0 %1898
      %1900 = vrot.lane.b32.xlu0 %v806, 80
      %v1901 = vpop.permute.xlu0 %1900
      %1902 = vrot.lane.b32.xlu0 %v809, 80
      %v1903 = vpop.permute.xlu0 %1902
      %1904 = vrot.lane.b32.xlu0 %v811, 80
      %v1905 = vpop.permute.xlu0 %1904
      %1906 = vrot.lane.b32.xlu0 %v814, 80
      %v1907 = vpop.permute.xlu0 %1906
      %1908 = vrot.lane.b32.xlu0 %v816, 80
      %v1909 = vpop.permute.xlu0 %1908
      %1910 = vrot.lane.b32.xlu0 %v819, 80
      %v1911 = vpop.permute.xlu0 %1910
      %1912 = vrot.lane.b32.xlu0 %v821, 80
      %v1913 = vpop.permute.xlu0 %1912
      %1914 = vrot.lane.b32.xlu0 %v824, 80
      %v1915 = vpop.permute.xlu0 %1914
      %1916 = vrot.lane.b32.xlu0 %v826, 80
      %v1917 = vpop.permute.xlu0 %1916
      %1918 = vrot.lane.b32.xlu0 %v829, 80
      %v1919 = vpop.permute.xlu0 %1918
      %1920 = vrot.lane.b32.xlu0 %v831, 80
      %v1921 = vpop.permute.xlu0 %1920
      %1922 = vrot.lane.b32.xlu0 %v834, 80
      %v1923 = vpop.permute.xlu0 %1922
      %1924 = vrot.lane.b32.xlu0 %v836, 80
      %v1925 = vpop.permute.xlu0 %1924
      %1926 = vrot.lane.b32.xlu0 %v839, 80
      %v1927 = vpop.permute.xlu0 %1926
      %1928 = vrot.lane.b32.xlu0 %v841, 80
      %v1929 = vpop.permute.xlu0 %1928
      %1930 = vrot.lane.b32.xlu0 %v844, 80
      %v1931 = vpop.permute.xlu0 %1930
      %1932 = vrot.lane.b32.xlu0 %v846, 80
      %v1933 = vpop.permute.xlu0 %1932
      %1934 = vrot.lane.b32.xlu0 %v849, 80
      %v1935 = vpop.permute.xlu0 %1934
      %1936 = vrot.lane.b32.xlu0 %v851, 80
      %v1937 = vpop.permute.xlu0 %1936
      %1938 = vrot.lane.b32.xlu0 %v854, 80
      %v1939 = vpop.permute.xlu0 %1938
      %1940 = vrot.lane.b32.xlu0 %v856, 80
      %v1941 = vpop.permute.xlu0 %1940
      %1942 = vrot.lane.b32.xlu0 %v859, 80
      %v1943 = vpop.permute.xlu0 %1942
      %1944 = vrot.lane.b32.xlu0 %v861, 80
      %v1945 = vpop.permute.xlu0 %1944
      %1946 = vrot.lane.b32.xlu0 %v864, 80
      %v1947 = vpop.permute.xlu0 %1946
      %1948 = vrot.lane.b32.xlu0 %v866, 80
      %v1949 = vpop.permute.xlu0 %1948
      %1950 = vrot.lane.b32.xlu0 %v869, 80
      %v1951 = vpop.permute.xlu0 %1950
      %1952 = vrot.lane.b32.xlu0 %v871, 80
      %v1953 = vpop.permute.xlu0 %1952
      %1954 = vrot.lane.b32.xlu0 %v874, 80
      %v1955 = vpop.permute.xlu0 %1954
      %1956 = vrot.lane.b32.xlu0 %v876, 80
      %v1957 = vpop.permute.xlu0 %1956
      %1958 = vrot.lane.b32.xlu0 %v879, 80
      %v1959 = vpop.permute.xlu0 %1958
      %1960 = vrot.lane.b32.xlu0 %v881, 80
      %v1961 = vpop.permute.xlu0 %1960
      %1962 = vrot.lane.b32.xlu0 %v884, 80
      %v1963 = vpop.permute.xlu0 %1962
      %1964 = vrot.lane.b32.xlu0 %v886, 80
      %v1965 = vpop.permute.xlu0 %1964
      %v2064 = vmax.f32 %v1672, %v1771
      %v2065 = vmax.f32 %v1673, %v1773
      %v2066 = vmax.f32 %v1674, %v1775
      %v2067 = vmax.f32 %v1675, %v1777
      %v2068 = vmax.f32 %v1676, %v1779
      %v2069 = vmax.f32 %v1677, %v1781
      %v2070 = vmax.f32 %v1678, %v1783
      %v2071 = vmax.f32 %v1679, %v1785
      %v2072 = vmax.f32 %v1680, %v1787
      %v2073 = vmax.f32 %v1681, %v1789
      %v2074 = vmax.f32 %v1682, %v1791
      %v2075 = vmax.f32 %v1683, %v1793
      %v2076 = vmax.f32 %v1684, %v1795
      %v2077 = vmax.f32 %v1685, %v1797
      %v2078 = vmax.f32 %v1686, %v1799
      %v2079 = vmax.f32 %v1687, %v1801
      %v2080 = vmax.f32 %v1688, %v1803
      %v2081 = vmax.f32 %v1689, %v1805
      %v2082 = vmax.f32 %v1690, %v1807
      %v2083 = vmax.f32 %v1691, %v1809
      %v2084 = vmax.f32 %v1692, %v1811
      %v2085 = vmax.f32 %v1693, %v1813
      %v2086 = vmax.f32 %v1694, %v1815
      %v2087 = vmax.f32 %v1695, %v1817
      %v2088 = vmax.f32 %v1696, %v1819
      %v2089 = vmax.f32 %v1697, %v1821
      %v2090 = vmax.f32 %v1698, %v1823
      %v2091 = vmax.f32 %v1699, %v1825
      %v2092 = vmax.f32 %v1700, %v1827
      %v2093 = vmax.f32 %v1701, %v1829
      %v2094 = vmax.f32 %v1702, %v1831
      %v2095 = vmax.f32 %v1703, %v1833
      %v2096 = vmax.f32 %v1704, %v1835
      %v2097 = vmax.f32 %v1705, %v1837
      %v2098 = vmax.f32 %v1706, %v1839
      %v2099 = vmax.f32 %v1707, %v1841
      %v2100 = vmax.f32 %v1708, %v1843
      %v2101 = vmax.f32 %v1709, %v1845
      %v2102 = vmax.f32 %v1710, %v1847
      %v2103 = vmax.f32 %v1711, %v1849
      %v2104 = vmax.f32 %v1712, %v1851
      %v2105 = vmax.f32 %v1713, %v1853
      %v2106 = vmax.f32 %v1714, %v1855
      %v2107 = vmax.f32 %v1715, %v1857
      %v2108 = vmax.f32 %v1716, %v1859
      %v2109 = vmax.f32 %v1717, %v1861
      %v2110 = vmax.f32 %v1718, %v1863
      %v2111 = vmax.f32 %v1719, %v1865
      %v2112 = vmax.f32 %v1720, %v1867
      %v2113 = vmax.f32 %v1721, %v1869
      %v2114 = vmax.f32 %v1722, %v1871
      %v2115 = vmax.f32 %v1723, %v1873
      %v2116 = vmax.f32 %v1724, %v1875
      %v2117 = vmax.f32 %v1725, %v1877
      %v2118 = vmax.f32 %v1726, %v1879
      %v2119 = vmax.f32 %v1727, %v1881
      %v2120 = vmax.f32 %v1728, %v1883
      %v2121 = vmax.f32 %v1729, %v1885
      %v2122 = vmax.f32 %v1730, %v1887
      %v2123 = vmax.f32 %v1731, %v1889
      %v2124 = vmax.f32 %v1732, %v1891
      %v2125 = vmax.f32 %v1733, %v1893
      %v2126 = vmax.f32 %v1734, %v1895
      %v2127 = vmax.f32 %v1735, %v1897
      %v2128 = vmax.f32 %v1736, %v1899
      %v2129 = vmax.f32 %v1737, %v1901
      %v2130 = vmax.f32 %v1738, %v1903
      %v2131 = vmax.f32 %v1739, %v1905
      %v2132 = vmax.f32 %v1740, %v1907
      %v2133 = vmax.f32 %v1741, %v1909
      %v2134 = vmax.f32 %v1742, %v1911
      %v2135 = vmax.f32 %v1743, %v1913
      %v2136 = vmax.f32 %v1744, %v1915
      %v2137 = vmax.f32 %v1745, %v1917
      %v2138 = vmax.f32 %v1746, %v1919
      %v2139 = vmax.f32 %v1747, %v1921
      %v2140 = vmax.f32 %v1748, %v1923
      %v2141 = vmax.f32 %v1749, %v1925
      %v2142 = vmax.f32 %v1750, %v1927
      %v2143 = vmax.f32 %v1751, %v1929
      %v2144 = vmax.f32 %v1752, %v1931
      %v2145 = vmax.f32 %v1753, %v1933
      %v2146 = vmax.f32 %v1754, %v1935
      %v2147 = vmax.f32 %v1755, %v1937
      %v2148 = vmax.f32 %v1756, %v1939
      %v2149 = vmax.f32 %v1757, %v1941
      %v2150 = vmax.f32 %v1758, %v1943
      %v2151 = vmax.f32 %v1759, %v1945
      %v2152 = vmax.f32 %v1760, %v1947
      %v2153 = vmax.f32 %v1761, %v1949
      %v2154 = vmax.f32 %v1762, %v1951
      %v2155 = vmax.f32 %v1763, %v1953
      %v2156 = vmax.f32 %v1764, %v1955
      %v2157 = vmax.f32 %v1765, %v1957
      %v2158 = vmax.f32 %v1766, %v1959
      %v2159 = vmax.f32 %v1767, %v1961
      %v2160 = vmax.f32 %v1768, %v1963
      %v2161 = vmax.f32 %v1769, %v1965
      %v2162 = vpack.c.bf16 %v2064, %v2064
      %v2163 = vpack.c.bf16 %v2065, %v2065
      %v2164 = vpack.c.bf16 %v2066, %v2066
      %v2165 = vpack.c.bf16 %v2067, %v2067
      %v2166 = vpack.c.bf16 %v2068, %v2068
      %v2167 = vpack.c.bf16 %v2069, %v2069
      %v2168 = vpack.c.bf16 %v2070, %v2070
      %v2169 = vpack.c.bf16 %v2071, %v2071
      %v2170 = vpack.c.bf16 %v2072, %v2072
      %v2171 = vpack.c.bf16 %v2073, %v2073
      %v2172 = vpack.c.bf16 %v2074, %v2074
      %v2173 = vpack.c.bf16 %v2075, %v2075
      %v2174 = vpack.c.bf16 %v2076, %v2076
      %v2175 = vpack.c.bf16 %v2077, %v2077
      %v2176 = vpack.c.bf16 %v2078, %v2078
      %v2177 = vpack.c.bf16 %v2079, %v2079
      %v2178 = vpack.c.bf16 %v2080, %v2080
      %v2179 = vpack.c.bf16 %v2081, %v2081
      %v2180 = vpack.c.bf16 %v2082, %v2082
      %v2181 = vpack.c.bf16 %v2083, %v2083
      %v2182 = vpack.c.bf16 %v2084, %v2084
      %v2183 = vpack.c.bf16 %v2085, %v2085
      %v2184 = vpack.c.bf16 %v2086, %v2086
      %v2185 = vpack.c.bf16 %v2087, %v2087
      %v2186 = vpack.c.bf16 %v2088, %v2088
      %v2187 = vpack.c.bf16 %v2089, %v2089
      %v2188 = vpack.c.bf16 %v2090, %v2090
      %v2189 = vpack.c.bf16 %v2091, %v2091
      %v2190 = vpack.c.bf16 %v2092, %v2092
      %v2191 = vpack.c.bf16 %v2093, %v2093
      %v2192 = vpack.c.bf16 %v2094, %v2094
      %v2193 = vpack.c.bf16 %v2095, %v2095
      %v2194 = vpack.c.bf16 %v2096, %v2096
      %v2195 = vpack.c.bf16 %v2097, %v2097
      %v2196 = vpack.c.bf16 %v2098, %v2098
      %v2197 = vpack.c.bf16 %v2099, %v2099
      %v2198 = vpack.c.bf16 %v2100, %v2100
      %v2199 = vpack.c.bf16 %v2101, %v2101
      %v2200 = vpack.c.bf16 %v2102, %v2102
      %v2201 = vpack.c.bf16 %v2103, %v2103
      %v2202 = vpack.c.bf16 %v2104, %v2104
      %v2203 = vpack.c.bf16 %v2105, %v2105
      %v2204 = vpack.c.bf16 %v2106, %v2106
      %v2205 = vpack.c.bf16 %v2107, %v2107
      %v2206 = vpack.c.bf16 %v2108, %v2108
      %v2207 = vpack.c.bf16 %v2109, %v2109
      %v2208 = vpack.c.bf16 %v2110, %v2110
      %v2209 = vpack.c.bf16 %v2111, %v2111
      %v2210 = vpack.c.bf16 %v2112, %v2112
      %v2211 = vpack.c.bf16 %v2113, %v2113
      %v2212 = vpack.c.bf16 %v2114, %v2114
      %v2213 = vpack.c.bf16 %v2115, %v2115
      %v2214 = vpack.c.bf16 %v2116, %v2116
      %v2215 = vpack.c.bf16 %v2117, %v2117
      %v2216 = vpack.c.bf16 %v2118, %v2118
      %v2217 = vpack.c.bf16 %v2119, %v2119
      %v2218 = vpack.c.bf16 %v2120, %v2120
      %v2219 = vpack.c.bf16 %v2121, %v2121
      %v2220 = vpack.c.bf16 %v2122, %v2122
      %v2221 = vpack.c.bf16 %v2123, %v2123
      %v2222 = vpack.c.bf16 %v2124, %v2124
      %v2223 = vpack.c.bf16 %v2125, %v2125
      %v2224 = vpack.c.bf16 %v2126, %v2126
      %v2225 = vpack.c.bf16 %v2127, %v2127
      %v2226 = vpack.c.bf16 %v2128, %v2128
      %v2227 = vpack.c.bf16 %v2129, %v2129
      %v2228 = vpack.c.bf16 %v2130, %v2130
      %v2229 = vpack.c.bf16 %v2131, %v2131
      %v2230 = vpack.c.bf16 %v2132, %v2132
      %v2231 = vpack.c.bf16 %v2133, %v2133
      %v2232 = vpack.c.bf16 %v2134, %v2134
      %v2233 = vpack.c.bf16 %v2135, %v2135
      %v2234 = vpack.c.bf16 %v2136, %v2136
      %v2235 = vpack.c.bf16 %v2137, %v2137
      %v2236 = vpack.c.bf16 %v2138, %v2138
      %v2237 = vpack.c.bf16 %v2139, %v2139
      %v2238 = vpack.c.bf16 %v2140, %v2140
      %v2239 = vpack.c.bf16 %v2141, %v2141
      %v2240 = vpack.c.bf16 %v2142, %v2142
      %v2241 = vpack.c.bf16 %v2143, %v2143
      %v2242 = vpack.c.bf16 %v2144, %v2144
      %v2243 = vpack.c.bf16 %v2145, %v2145
      %v2244 = vpack.c.bf16 %v2146, %v2146
      %v2245 = vpack.c.bf16 %v2147, %v2147
      %v2246 = vpack.c.bf16 %v2148, %v2148
      %v2247 = vpack.c.bf16 %v2149, %v2149
      %v2248 = vpack.c.bf16 %v2150, %v2150
      %v2249 = vpack.c.bf16 %v2151, %v2151
      %v2250 = vpack.c.bf16 %v2152, %v2152
      %v2251 = vpack.c.bf16 %v2153, %v2153
      %v2252 = vpack.c.bf16 %v2154, %v2154
      %v2253 = vpack.c.bf16 %v2155, %v2155
      %v2254 = vpack.c.bf16 %v2156, %v2156
      %v2255 = vpack.c.bf16 %v2157, %v2157
      %v2256 = vpack.c.bf16 %v2158, %v2158
      %v2257 = vpack.c.bf16 %v2159, %v2159
      %v2258 = vpack.c.bf16 %v2160, %v2160
      %v2259 = vpack.c.bf16 %v2161, %v2161
      %vm2260 = vcmask 125952
      %2261 = vst.msk [vmem:[%s172] sm:$0xf] %vm2260, %v2162
      %2262 = vst.msk [vmem:[%s172 + $0x4] sm:$0xf] %vm2260, %v2163
      %2263 = vst.msk [vmem:[%s172 + $0x8] sm:$0xf] %vm2260, %v2164
      %2264 = vst.msk [vmem:[%s172 + $0xc] sm:$0xf] %vm2260, %v2165
      %2265 = vst.msk [vmem:[%s172 + $0x10] sm:$0xf] %vm2260, %v2166
      %2266 = vst.msk [vmem:[%s172 + $0x14] sm:$0xf] %vm2260, %v2167
      %2267 = vst.msk [vmem:[%s172 + $0x18] sm:$0xf] %vm2260, %v2168
      %2268 = vst.msk [vmem:[%s172 + $0x1c] sm:$0xf] %vm2260, %v2169
      %2269 = vst.msk [vmem:[%s172 + $0x20] sm:$0xf] %vm2260, %v2170
      %2270 = vst.msk [vmem:[%s172 + $0x24] sm:$0xf] %vm2260, %v2171
      %2271 = vst.msk [vmem:[%s172 + $0x28] sm:$0xf] %vm2260, %v2172
      %2272 = vst.msk [vmem:[%s172 + $0x2c] sm:$0xf] %vm2260, %v2173
      %2273 = vst.msk [vmem:[%s172 + $0x30] sm:$0xf] %vm2260, %v2174
      %2274 = vst.msk [vmem:[%s172 + $0x34] sm:$0xf] %vm2260, %v2175
      %2275 = vst.msk [vmem:[%s172 + $0x38] sm:$0xf] %vm2260, %v2176
      %2276 = vst.msk [vmem:[%s172 + $0x3c] sm:$0xf] %vm2260, %v2177
      %2277 = vst.msk [vmem:[%s172 + $0x40] sm:$0xf] %vm2260, %v2178
      %2278 = vst.msk [vmem:[%s172 + $0x44] sm:$0xf] %vm2260, %v2179
      %2279 = vst.msk [vmem:[%s172 + $0x48] sm:$0xf] %vm2260, %v2180
      %2280 = vst.msk [vmem:[%s172 + $0x4c] sm:$0xf] %vm2260, %v2181
      %2281 = vst.msk [vmem:[%s172 + $0x50] sm:$0xf] %vm2260, %v2182
      %2282 = vst.msk [vmem:[%s172 + $0x54] sm:$0xf] %vm2260, %v2183
      %2283 = vst.msk [vmem:[%s172 + $0x58] sm:$0xf] %vm2260, %v2184
      %2284 = vst.msk [vmem:[%s172 + $0x5c] sm:$0xf] %vm2260, %v2185
      %2285 = vst.msk [vmem:[%s172 + $0x60] sm:$0xf] %vm2260, %v2186
      %2286 = vst.msk [vmem:[%s172 + $0x64] sm:$0xf] %vm2260, %v2187
      %2287 = vst.msk [vmem:[%s172 + $0x68] sm:$0xf] %vm2260, %v2188
      %2288 = vst.msk [vmem:[%s172 + $0x6c] sm:$0xf] %vm2260, %v2189
      %2289 = vst.msk [vmem:[%s172 + $0x70] sm:$0xf] %vm2260, %v2190
      %2290 = vst.msk [vmem:[%s172 + $0x74] sm:$0xf] %vm2260, %v2191
      %2291 = vst.msk [vmem:[%s172 + $0x78] sm:$0xf] %vm2260, %v2192
      %2292 = vst.msk [vmem:[%s172 + $0x7c] sm:$0xf] %vm2260, %v2193
      %2293 = vst.msk [vmem:[%s172 + $0x80] sm:$0xf] %vm2260, %v2194
      %2294 = vst.msk [vmem:[%s172 + $0x84] sm:$0xf] %vm2260, %v2195
      %2295 = vst.msk [vmem:[%s172 + $0x88] sm:$0xf] %vm2260, %v2196
      %2296 = vst.msk [vmem:[%s172 + $0x8c] sm:$0xf] %vm2260, %v2197
      %2297 = vst.msk [vmem:[%s172 + $0x90] sm:$0xf] %vm2260, %v2198
      %2298 = vst.msk [vmem:[%s172 + $0x94] sm:$0xf] %vm2260, %v2199
      %2299 = vst.msk [vmem:[%s172 + $0x98] sm:$0xf] %vm2260, %v2200
      %2300 = vst.msk [vmem:[%s172 + $0x9c] sm:$0xf] %vm2260, %v2201
      %2301 = vst.msk [vmem:[%s172 + $0xa0] sm:$0xf] %vm2260, %v2202
      %2302 = vst.msk [vmem:[%s172 + $0xa4] sm:$0xf] %vm2260, %v2203
      %2303 = vst.msk [vmem:[%s172 + $0xa8] sm:$0xf] %vm2260, %v2204
      %2304 = vst.msk [vmem:[%s172 + $0xac] sm:$0xf] %vm2260, %v2205
      %2305 = vst.msk [vmem:[%s172 + $0xb0] sm:$0xf] %vm2260, %v2206
      %2306 = vst.msk [vmem:[%s172 + $0xb4] sm:$0xf] %vm2260, %v2207
      %2307 = vst.msk [vmem:[%s172 + $0xb8] sm:$0xf] %vm2260, %v2208
      %2308 = vst.msk [vmem:[%s172 + $0xbc] sm:$0xf] %vm2260, %v2209
      %2309 = vst.msk [vmem:[%s172 + $0xc0] sm:$0xf] %vm2260, %v2210
      %2310 = vst.msk [vmem:[%s172 + $0xc4] sm:$0xf] %vm2260, %v2211
      %2311 = vst.msk [vmem:[%s172 + $0xc8] sm:$0xf] %vm2260, %v2212
      %2312 = vst.msk [vmem:[%s172 + $0xcc] sm:$0xf] %vm2260, %v2213
      %2313 = vst.msk [vmem:[%s172 + $0xd0] sm:$0xf] %vm2260, %v2214
      %2314 = vst.msk [vmem:[%s172 + $0xd4] sm:$0xf] %vm2260, %v2215
      %2315 = vst.msk [vmem:[%s172 + $0xd8] sm:$0xf] %vm2260, %v2216
      %2316 = vst.msk [vmem:[%s172 + $0xdc] sm:$0xf] %vm2260, %v2217
      %2317 = vst.msk [vmem:[%s172 + $0xe0] sm:$0xf] %vm2260, %v2218
      %2318 = vst.msk [vmem:[%s172 + $0xe4] sm:$0xf] %vm2260, %v2219
      %2319 = vst.msk [vmem:[%s172 + $0xe8] sm:$0xf] %vm2260, %v2220
      %2320 = vst.msk [vmem:[%s172 + $0xec] sm:$0xf] %vm2260, %v2221
      %2321 = vst.msk [vmem:[%s172 + $0xf0] sm:$0xf] %vm2260, %v2222
      %2322 = vst.msk [vmem:[%s172 + $0xf4] sm:$0xf] %vm2260, %v2223
      %2323 = vst.msk [vmem:[%s172 + $0xf8] sm:$0xf] %vm2260, %v2224
      %2324 = vst.msk [vmem:[%s172 + $0xfc] sm:$0xf] %vm2260, %v2225
      %2325 = vst.msk [vmem:[%s172 + $0x100] sm:$0xf] %vm2260, %v2226
      %2326 = vst.msk [vmem:[%s172 + $0x104] sm:$0xf] %vm2260, %v2227
      %2327 = vst.msk [vmem:[%s172 + $0x108] sm:$0xf] %vm2260, %v2228
      %2328 = vst.msk [vmem:[%s172 + $0x10c] sm:$0xf] %vm2260, %v2229
      %2329 = vst.msk [vmem:[%s172 + $0x110] sm:$0xf] %vm2260, %v2230
      %2330 = vst.msk [vmem:[%s172 + $0x114] sm:$0xf] %vm2260, %v2231
      %2331 = vst.msk [vmem:[%s172 + $0x118] sm:$0xf] %vm2260, %v2232
      %2332 = vst.msk [vmem:[%s172 + $0x11c] sm:$0xf] %vm2260, %v2233
      %2333 = vst.msk [vmem:[%s172 + $0x120] sm:$0xf] %vm2260, %v2234
      %2334 = vst.msk [vmem:[%s172 + $0x124] sm:$0xf] %vm2260, %v2235
      %2335 = vst.msk [vmem:[%s172 + $0x128] sm:$0xf] %vm2260, %v2236
      %2336 = vst.msk [vmem:[%s172 + $0x12c] sm:$0xf] %vm2260, %v2237
      %2337 = vst.msk [vmem:[%s172 + $0x130] sm:$0xf] %vm2260, %v2238
      %2338 = vst.msk [vmem:[%s172 + $0x134] sm:$0xf] %vm2260, %v2239
      %2339 = vst.msk [vmem:[%s172 + $0x138] sm:$0xf] %vm2260, %v2240
      %2340 = vst.msk [vmem:[%s172 + $0x13c] sm:$0xf] %vm2260, %v2241
      %2341 = vst.msk [vmem:[%s172 + $0x140] sm:$0xf] %vm2260, %v2242
      %2342 = vst.msk [vmem:[%s172 + $0x144] sm:$0xf] %vm2260, %v2243
      %2343 = vst.msk [vmem:[%s172 + $0x148] sm:$0xf] %vm2260, %v2244
      %2344 = vst.msk [vmem:[%s172 + $0x14c] sm:$0xf] %vm2260, %v2245
      %2345 = vst.msk [vmem:[%s172 + $0x150] sm:$0xf] %vm2260, %v2246
      %2346 = vst.msk [vmem:[%s172 + $0x154] sm:$0xf] %vm2260, %v2247
      %2347 = vst.msk [vmem:[%s172 + $0x158] sm:$0xf] %vm2260, %v2248
      %2348 = vst.msk [vmem:[%s172 + $0x15c] sm:$0xf] %vm2260, %v2249
      %2349 = vst.msk [vmem:[%s172 + $0x160] sm:$0xf] %vm2260, %v2250
      %2350 = vst.msk [vmem:[%s172 + $0x164] sm:$0xf] %vm2260, %v2251
      %2351 = vst.msk [vmem:[%s172 + $0x168] sm:$0xf] %vm2260, %v2252
      %2352 = vst.msk [vmem:[%s172 + $0x16c] sm:$0xf] %vm2260, %v2253
      %2353 = vst.msk [vmem:[%s172 + $0x170] sm:$0xf] %vm2260, %v2254
      %2354 = vst.msk [vmem:[%s172 + $0x174] sm:$0xf] %vm2260, %v2255
      %2355 = vst.msk [vmem:[%s172 + $0x178] sm:$0xf] %vm2260, %v2256
      %2356 = vst.msk [vmem:[%s172 + $0x17c] sm:$0xf] %vm2260, %v2257
      %2357 = vst.msk [vmem:[%s172 + $0x180] sm:$0xf] %vm2260, %v2258
      %2358 = vst.msk [vmem:[%s172 + $0x184] sm:$0xf] %vm2260, %v2259
      %s2359 = smul.u32 98, %s14
      %p2360 = scmp.lt.s32.totalorder %s2359, 195
      %s2361 = scalar_select %p2360, %s2359, 195
      %s2362 = smul.addr %s2361, 4
      %s2363 = scalar_lea.vmem %s3, %s2362
      // Predicated region
      $region33: #{cnn_forward.3} parent=31 // pred_check
        %p2364 = pneg %p100
      $region34: #{cnn_forward.3} parent=31 // pred_check_branch
        %2366 = sbr.rel (%p2364) target = $region36
      $region35: #{cnn_forward.3} parent=31 // pred_region
        %s2367 = smul.u32 98, %s14
      $region36: #{cnn_forward.3} parent=31 // pred_fallthru
        _
    $region32: #{cnn_forward.3} parent=5 // pred_fallthru
      _
    %p2368 = scmp.le.s32.totalorder 2, %s9
    // Predicated region
    $region37: #{cnn_forward.3} parent=5 // pred_check
      %p2369 = pneg %p2368
    $region38: #{cnn_forward.3} parent=5 // pred_check_branch
      %2371 = sbr.rel (%p2369) target = $region40
    $region39: #{cnn_forward.3} parent=5 // pred_region
      %s2372 = ssub.s32 %s9, 2
      // Predicated region
      $region41: #{cnn_forward.3} parent=39 // pred_check
        %p2373 = pneg %p106
      $region42: #{cnn_forward.3} parent=39 // pred_check_branch
        %2375 = sbr.rel (%p2373) target = $region44
      $region43: #{cnn_forward.3} parent=39 // pred_region
        %s2376 = smul.u32 98, %s15
        %p2377 = scmp.lt.s32.totalorder %s2376, 195
        %s2378 = scalar_select %p2377, %s2376, 195
        %s2379 = smul.addr %s2378, 4
        %s2380 = scalar_lea.vmem %s3, %s2379
      $region44: #{cnn_forward.3} parent=39 // pred_fallthru
        _
    $region40: #{cnn_forward.3} parent=5 // pred_fallthru
      _
  $region6: #{cnn_forward.3} parent=0 // loop_footer
    %s13 = sadd.s32 1, %s9
  $region7: #{cnn_forward.3} parent=0 // loop_footer_branch
    %8 = sbr.rel target = $region3
  $region8: #{cnn_forward.3} parent=0 // loop_exit
    _

// kernel: cnn_forward.4
$region0: #{cnn_forward.4}
  #allocation0 [shape = 'u32[]', space=smem, size = 0x4, offset = 0x4, fixed_abs, tag = 'smem constant byte address 0x4 - core index']
  #allocation1 [shape = 'u32[72,128]{1,0:T(1,128)}', space=vmem, size = 0x9000, scoped, tag = 'internal scratch']
  %s0 = inlined_call_operand.vmem [shape: bf16[1568,512], index: 0, kind: input, shape index: {}]
  %s1 = inlined_call_operand.vmem [shape: bf16[512,32], index: 1, kind: input, shape index: {}]
  %s2 = inlined_call_operand.vmem [shape: f32[1,32], index: 2, kind: input, shape index: {}]
  %s3 = inlined_call_operand.vmem [shape: bf16[1568,8], index: 3, kind: output, shape index: {}]
  %s4 = sld [smem:[#allocation0]]
  $region45: #{cnn_forward.4} parent=0
    _
  %s6 = ssub.s32 1, %s4
  %s7 = scalar_select 0, %s6, %s4
  loop: start=0, step=1, limit=4
  $region2: #{cnn_forward.4} parent=0 // loop_pre_header
    _
  $region3: #{cnn_forward.4} parent=0 // loop_header
    %s9 = sphi 0, %s13
    %p10 = scmp.ge.s32.totalorder %s9, 4
    %s19 = sphi 0, %s21
    %s22 = sphi 0, %s19
    %s23 = sphi 0, %s22
    %s39 = sphi 0, %s23
    %s43 = sphi 0, %s43
    %s45 = sphi 0, %s43
    %s46 = sphi 0, %s45
    %s60 = sphi 0, %s46
    %s64 = sphi 0, %s64
    %s66 = sphi 0, %s64
    %s67 = sphi 0, %s66
    %s81 = sphi 0, %s67
    %s87 = sphi 0, %s89
    %s90 = sphi 0, %s87
    %s91 = sphi 0, %s90
    %s107 = sphi 0, %s91
  $region4: #{cnn_forward.4} parent=0 // loop_header_branch
    %12 = sbr.rel (%p10) target = $region8
  $region5: #{cnn_forward.4} parent=0 // loop_body
    %s14 = ssub.s32 %s9, 1
    %s15 = ssub.s32 %s9, 2
    %s16 = sadd.s32 %s9, 1
    %s17 = ssub.s32 %s9, %s16
    %p18 = scmp.eq.s32.totalorder %s17, 0
    %s20 = sadd.s32 %s19, 1
    %s21 = scalar_select %p18, %s19, %s20
    %p24 = pneg %p18
    %p25 = scmp.eq.s32.totalorder %s9, 1
    %p26 = por %p24, %p25
    %p27 = scmp.ne.s32.totalorder %s19, %s22
    %p28 = scmp.eq.s32.totalorder %s9, 0
    %p29 = por %p27, %p28
    %p30 = scmp.ne.s32.totalorder %s19, %s22
    %p31 = scmp.eq.s32.totalorder %s14, 1
    %p32 = por %p30, %p31
    %p33 = scmp.ne.s32.totalorder %s22, %s23
    %p34 = scmp.eq.s32.totalorder %s14, 0
    %p35 = por %p33, %p34
    %p36 = scmp.ne.s32.totalorder %s22, %s23
    %p37 = scmp.eq.s32.totalorder %s15, 1
    %p38 = por %p36, %p37
    %p40 = scmp.ne.s32.totalorder %s23, %s39
    %p41 = scmp.eq.s32.totalorder %s15, 0
    %p42 = por %p40, %p41
    %s44 = sadd.s32 %s43, 1
    %p47 = scmp.eq.s32.totalorder %s9, 1
    %p48 = scmp.ne.s32.totalorder %s43, %s45
    %p49 = scmp.eq.s32.totalorder %s9, 0
    %p50 = por %p48, %p49
    %p51 = scmp.ne.s32.totalorder %s43, %s45
    %p52 = scmp.eq.s32.totalorder %s14, 1
    %p53 = por %p51, %p52
    %p54 = scmp.ne.s32.totalorder %s45, %s46
    %p55 = scmp.eq.s32.totalorder %s14, 0
    %p56 = por %p54, %p55
    %p57 = scmp.ne.s32.totalorder %s45, %s46
    %p58 = scmp.eq.s32.totalorder %s15, 1
    %p59 = por %p57, %p58
    %p61 = scmp.ne.s32.totalorder %s46, %s60
    %p62 = scmp.eq.s32.totalorder %s15, 0
    %p63 = por %p61, %p62
    %s65 = sadd.s32 %s64, 1
    %p68 = scmp.eq.s32.totalorder %s9, 1
    %p69 = scmp.ne.s32.totalorder %s64, %s66
    %p70 = scmp.eq.s32.totalorder %s9, 0
    %p71 = por %p69, %p70
    %p72 = scmp.ne.s32.totalorder %s64, %s66
    %p73 = scmp.eq.s32.totalorder %s14, 1
    %p74 = por %p72, %p73
    %p75 = scmp.ne.s32.totalorder %s66, %s67
    %p76 = scmp.eq.s32.totalorder %s14, 0
    %p77 = por %p75, %p76
    %p78 = scmp.ne.s32.totalorder %s66, %s67
    %p79 = scmp.eq.s32.totalorder %s15, 1
    %p80 = por %p78, %p79
    %p82 = scmp.ne.s32.totalorder %s67, %s81
    %p83 = scmp.eq.s32.totalorder %s15, 0
    %p84 = por %p82, %p83
    %s85 = ssub.s32 %s9, %s16
    %p86 = scmp.eq.s32.totalorder %s85, 0
    %s88 = sadd.s32 %s87, 1
    %s89 = scalar_select %p86, %s87, %s88
    %p92 = pneg %p86
    %p93 = scmp.eq.s32.totalorder %s9, 1
    %p94 = por %p92, %p93
    %p95 = scmp.ne.s32.totalorder %s87, %s90
    %p96 = scmp.eq.s32.totalorder %s9, 0
    %p97 = por %p95, %p96
    %p98 = scmp.ne.s32.totalorder %s87, %s90
    %p99 = scmp.eq.s32.totalorder %s14, 1
    %p100 = por %p98, %p99
    %p101 = scmp.ne.s32.totalorder %s90, %s91
    %p102 = scmp.eq.s32.totalorder %s14, 0
    %p103 = por %p101, %p102
    %p104 = scmp.ne.s32.totalorder %s90, %s91
    %p105 = scmp.eq.s32.totalorder %s15, 1
    %p106 = por %p104, %p105
    %p108 = scmp.ne.s32.totalorder %s91, %s107
    %p109 = scmp.eq.s32.totalorder %s15, 0
    %p110 = por %p108, %p109
    %p111 = scmp.le.s32.totalorder 1, %s9
    %p112 = scmp.lt.s32.totalorder %s9, 3
    %p113 = pnand %p111, %p112
    %p114 = pneg %p113
    // Predicated region
    $region9: #{cnn_forward.4} parent=5 // pred_check
      _
    $region10: #{cnn_forward.4} parent=5 // pred_check_branch
      %116 = sbr.rel (%p113) target = $region12
    $region11: #{cnn_forward.4} parent=5 // pred_region
      %s117 = ssub.s32 %s9, 1
      // Predicated region
      $region13: #{cnn_forward.4} parent=11 // pred_check
        %p118 = pneg %p56
      $region14: #{cnn_forward.4} parent=11 // pred_check_branch
        %120 = sbr.rel (%p118) target = $region16
      $region15: #{cnn_forward.4} parent=11 // pred_region
        _
      $region16: #{cnn_forward.4} parent=11 // pred_fallthru
        _
      // Predicated region
      $region17: #{cnn_forward.4} parent=11 // pred_check
        %p121 = pneg %p77
      $region18: #{cnn_forward.4} parent=11 // pred_check_branch
        %123 = sbr.rel (%p121) target = $region20
      $region19: #{cnn_forward.4} parent=11 // pred_region
        _
      $region20: #{cnn_forward.4} parent=11 // pred_fallthru
        _
    $region12: #{cnn_forward.4} parent=5 // pred_fallthru
      _
    %p124 = scmp.lt.s32.totalorder %s9, 2
    // Predicated region
    $region21: #{cnn_forward.4} parent=5 // pred_check
      %p125 = pneg %p124
    $region22: #{cnn_forward.4} parent=5 // pred_check_branch
      %127 = sbr.rel (%p125) target = $region24
    $region23: #{cnn_forward.4} parent=5 // pred_region
      // Predicated region
      $region25: #{cnn_forward.4} parent=23 // pred_check
        %p128 = pneg %p29
      $region26: #{cnn_forward.4} parent=23 // pred_check_branch
        %130 = sbr.rel (%p128) target = $region28
      $region27: #{cnn_forward.4} parent=23 // pred_region
        %s131 = smul.u32 98, %s9
        %p132 = scmp.lt.s32.totalorder %s131, 195
        %s133 = scalar_select %p132, %s131, 195
        %s134 = smul.addr %s133, 4
        %s135 = smul.addr %s134, 4
        %s136 = scalar_lea.vmem %s0, %s135
        %s137 = smul.u32 98, %s9
      $region28: #{cnn_forward.4} parent=23 // pred_fallthru
        _
    $region24: #{cnn_forward.4} parent=5 // pred_fallthru
      _
    %p138 = scmp.le.s32.totalorder 1, %s9
    %p139 = scmp.lt.s32.totalorder %s9, 3
    %p140 = pnand %p138, %p139
    %p141 = pneg %p140
    // Predicated region
    $region29: #{cnn_forward.4} parent=5 // pred_check
      _
    $region30: #{cnn_forward.4} parent=5 // pred_check_branch
      %143 = sbr.rel (%p140) target = $region32
    $region31: #{cnn_forward.4} parent=5 // pred_region
      %s144 = ssub.s32 %s9, 1
      %s145 = smul.u32 98, %s14
      %p146 = scmp.lt.s32.totalorder %s145, 195
      %s147 = scalar_select %p146, %s145, 195
      %s148 = smul.addr %s147, 4
      %s149 = smul.addr %s148, 4
      %s150 = scalar_lea.vmem %s0, %s149
      %p151 = pneg %p35
      %p152 = pneg %p32
      %p153 = pneg %p56
      %p154 = pneg %p53
      %p155 = pneg %p77
      %p156 = pneg %p74
      %p157 = pneg %p103
      %p158 = pneg %p100
      %s159 = smul.u32 98, %s14
      %p160 = scmp.lt.s32.totalorder %s159, 195
      %s161 = scalar_select %p160, %s159, 195
      %s162 = smul.addr %s161, 4
      %s163 = scalar_lea.vmem %s3, %s162
      %s164 = smul.u32 98, %s14
      %p165 = scmp.lt.s32.totalorder %s164, 195
      %s166 = scalar_select %p165, %s164, 195
      %s167 = smul.addr %s166, 4
      %s168 = smul.addr %s167, 4
      %s169 = scalar_lea.vmem %s0, %s168
      %s170 = smul.u32 98, %s14
      %s171 = smul.u32 98, %s14
      %p172 = scmp.lt.s32.totalorder %s171, 195
      %s173 = scalar_select %p172, %s171, 195
      %s174 = smul.addr %s173, 4
      %s175 = scalar_lea.vmem %s3, %s174
      %s176 = smul.u32 98, %s14
      %v177 = vld [vmem:[%s169] sm:$0xff]
      %v178 = vld [vmem:[%s169 + $0x8] sm:$0xff]
      %v179 = vld [vmem:[%s169 + $0x10] sm:$0xff]
      %v180 = vld [vmem:[%s169 + $0x18] sm:$0xff]
      %v181 = vld [vmem:[%s169 + $0x20] sm:$0xff]
      %v182 = vld [vmem:[%s169 + $0x28] sm:$0xff]
      %v183 = vld [vmem:[%s169 + $0x30] sm:$0xff]
      %v184 = vld [vmem:[%s169 + $0x38] sm:$0xff]
      %v185 = vld [vmem:[%s169 + $0x40] sm:$0xff]
      %v186 = vld [vmem:[%s169 + $0x48] sm:$0xff]
      %v187 = vld [vmem:[%s169 + $0x50] sm:$0xff]
      %v188 = vld [vmem:[%s169 + $0x58] sm:$0xff]
      %v189 = vld [vmem:[%s169 + $0x60] sm:$0xff]
      %v190 = vld [vmem:[%s169 + $0x68] sm:$0xff]
      %v191 = vld [vmem:[%s169 + $0x70] sm:$0xff]
      %v192 = vld [vmem:[%s169 + $0x78] sm:$0xff]
      %v193 = vld [vmem:[%s169 + $0x80] sm:$0xff]
      %v194 = vld [vmem:[%s169 + $0x88] sm:$0xff]
      %v195 = vld [vmem:[%s169 + $0x90] sm:$0xff]
      %v196 = vld [vmem:[%s169 + $0x98] sm:$0xff]
      %v197 = vld [vmem:[%s169 + $0xa0] sm:$0xff]
      %v198 = vld [vmem:[%s169 + $0xa8] sm:$0xff]
      %v199 = vld [vmem:[%s169 + $0xb0] sm:$0xff]
      %v200 = vld [vmem:[%s169 + $0xb8] sm:$0xff]
      %v201 = vld [vmem:[%s169 + $0xc0] sm:$0xff]
      %v202 = vld [vmem:[%s169 + $0xc8] sm:$0xff]
      %v203 = vld [vmem:[%s169 + $0xd0] sm:$0xff]
      %v204 = vld [vmem:[%s169 + $0xd8] sm:$0xff]
      %v205 = vld [vmem:[%s169 + $0xe0] sm:$0xff]
      %v206 = vld [vmem:[%s169 + $0xe8] sm:$0xff]
      %v207 = vld [vmem:[%s169 + $0xf0] sm:$0xff]
      %v208 = vld [vmem:[%s169 + $0xf8] sm:$0xff]
      %v209 = vld [vmem:[%s169 + $0x100] sm:$0xff]
      %v210 = vld [vmem:[%s169 + $0x108] sm:$0xff]
      %v211 = vld [vmem:[%s169 + $0x110] sm:$0xff]
      %v212 = vld [vmem:[%s169 + $0x118] sm:$0xff]
      %v213 = vld [vmem:[%s169 + $0x120] sm:$0xff]
      %v214 = vld [vmem:[%s169 + $0x128] sm:$0xff]
      %v215 = vld [vmem:[%s169 + $0x130] sm:$0xff]
      %v216 = vld [vmem:[%s169 + $0x138] sm:$0xff]
      %v217 = vld [vmem:[%s169 + $0x140] sm:$0xff]
      %v218 = vld [vmem:[%s169 + $0x148] sm:$0xff]
      %v219 = vld [vmem:[%s169 + $0x150] sm:$0xff]
      %v220 = vld [vmem:[%s169 + $0x158] sm:$0xff]
      %v221 = vld [vmem:[%s169 + $0x160] sm:$0xff]
      %v222 = vld [vmem:[%s169 + $0x168] sm:$0xff]
      %v223 = vld [vmem:[%s169 + $0x170] sm:$0xff]
      %v224 = vld [vmem:[%s169 + $0x178] sm:$0xff]
      %v225 = vld [vmem:[%s169 + $0x180] sm:$0xff]
      %v226 = vld [vmem:[%s169 + $0x188] sm:$0xff]
      %v227 = vld [vmem:[%s169 + $0x190] sm:$0xff]
      %v228 = vld [vmem:[%s169 + $0x198] sm:$0xff]
      %v229 = vld [vmem:[%s169 + $0x1a0] sm:$0xff]
      %v230 = vld [vmem:[%s169 + $0x1a8] sm:$0xff]
      %v231 = vld [vmem:[%s169 + $0x1b0] sm:$0xff]
      %v232 = vld [vmem:[%s169 + $0x1b8] sm:$0xff]
      %v233 = vld [vmem:[%s169 + $0x1c0] sm:$0xff]
      %v234 = vld [vmem:[%s169 + $0x1c8] sm:$0xff]
      %v235 = vld [vmem:[%s169 + $0x1d0] sm:$0xff]
      %v236 = vld [vmem:[%s169 + $0x1d8] sm:$0xff]
      %v237 = vld [vmem:[%s169 + $0x1e0] sm:$0xff]
      %v238 = vld [vmem:[%s169 + $0x1e8] sm:$0xff]
      %v239 = vld [vmem:[%s169 + $0x1f0] sm:$0xff]
      %v240 = vld [vmem:[%s169 + $0x1f8] sm:$0xff]
      %v241 = vld [vmem:[%s169 + $0x200] sm:$0xff]
      %v242 = vld [vmem:[%s169 + $0x208] sm:$0xff]
      %v243 = vld [vmem:[%s169 + $0x210] sm:$0xff]
      %v244 = vld [vmem:[%s169 + $0x218] sm:$0xff]
      %v245 = vld [vmem:[%s169 + $0x220] sm:$0xff]
      %v246 = vld [vmem:[%s169 + $0x228] sm:$0xff]
      %v247 = vld [vmem:[%s169 + $0x230] sm:$0xff]
      %v248 = vld [vmem:[%s169 + $0x238] sm:$0xff]
      %v249 = vld [vmem:[%s169 + $0x240] sm:$0xff]
      %v250 = vld [vmem:[%s169 + $0x248] sm:$0xff]
      %v251 = vld [vmem:[%s169 + $0x250] sm:$0xff]
      %v252 = vld [vmem:[%s169 + $0x258] sm:$0xff]
      %v253 = vld [vmem:[%s169 + $0x260] sm:$0xff]
      %v254 = vld [vmem:[%s169 + $0x268] sm:$0xff]
      %v255 = vld [vmem:[%s169 + $0x270] sm:$0xff]
      %v256 = vld [vmem:[%s169 + $0x278] sm:$0xff]
      %v257 = vld [vmem:[%s169 + $0x280] sm:$0xff]
      %v258 = vld [vmem:[%s169 + $0x288] sm:$0xff]
      %v259 = vld [vmem:[%s169 + $0x290] sm:$0xff]
      %v260 = vld [vmem:[%s169 + $0x298] sm:$0xff]
      %v261 = vld [vmem:[%s169 + $0x2a0] sm:$0xff]
      %v262 = vld [vmem:[%s169 + $0x2a8] sm:$0xff]
      %v263 = vld [vmem:[%s169 + $0x2b0] sm:$0xff]
      %v264 = vld [vmem:[%s169 + $0x2b8] sm:$0xff]
      %v265 = vld [vmem:[%s169 + $0x2c0] sm:$0xff]
      %v266 = vld [vmem:[%s169 + $0x2c8] sm:$0xff]
      %v267 = vld [vmem:[%s169 + $0x2d0] sm:$0xff]
      %v268 = vld [vmem:[%s169 + $0x2d8] sm:$0xff]
      %v269 = vld [vmem:[%s169 + $0x2e0] sm:$0xff]
      %v270 = vld [vmem:[%s169 + $0x2e8] sm:$0xff]
      %v271 = vld [vmem:[%s169 + $0x2f0] sm:$0xff]
      %v272 = vld [vmem:[%s169 + $0x2f8] sm:$0xff]
      %v273 = vld [vmem:[%s169 + $0x300] sm:$0xff]
      %v274 = vld [vmem:[%s169 + $0x308] sm:$0xff]
      %v275 = vld [vmem:[%s169 + $0x310] sm:$0xff]
      %v276 = vld [vmem:[%s169 + $0x318] sm:$0xff]
      %v277 = vld [vmem:[%s169 + $0x320] sm:$0xff]
      %v278 = vld [vmem:[%s169 + $0x328] sm:$0xff]
      %v279 = vld [vmem:[%s169 + $0x330] sm:$0xff]
      %v280 = vld [vmem:[%s169 + $0x338] sm:$0xff]
      %v281 = vld [vmem:[%s169 + $0x340] sm:$0xff]
      %v282 = vld [vmem:[%s169 + $0x348] sm:$0xff]
      %v283 = vld [vmem:[%s169 + $0x350] sm:$0xff]
      %v284 = vld [vmem:[%s169 + $0x358] sm:$0xff]
      %v285 = vld [vmem:[%s169 + $0x360] sm:$0xff]
      %v286 = vld [vmem:[%s169 + $0x368] sm:$0xff]
      %v287 = vld [vmem:[%s169 + $0x370] sm:$0xff]
      %v288 = vld [vmem:[%s169 + $0x378] sm:$0xff]
      %v289 = vld [vmem:[%s169 + $0x380] sm:$0xff]
      %v290 = vld [vmem:[%s169 + $0x388] sm:$0xff]
      %v291 = vld [vmem:[%s169 + $0x390] sm:$0xff]
      %v292 = vld [vmem:[%s169 + $0x398] sm:$0xff]
      %v293 = vld [vmem:[%s169 + $0x3a0] sm:$0xff]
      %v294 = vld [vmem:[%s169 + $0x3a8] sm:$0xff]
      %v295 = vld [vmem:[%s169 + $0x3b0] sm:$0xff]
      %v296 = vld [vmem:[%s169 + $0x3b8] sm:$0xff]
      %v297 = vld [vmem:[%s169 + $0x3c0] sm:$0xff]
      %v298 = vld [vmem:[%s169 + $0x3c8] sm:$0xff]
      %v299 = vld [vmem:[%s169 + $0x3d0] sm:$0xff]
      %v300 = vld [vmem:[%s169 + $0x3d8] sm:$0xff]
      %v301 = vld [vmem:[%s169 + $0x3e0] sm:$0xff]
      %v302 = vld [vmem:[%s169 + $0x3e8] sm:$0xff]
      %v303 = vld [vmem:[%s169 + $0x3f0] sm:$0xff]
      %v304 = vld [vmem:[%s169 + $0x3f8] sm:$0xff]
      %v305 = vld [vmem:[%s169 + $0x400] sm:$0xff]
      %v306 = vld [vmem:[%s169 + $0x408] sm:$0xff]
      %v307 = vld [vmem:[%s169 + $0x410] sm:$0xff]
      %v308 = vld [vmem:[%s169 + $0x418] sm:$0xff]
      %v309 = vld [vmem:[%s169 + $0x420] sm:$0xff]
      %v310 = vld [vmem:[%s169 + $0x428] sm:$0xff]
      %v311 = vld [vmem:[%s169 + $0x430] sm:$0xff]
      %v312 = vld [vmem:[%s169 + $0x438] sm:$0xff]
      %v313 = vld [vmem:[%s169 + $0x440] sm:$0xff]
      %v314 = vld [vmem:[%s169 + $0x448] sm:$0xff]
      %v315 = vld [vmem:[%s169 + $0x450] sm:$0xff]
      %v316 = vld [vmem:[%s169 + $0x458] sm:$0xff]
      %v317 = vld [vmem:[%s169 + $0x460] sm:$0xff]
      %v318 = vld [vmem:[%s169 + $0x468] sm:$0xff]
      %v319 = vld [vmem:[%s169 + $0x470] sm:$0xff]
      %v320 = vld [vmem:[%s169 + $0x478] sm:$0xff]
      %v321 = vld [vmem:[%s169 + $0x480] sm:$0xff]
      %v322 = vld [vmem:[%s169 + $0x488] sm:$0xff]
      %v323 = vld [vmem:[%s169 + $0x490] sm:$0xff]
      %v324 = vld [vmem:[%s169 + $0x498] sm:$0xff]
      %v325 = vld [vmem:[%s169 + $0x4a0] sm:$0xff]
      %v326 = vld [vmem:[%s169 + $0x4a8] sm:$0xff]
      %v327 = vld [vmem:[%s169 + $0x4b0] sm:$0xff]
      %v328 = vld [vmem:[%s169 + $0x4b8] sm:$0xff]
      %v329 = vld [vmem:[%s169 + $0x4c0] sm:$0xff]
      %v330 = vld [vmem:[%s169 + $0x4c8] sm:$0xff]
      %v331 = vld [vmem:[%s169 + $0x4d0] sm:$0xff]
      %v332 = vld [vmem:[%s169 + $0x4d8] sm:$0xff]
      %v333 = vld [vmem:[%s169 + $0x4e0] sm:$0xff]
      %v334 = vld [vmem:[%s169 + $0x4e8] sm:$0xff]
      %v335 = vld [vmem:[%s169 + $0x4f0] sm:$0xff]
      %v336 = vld [vmem:[%s169 + $0x4f8] sm:$0xff]
      %v337 = vld [vmem:[%s169 + $0x500] sm:$0xff]
      %v338 = vld [vmem:[%s169 + $0x508] sm:$0xff]
      %v339 = vld [vmem:[%s169 + $0x510] sm:$0xff]
      %v340 = vld [vmem:[%s169 + $0x518] sm:$0xff]
      %v341 = vld [vmem:[%s169 + $0x520] sm:$0xff]
      %v342 = vld [vmem:[%s169 + $0x528] sm:$0xff]
      %v343 = vld [vmem:[%s169 + $0x530] sm:$0xff]
      %v344 = vld [vmem:[%s169 + $0x538] sm:$0xff]
      %v345 = vld [vmem:[%s169 + $0x540] sm:$0xff]
      %v346 = vld [vmem:[%s169 + $0x548] sm:$0xff]
      %v347 = vld [vmem:[%s169 + $0x550] sm:$0xff]
      %v348 = vld [vmem:[%s169 + $0x558] sm:$0xff]
      %v349 = vld [vmem:[%s169 + $0x560] sm:$0xff]
      %v350 = vld [vmem:[%s169 + $0x568] sm:$0xff]
      %v351 = vld [vmem:[%s169 + $0x570] sm:$0xff]
      %v352 = vld [vmem:[%s169 + $0x578] sm:$0xff]
      %v353 = vld [vmem:[%s169 + $0x580] sm:$0xff]
      %v354 = vld [vmem:[%s169 + $0x588] sm:$0xff]
      %v355 = vld [vmem:[%s169 + $0x590] sm:$0xff]
      %v356 = vld [vmem:[%s169 + $0x598] sm:$0xff]
      %v357 = vld [vmem:[%s169 + $0x5a0] sm:$0xff]
      %v358 = vld [vmem:[%s169 + $0x5a8] sm:$0xff]
      %v359 = vld [vmem:[%s169 + $0x5b0] sm:$0xff]
      %v360 = vld [vmem:[%s169 + $0x5b8] sm:$0xff]
      %v361 = vld [vmem:[%s169 + $0x5c0] sm:$0xff]
      %v362 = vld [vmem:[%s169 + $0x5c8] sm:$0xff]
      %v363 = vld [vmem:[%s169 + $0x5d0] sm:$0xff]
      %v364 = vld [vmem:[%s169 + $0x5d8] sm:$0xff]
      %v365 = vld [vmem:[%s169 + $0x5e0] sm:$0xff]
      %v366 = vld [vmem:[%s169 + $0x5e8] sm:$0xff]
      %v367 = vld [vmem:[%s169 + $0x5f0] sm:$0xff]
      %v368 = vld [vmem:[%s169 + $0x5f8] sm:$0xff]
      %v369 = vld [vmem:[%s169 + $0x600] sm:$0xff]
      %v370 = vld [vmem:[%s169 + $0x608] sm:$0xff]
      %v371 = vld [vmem:[%s169 + $0x610] sm:$0xff]
      %v372 = vld [vmem:[%s169 + $0x618] sm:$0xff]
      %v373 = vld [vmem:[%s1] sm:$0xf]
      %v374 = vld [vmem:[%s1 + $0x4] sm:$0xf]
      %v375 = vld [vmem:[%s1 + $0x8] sm:$0xf]
      %v376 = vld [vmem:[%s1 + $0xc] sm:$0xf]
      %v377 = vld [vmem:[%s1 + $0x10] sm:$0xf]
      %v378 = vld [vmem:[%s1 + $0x14] sm:$0xf]
      %v379 = vld [vmem:[%s1 + $0x18] sm:$0xf]
      %v380 = vld [vmem:[%s1 + $0x1c] sm:$0xf]
      %v381 = vld [vmem:[%s1 + $0x20] sm:$0xf]
      %v382 = vld [vmem:[%s1 + $0x24] sm:$0xf]
      %v383 = vld [vmem:[%s1 + $0x28] sm:$0xf]
      %v384 = vld [vmem:[%s1 + $0x2c] sm:$0xf]
      %v385 = vld [vmem:[%s1 + $0x30] sm:$0xf]
      %v386 = vld [vmem:[%s1 + $0x34] sm:$0xf]
      %v387 = vld [vmem:[%s1 + $0x38] sm:$0xf]
      %v388 = vld [vmem:[%s1 + $0x3c] sm:$0xf]
      %v389 = vld [vmem:[%s1 + $0x40] sm:$0xf]
      %v390 = vld [vmem:[%s1 + $0x44] sm:$0xf]
      %v391 = vld [vmem:[%s1 + $0x48] sm:$0xf]
      %v392 = vld [vmem:[%s1 + $0x4c] sm:$0xf]
      %v393 = vld [vmem:[%s1 + $0x50] sm:$0xf]
      %v394 = vld [vmem:[%s1 + $0x54] sm:$0xf]
      %v395 = vld [vmem:[%s1 + $0x58] sm:$0xf]
      %v396 = vld [vmem:[%s1 + $0x5c] sm:$0xf]
      %v397 = vld [vmem:[%s1 + $0x60] sm:$0xf]
      %v398 = vld [vmem:[%s1 + $0x64] sm:$0xf]
      %v399 = vld [vmem:[%s1 + $0x68] sm:$0xf]
      %v400 = vld [vmem:[%s1 + $0x6c] sm:$0xf]
      %v401 = vld [vmem:[%s1 + $0x70] sm:$0xf]
      %v402 = vld [vmem:[%s1 + $0x74] sm:$0xf]
      %v403 = vld [vmem:[%s1 + $0x78] sm:$0xf]
      %v404 = vld [vmem:[%s1 + $0x7c] sm:$0xf]
      %v405 = vld [vmem:[%s1 + $0x80] sm:$0xf]
      %v406 = vld [vmem:[%s1 + $0x84] sm:$0xf]
      %v407 = vld [vmem:[%s1 + $0x88] sm:$0xf]
      %v408 = vld [vmem:[%s1 + $0x8c] sm:$0xf]
      %v409 = vld [vmem:[%s1 + $0x90] sm:$0xf]
      %v410 = vld [vmem:[%s1 + $0x94] sm:$0xf]
      %v411 = vld [vmem:[%s1 + $0x98] sm:$0xf]
      %v412 = vld [vmem:[%s1 + $0x9c] sm:$0xf]
      %v413 = vld [vmem:[%s1 + $0xa0] sm:$0xf]
      %v414 = vld [vmem:[%s1 + $0xa4] sm:$0xf]
      %v415 = vld [vmem:[%s1 + $0xa8] sm:$0xf]
      %v416 = vld [vmem:[%s1 + $0xac] sm:$0xf]
      %v417 = vld [vmem:[%s1 + $0xb0] sm:$0xf]
      %v418 = vld [vmem:[%s1 + $0xb4] sm:$0xf]
      %v419 = vld [vmem:[%s1 + $0xb8] sm:$0xf]
      %v420 = vld [vmem:[%s1 + $0xbc] sm:$0xf]
      %v421 = vld [vmem:[%s1 + $0xc0] sm:$0xf]
      %v422 = vld [vmem:[%s1 + $0xc4] sm:$0xf]
      %v423 = vld [vmem:[%s1 + $0xc8] sm:$0xf]
      %v424 = vld [vmem:[%s1 + $0xcc] sm:$0xf]
      %v425 = vld [vmem:[%s1 + $0xd0] sm:$0xf]
      %v426 = vld [vmem:[%s1 + $0xd4] sm:$0xf]
      %v427 = vld [vmem:[%s1 + $0xd8] sm:$0xf]
      %v428 = vld [vmem:[%s1 + $0xdc] sm:$0xf]
      %v429 = vld [vmem:[%s1 + $0xe0] sm:$0xf]
      %v430 = vld [vmem:[%s1 + $0xe4] sm:$0xf]
      %v431 = vld [vmem:[%s1 + $0xe8] sm:$0xf]
      %v432 = vld [vmem:[%s1 + $0xec] sm:$0xf]
      %v433 = vld [vmem:[%s1 + $0xf0] sm:$0xf]
      %v434 = vld [vmem:[%s1 + $0xf4] sm:$0xf]
      %v435 = vld [vmem:[%s1 + $0xf8] sm:$0xf]
      %v436 = vld [vmem:[%s1 + $0xfc] sm:$0xf]
      %v437 = vld [vmem:[%s2] sm:$0x1]
      %v439 = vperm.slane %v437, 0
      %v637 = vunpack.c.l.b16 %v177
      %v638 = vunpack.c.h.b16 %v177
      %v639 = vunpack.c.l.b16 %v178
      %v640 = vunpack.c.h.b16 %v178
      %v641 = vunpack.c.l.b16 %v179
      %v642 = vunpack.c.h.b16 %v179
      %v643 = vunpack.c.l.b16 %v180
      %v644 = vunpack.c.h.b16 %v180
      %v645 = vunpack.c.l.b16 %v181
      %v646 = vunpack.c.h.b16 %v181
      %v647 = vunpack.c.l.b16 %v182
      %v648 = vunpack.c.h.b16 %v182
      %v649 = vunpack.c.l.b16 %v183
      %v650 = vunpack.c.h.b16 %v183
      %v651 = vunpack.c.l.b16 %v184
      %v652 = vunpack.c.h.b16 %v184
      %v653 = vunpack.c.l.b16 %v185
      %v654 = vunpack.c.h.b16 %v185
      %v655 = vunpack.c.l.b16 %v186
      %v656 = vunpack.c.h.b16 %v186
      %v657 = vunpack.c.l.b16 %v187
      %v658 = vunpack.c.h.b16 %v187
      %v659 = vunpack.c.l.b16 %v188
      %v660 = vunpack.c.h.b16 %v188
      %v661 = vunpack.c.l.b16 %v189
      %v662 = vunpack.c.h.b16 %v189
      %v663 = vunpack.c.l.b16 %v190
      %v664 = vunpack.c.h.b16 %v190
      %v665 = vunpack.c.l.b16 %v191
      %v666 = vunpack.c.h.b16 %v191
      %v667 = vunpack.c.l.b16 %v192
      %v668 = vunpack.c.h.b16 %v192
      %v669 = vunpack.c.l.b16 %v193
      %v670 = vunpack.c.h.b16 %v193
      %v671 = vunpack.c.l.b16 %v194
      %v672 = vunpack.c.h.b16 %v194
      %v673 = vunpack.c.l.b16 %v195
      %v674 = vunpack.c.h.b16 %v195
      %v675 = vunpack.c.l.b16 %v196
      %v676 = vunpack.c.h.b16 %v196
      %v677 = vunpack.c.l.b16 %v197
      %v678 = vunpack.c.h.b16 %v197
      %v679 = vunpack.c.l.b16 %v198
      %v680 = vunpack.c.h.b16 %v198
      %v681 = vunpack.c.l.b16 %v199
      %v682 = vunpack.c.h.b16 %v199
      %v683 = vunpack.c.l.b16 %v200
      %v684 = vunpack.c.h.b16 %v200
      %v685 = vunpack.c.l.b16 %v201
      %v686 = vunpack.c.h.b16 %v201
      %v687 = vunpack.c.l.b16 %v202
      %v688 = vunpack.c.h.b16 %v202
      %v689 = vunpack.c.l.b16 %v203
      %v690 = vunpack.c.h.b16 %v203
      %v691 = vunpack.c.l.b16 %v204
      %v692 = vunpack.c.h.b16 %v204
      %v693 = vunpack.c.l.b16 %v205
      %v694 = vunpack.c.h.b16 %v205
      %v695 = vunpack.c.l.b16 %v206
      %v696 = vunpack.c.h.b16 %v206
      %v697 = vunpack.c.l.b16 %v207
      %v698 = vunpack.c.h.b16 %v207
      %v699 = vunpack.c.l.b16 %v208
      %v700 = vunpack.c.h.b16 %v208
      %v701 = vunpack.c.l.b16 %v209
      %v702 = vunpack.c.h.b16 %v209
      %v703 = vunpack.c.l.b16 %v210
      %v704 = vunpack.c.h.b16 %v210
      %v705 = vunpack.c.l.b16 %v211
      %v706 = vunpack.c.h.b16 %v211
      %v707 = vunpack.c.l.b16 %v212
      %v708 = vunpack.c.h.b16 %v212
      %v709 = vunpack.c.l.b16 %v213
      %v710 = vunpack.c.h.b16 %v213
      %v711 = vunpack.c.l.b16 %v214
      %v712 = vunpack.c.h.b16 %v214
      %v713 = vunpack.c.l.b16 %v215
      %v714 = vunpack.c.h.b16 %v215
      %v715 = vunpack.c.l.b16 %v216
      %v716 = vunpack.c.h.b16 %v216
      %v717 = vunpack.c.l.b16 %v217
      %v718 = vunpack.c.h.b16 %v217
      %v719 = vunpack.c.l.b16 %v218
      %v720 = vunpack.c.h.b16 %v218
      %v721 = vunpack.c.l.b16 %v219
      %v722 = vunpack.c.h.b16 %v219
      %v723 = vunpack.c.l.b16 %v220
      %v724 = vunpack.c.h.b16 %v220
      %v725 = vunpack.c.l.b16 %v221
      %v726 = vunpack.c.h.b16 %v221
      %v727 = vunpack.c.l.b16 %v222
      %v728 = vunpack.c.h.b16 %v222
      %v729 = vunpack.c.l.b16 %v223
      %v730 = vunpack.c.h.b16 %v223
      %v731 = vunpack.c.l.b16 %v224
      %v732 = vunpack.c.h.b16 %v224
      %v733 = vunpack.c.l.b16 %v225
      %v734 = vunpack.c.h.b16 %v225
      %v735 = vunpack.c.l.b16 %v226
      %v736 = vunpack.c.h.b16 %v226
      %v737 = vunpack.c.l.b16 %v227
      %v738 = vunpack.c.h.b16 %v227
      %v739 = vunpack.c.l.b16 %v228
      %v740 = vunpack.c.h.b16 %v228
      %v741 = vunpack.c.l.b16 %v229
      %v742 = vunpack.c.h.b16 %v229
      %v743 = vunpack.c.l.b16 %v230
      %v744 = vunpack.c.h.b16 %v230
      %v745 = vunpack.c.l.b16 %v231
      %v746 = vunpack.c.h.b16 %v231
      %v747 = vunpack.c.l.b16 %v232
      %v748 = vunpack.c.h.b16 %v232
      %v749 = vunpack.c.l.b16 %v233
      %v750 = vunpack.c.h.b16 %v233
      %v751 = vunpack.c.l.b16 %v234
      %v752 = vunpack.c.h.b16 %v234
      %v753 = vunpack.c.l.b16 %v235
      %v754 = vunpack.c.h.b16 %v235
      %v755 = vunpack.c.l.b16 %v236
      %v756 = vunpack.c.h.b16 %v236
      %v757 = vunpack.c.l.b16 %v237
      %v758 = vunpack.c.h.b16 %v237
      %v759 = vunpack.c.l.b16 %v238
      %v760 = vunpack.c.h.b16 %v238
      %v761 = vunpack.c.l.b16 %v239
      %v762 = vunpack.c.h.b16 %v239
      %v763 = vunpack.c.l.b16 %v240
      %v764 = vunpack.c.h.b16 %v240
      %v765 = vunpack.c.l.b16 %v241
      %v766 = vunpack.c.h.b16 %v241
      %v767 = vunpack.c.l.b16 %v242
      %v768 = vunpack.c.h.b16 %v242
      %v769 = vunpack.c.l.b16 %v243
      %v770 = vunpack.c.h.b16 %v243
      %v771 = vunpack.c.l.b16 %v244
      %v772 = vunpack.c.h.b16 %v244
      %v773 = vunpack.c.l.b16 %v245
      %v774 = vunpack.c.h.b16 %v245
      %v775 = vunpack.c.l.b16 %v246
      %v776 = vunpack.c.h.b16 %v246
      %v777 = vunpack.c.l.b16 %v247
      %v778 = vunpack.c.h.b16 %v247
      %v779 = vunpack.c.l.b16 %v248
      %v780 = vunpack.c.h.b16 %v248
      %v781 = vunpack.c.l.b16 %v249
      %v782 = vunpack.c.h.b16 %v249
      %v783 = vunpack.c.l.b16 %v250
      %v784 = vunpack.c.h.b16 %v250
      %v785 = vunpack.c.l.b16 %v251
      %v786 = vunpack.c.h.b16 %v251
      %v787 = vunpack.c.l.b16 %v252
      %v788 = vunpack.c.h.b16 %v252
      %v789 = vunpack.c.l.b16 %v253
      %v790 = vunpack.c.h.b16 %v253
      %v791 = vunpack.c.l.b16 %v254
      %v792 = vunpack.c.h.b16 %v254
      %v793 = vunpack.c.l.b16 %v255
      %v794 = vunpack.c.h.b16 %v255
      %v795 = vunpack.c.l.b16 %v256
      %v796 = vunpack.c.h.b16 %v256
      %v797 = vunpack.c.l.b16 %v257
      %v798 = vunpack.c.h.b16 %v257
      %v799 = vunpack.c.l.b16 %v258
      %v800 = vunpack.c.h.b16 %v258
      %v801 = vunpack.c.l.b16 %v259
      %v802 = vunpack.c.h.b16 %v259
      %v803 = vunpack.c.l.b16 %v260
      %v804 = vunpack.c.h.b16 %v260
      %v805 = vunpack.c.l.b16 %v261
      %v806 = vunpack.c.h.b16 %v261
      %v807 = vunpack.c.l.b16 %v262
      %v808 = vunpack.c.h.b16 %v262
      %v809 = vunpack.c.l.b16 %v263
      %v810 = vunpack.c.h.b16 %v263
      %v811 = vunpack.c.l.b16 %v264
      %v812 = vunpack.c.h.b16 %v264
      %v813 = vunpack.c.l.b16 %v265
      %v814 = vunpack.c.h.b16 %v265
      %v815 = vunpack.c.l.b16 %v266
      %v816 = vunpack.c.h.b16 %v266
      %v817 = vunpack.c.l.b16 %v267
      %v818 = vunpack.c.h.b16 %v267
      %v819 = vunpack.c.l.b16 %v268
      %v820 = vunpack.c.h.b16 %v268
      %v821 = vunpack.c.l.b16 %v269
      %v822 = vunpack.c.h.b16 %v269
      %v823 = vunpack.c.l.b16 %v270
      %v824 = vunpack.c.h.b16 %v270
      %v825 = vunpack.c.l.b16 %v271
      %v826 = vunpack.c.h.b16 %v271
      %v827 = vunpack.c.l.b16 %v272
      %v828 = vunpack.c.h.b16 %v272
      %v829 = vunpack.c.l.b16 %v273
      %v830 = vunpack.c.h.b16 %v273
      %v831 = vunpack.c.l.b16 %v274
      %v832 = vunpack.c.h.b16 %v274
      %v833 = vunpack.c.l.b16 %v275
      %v834 = vunpack.c.h.b16 %v275
      %v835 = vunpack.c.l.b16 %v276
      %v836 = vunpack.c.h.b16 %v276
      %v837 = vunpack.c.l.b16 %v277
      %v838 = vunpack.c.h.b16 %v277
      %v839 = vunpack.c.l.b16 %v278
      %v840 = vunpack.c.h.b16 %v278
      %v841 = vunpack.c.l.b16 %v279
      %v842 = vunpack.c.h.b16 %v279
      %v843 = vunpack.c.l.b16 %v280
      %v844 = vunpack.c.h.b16 %v280
      %v845 = vunpack.c.l.b16 %v281
      %v846 = vunpack.c.h.b16 %v281
      %v847 = vunpack.c.l.b16 %v282
      %v848 = vunpack.c.h.b16 %v282
      %v849 = vunpack.c.l.b16 %v283
      %v850 = vunpack.c.h.b16 %v283
      %v851 = vunpack.c.l.b16 %v284
      %v852 = vunpack.c.h.b16 %v284
      %v853 = vunpack.c.l.b16 %v285
      %v854 = vunpack.c.h.b16 %v285
      %v855 = vunpack.c.l.b16 %v286
      %v856 = vunpack.c.h.b16 %v286
      %v857 = vunpack.c.l.b16 %v287
      %v858 = vunpack.c.h.b16 %v287
      %v859 = vunpack.c.l.b16 %v288
      %v860 = vunpack.c.h.b16 %v288
      %v861 = vunpack.c.l.b16 %v289
      %v862 = vunpack.c.h.b16 %v289
      %v863 = vunpack.c.l.b16 %v290
      %v864 = vunpack.c.h.b16 %v290
      %v865 = vunpack.c.l.b16 %v291
      %v866 = vunpack.c.h.b16 %v291
      %v867 = vunpack.c.l.b16 %v292
      %v868 = vunpack.c.h.b16 %v292
      %v869 = vunpack.c.l.b16 %v293
      %v870 = vunpack.c.h.b16 %v293
      %v871 = vunpack.c.l.b16 %v294
      %v872 = vunpack.c.h.b16 %v294
      %v873 = vunpack.c.l.b16 %v295
      %v874 = vunpack.c.h.b16 %v295
      %v875 = vunpack.c.l.b16 %v296
      %v876 = vunpack.c.h.b16 %v296
      %v877 = vunpack.c.l.b16 %v297
      %v878 = vunpack.c.h.b16 %v297
      %v879 = vunpack.c.l.b16 %v298
      %v880 = vunpack.c.h.b16 %v298
      %v881 = vunpack.c.l.b16 %v299
      %v882 = vunpack.c.h.b16 %v299
      %v883 = vunpack.c.l.b16 %v300
      %v884 = vunpack.c.h.b16 %v300
      %v885 = vunpack.c.l.b16 %v301
      %v886 = vunpack.c.h.b16 %v301
      %v887 = vunpack.c.l.b16 %v302
      %v888 = vunpack.c.h.b16 %v302
      %v889 = vunpack.c.l.b16 %v303
      %v890 = vunpack.c.h.b16 %v303
      %v891 = vunpack.c.l.b16 %v304
      %v892 = vunpack.c.h.b16 %v304
      %v893 = vunpack.c.l.b16 %v305
      %v894 = vunpack.c.h.b16 %v305
      %v895 = vunpack.c.l.b16 %v306
      %v896 = vunpack.c.h.b16 %v306
      %v897 = vunpack.c.l.b16 %v307
      %v898 = vunpack.c.h.b16 %v307
      %v899 = vunpack.c.l.b16 %v308
      %v900 = vunpack.c.h.b16 %v308
      %v901 = vunpack.c.l.b16 %v309
      %v902 = vunpack.c.h.b16 %v309
      %v903 = vunpack.c.l.b16 %v310
      %v904 = vunpack.c.h.b16 %v310
      %v905 = vunpack.c.l.b16 %v311
      %v906 = vunpack.c.h.b16 %v311
      %v907 = vunpack.c.l.b16 %v312
      %v908 = vunpack.c.h.b16 %v312
      %v909 = vunpack.c.l.b16 %v313
      %v910 = vunpack.c.h.b16 %v313
      %v911 = vunpack.c.l.b16 %v314
      %v912 = vunpack.c.h.b16 %v314
      %v913 = vunpack.c.l.b16 %v315
      %v914 = vunpack.c.h.b16 %v315
      %v915 = vunpack.c.l.b16 %v316
      %v916 = vunpack.c.h.b16 %v316
      %v917 = vunpack.c.l.b16 %v317
      %v918 = vunpack.c.h.b16 %v317
      %v919 = vunpack.c.l.b16 %v318
      %v920 = vunpack.c.h.b16 %v318
      %v921 = vunpack.c.l.b16 %v319
      %v922 = vunpack.c.h.b16 %v319
      %v923 = vunpack.c.l.b16 %v320
      %v924 = vunpack.c.h.b16 %v320
      %v925 = vunpack.c.l.b16 %v321
      %v926 = vunpack.c.h.b16 %v321
      %v927 = vunpack.c.l.b16 %v322
      %v928 = vunpack.c.h.b16 %v322
      %v929 = vunpack.c.l.b16 %v323
      %v930 = vunpack.c.h.b16 %v323
      %v931 = vunpack.c.l.b16 %v324
      %v932 = vunpack.c.h.b16 %v324
      %v933 = vunpack.c.l.b16 %v325
      %v934 = vunpack.c.h.b16 %v325
      %v935 = vunpack.c.l.b16 %v326
      %v936 = vunpack.c.h.b16 %v326
      %v937 = vunpack.c.l.b16 %v327
      %v938 = vunpack.c.h.b16 %v327
      %v939 = vunpack.c.l.b16 %v328
      %v940 = vunpack.c.h.b16 %v328
      %v941 = vunpack.c.l.b16 %v329
      %v942 = vunpack.c.h.b16 %v329
      %v943 = vunpack.c.l.b16 %v330
      %v944 = vunpack.c.h.b16 %v330
      %v945 = vunpack.c.l.b16 %v331
      %v946 = vunpack.c.h.b16 %v331
      %v947 = vunpack.c.l.b16 %v332
      %v948 = vunpack.c.h.b16 %v332
      %v949 = vunpack.c.l.b16 %v333
      %v950 = vunpack.c.h.b16 %v333
      %v951 = vunpack.c.l.b16 %v334
      %v952 = vunpack.c.h.b16 %v334
      %v953 = vunpack.c.l.b16 %v335
      %v954 = vunpack.c.h.b16 %v335
      %v955 = vunpack.c.l.b16 %v336
      %v956 = vunpack.c.h.b16 %v336
      %v957 = vunpack.c.l.b16 %v337
      %v958 = vunpack.c.h.b16 %v337
      %v959 = vunpack.c.l.b16 %v338
      %v960 = vunpack.c.h.b16 %v338
      %v961 = vunpack.c.l.b16 %v339
      %v962 = vunpack.c.h.b16 %v339
      %v963 = vunpack.c.l.b16 %v340
      %v964 = vunpack.c.h.b16 %v340
      %v965 = vunpack.c.l.b16 %v341
      %v966 = vunpack.c.h.b16 %v341
      %v967 = vunpack.c.l.b16 %v342
      %v968 = vunpack.c.h.b16 %v342
      %v969 = vunpack.c.l.b16 %v343
      %v970 = vunpack.c.h.b16 %v343
      %v971 = vunpack.c.l.b16 %v344
      %v972 = vunpack.c.h.b16 %v344
      %v973 = vunpack.c.l.b16 %v345
      %v974 = vunpack.c.h.b16 %v345
      %v975 = vunpack.c.l.b16 %v346
      %v976 = vunpack.c.h.b16 %v346
      %v977 = vunpack.c.l.b16 %v347
      %v978 = vunpack.c.h.b16 %v347
      %v979 = vunpack.c.l.b16 %v348
      %v980 = vunpack.c.h.b16 %v348
      %v981 = vunpack.c.l.b16 %v349
      %v982 = vunpack.c.h.b16 %v349
      %v983 = vunpack.c.l.b16 %v350
      %v984 = vunpack.c.h.b16 %v350
      %v985 = vunpack.c.l.b16 %v351
      %v986 = vunpack.c.h.b16 %v351
      %v987 = vunpack.c.l.b16 %v352
      %v988 = vunpack.c.h.b16 %v352
      %v989 = vunpack.c.l.b16 %v353
      %v990 = vunpack.c.h.b16 %v353
      %v991 = vunpack.c.l.b16 %v354
      %v992 = vunpack.c.h.b16 %v354
      %v993 = vunpack.c.l.b16 %v355
      %v994 = vunpack.c.h.b16 %v355
      %v995 = vunpack.c.l.b16 %v356
      %v996 = vunpack.c.h.b16 %v356
      %v997 = vunpack.c.l.b16 %v357
      %v998 = vunpack.c.h.b16 %v357
      %v999 = vunpack.c.l.b16 %v358
      %v1000 = vunpack.c.h.b16 %v358
      %v1001 = vunpack.c.l.b16 %v359
      %v1002 = vunpack.c.h.b16 %v359
      %v1003 = vunpack.c.l.b16 %v360
      %v1004 = vunpack.c.h.b16 %v360
      %v1005 = vunpack.c.l.b16 %v361
      %v1006 = vunpack.c.h.b16 %v361
      %v1007 = vunpack.c.l.b16 %v362
      %v1008 = vunpack.c.h.b16 %v362
      %v1009 = vunpack.c.l.b16 %v363
      %v1010 = vunpack.c.h.b16 %v363
      %v1011 = vunpack.c.l.b16 %v364
      %v1012 = vunpack.c.h.b16 %v364
      %v1013 = vunpack.c.l.b16 %v365
      %v1014 = vunpack.c.h.b16 %v365
      %v1015 = vunpack.c.l.b16 %v366
      %v1016 = vunpack.c.h.b16 %v366
      %v1017 = vunpack.c.l.b16 %v367
      %v1018 = vunpack.c.h.b16 %v367
      %v1019 = vunpack.c.l.b16 %v368
      %v1020 = vunpack.c.h.b16 %v368
      %v1021 = vunpack.c.l.b16 %v369
      %v1022 = vunpack.c.h.b16 %v369
      %v1023 = vunpack.c.l.b16 %v370
      %v1024 = vunpack.c.h.b16 %v370
      %v1025 = vunpack.c.l.b16 %v371
      %v1026 = vunpack.c.h.b16 %v371
      %v1027 = vunpack.c.l.b16 %v372
      %v1028 = vunpack.c.h.b16 %v372
      %v1029 = vpack.c.b16 %v641, %v637
      %v1030 = vpack.c.b16 %v642, %v638
      %v1031 = vpack.c.b16 %v643, %v639
      %v1032 = vpack.c.b16 %v644, %v640
      %v1033 = vpack.c.b16 %v649, %v645
      %v1034 = vpack.c.b16 %v650, %v646
      %v1035 = vpack.c.b16 %v651, %v647
      %v1036 = vpack.c.b16 %v652, %v648
      %v1037 = vpack.c.b16 %v657, %v653
      %v1038 = vpack.c.b16 %v658, %v654
      %v1039 = vpack.c.b16 %v659, %v655
      %v1040 = vpack.c.b16 %v660, %v656
      %v1041 = vpack.c.b16 %v665, %v661
      %v1042 = vpack.c.b16 %v666, %v662
      %v1043 = vpack.c.b16 %v667, %v663
      %v1044 = vpack.c.b16 %v668, %v664
      %v1045 = vpack.c.b16 %v673, %v669
      %v1046 = vpack.c.b16 %v674, %v670
      %v1047 = vpack.c.b16 %v675, %v671
      %v1048 = vpack.c.b16 %v676, %v672
      %v1049 = vpack.c.b16 %v681, %v677
      %v1050 = vpack.c.b16 %v682, %v678
      %v1051 = vpack.c.b16 %v683, %v679
      %v1052 = vpack.c.b16 %v684, %v680
      %v1053 = vpack.c.b16 %v689, %v685
      %v1054 = vpack.c.b16 %v690, %v686
      %v1055 = vpack.c.b16 %v691, %v687
      %v1056 = vpack.c.b16 %v692, %v688
      %v1057 = vpack.c.b16 %v697, %v693
      %v1058 = vpack.c.b16 %v698, %v694
      %v1059 = vpack.c.b16 %v699, %v695
      %v1060 = vpack.c.b16 %v700, %v696
      %v1061 = vpack.c.b16 %v705, %v701
      %v1062 = vpack.c.b16 %v706, %v702
      %v1063 = vpack.c.b16 %v707, %v703
      %v1064 = vpack.c.b16 %v708, %v704
      %v1065 = vpack.c.b16 %v713, %v709
      %v1066 = vpack.c.b16 %v714, %v710
      %v1067 = vpack.c.b16 %v715, %v711
      %v1068 = vpack.c.b16 %v716, %v712
      %v1069 = vpack.c.b16 %v721, %v717
      %v1070 = vpack.c.b16 %v722, %v718
      %v1071 = vpack.c.b16 %v723, %v719
      %v1072 = vpack.c.b16 %v724, %v720
      %v1073 = vpack.c.b16 %v729, %v725
      %v1074 = vpack.c.b16 %v730, %v726
      %v1075 = vpack.c.b16 %v731, %v727
      %v1076 = vpack.c.b16 %v732, %v728
      %v1077 = vpack.c.b16 %v737, %v733
      %v1078 = vpack.c.b16 %v738, %v734
      %v1079 = vpack.c.b16 %v739, %v735
      %v1080 = vpack.c.b16 %v740, %v736
      %v1081 = vpack.c.b16 %v745, %v741
      %v1082 = vpack.c.b16 %v746, %v742
      %v1083 = vpack.c.b16 %v747, %v743
      %v1084 = vpack.c.b16 %v748, %v744
      %v1085 = vpack.c.b16 %v753, %v749
      %v1086 = vpack.c.b16 %v754, %v750
      %v1087 = vpack.c.b16 %v755, %v751
      %v1088 = vpack.c.b16 %v756, %v752
      %v1089 = vpack.c.b16 %v761, %v757
      %v1090 = vpack.c.b16 %v762, %v758
      %v1091 = vpack.c.b16 %v763, %v759
      %v1092 = vpack.c.b16 %v764, %v760
      %v1093 = vpack.c.b16 %v769, %v765
      %v1094 = vpack.c.b16 %v770, %v766
      %v1095 = vpack.c.b16 %v771, %v767
      %v1096 = vpack.c.b16 %v772, %v768
      %v1097 = vpack.c.b16 %v777, %v773
      %v1098 = vpack.c.b16 %v778, %v774
      %v1099 = vpack.c.b16 %v779, %v775
      %v1100 = vpack.c.b16 %v780, %v776
      %v1101 = vpack.c.b16 %v785, %v781
      %v1102 = vpack.c.b16 %v786, %v782
      %v1103 = vpack.c.b16 %v787, %v783
      %v1104 = vpack.c.b16 %v788, %v784
      %v1105 = vpack.c.b16 %v793, %v789
      %v1106 = vpack.c.b16 %v794, %v790
      %v1107 = vpack.c.b16 %v795, %v791
      %v1108 = vpack.c.b16 %v796, %v792
      %v1109 = vpack.c.b16 %v801, %v797
      %v1110 = vpack.c.b16 %v802, %v798
      %v1111 = vpack.c.b16 %v803, %v799
      %v1112 = vpack.c.b16 %v804, %v800
      %v1113 = vpack.c.b16 %v809, %v805
      %v1114 = vpack.c.b16 %v810, %v806
      %v1115 = vpack.c.b16 %v811, %v807
      %v1116 = vpack.c.b16 %v812, %v808
      %v1117 = vpack.c.b16 %v817, %v813
      %v1118 = vpack.c.b16 %v818, %v814
      %v1119 = vpack.c.b16 %v819, %v815
      %v1120 = vpack.c.b16 %v820, %v816
      %v1121 = vpack.c.b16 %v825, %v821
      %v1122 = vpack.c.b16 %v826, %v822
      %v1123 = vpack.c.b16 %v827, %v823
      %v1124 = vpack.c.b16 %v828, %v824
      %v1125 = vpack.c.b16 %v833, %v829
      %v1126 = vpack.c.b16 %v834, %v830
      %v1127 = vpack.c.b16 %v835, %v831
      %v1128 = vpack.c.b16 %v836, %v832
      %v1129 = vpack.c.b16 %v841, %v837
      %v1130 = vpack.c.b16 %v842, %v838
      %v1131 = vpack.c.b16 %v843, %v839
      %v1132 = vpack.c.b16 %v844, %v840
      %v1133 = vpack.c.b16 %v849, %v845
      %v1134 = vpack.c.b16 %v850, %v846
      %v1135 = vpack.c.b16 %v851, %v847
      %v1136 = vpack.c.b16 %v852, %v848
      %v1137 = vpack.c.b16 %v857, %v853
      %v1138 = vpack.c.b16 %v858, %v854
      %v1139 = vpack.c.b16 %v859, %v855
      %v1140 = vpack.c.b16 %v860, %v856
      %v1141 = vpack.c.b16 %v865, %v861
      %v1142 = vpack.c.b16 %v866, %v862
      %v1143 = vpack.c.b16 %v867, %v863
      %v1144 = vpack.c.b16 %v868, %v864
      %v1145 = vpack.c.b16 %v873, %v869
      %v1146 = vpack.c.b16 %v874, %v870
      %v1147 = vpack.c.b16 %v875, %v871
      %v1148 = vpack.c.b16 %v876, %v872
      %v1149 = vpack.c.b16 %v881, %v877
      %v1150 = vpack.c.b16 %v882, %v878
      %v1151 = vpack.c.b16 %v883, %v879
      %v1152 = vpack.c.b16 %v884, %v880
      %v1153 = vpack.c.b16 %v889, %v885
      %v1154 = vpack.c.b16 %v890, %v886
      %v1155 = vpack.c.b16 %v891, %v887
      %v1156 = vpack.c.b16 %v892, %v888
      %v1157 = vpack.c.b16 %v897, %v893
      %v1158 = vpack.c.b16 %v898, %v894
      %v1159 = vpack.c.b16 %v899, %v895
      %v1160 = vpack.c.b16 %v900, %v896
      %v1161 = vpack.c.b16 %v905, %v901
      %v1162 = vpack.c.b16 %v906, %v902
      %v1163 = vpack.c.b16 %v907, %v903
      %v1164 = vpack.c.b16 %v908, %v904
      %v1165 = vpack.c.b16 %v913, %v909
      %v1166 = vpack.c.b16 %v914, %v910
      %v1167 = vpack.c.b16 %v915, %v911
      %v1168 = vpack.c.b16 %v916, %v912
      %v1169 = vpack.c.b16 %v921, %v917
      %v1170 = vpack.c.b16 %v922, %v918
      %v1171 = vpack.c.b16 %v923, %v919
      %v1172 = vpack.c.b16 %v924, %v920
      %v1173 = vpack.c.b16 %v929, %v925
      %v1174 = vpack.c.b16 %v930, %v926
      %v1175 = vpack.c.b16 %v931, %v927
      %v1176 = vpack.c.b16 %v932, %v928
      %v1177 = vpack.c.b16 %v937, %v933
      %v1178 = vpack.c.b16 %v938, %v934
      %v1179 = vpack.c.b16 %v939, %v935
      %v1180 = vpack.c.b16 %v940, %v936
      %v1181 = vpack.c.b16 %v945, %v941
      %v1182 = vpack.c.b16 %v946, %v942
      %v1183 = vpack.c.b16 %v947, %v943
      %v1184 = vpack.c.b16 %v948, %v944
      %v1185 = vpack.c.b16 %v953, %v949
      %v1186 = vpack.c.b16 %v954, %v950
      %v1187 = vpack.c.b16 %v955, %v951
      %v1188 = vpack.c.b16 %v956, %v952
      %v1189 = vpack.c.b16 %v961, %v957
      %v1190 = vpack.c.b16 %v962, %v958
      %v1191 = vpack.c.b16 %v963, %v959
      %v1192 = vpack.c.b16 %v964, %v960
      %v1193 = vpack.c.b16 %v969, %v965
      %v1194 = vpack.c.b16 %v970, %v966
      %v1195 = vpack.c.b16 %v971, %v967
      %v1196 = vpack.c.b16 %v972, %v968
      %v1197 = vpack.c.b16 %v977, %v973
      %v1198 = vpack.c.b16 %v978, %v974
      %v1199 = vpack.c.b16 %v979, %v975
      %v1200 = vpack.c.b16 %v980, %v976
      %v1201 = vpack.c.b16 %v985, %v981
      %v1202 = vpack.c.b16 %v986, %v982
      %v1203 = vpack.c.b16 %v987, %v983
      %v1204 = vpack.c.b16 %v988, %v984
      %v1205 = vpack.c.b16 %v993, %v989
      %v1206 = vpack.c.b16 %v994, %v990
      %v1207 = vpack.c.b16 %v995, %v991
      %v1208 = vpack.c.b16 %v996, %v992
      %v1209 = vpack.c.b16 %v1001, %v997
      %v1210 = vpack.c.b16 %v1002, %v998
      %v1211 = vpack.c.b16 %v1003, %v999
      %v1212 = vpack.c.b16 %v1004, %v1000
      %v1213 = vpack.c.b16 %v1009, %v1005
      %v1214 = vpack.c.b16 %v1010, %v1006
      %v1215 = vpack.c.b16 %v1011, %v1007
      %v1216 = vpack.c.b16 %v1012, %v1008
      %v1217 = vpack.c.b16 %v1017, %v1013
      %v1218 = vpack.c.b16 %v1018, %v1014
      %v1219 = vpack.c.b16 %v1019, %v1015
      %v1220 = vpack.c.b16 %v1020, %v1016
      %v1221 = vpack.c.b16 %v1025, %v1021
      %v1222 = vpack.c.b16 %v1026, %v1022
      %v1223 = vpack.c.b16 %v1027, %v1023
      %v1224 = vpack.c.b16 %v1028, %v1024
      %v1485 = vunpack.c.l.b16 %v373
      %v1486 = vunpack.c.l.b16 %v374
      %v1487 = vunpack.c.l.b16 %v375
      %v1488 = vunpack.c.l.b16 %v376
      %v1489 = vunpack.c.l.b16 %v377
      %v1490 = vunpack.c.l.b16 %v378
      %v1491 = vunpack.c.l.b16 %v379
      %v1492 = vunpack.c.l.b16 %v380
      %v1493 = vunpack.c.l.b16 %v381
      %v1494 = vunpack.c.l.b16 %v382
      %v1495 = vunpack.c.l.b16 %v383
      %v1496 = vunpack.c.l.b16 %v384
      %v1497 = vunpack.c.l.b16 %v385
      %v1498 = vunpack.c.l.b16 %v386
      %v1499 = vunpack.c.l.b16 %v387
      %v1500 = vunpack.c.l.b16 %v388
      %v1501 = vunpack.c.l.b16 %v389
      %v1502 = vunpack.c.l.b16 %v390
      %v1503 = vunpack.c.l.b16 %v391
      %v1504 = vunpack.c.l.b16 %v392
      %v1505 = vunpack.c.l.b16 %v393
      %v1506 = vunpack.c.l.b16 %v394
      %v1507 = vunpack.c.l.b16 %v395
      %v1508 = vunpack.c.l.b16 %v396
      %v1509 = vunpack.c.l.b16 %v397
      %v1510 = vunpack.c.l.b16 %v398
      %v1511 = vunpack.c.l.b16 %v399
      %v1512 = vunpack.c.l.b16 %v400
      %v1513 = vunpack.c.l.b16 %v401
      %v1514 = vunpack.c.l.b16 %v402
      %v1515 = vunpack.c.l.b16 %v403
      %v1516 = vunpack.c.l.b16 %v404
      %v1517 = vunpack.c.l.b16 %v405
      %v1518 = vunpack.c.l.b16 %v406
      %v1519 = vunpack.c.l.b16 %v407
      %v1520 = vunpack.c.l.b16 %v408
      %v1521 = vunpack.c.l.b16 %v409
      %v1522 = vunpack.c.l.b16 %v410
      %v1523 = vunpack.c.l.b16 %v411
      %v1524 = vunpack.c.l.b16 %v412
      %v1525 = vunpack.c.l.b16 %v413
      %v1526 = vunpack.c.l.b16 %v414
      %v1527 = vunpack.c.l.b16 %v415
      %v1528 = vunpack.c.l.b16 %v416
      %v1529 = vunpack.c.l.b16 %v417
      %v1530 = vunpack.c.l.b16 %v418
      %v1531 = vunpack.c.l.b16 %v419
      %v1532 = vunpack.c.l.b16 %v420
      %v1533 = vunpack.c.l.b16 %v421
      %v1534 = vunpack.c.l.b16 %v422
      %v1535 = vunpack.c.l.b16 %v423
      %v1536 = vunpack.c.l.b16 %v424
      %v1537 = vunpack.c.l.b16 %v425
      %v1538 = vunpack.c.l.b16 %v426
      %v1539 = vunpack.c.l.b16 %v427
      %v1540 = vunpack.c.l.b16 %v428
      %v1541 = vunpack.c.l.b16 %v429
      %v1542 = vunpack.c.l.b16 %v430
      %v1543 = vunpack.c.l.b16 %v431
      %v1544 = vunpack.c.l.b16 %v432
      %v1545 = vunpack.c.l.b16 %v433
      %v1546 = vunpack.c.l.b16 %v434
      %v1547 = vunpack.c.l.b16 %v435
      %v1548 = vunpack.c.l.b16 %v436
      %v1549 = vpack.c.b16 %v1486, %v1485
      %v1550 = vpack.c.b16 %v1488, %v1487
      %v1551 = vpack.c.b16 %v1490, %v1489
      %v1552 = vpack.c.b16 %v1492, %v1491
      %v1553 = vpack.c.b16 %v1494, %v1493
      %v1554 = vpack.c.b16 %v1496, %v1495
      %v1555 = vpack.c.b16 %v1498, %v1497
      %v1556 = vpack.c.b16 %v1500, %v1499
      %v1557 = vpack.c.b16 %v1502, %v1501
      %v1558 = vpack.c.b16 %v1504, %v1503
      %v1559 = vpack.c.b16 %v1506, %v1505
      %v1560 = vpack.c.b16 %v1508, %v1507
      %v1561 = vpack.c.b16 %v1510, %v1509
      %v1562 = vpack.c.b16 %v1512, %v1511
      %v1563 = vpack.c.b16 %v1514, %v1513
      %v1564 = vpack.c.b16 %v1516, %v1515
      %v1565 = vpack.c.b16 %v1518, %v1517
      %v1566 = vpack.c.b16 %v1520, %v1519
      %v1567 = vpack.c.b16 %v1522, %v1521
      %v1568 = vpack.c.b16 %v1524, %v1523
      %v1569 = vpack.c.b16 %v1526, %v1525
      %v1570 = vpack.c.b16 %v1528, %v1527
      %v1571 = vpack.c.b16 %v1530, %v1529
      %v1572 = vpack.c.b16 %v1532, %v1531
      %v1573 = vpack.c.b16 %v1534, %v1533
      %v1574 = vpack.c.b16 %v1536, %v1535
      %v1575 = vpack.c.b16 %v1538, %v1537
      %v1576 = vpack.c.b16 %v1540, %v1539
      %v1577 = vpack.c.b16 %v1542, %v1541
      %v1578 = vpack.c.b16 %v1544, %v1543
      %v1579 = vpack.c.b16 %v1546, %v1545
      %v1580 = vpack.c.b16 %v1548, %v1547
      %1613 = vmatpush.bf16.msra.mxu0 %v1556
      %1614 = vmatpush.bf16.msra.mxu0 %v1555
      %1615 = vmatpush.bf16.msra.mxu0 %v1554
      %1616 = vmatpush.bf16.msra.mxu0 %v1553
      %1617 = vmatpush.bf16.msra.mxu0 %v1552
      %1618 = vmatpush.bf16.msra.mxu0 %v1551
      %1619 = vmatpush.bf16.msra.mxu0 %v1550
      %1620 = vmatpush.bf16.msra.mxu0 %v1549
      %1621 = vmatmul.bf16.gmra.mxu0 %v1029
      %v1622 = vpop.f32.mrf.mxu0
      %v1623 = vadd.f32 %v439, %v1622
      %v1624 = vpop.f32.mrf.mxu0
      %v1625 = vadd.f32 %v439, %v1624
      %1626 = vmatmul.bf16.gmra.mxu0 %v1033
      %v1627 = vpop.f32.mrf.mxu0
      %v1628 = vadd.f32 %v439, %v1627
      %v1629 = vpop.f32.mrf.mxu0
      %v1630 = vadd.f32 %v439, %v1629
      %1631 = vmatmul.bf16.gmra.mxu0 %v1037
      %v1632 = vpop.f32.mrf.mxu0
      %v1633 = vadd.f32 %v439, %v1632
      %v1634 = vpop.f32.mrf.mxu0
      %v1635 = vadd.f32 %v439, %v1634
      %1636 = vmatmul.bf16.gmra.mxu0 %v1041
      %v1637 = vpop.f32.mrf.mxu0
      %v1638 = vadd.f32 %v439, %v1637
      %v1639 = vpop.f32.mrf.mxu0
      %v1640 = vadd.f32 %v439, %v1639
      %1641 = vmatmul.bf16.gmra.mxu0 %v1045
      %v1642 = vpop.f32.mrf.mxu0
      %v1643 = vadd.f32 %v439, %v1642
      %v1644 = vpop.f32.mrf.mxu0
      %v1645 = vadd.f32 %v439, %v1644
      %1646 = vmatmul.bf16.gmra.mxu0 %v1049
      %v1647 = vpop.f32.mrf.mxu0
      %v1648 = vadd.f32 %v439, %v1647
      %v1649 = vpop.f32.mrf.mxu0
      %v1650 = vadd.f32 %v439, %v1649
      %1651 = vmatmul.bf16.gmra.mxu0 %v1053
      %v1652 = vpop.f32.mrf.mxu0
      %v1653 = vadd.f32 %v439, %v1652
      %v1654 = vpop.f32.mrf.mxu0
      %v1655 = vadd.f32 %v439, %v1654
      %1656 = vmatmul.bf16.gmra.mxu0 %v1057
      %v1657 = vpop.f32.mrf.mxu0
      %v1658 = vadd.f32 %v439, %v1657
      %v1659 = vpop.f32.mrf.mxu0
      %v1660 = vadd.f32 %v439, %v1659
      %1661 = vmatmul.bf16.gmra.mxu0 %v1061
      %v1662 = vpop.f32.mrf.mxu0
      %v1663 = vadd.f32 %v439, %v1662
      %v1664 = vpop.f32.mrf.mxu0
      %v1665 = vadd.f32 %v439, %v1664
      %1666 = vmatmul.bf16.gmra.mxu0 %v1065
      %v1667 = vpop.f32.mrf.mxu0
      %v1668 = vadd.f32 %v439, %v1667
      %v1669 = vpop.f32.mrf.mxu0
      %v1670 = vadd.f32 %v439, %v1669
      %1671 = vmatmul.bf16.gmra.mxu0 %v1069
      %v1672 = vpop.f32.mrf.mxu0
      %v1673 = vadd.f32 %v439, %v1672
      %v1674 = vpop.f32.mrf.mxu0
      %v1675 = vadd.f32 %v439, %v1674
      %1676 = vmatmul.bf16.gmra.mxu0 %v1073
      %v1677 = vpop.f32.mrf.mxu0
      %v1678 = vadd.f32 %v439, %v1677
      %v1679 = vpop.f32.mrf.mxu0
      %v1680 = vadd.f32 %v439, %v1679
      %1681 = vmatmul.bf16.gmra.mxu0 %v1077
      %v1682 = vpop.f32.mrf.mxu0
      %v1683 = vadd.f32 %v439, %v1682
      %v1684 = vpop.f32.mrf.mxu0
      %v1685 = vadd.f32 %v439, %v1684
      %1686 = vmatmul.bf16.gmra.mxu0 %v1081
      %v1687 = vpop.f32.mrf.mxu0
      %v1688 = vadd.f32 %v439, %v1687
      %v1689 = vpop.f32.mrf.mxu0
      %v1690 = vadd.f32 %v439, %v1689
      %1691 = vmatmul.bf16.gmra.mxu0 %v1085
      %v1692 = vpop.f32.mrf.mxu0
      %v1693 = vadd.f32 %v439, %v1692
      %v1694 = vpop.f32.mrf.mxu0
      %v1695 = vadd.f32 %v439, %v1694
      %1696 = vmatmul.bf16.gmra.mxu0 %v1089
      %v1697 = vpop.f32.mrf.mxu0
      %v1698 = vadd.f32 %v439, %v1697
      %v1699 = vpop.f32.mrf.mxu0
      %v1700 = vadd.f32 %v439, %v1699
      %1701 = vmatmul.bf16.gmra.mxu0 %v1093
      %v1702 = vpop.f32.mrf.mxu0
      %v1703 = vadd.f32 %v439, %v1702
      %v1704 = vpop.f32.mrf.mxu0
      %v1705 = vadd.f32 %v439, %v1704
      %1706 = vmatmul.bf16.gmra.mxu0 %v1097
      %v1707 = vpop.f32.mrf.mxu0
      %v1708 = vadd.f32 %v439, %v1707
      %v1709 = vpop.f32.mrf.mxu0
      %v1710 = vadd.f32 %v439, %v1709
      %1711 = vmatmul.bf16.gmra.mxu0 %v1101
      %v1712 = vpop.f32.mrf.mxu0
      %v1713 = vadd.f32 %v439, %v1712
      %v1714 = vpop.f32.mrf.mxu0
      %v1715 = vadd.f32 %v439, %v1714
      %1716 = vmatmul.bf16.gmra.mxu0 %v1105
      %v1717 = vpop.f32.mrf.mxu0
      %v1718 = vadd.f32 %v439, %v1717
      %v1719 = vpop.f32.mrf.mxu0
      %v1720 = vadd.f32 %v439, %v1719
      %1721 = vmatmul.bf16.gmra.mxu0 %v1109
      %v1722 = vpop.f32.mrf.mxu0
      %v1723 = vadd.f32 %v439, %v1722
      %v1724 = vpop.f32.mrf.mxu0
      %v1725 = vadd.f32 %v439, %v1724
      %1726 = vmatmul.bf16.gmra.mxu0 %v1113
      %v1727 = vpop.f32.mrf.mxu0
      %v1728 = vadd.f32 %v439, %v1727
      %v1729 = vpop.f32.mrf.mxu0
      %v1730 = vadd.f32 %v439, %v1729
      %1731 = vmatmul.bf16.gmra.mxu0 %v1117
      %v1732 = vpop.f32.mrf.mxu0
      %v1733 = vadd.f32 %v439, %v1732
      %v1734 = vpop.f32.mrf.mxu0
      %v1735 = vadd.f32 %v439, %v1734
      %1736 = vmatmul.bf16.gmra.mxu0 %v1121
      %v1737 = vpop.f32.mrf.mxu0
      %v1738 = vadd.f32 %v439, %v1737
      %v1739 = vpop.f32.mrf.mxu0
      %v1740 = vadd.f32 %v439, %v1739
      %1741 = vmatmul.bf16.gmra.mxu0 %v1125
      %v1742 = vpop.f32.mrf.mxu0
      %v1743 = vadd.f32 %v439, %v1742
      %v1744 = vpop.f32.mrf.mxu0
      %v1745 = vadd.f32 %v439, %v1744
      %1746 = vmatmul.bf16.gmra.mxu0 %v1129
      %v1747 = vpop.f32.mrf.mxu0
      %v1748 = vadd.f32 %v439, %v1747
      %v1749 = vpop.f32.mrf.mxu0
      %v1750 = vadd.f32 %v439, %v1749
      %1751 = vmatmul.bf16.gmra.mxu0 %v1133
      %v1752 = vpop.f32.mrf.mxu0
      %v1753 = vadd.f32 %v439, %v1752
      %v1754 = vpop.f32.mrf.mxu0
      %v1755 = vadd.f32 %v439, %v1754
      %1756 = vmatmul.bf16.gmra.mxu0 %v1137
      %v1757 = vpop.f32.mrf.mxu0
      %v1758 = vadd.f32 %v439, %v1757
      %v1759 = vpop.f32.mrf.mxu0
      %v1760 = vadd.f32 %v439, %v1759
      %1761 = vmatmul.bf16.gmra.mxu0 %v1141
      %v1762 = vpop.f32.mrf.mxu0
      %v1763 = vadd.f32 %v439, %v1762
      %v1764 = vpop.f32.mrf.mxu0
      %v1765 = vadd.f32 %v439, %v1764
      %1766 = vmatmul.bf16.gmra.mxu0 %v1145
      %v1767 = vpop.f32.mrf.mxu0
      %v1768 = vadd.f32 %v439, %v1767
      %v1769 = vpop.f32.mrf.mxu0
      %v1770 = vadd.f32 %v439, %v1769
      %1771 = vmatmul.bf16.gmra.mxu0 %v1149
      %v1772 = vpop.f32.mrf.mxu0
      %v1773 = vadd.f32 %v439, %v1772
      %v1774 = vpop.f32.mrf.mxu0
      %v1775 = vadd.f32 %v439, %v1774
      %1776 = vmatmul.bf16.gmra.mxu0 %v1153
      %v1777 = vpop.f32.mrf.mxu0
      %v1778 = vadd.f32 %v439, %v1777
      %v1779 = vpop.f32.mrf.mxu0
      %v1780 = vadd.f32 %v439, %v1779
      %1781 = vmatmul.bf16.gmra.mxu0 %v1157
      %v1782 = vpop.f32.mrf.mxu0
      %v1783 = vadd.f32 %v439, %v1782
      %v1784 = vpop.f32.mrf.mxu0
      %v1785 = vadd.f32 %v439, %v1784
      %1786 = vmatmul.bf16.gmra.mxu0 %v1161
      %v1787 = vpop.f32.mrf.mxu0
      %v1788 = vadd.f32 %v439, %v1787
      %v1789 = vpop.f32.mrf.mxu0
      %v1790 = vadd.f32 %v439, %v1789
      %1791 = vmatmul.bf16.gmra.mxu0 %v1165
      %v1792 = vpop.f32.mrf.mxu0
      %v1793 = vadd.f32 %v439, %v1792
      %v1794 = vpop.f32.mrf.mxu0
      %v1795 = vadd.f32 %v439, %v1794
      %1796 = vmatmul.bf16.gmra.mxu0 %v1169
      %v1797 = vpop.f32.mrf.mxu0
      %v1798 = vadd.f32 %v439, %v1797
      %v1799 = vpop.f32.mrf.mxu0
      %v1800 = vadd.f32 %v439, %v1799
      %1801 = vmatmul.bf16.gmra.mxu0 %v1173
      %v1802 = vpop.f32.mrf.mxu0
      %v1803 = vadd.f32 %v439, %v1802
      %v1804 = vpop.f32.mrf.mxu0
      %v1805 = vadd.f32 %v439, %v1804
      %1806 = vmatmul.bf16.gmra.mxu0 %v1177
      %v1807 = vpop.f32.mrf.mxu0
      %v1808 = vadd.f32 %v439, %v1807
      %v1809 = vpop.f32.mrf.mxu0
      %v1810 = vadd.f32 %v439, %v1809
      %1811 = vmatmul.bf16.gmra.mxu0 %v1181
      %v1812 = vpop.f32.mrf.mxu0
      %v1813 = vadd.f32 %v439, %v1812
      %v1814 = vpop.f32.mrf.mxu0
      %v1815 = vadd.f32 %v439, %v1814
      %1816 = vmatmul.bf16.gmra.mxu0 %v1185
      %v1817 = vpop.f32.mrf.mxu0
      %v1818 = vadd.f32 %v439, %v1817
      %v1819 = vpop.f32.mrf.mxu0
      %v1820 = vadd.f32 %v439, %v1819
      %1821 = vmatmul.bf16.gmra.mxu0 %v1189
      %v1822 = vpop.f32.mrf.mxu0
      %v1823 = vadd.f32 %v439, %v1822
      %v1824 = vpop.f32.mrf.mxu0
      %v1825 = vadd.f32 %v439, %v1824
      %1826 = vmatmul.bf16.gmra.mxu0 %v1193
      %v1827 = vpop.f32.mrf.mxu0
      %v1828 = vadd.f32 %v439, %v1827
      %v1829 = vpop.f32.mrf.mxu0
      %v1830 = vadd.f32 %v439, %v1829
      %1831 = vmatmul.bf16.gmra.mxu0 %v1197
      %v1832 = vpop.f32.mrf.mxu0
      %v1833 = vadd.f32 %v439, %v1832
      %v1834 = vpop.f32.mrf.mxu0
      %v1835 = vadd.f32 %v439, %v1834
      %1836 = vmatmul.bf16.gmra.mxu0 %v1201
      %v1837 = vpop.f32.mrf.mxu0
      %v1838 = vadd.f32 %v439, %v1837
      %v1839 = vpop.f32.mrf.mxu0
      %v1840 = vadd.f32 %v439, %v1839
      %1841 = vmatmul.bf16.gmra.mxu0 %v1205
      %v1842 = vpop.f32.mrf.mxu0
      %v1843 = vadd.f32 %v439, %v1842
      %v1844 = vpop.f32.mrf.mxu0
      %v1845 = vadd.f32 %v439, %v1844
      %1846 = vmatmul.bf16.gmra.mxu0 %v1209
      %v1847 = vpop.f32.mrf.mxu0
      %v1848 = vadd.f32 %v439, %v1847
      %v1849 = vpop.f32.mrf.mxu0
      %v1850 = vadd.f32 %v439, %v1849
      %1851 = vmatmul.bf16.gmra.mxu0 %v1213
      %v1852 = vpop.f32.mrf.mxu0
      %v1853 = vadd.f32 %v439, %v1852
      %v1854 = vpop.f32.mrf.mxu0
      %v1855 = vadd.f32 %v439, %v1854
      %1856 = vmatmul.bf16.gmra.mxu0 %v1217
      %v1857 = vpop.f32.mrf.mxu0
      %v1858 = vadd.f32 %v439, %v1857
      %v1859 = vpop.f32.mrf.mxu0
      %v1860 = vadd.f32 %v439, %v1859
      %1861 = vmatmul.bf16.gmra.mxu0 %v1221
      %v1862 = vpop.f32.mrf.mxu0
      %v1863 = vadd.f32 %v439, %v1862
      %v1864 = vpop.f32.mrf.mxu0
      %v1865 = vadd.f32 %v439, %v1864
      %1866 = vdwg.mxu0
      %1867 = vmatpush.bf16.msra.mxu0 %v1564
      %1868 = vmatpush.bf16.msra.mxu0 %v1563
      %1869 = vmatpush.bf16.msra.mxu0 %v1562
      %1870 = vmatpush.bf16.msra.mxu0 %v1561
      %1871 = vmatpush.bf16.msra.mxu0 %v1560
      %1872 = vmatpush.bf16.msra.mxu0 %v1559
      %1873 = vmatpush.bf16.msra.mxu0 %v1558
      %1874 = vmatpush.bf16.msra.mxu0 %v1557
      %1875 = vmatmul.bf16.gmra.mxu0 %v1030
      %v1876 = vpop.f32.mrf.mxu0
      %v1877 = vadd.f32 %v1623, %v1876
      %v1878 = vpop.f32.mrf.mxu0
      %v1879 = vadd.f32 %v1625, %v1878
      %1880 = vmatmul.bf16.gmra.mxu0 %v1034
      %v1881 = vpop.f32.mrf.mxu0
      %v1882 = vadd.f32 %v1628, %v1881
      %v1883 = vpop.f32.mrf.mxu0
      %v1884 = vadd.f32 %v1630, %v1883
      %1885 = vmatmul.bf16.gmra.mxu0 %v1038
      %v1886 = vpop.f32.mrf.mxu0
      %v1887 = vadd.f32 %v1633, %v1886
      %v1888 = vpop.f32.mrf.mxu0
      %v1889 = vadd.f32 %v1635, %v1888
      %1890 = vmatmul.bf16.gmra.mxu0 %v1042
      %v1891 = vpop.f32.mrf.mxu0
      %v1892 = vadd.f32 %v1638, %v1891
      %v1893 = vpop.f32.mrf.mxu0
      %v1894 = vadd.f32 %v1640, %v1893
      %1895 = vmatmul.bf16.gmra.mxu0 %v1046
      %v1896 = vpop.f32.mrf.mxu0
      %v1897 = vadd.f32 %v1643, %v1896
      %v1898 = vpop.f32.mrf.mxu0
      %v1899 = vadd.f32 %v1645, %v1898
      %1900 = vmatmul.bf16.gmra.mxu0 %v1050
      %v1901 = vpop.f32.mrf.mxu0
      %v1902 = vadd.f32 %v1648, %v1901
      %v1903 = vpop.f32.mrf.mxu0
      %v1904 = vadd.f32 %v1650, %v1903
      %1905 = vmatmul.bf16.gmra.mxu0 %v1054
      %v1906 = vpop.f32.mrf.mxu0
      %v1907 = vadd.f32 %v1653, %v1906
      %v1908 = vpop.f32.mrf.mxu0
      %v1909 = vadd.f32 %v1655, %v1908
      %1910 = vmatmul.bf16.gmra.mxu0 %v1058
      %v1911 = vpop.f32.mrf.mxu0
      %v1912 = vadd.f32 %v1658, %v1911
      %v1913 = vpop.f32.mrf.mxu0
      %v1914 = vadd.f32 %v1660, %v1913
      %1915 = vmatmul.bf16.gmra.mxu0 %v1062
      %v1916 = vpop.f32.mrf.mxu0
      %v1917 = vadd.f32 %v1663, %v1916
      %v1918 = vpop.f32.mrf.mxu0
      %v1919 = vadd.f32 %v1665, %v1918
      %1920 = vmatmul.bf16.gmra.mxu0 %v1066
      %v1921 = vpop.f32.mrf.mxu0
      %v1922 = vadd.f32 %v1668, %v1921
      %v1923 = vpop.f32.mrf.mxu0
      %v1924 = vadd.f32 %v1670, %v1923
      %1925 = vmatmul.bf16.gmra.mxu0 %v1070
      %v1926 = vpop.f32.mrf.mxu0
      %v1927 = vadd.f32 %v1673, %v1926
      %v1928 = vpop.f32.mrf.mxu0
      %v1929 = vadd.f32 %v1675, %v1928
      %1930 = vmatmul.bf16.gmra.mxu0 %v1074
      %v1931 = vpop.f32.mrf.mxu0
      %v1932 = vadd.f32 %v1678, %v1931
      %v1933 = vpop.f32.mrf.mxu0
      %v1934 = vadd.f32 %v1680, %v1933
      %1935 = vmatmul.bf16.gmra.mxu0 %v1078
      %v1936 = vpop.f32.mrf.mxu0
      %v1937 = vadd.f32 %v1683, %v1936
      %v1938 = vpop.f32.mrf.mxu0
      %v1939 = vadd.f32 %v1685, %v1938
      %1940 = vmatmul.bf16.gmra.mxu0 %v1082
      %v1941 = vpop.f32.mrf.mxu0
      %v1942 = vadd.f32 %v1688, %v1941
      %v1943 = vpop.f32.mrf.mxu0
      %v1944 = vadd.f32 %v1690, %v1943
      %1945 = vmatmul.bf16.gmra.mxu0 %v1086
      %v1946 = vpop.f32.mrf.mxu0
      %v1947 = vadd.f32 %v1693, %v1946
      %v1948 = vpop.f32.mrf.mxu0
      %v1949 = vadd.f32 %v1695, %v1948
      %1950 = vmatmul.bf16.gmra.mxu0 %v1090
      %v1951 = vpop.f32.mrf.mxu0
      %v1952 = vadd.f32 %v1698, %v1951
      %v1953 = vpop.f32.mrf.mxu0
      %v1954 = vadd.f32 %v1700, %v1953
      %1955 = vmatmul.bf16.gmra.mxu0 %v1094
      %v1956 = vpop.f32.mrf.mxu0
      %v1957 = vadd.f32 %v1703, %v1956
      %v1958 = vpop.f32.mrf.mxu0
      %v1959 = vadd.f32 %v1705, %v1958
      %1960 = vmatmul.bf16.gmra.mxu0 %v1098
      %v1961 = vpop.f32.mrf.mxu0
      %v1962 = vadd.f32 %v1708, %v1961
      %v1963 = vpop.f32.mrf.mxu0
      %v1964 = vadd.f32 %v1710, %v1963
      %1965 = vmatmul.bf16.gmra.mxu0 %v1102
      %v1966 = vpop.f32.mrf.mxu0
      %v1967 = vadd.f32 %v1713, %v1966
      %v1968 = vpop.f32.mrf.mxu0
      %v1969 = vadd.f32 %v1715, %v1968
      %1970 = vmatmul.bf16.gmra.mxu0 %v1106
      %v1971 = vpop.f32.mrf.mxu0
      %v1972 = vadd.f32 %v1718, %v1971
      %v1973 = vpop.f32.mrf.mxu0
      %v1974 = vadd.f32 %v1720, %v1973
      %1975 = vmatmul.bf16.gmra.mxu0 %v1110
      %v1976 = vpop.f32.mrf.mxu0
      %v1977 = vadd.f32 %v1723, %v1976
      %v1978 = vpop.f32.mrf.mxu0
      %v1979 = vadd.f32 %v1725, %v1978
      %1980 = vmatmul.bf16.gmra.mxu0 %v1114
      %v1981 = vpop.f32.mrf.mxu0
      %v1982 = vadd.f32 %v1728, %v1981
      %v1983 = vpop.f32.mrf.mxu0
      %v1984 = vadd.f32 %v1730, %v1983
      %1985 = vmatmul.bf16.gmra.mxu0 %v1118
      %v1986 = vpop.f32.mrf.mxu0
      %v1987 = vadd.f32 %v1733, %v1986
      %v1988 = vpop.f32.mrf.mxu0
      %v1989 = vadd.f32 %v1735, %v1988
      %1990 = vmatmul.bf16.gmra.mxu0 %v1122
      %v1991 = vpop.f32.mrf.mxu0
      %v1992 = vadd.f32 %v1738, %v1991
      %v1993 = vpop.f32.mrf.mxu0
      %v1994 = vadd.f32 %v1740, %v1993
      %1995 = vmatmul.bf16.gmra.mxu0 %v1126
      %v1996 = vpop.f32.mrf.mxu0
      %v1997 = vadd.f32 %v1743, %v1996
      %v1998 = vpop.f32.mrf.mxu0
      %v1999 = vadd.f32 %v1745, %v1998
      %2000 = vmatmul.bf16.gmra.mxu0 %v1130
      %v2001 = vpop.f32.mrf.mxu0
      %v2002 = vadd.f32 %v1748, %v2001
      %v2003 = vpop.f32.mrf.mxu0
      %v2004 = vadd.f32 %v1750, %v2003
      %2005 = vmatmul.bf16.gmra.mxu0 %v1134
      %v2006 = vpop.f32.mrf.mxu0
      %v2007 = vadd.f32 %v1753, %v2006
      %v2008 = vpop.f32.mrf.mxu0
      %v2009 = vadd.f32 %v1755, %v2008
      %2010 = vmatmul.bf16.gmra.mxu0 %v1138
      %v2011 = vpop.f32.mrf.mxu0
      %v2012 = vadd.f32 %v1758, %v2011
      %v2013 = vpop.f32.mrf.mxu0
      %v2014 = vadd.f32 %v1760, %v2013
      %2015 = vmatmul.bf16.gmra.mxu0 %v1142
      %v2016 = vpop.f32.mrf.mxu0
      %v2017 = vadd.f32 %v1763, %v2016
      %v2018 = vpop.f32.mrf.mxu0
      %v2019 = vadd.f32 %v1765, %v2018
      %2020 = vmatmul.bf16.gmra.mxu0 %v1146
      %v2021 = vpop.f32.mrf.mxu0
      %v2022 = vadd.f32 %v1768, %v2021
      %v2023 = vpop.f32.mrf.mxu0
      %v2024 = vadd.f32 %v1770, %v2023
      %2025 = vmatmul.bf16.gmra.mxu0 %v1150
      %v2026 = vpop.f32.mrf.mxu0
      %v2027 = vadd.f32 %v1773, %v2026
      %v2028 = vpop.f32.mrf.mxu0
      %v2029 = vadd.f32 %v1775, %v2028
      %2030 = vmatmul.bf16.gmra.mxu0 %v1154
      %v2031 = vpop.f32.mrf.mxu0
      %v2032 = vadd.f32 %v1778, %v2031
      %v2033 = vpop.f32.mrf.mxu0
      %v2034 = vadd.f32 %v1780, %v2033
      %2035 = vmatmul.bf16.gmra.mxu0 %v1158
      %v2036 = vpop.f32.mrf.mxu0
      %v2037 = vadd.f32 %v1783, %v2036
      %v2038 = vpop.f32.mrf.mxu0
      %v2039 = vadd.f32 %v1785, %v2038
      %2040 = vmatmul.bf16.gmra.mxu0 %v1162
      %v2041 = vpop.f32.mrf.mxu0
      %v2042 = vadd.f32 %v1788, %v2041
      %v2043 = vpop.f32.mrf.mxu0
      %v2044 = vadd.f32 %v1790, %v2043
      %2045 = vmatmul.bf16.gmra.mxu0 %v1166
      %v2046 = vpop.f32.mrf.mxu0
      %v2047 = vadd.f32 %v1793, %v2046
      %v2048 = vpop.f32.mrf.mxu0
      %v2049 = vadd.f32 %v1795, %v2048
      %2050 = vmatmul.bf16.gmra.mxu0 %v1170
      %v2051 = vpop.f32.mrf.mxu0
      %v2052 = vadd.f32 %v1798, %v2051
      %v2053 = vpop.f32.mrf.mxu0
      %v2054 = vadd.f32 %v1800, %v2053
      %2055 = vmatmul.bf16.gmra.mxu0 %v1174
      %v2056 = vpop.f32.mrf.mxu0
      %v2057 = vadd.f32 %v1803, %v2056
      %v2058 = vpop.f32.mrf.mxu0
      %v2059 = vadd.f32 %v1805, %v2058
      %2060 = vmatmul.bf16.gmra.mxu0 %v1178
      %v2061 = vpop.f32.mrf.mxu0
      %v2062 = vadd.f32 %v1808, %v2061
      %v2063 = vpop.f32.mrf.mxu0
      %v2064 = vadd.f32 %v1810, %v2063
      %2065 = vmatmul.bf16.gmra.mxu0 %v1182
      %v2066 = vpop.f32.mrf.mxu0
      %v2067 = vadd.f32 %v1813, %v2066
      %v2068 = vpop.f32.mrf.mxu0
      %v2069 = vadd.f32 %v1815, %v2068
      %2070 = vmatmul.bf16.gmra.mxu0 %v1186
      %v2071 = vpop.f32.mrf.mxu0
      %v2072 = vadd.f32 %v1818, %v2071
      %v2073 = vpop.f32.mrf.mxu0
      %v2074 = vadd.f32 %v1820, %v2073
      %2075 = vmatmul.bf16.gmra.mxu0 %v1190
      %v2076 = vpop.f32.mrf.mxu0
      %v2077 = vadd.f32 %v1823, %v2076
      %v2078 = vpop.f32.mrf.mxu0
      %v2079 = vadd.f32 %v1825, %v2078
      %2080 = vmatmul.bf16.gmra.mxu0 %v1194
      %v2081 = vpop.f32.mrf.mxu0
      %v2082 = vadd.f32 %v1828, %v2081
      %v2083 = vpop.f32.mrf.mxu0
      %v2084 = vadd.f32 %v1830, %v2083
      %2085 = vmatmul.bf16.gmra.mxu0 %v1198
      %v2086 = vpop.f32.mrf.mxu0
      %v2087 = vadd.f32 %v1833, %v2086
      %v2088 = vpop.f32.mrf.mxu0
      %v2089 = vadd.f32 %v1835, %v2088
      %2090 = vmatmul.bf16.gmra.mxu0 %v1202
      %v2091 = vpop.f32.mrf.mxu0
      %v2092 = vadd.f32 %v1838, %v2091
      %v2093 = vpop.f32.mrf.mxu0
      %v2094 = vadd.f32 %v1840, %v2093
      %2095 = vmatmul.bf16.gmra.mxu0 %v1206
      %v2096 = vpop.f32.mrf.mxu0
      %v2097 = vadd.f32 %v1843, %v2096
      %v2098 = vpop.f32.mrf.mxu0
      %v2099 = vadd.f32 %v1845, %v2098
      %2100 = vmatmul.bf16.gmra.mxu0 %v1210
      %v2101 = vpop.f32.mrf.mxu0
      %v2102 = vadd.f32 %v1848, %v2101
      %v2103 = vpop.f32.mrf.mxu0
      %v2104 = vadd.f32 %v1850, %v2103
      %2105 = vmatmul.bf16.gmra.mxu0 %v1214
      %v2106 = vpop.f32.mrf.mxu0
      %v2107 = vadd.f32 %v1853, %v2106
      %v2108 = vpop.f32.mrf.mxu0
      %v2109 = vadd.f32 %v1855, %v2108
      %2110 = vmatmul.bf16.gmra.mxu0 %v1218
      %v2111 = vpop.f32.mrf.mxu0
      %v2112 = vadd.f32 %v1858, %v2111
      %v2113 = vpop.f32.mrf.mxu0
      %v2114 = vadd.f32 %v1860, %v2113
      %2115 = vmatmul.bf16.gmra.mxu0 %v1222
      %v2116 = vpop.f32.mrf.mxu0
      %v2117 = vadd.f32 %v1863, %v2116
      %v2118 = vpop.f32.mrf.mxu0
      %v2119 = vadd.f32 %v1865, %v2118
      %2120 = vdwg.mxu0
      %2121 = vmatpush.bf16.msra.mxu0 %v1572
      %2122 = vmatpush.bf16.msra.mxu0 %v1571
      %2123 = vmatpush.bf16.msra.mxu0 %v1570
      %2124 = vmatpush.bf16.msra.mxu0 %v1569
      %2125 = vmatpush.bf16.msra.mxu0 %v1568
      %2126 = vmatpush.bf16.msra.mxu0 %v1567
      %2127 = vmatpush.bf16.msra.mxu0 %v1566
      %2128 = vmatpush.bf16.msra.mxu0 %v1565
      %2129 = vmatmul.bf16.gmra.mxu0 %v1031
      %v2130 = vpop.f32.mrf.mxu0
      %v2131 = vadd.f32 %v1877, %v2130
      %v2132 = vpop.f32.mrf.mxu0
      %v2133 = vadd.f32 %v1879, %v2132
      %2134 = vmatmul.bf16.gmra.mxu0 %v1035
      %v2135 = vpop.f32.mrf.mxu0
      %v2136 = vadd.f32 %v1882, %v2135
      %v2137 = vpop.f32.mrf.mxu0
      %v2138 = vadd.f32 %v1884, %v2137
      %2139 = vmatmul.bf16.gmra.mxu0 %v1039
      %v2140 = vpop.f32.mrf.mxu0
      %v2141 = vadd.f32 %v1887, %v2140
      %v2142 = vpop.f32.mrf.mxu0
      %v2143 = vadd.f32 %v1889, %v2142
      %2144 = vmatmul.bf16.gmra.mxu0 %v1043
      %v2145 = vpop.f32.mrf.mxu0
      %v2146 = vadd.f32 %v1892, %v2145
      %v2147 = vpop.f32.mrf.mxu0
      %v2148 = vadd.f32 %v1894, %v2147
      %2149 = vmatmul.bf16.gmra.mxu0 %v1047
      %v2150 = vpop.f32.mrf.mxu0
      %v2151 = vadd.f32 %v1897, %v2150
      %v2152 = vpop.f32.mrf.mxu0
      %v2153 = vadd.f32 %v1899, %v2152
      %2154 = vmatmul.bf16.gmra.mxu0 %v1051
      %v2155 = vpop.f32.mrf.mxu0
      %v2156 = vadd.f32 %v1902, %v2155
      %v2157 = vpop.f32.mrf.mxu0
      %v2158 = vadd.f32 %v1904, %v2157
      %2159 = vmatmul.bf16.gmra.mxu0 %v1055
      %v2160 = vpop.f32.mrf.mxu0
      %v2161 = vadd.f32 %v1907, %v2160
      %v2162 = vpop.f32.mrf.mxu0
      %v2163 = vadd.f32 %v1909, %v2162
      %2164 = vmatmul.bf16.gmra.mxu0 %v1059
      %v2165 = vpop.f32.mrf.mxu0
      %v2166 = vadd.f32 %v1912, %v2165
      %v2167 = vpop.f32.mrf.mxu0
      %v2168 = vadd.f32 %v1914, %v2167
      %2169 = vmatmul.bf16.gmra.mxu0 %v1063
      %v2170 = vpop.f32.mrf.mxu0
      %v2171 = vadd.f32 %v1917, %v2170
      %v2172 = vpop.f32.mrf.mxu0
      %v2173 = vadd.f32 %v1919, %v2172
      %2174 = vmatmul.bf16.gmra.mxu0 %v1067
      %v2175 = vpop.f32.mrf.mxu0
      %v2176 = vadd.f32 %v1922, %v2175
      %v2177 = vpop.f32.mrf.mxu0
      %v2178 = vadd.f32 %v1924, %v2177
      %2179 = vmatmul.bf16.gmra.mxu0 %v1071
      %v2180 = vpop.f32.mrf.mxu0
      %v2181 = vadd.f32 %v1927, %v2180
      %v2182 = vpop.f32.mrf.mxu0
      %v2183 = vadd.f32 %v1929, %v2182
      %2184 = vmatmul.bf16.gmra.mxu0 %v1075
      %v2185 = vpop.f32.mrf.mxu0
      %v2186 = vadd.f32 %v1932, %v2185
      %v2187 = vpop.f32.mrf.mxu0
      %v2188 = vadd.f32 %v1934, %v2187
      %2189 = vmatmul.bf16.gmra.mxu0 %v1079
      %v2190 = vpop.f32.mrf.mxu0
      %v2191 = vadd.f32 %v1937, %v2190
      %v2192 = vpop.f32.mrf.mxu0
      %v2193 = vadd.f32 %v1939, %v2192
      %2194 = vmatmul.bf16.gmra.mxu0 %v1083
      %v2195 = vpop.f32.mrf.mxu0
      %v2196 = vadd.f32 %v1942, %v2195
      %v2197 = vpop.f32.mrf.mxu0
      %v2198 = vadd.f32 %v1944, %v2197
      %2199 = vmatmul.bf16.gmra.mxu0 %v1087
      %v2200 = vpop.f32.mrf.mxu0
      %v2201 = vadd.f32 %v1947, %v2200
      %v2202 = vpop.f32.mrf.mxu0
      %v2203 = vadd.f32 %v1949, %v2202
      %2204 = vmatmul.bf16.gmra.mxu0 %v1091
      %v2205 = vpop.f32.mrf.mxu0
      %v2206 = vadd.f32 %v1952, %v2205
      %v2207 = vpop.f32.mrf.mxu0
      %v2208 = vadd.f32 %v1954, %v2207
      %2209 = vmatmul.bf16.gmra.mxu0 %v1095
      %v2210 = vpop.f32.mrf.mxu0
      %v2211 = vadd.f32 %v1957, %v2210
      %v2212 = vpop.f32.mrf.mxu0
      %v2213 = vadd.f32 %v1959, %v2212
      %2214 = vmatmul.bf16.gmra.mxu0 %v1099
      %v2215 = vpop.f32.mrf.mxu0
      %v2216 = vadd.f32 %v1962, %v2215
      %v2217 = vpop.f32.mrf.mxu0
      %v2218 = vadd.f32 %v1964, %v2217
      %2219 = vmatmul.bf16.gmra.mxu0 %v1103
      %v2220 = vpop.f32.mrf.mxu0
      %v2221 = vadd.f32 %v1967, %v2220
      %v2222 = vpop.f32.mrf.mxu0
      %v2223 = vadd.f32 %v1969, %v2222
      %2224 = vmatmul.bf16.gmra.mxu0 %v1107
      %v2225 = vpop.f32.mrf.mxu0
      %v2226 = vadd.f32 %v1972, %v2225
      %v2227 = vpop.f32.mrf.mxu0
      %v2228 = vadd.f32 %v1974, %v2227
      %2229 = vmatmul.bf16.gmra.mxu0 %v1111
      %v2230 = vpop.f32.mrf.mxu0
      %v2231 = vadd.f32 %v1977, %v2230
      %v2232 = vpop.f32.mrf.mxu0
      %v2233 = vadd.f32 %v1979, %v2232
      %2234 = vmatmul.bf16.gmra.mxu0 %v1115
      %v2235 = vpop.f32.mrf.mxu0
      %v2236 = vadd.f32 %v1982, %v2235
      %v2237 = vpop.f32.mrf.mxu0
      %v2238 = vadd.f32 %v1984, %v2237
      %2239 = vmatmul.bf16.gmra.mxu0 %v1119
      %v2240 = vpop.f32.mrf.mxu0
      %v2241 = vadd.f32 %v1987, %v2240
      %v2242 = vpop.f32.mrf.mxu0
      %v2243 = vadd.f32 %v1989, %v2242
      %2244 = vmatmul.bf16.gmra.mxu0 %v1123
      %v2245 = vpop.f32.mrf.mxu0
      %v2246 = vadd.f32 %v1992, %v2245
      %v2247 = vpop.f32.mrf.mxu0
      %v2248 = vadd.f32 %v1994, %v2247
      %2249 = vmatmul.bf16.gmra.mxu0 %v1127
      %v2250 = vpop.f32.mrf.mxu0
      %v2251 = vadd.f32 %v1997, %v2250
      %v2252 = vpop.f32.mrf.mxu0
      %v2253 = vadd.f32 %v1999, %v2252
      %2254 = vmatmul.bf16.gmra.mxu0 %v1131
      %v2255 = vpop.f32.mrf.mxu0
      %v2256 = vadd.f32 %v2002, %v2255
      %v2257 = vpop.f32.mrf.mxu0
      %v2258 = vadd.f32 %v2004, %v2257
      %2259 = vmatmul.bf16.gmra.mxu0 %v1135
      %v2260 = vpop.f32.mrf.mxu0
      %v2261 = vadd.f32 %v2007, %v2260
      %v2262 = vpop.f32.mrf.mxu0
      %v2263 = vadd.f32 %v2009, %v2262
      %2264 = vmatmul.bf16.gmra.mxu0 %v1139
      %v2265 = vpop.f32.mrf.mxu0
      %v2266 = vadd.f32 %v2012, %v2265
      %v2267 = vpop.f32.mrf.mxu0
      %v2268 = vadd.f32 %v2014, %v2267
      %2269 = vmatmul.bf16.gmra.mxu0 %v1143
      %v2270 = vpop.f32.mrf.mxu0
      %v2271 = vadd.f32 %v2017, %v2270
      %v2272 = vpop.f32.mrf.mxu0
      %v2273 = vadd.f32 %v2019, %v2272
      %2274 = vmatmul.bf16.gmra.mxu0 %v1147
      %v2275 = vpop.f32.mrf.mxu0
      %v2276 = vadd.f32 %v2022, %v2275
      %v2277 = vpop.f32.mrf.mxu0
      %v2278 = vadd.f32 %v2024, %v2277
      %2279 = vmatmul.bf16.gmra.mxu0 %v1151
      %v2280 = vpop.f32.mrf.mxu0
      %v2281 = vadd.f32 %v2027, %v2280
      %v2282 = vpop.f32.mrf.mxu0
      %v2283 = vadd.f32 %v2029, %v2282
      %2284 = vmatmul.bf16.gmra.mxu0 %v1155
      %v2285 = vpop.f32.mrf.mxu0
      %v2286 = vadd.f32 %v2032, %v2285
      %v2287 = vpop.f32.mrf.mxu0
      %v2288 = vadd.f32 %v2034, %v2287
      %2289 = vmatmul.bf16.gmra.mxu0 %v1159
      %v2290 = vpop.f32.mrf.mxu0
      %v2291 = vadd.f32 %v2037, %v2290
      %v2292 = vpop.f32.mrf.mxu0
      %v2293 = vadd.f32 %v2039, %v2292
      %2294 = vmatmul.bf16.gmra.mxu0 %v1163
      %v2295 = vpop.f32.mrf.mxu0
      %v2296 = vadd.f32 %v2042, %v2295
      %v2297 = vpop.f32.mrf.mxu0
      %v2298 = vadd.f32 %v2044, %v2297
      %2299 = vmatmul.bf16.gmra.mxu0 %v1167
      %v2300 = vpop.f32.mrf.mxu0
      %v2301 = vadd.f32 %v2047, %v2300
      %v2302 = vpop.f32.mrf.mxu0
      %v2303 = vadd.f32 %v2049, %v2302
      %2304 = vmatmul.bf16.gmra.mxu0 %v1171
      %v2305 = vpop.f32.mrf.mxu0
      %v2306 = vadd.f32 %v2052, %v2305
      %v2307 = vpop.f32.mrf.mxu0
      %v2308 = vadd.f32 %v2054, %v2307
      %2309 = vmatmul.bf16.gmra.mxu0 %v1175
      %v2310 = vpop.f32.mrf.mxu0
      %v2311 = vadd.f32 %v2057, %v2310
      %v2312 = vpop.f32.mrf.mxu0
      %v2313 = vadd.f32 %v2059, %v2312
      %2314 = vmatmul.bf16.gmra.mxu0 %v1179
      %v2315 = vpop.f32.mrf.mxu0
      %v2316 = vadd.f32 %v2062, %v2315
      %v2317 = vpop.f32.mrf.mxu0
      %v2318 = vadd.f32 %v2064, %v2317
      %2319 = vmatmul.bf16.gmra.mxu0 %v1183
      %v2320 = vpop.f32.mrf.mxu0
      %v2321 = vadd.f32 %v2067, %v2320
      %v2322 = vpop.f32.mrf.mxu0
      %v2323 = vadd.f32 %v2069, %v2322
      %2324 = vmatmul.bf16.gmra.mxu0 %v1187
      %v2325 = vpop.f32.mrf.mxu0
      %v2326 = vadd.f32 %v2072, %v2325
      %v2327 = vpop.f32.mrf.mxu0
      %v2328 = vadd.f32 %v2074, %v2327
      %2329 = vmatmul.bf16.gmra.mxu0 %v1191
      %v2330 = vpop.f32.mrf.mxu0
      %v2331 = vadd.f32 %v2077, %v2330
      %v2332 = vpop.f32.mrf.mxu0
      %v2333 = vadd.f32 %v2079, %v2332
      %2334 = vmatmul.bf16.gmra.mxu0 %v1195
      %v2335 = vpop.f32.mrf.mxu0
      %v2336 = vadd.f32 %v2082, %v2335
      %v2337 = vpop.f32.mrf.mxu0
      %v2338 = vadd.f32 %v2084, %v2337
      %2339 = vmatmul.bf16.gmra.mxu0 %v1199
      %v2340 = vpop.f32.mrf.mxu0
      %v2341 = vadd.f32 %v2087, %v2340
      %v2342 = vpop.f32.mrf.mxu0
      %v2343 = vadd.f32 %v2089, %v2342
      %2344 = vmatmul.bf16.gmra.mxu0 %v1203
      %v2345 = vpop.f32.mrf.mxu0
      %v2346 = vadd.f32 %v2092, %v2345
      %v2347 = vpop.f32.mrf.mxu0
      %v2348 = vadd.f32 %v2094, %v2347
      %2349 = vmatmul.bf16.gmra.mxu0 %v1207
      %v2350 = vpop.f32.mrf.mxu0
      %v2351 = vadd.f32 %v2097, %v2350
      %v2352 = vpop.f32.mrf.mxu0
      %v2353 = vadd.f32 %v2099, %v2352
      %2354 = vmatmul.bf16.gmra.mxu0 %v1211
      %v2355 = vpop.f32.mrf.mxu0
      %v2356 = vadd.f32 %v2102, %v2355
      %v2357 = vpop.f32.mrf.mxu0
      %v2358 = vadd.f32 %v2104, %v2357
      %2359 = vmatmul.bf16.gmra.mxu0 %v1215
      %v2360 = vpop.f32.mrf.mxu0
      %v2361 = vadd.f32 %v2107, %v2360
      %v2362 = vpop.f32.mrf.mxu0
      %v2363 = vadd.f32 %v2109, %v2362
      %2364 = vmatmul.bf16.gmra.mxu0 %v1219
      %v2365 = vpop.f32.mrf.mxu0
      %v2366 = vadd.f32 %v2112, %v2365
      %v2367 = vpop.f32.mrf.mxu0
      %v2368 = vadd.f32 %v2114, %v2367
      %2369 = vmatmul.bf16.gmra.mxu0 %v1223
      %v2370 = vpop.f32.mrf.mxu0
      %v2371 = vadd.f32 %v2117, %v2370
      %v2372 = vpop.f32.mrf.mxu0
      %v2373 = vadd.f32 %v2119, %v2372
      %2374 = vdwg.mxu0
      %2375 = vmatpush.bf16.msra.mxu0 %v1580
      %2376 = vmatpush.bf16.msra.mxu0 %v1579
      %2377 = vmatpush.bf16.msra.mxu0 %v1578
      %2378 = vmatpush.bf16.msra.mxu0 %v1577
      %2379 = vmatpush.bf16.msra.mxu0 %v1576
      %2380 = vmatpush.bf16.msra.mxu0 %v1575
      %2381 = vmatpush.bf16.msra.mxu0 %v1574
      %2382 = vmatpush.bf16.msra.mxu0 %v1573
      %2383 = vmatmul.bf16.gmra.mxu0 %v1032
      %v2384 = vpop.f32.mrf.mxu0
      %v2385 = vadd.f32 %v2131, %v2384
      %v2386 = vpop.f32.mrf.mxu0
      %v2387 = vadd.f32 %v2133, %v2386
      %2388 = vmatmul.bf16.gmra.mxu0 %v1036
      %v2389 = vpop.f32.mrf.mxu0
      %v2390 = vadd.f32 %v2136, %v2389
      %v2391 = vpop.f32.mrf.mxu0
      %v2392 = vadd.f32 %v2138, %v2391
      %2393 = vmatmul.bf16.gmra.mxu0 %v1040
      %v2394 = vpop.f32.mrf.mxu0
      %v2395 = vadd.f32 %v2141, %v2394
      %v2396 = vpop.f32.mrf.mxu0
      %v2397 = vadd.f32 %v2143, %v2396
      %2398 = vmatmul.bf16.gmra.mxu0 %v1044
      %v2399 = vpop.f32.mrf.mxu0
      %v2400 = vadd.f32 %v2146, %v2399
      %v2401 = vpop.f32.mrf.mxu0
      %v2402 = vadd.f32 %v2148, %v2401
      %2403 = vmatmul.bf16.gmra.mxu0 %v1048
      %v2404 = vpop.f32.mrf.mxu0
      %v2405 = vadd.f32 %v2151, %v2404
      %v2406 = vpop.f32.mrf.mxu0
      %v2407 = vadd.f32 %v2153, %v2406
      %2408 = vmatmul.bf16.gmra.mxu0 %v1052
      %v2409 = vpop.f32.mrf.mxu0
      %v2410 = vadd.f32 %v2156, %v2409
      %v2411 = vpop.f32.mrf.mxu0
      %v2412 = vadd.f32 %v2158, %v2411
      %2413 = vmatmul.bf16.gmra.mxu0 %v1056
      %v2414 = vpop.f32.mrf.mxu0
      %v2415 = vadd.f32 %v2161, %v2414
      %v2416 = vpop.f32.mrf.mxu0
      %v2417 = vadd.f32 %v2163, %v2416
      %2418 = vmatmul.bf16.gmra.mxu0 %v1060
      %v2419 = vpop.f32.mrf.mxu0
      %v2420 = vadd.f32 %v2166, %v2419
      %v2421 = vpop.f32.mrf.mxu0
      %v2422 = vadd.f32 %v2168, %v2421
      %2423 = vmatmul.bf16.gmra.mxu0 %v1064
      %v2424 = vpop.f32.mrf.mxu0
      %v2425 = vadd.f32 %v2171, %v2424
      %v2426 = vpop.f32.mrf.mxu0
      %v2427 = vadd.f32 %v2173, %v2426
      %2428 = vmatmul.bf16.gmra.mxu0 %v1068
      %v2429 = vpop.f32.mrf.mxu0
      %v2430 = vadd.f32 %v2176, %v2429
      %v2431 = vpop.f32.mrf.mxu0
      %v2432 = vadd.f32 %v2178, %v2431
      %2433 = vmatmul.bf16.gmra.mxu0 %v1072
      %v2434 = vpop.f32.mrf.mxu0
      %v2435 = vadd.f32 %v2181, %v2434
      %v2436 = vpop.f32.mrf.mxu0
      %v2437 = vadd.f32 %v2183, %v2436
      %2438 = vmatmul.bf16.gmra.mxu0 %v1076
      %v2439 = vpop.f32.mrf.mxu0
      %v2440 = vadd.f32 %v2186, %v2439
      %v2441 = vpop.f32.mrf.mxu0
      %v2442 = vadd.f32 %v2188, %v2441
      %2443 = vmatmul.bf16.gmra.mxu0 %v1080
      %v2444 = vpop.f32.mrf.mxu0
      %v2445 = vadd.f32 %v2191, %v2444
      %v2446 = vpop.f32.mrf.mxu0
      %v2447 = vadd.f32 %v2193, %v2446
      %2448 = vmatmul.bf16.gmra.mxu0 %v1084
      %v2449 = vpop.f32.mrf.mxu0
      %v2450 = vadd.f32 %v2196, %v2449
      %v2451 = vpop.f32.mrf.mxu0
      %v2452 = vadd.f32 %v2198, %v2451
      %2453 = vmatmul.bf16.gmra.mxu0 %v1088
      %v2454 = vpop.f32.mrf.mxu0
      %v2455 = vadd.f32 %v2201, %v2454
      %v2456 = vpop.f32.mrf.mxu0
      %v2457 = vadd.f32 %v2203, %v2456
      %2458 = vmatmul.bf16.gmra.mxu0 %v1092
      %v2459 = vpop.f32.mrf.mxu0
      %v2460 = vadd.f32 %v2206, %v2459
      %v2461 = vpop.f32.mrf.mxu0
      %v2462 = vadd.f32 %v2208, %v2461
      %2463 = vmatmul.bf16.gmra.mxu0 %v1096
      %v2464 = vpop.f32.mrf.mxu0
      %v2465 = vadd.f32 %v2211, %v2464
      %v2466 = vpop.f32.mrf.mxu0
      %v2467 = vadd.f32 %v2213, %v2466
      %2468 = vmatmul.bf16.gmra.mxu0 %v1100
      %v2469 = vpop.f32.mrf.mxu0
      %v2470 = vadd.f32 %v2216, %v2469
      %v2471 = vpop.f32.mrf.mxu0
      %v2472 = vadd.f32 %v2218, %v2471
      %2473 = vmatmul.bf16.gmra.mxu0 %v1104
      %v2474 = vpop.f32.mrf.mxu0
      %v2475 = vadd.f32 %v2221, %v2474
      %v2476 = vpop.f32.mrf.mxu0
      %v2477 = vadd.f32 %v2223, %v2476
      %2478 = vmatmul.bf16.gmra.mxu0 %v1108
      %v2479 = vpop.f32.mrf.mxu0
      %v2480 = vadd.f32 %v2226, %v2479
      %v2481 = vpop.f32.mrf.mxu0
      %v2482 = vadd.f32 %v2228, %v2481
      %2483 = vmatmul.bf16.gmra.mxu0 %v1112
      %v2484 = vpop.f32.mrf.mxu0
      %v2485 = vadd.f32 %v2231, %v2484
      %v2486 = vpop.f32.mrf.mxu0
      %v2487 = vadd.f32 %v2233, %v2486
      %2488 = vmatmul.bf16.gmra.mxu0 %v1116
      %v2489 = vpop.f32.mrf.mxu0
      %v2490 = vadd.f32 %v2236, %v2489
      %v2491 = vpop.f32.mrf.mxu0
      %v2492 = vadd.f32 %v2238, %v2491
      %2493 = vmatmul.bf16.gmra.mxu0 %v1120
      %v2494 = vpop.f32.mrf.mxu0
      %v2495 = vadd.f32 %v2241, %v2494
      %v2496 = vpop.f32.mrf.mxu0
      %v2497 = vadd.f32 %v2243, %v2496
      %2498 = vmatmul.bf16.gmra.mxu0 %v1124
      %v2499 = vpop.f32.mrf.mxu0
      %v2500 = vadd.f32 %v2246, %v2499
      %v2501 = vpop.f32.mrf.mxu0
      %v2502 = vadd.f32 %v2248, %v2501
      %2503 = vmatmul.bf16.gmra.mxu0 %v1128
      %v2504 = vpop.f32.mrf.mxu0
      %v2505 = vadd.f32 %v2251, %v2504
      %v2506 = vpop.f32.mrf.mxu0
      %v2507 = vadd.f32 %v2253, %v2506
      %2508 = vmatmul.bf16.gmra.mxu0 %v1132
      %v2509 = vpop.f32.mrf.mxu0
      %v2510 = vadd.f32 %v2256, %v2509
      %v2511 = vpop.f32.mrf.mxu0
      %v2512 = vadd.f32 %v2258, %v2511
      %2513 = vmatmul.bf16.gmra.mxu0 %v1136
      %v2514 = vpop.f32.mrf.mxu0
      %v2515 = vadd.f32 %v2261, %v2514
      %v2516 = vpop.f32.mrf.mxu0
      %v2517 = vadd.f32 %v2263, %v2516
      %2518 = vmatmul.bf16.gmra.mxu0 %v1140
      %v2519 = vpop.f32.mrf.mxu0
      %v2520 = vadd.f32 %v2266, %v2519
      %v2521 = vpop.f32.mrf.mxu0
      %v2522 = vadd.f32 %v2268, %v2521
      %2523 = vmatmul.bf16.gmra.mxu0 %v1144
      %v2524 = vpop.f32.mrf.mxu0
      %v2525 = vadd.f32 %v2271, %v2524
      %v2526 = vpop.f32.mrf.mxu0
      %v2527 = vadd.f32 %v2273, %v2526
      %2528 = vmatmul.bf16.gmra.mxu0 %v1148
      %v2529 = vpop.f32.mrf.mxu0
      %v2530 = vadd.f32 %v2276, %v2529
      %v2531 = vpop.f32.mrf.mxu0
      %v2532 = vadd.f32 %v2278, %v2531
      %2533 = vmatmul.bf16.gmra.mxu0 %v1152
      %v2534 = vpop.f32.mrf.mxu0
      %v2535 = vadd.f32 %v2281, %v2534
      %v2536 = vpop.f32.mrf.mxu0
      %v2537 = vadd.f32 %v2283, %v2536
      %2538 = vmatmul.bf16.gmra.mxu0 %v1156
      %v2539 = vpop.f32.mrf.mxu0
      %v2540 = vadd.f32 %v2286, %v2539
      %v2541 = vpop.f32.mrf.mxu0
      %v2542 = vadd.f32 %v2288, %v2541
      %2543 = vmatmul.bf16.gmra.mxu0 %v1160
      %v2544 = vpop.f32.mrf.mxu0
      %v2545 = vadd.f32 %v2291, %v2544
      %v2546 = vpop.f32.mrf.mxu0
      %v2547 = vadd.f32 %v2293, %v2546
      %2548 = vmatmul.bf16.gmra.mxu0 %v1164
      %v2549 = vpop.f32.mrf.mxu0
      %v2550 = vadd.f32 %v2296, %v2549
      %v2551 = vpop.f32.mrf.mxu0
      %v2552 = vadd.f32 %v2298, %v2551
      %2553 = vmatmul.bf16.gmra.mxu0 %v1168
      %v2554 = vpop.f32.mrf.mxu0
      %v2555 = vadd.f32 %v2301, %v2554
      %v2556 = vpop.f32.mrf.mxu0
      %v2557 = vadd.f32 %v2303, %v2556
      %2558 = vmatmul.bf16.gmra.mxu0 %v1172
      %v2559 = vpop.f32.mrf.mxu0
      %v2560 = vadd.f32 %v2306, %v2559
      %v2561 = vpop.f32.mrf.mxu0
      %v2562 = vadd.f32 %v2308, %v2561
      %2563 = vmatmul.bf16.gmra.mxu0 %v1176
      %v2564 = vpop.f32.mrf.mxu0
      %v2565 = vadd.f32 %v2311, %v2564
      %v2566 = vpop.f32.mrf.mxu0
      %v2567 = vadd.f32 %v2313, %v2566
      %2568 = vmatmul.bf16.gmra.mxu0 %v1180
      %v2569 = vpop.f32.mrf.mxu0
      %v2570 = vadd.f32 %v2316, %v2569
      %v2571 = vpop.f32.mrf.mxu0
      %v2572 = vadd.f32 %v2318, %v2571
      %2573 = vmatmul.bf16.gmra.mxu0 %v1184
      %v2574 = vpop.f32.mrf.mxu0
      %v2575 = vadd.f32 %v2321, %v2574
      %v2576 = vpop.f32.mrf.mxu0
      %v2577 = vadd.f32 %v2323, %v2576
      %2578 = vmatmul.bf16.gmra.mxu0 %v1188
      %v2579 = vpop.f32.mrf.mxu0
      %v2580 = vadd.f32 %v2326, %v2579
      %v2581 = vpop.f32.mrf.mxu0
      %v2582 = vadd.f32 %v2328, %v2581
      %2583 = vmatmul.bf16.gmra.mxu0 %v1192
      %v2584 = vpop.f32.mrf.mxu0
      %v2585 = vadd.f32 %v2331, %v2584
      %v2586 = vpop.f32.mrf.mxu0
      %v2587 = vadd.f32 %v2333, %v2586
      %2588 = vmatmul.bf16.gmra.mxu0 %v1196
      %v2589 = vpop.f32.mrf.mxu0
      %v2590 = vadd.f32 %v2336, %v2589
      %v2591 = vpop.f32.mrf.mxu0
      %v2592 = vadd.f32 %v2338, %v2591
      %2593 = vmatmul.bf16.gmra.mxu0 %v1200
      %v2594 = vpop.f32.mrf.mxu0
      %v2595 = vadd.f32 %v2341, %v2594
      %v2596 = vpop.f32.mrf.mxu0
      %v2597 = vadd.f32 %v2343, %v2596
      %2598 = vmatmul.bf16.gmra.mxu0 %v1204
      %v2599 = vpop.f32.mrf.mxu0
      %v2600 = vadd.f32 %v2346, %v2599
      %v2601 = vpop.f32.mrf.mxu0
      %v2602 = vadd.f32 %v2348, %v2601
      %2603 = vmatmul.bf16.gmra.mxu0 %v1208
      %v2604 = vpop.f32.mrf.mxu0
      %v2605 = vadd.f32 %v2351, %v2604
      %v2606 = vpop.f32.mrf.mxu0
      %v2607 = vadd.f32 %v2353, %v2606
      %2608 = vmatmul.bf16.gmra.mxu0 %v1212
      %v2609 = vpop.f32.mrf.mxu0
      %v2610 = vadd.f32 %v2356, %v2609
      %v2611 = vpop.f32.mrf.mxu0
      %v2612 = vadd.f32 %v2358, %v2611
      %2613 = vmatmul.bf16.gmra.mxu0 %v1216
      %v2614 = vpop.f32.mrf.mxu0
      %v2615 = vadd.f32 %v2361, %v2614
      %v2616 = vpop.f32.mrf.mxu0
      %v2617 = vadd.f32 %v2363, %v2616
      %2618 = vmatmul.bf16.gmra.mxu0 %v1220
      %v2619 = vpop.f32.mrf.mxu0
      %v2620 = vadd.f32 %v2366, %v2619
      %v2621 = vpop.f32.mrf.mxu0
      %v2622 = vadd.f32 %v2368, %v2621
      %2623 = vmatmul.bf16.gmra.mxu0 %v1224
      %v2624 = vpop.f32.mrf.mxu0
      %v2625 = vadd.f32 %v2371, %v2624
      %v2626 = vpop.f32.mrf.mxu0
      %v2627 = vadd.f32 %v2373, %v2626
      %2628 = vdwg.mxu0
      %2727 = vrot.lane.b32.xlu0 %v2385, 120
      %v2728 = vpop.permute.xlu0 %2727
      %2729 = vrot.lane.b32.xlu0 %v2387, 120
      %v2730 = vpop.permute.xlu0 %2729
      %2731 = vrot.lane.b32.xlu0 %v2390, 120
      %v2732 = vpop.permute.xlu0 %2731
      %2733 = vrot.lane.b32.xlu0 %v2392, 120
      %v2734 = vpop.permute.xlu0 %2733
      %2735 = vrot.lane.b32.xlu0 %v2395, 120
      %v2736 = vpop.permute.xlu0 %2735
      %2737 = vrot.lane.b32.xlu0 %v2397, 120
      %v2738 = vpop.permute.xlu0 %2737
      %2739 = vrot.lane.b32.xlu0 %v2400, 120
      %v2740 = vpop.permute.xlu0 %2739
      %2741 = vrot.lane.b32.xlu0 %v2402, 120
      %v2742 = vpop.permute.xlu0 %2741
      %2743 = vrot.lane.b32.xlu0 %v2405, 120
      %v2744 = vpop.permute.xlu0 %2743
      %2745 = vrot.lane.b32.xlu0 %v2407, 120
      %v2746 = vpop.permute.xlu0 %2745
      %2747 = vrot.lane.b32.xlu0 %v2410, 120
      %v2748 = vpop.permute.xlu0 %2747
      %2749 = vrot.lane.b32.xlu0 %v2412, 120
      %v2750 = vpop.permute.xlu0 %2749
      %2751 = vrot.lane.b32.xlu0 %v2415, 120
      %v2752 = vpop.permute.xlu0 %2751
      %2753 = vrot.lane.b32.xlu0 %v2417, 120
      %v2754 = vpop.permute.xlu0 %2753
      %2755 = vrot.lane.b32.xlu0 %v2420, 120
      %v2756 = vpop.permute.xlu0 %2755
      %2757 = vrot.lane.b32.xlu0 %v2422, 120
      %v2758 = vpop.permute.xlu0 %2757
      %2759 = vrot.lane.b32.xlu0 %v2425, 120
      %v2760 = vpop.permute.xlu0 %2759
      %2761 = vrot.lane.b32.xlu0 %v2427, 120
      %v2762 = vpop.permute.xlu0 %2761
      %2763 = vrot.lane.b32.xlu0 %v2430, 120
      %v2764 = vpop.permute.xlu0 %2763
      %2765 = vrot.lane.b32.xlu0 %v2432, 120
      %v2766 = vpop.permute.xlu0 %2765
      %2767 = vrot.lane.b32.xlu0 %v2435, 120
      %v2768 = vpop.permute.xlu0 %2767
      %2769 = vrot.lane.b32.xlu0 %v2437, 120
      %v2770 = vpop.permute.xlu0 %2769
      %2771 = vrot.lane.b32.xlu0 %v2440, 120
      %v2772 = vpop.permute.xlu0 %2771
      %2773 = vrot.lane.b32.xlu0 %v2442, 120
      %v2774 = vpop.permute.xlu0 %2773
      %2775 = vrot.lane.b32.xlu0 %v2445, 120
      %v2776 = vpop.permute.xlu0 %2775
      %2777 = vrot.lane.b32.xlu0 %v2447, 120
      %v2778 = vpop.permute.xlu0 %2777
      %2779 = vrot.lane.b32.xlu0 %v2450, 120
      %v2780 = vpop.permute.xlu0 %2779
      %2781 = vrot.lane.b32.xlu0 %v2452, 120
      %v2782 = vpop.permute.xlu0 %2781
      %2783 = vrot.lane.b32.xlu0 %v2455, 120
      %v2784 = vpop.permute.xlu0 %2783
      %2785 = vrot.lane.b32.xlu0 %v2457, 120
      %v2786 = vpop.permute.xlu0 %2785
      %2787 = vrot.lane.b32.xlu0 %v2460, 120
      %v2788 = vpop.permute.xlu0 %2787
      %2789 = vrot.lane.b32.xlu0 %v2462, 120
      %v2790 = vpop.permute.xlu0 %2789
      %2791 = vrot.lane.b32.xlu0 %v2465, 120
      %v2792 = vpop.permute.xlu0 %2791
      %2793 = vrot.lane.b32.xlu0 %v2467, 120
      %v2794 = vpop.permute.xlu0 %2793
      %2795 = vrot.lane.b32.xlu0 %v2470, 120
      %v2796 = vpop.permute.xlu0 %2795
      %2797 = vrot.lane.b32.xlu0 %v2472, 120
      %v2798 = vpop.permute.xlu0 %2797
      %2799 = vrot.lane.b32.xlu0 %v2475, 120
      %v2800 = vpop.permute.xlu0 %2799
      %2801 = vrot.lane.b32.xlu0 %v2477, 120
      %v2802 = vpop.permute.xlu0 %2801
      %2803 = vrot.lane.b32.xlu0 %v2480, 120
      %v2804 = vpop.permute.xlu0 %2803
      %2805 = vrot.lane.b32.xlu0 %v2482, 120
      %v2806 = vpop.permute.xlu0 %2805
      %2807 = vrot.lane.b32.xlu0 %v2485, 120
      %v2808 = vpop.permute.xlu0 %2807
      %2809 = vrot.lane.b32.xlu0 %v2487, 120
      %v2810 = vpop.permute.xlu0 %2809
      %2811 = vrot.lane.b32.xlu0 %v2490, 120
      %v2812 = vpop.permute.xlu0 %2811
      %2813 = vrot.lane.b32.xlu0 %v2492, 120
      %v2814 = vpop.permute.xlu0 %2813
      %2815 = vrot.lane.b32.xlu0 %v2495, 120
      %v2816 = vpop.permute.xlu0 %2815
      %2817 = vrot.lane.b32.xlu0 %v2497, 120
      %v2818 = vpop.permute.xlu0 %2817
      %2819 = vrot.lane.b32.xlu0 %v2500, 120
      %v2820 = vpop.permute.xlu0 %2819
      %2821 = vrot.lane.b32.xlu0 %v2502, 120
      %v2822 = vpop.permute.xlu0 %2821
      %2823 = vrot.lane.b32.xlu0 %v2505, 120
      %v2824 = vpop.permute.xlu0 %2823
      %2825 = vrot.lane.b32.xlu0 %v2507, 120
      %v2826 = vpop.permute.xlu0 %2825
      %2827 = vrot.lane.b32.xlu0 %v2510, 120
      %v2828 = vpop.permute.xlu0 %2827
      %2829 = vrot.lane.b32.xlu0 %v2512, 120
      %v2830 = vpop.permute.xlu0 %2829
      %2831 = vrot.lane.b32.xlu0 %v2515, 120
      %v2832 = vpop.permute.xlu0 %2831
      %2833 = vrot.lane.b32.xlu0 %v2517, 120
      %v2834 = vpop.permute.xlu0 %2833
      %2835 = vrot.lane.b32.xlu0 %v2520, 120
      %v2836 = vpop.permute.xlu0 %2835
      %2837 = vrot.lane.b32.xlu0 %v2522, 120
      %v2838 = vpop.permute.xlu0 %2837
      %2839 = vrot.lane.b32.xlu0 %v2525, 120
      %v2840 = vpop.permute.xlu0 %2839
      %2841 = vrot.lane.b32.xlu0 %v2527, 120
      %v2842 = vpop.permute.xlu0 %2841
      %2843 = vrot.lane.b32.xlu0 %v2530, 120
      %v2844 = vpop.permute.xlu0 %2843
      %2845 = vrot.lane.b32.xlu0 %v2532, 120
      %v2846 = vpop.permute.xlu0 %2845
      %2847 = vrot.lane.b32.xlu0 %v2535, 120
      %v2848 = vpop.permute.xlu0 %2847
      %2849 = vrot.lane.b32.xlu0 %v2537, 120
      %v2850 = vpop.permute.xlu0 %2849
      %2851 = vrot.lane.b32.xlu0 %v2540, 120
      %v2852 = vpop.permute.xlu0 %2851
      %2853 = vrot.lane.b32.xlu0 %v2542, 120
      %v2854 = vpop.permute.xlu0 %2853
      %2855 = vrot.lane.b32.xlu0 %v2545, 120
      %v2856 = vpop.permute.xlu0 %2855
      %2857 = vrot.lane.b32.xlu0 %v2547, 120
      %v2858 = vpop.permute.xlu0 %2857
      %2859 = vrot.lane.b32.xlu0 %v2550, 120
      %v2860 = vpop.permute.xlu0 %2859
      %2861 = vrot.lane.b32.xlu0 %v2552, 120
      %v2862 = vpop.permute.xlu0 %2861
      %2863 = vrot.lane.b32.xlu0 %v2555, 120
      %v2864 = vpop.permute.xlu0 %2863
      %2865 = vrot.lane.b32.xlu0 %v2557, 120
      %v2866 = vpop.permute.xlu0 %2865
      %2867 = vrot.lane.b32.xlu0 %v2560, 120
      %v2868 = vpop.permute.xlu0 %2867
      %2869 = vrot.lane.b32.xlu0 %v2562, 120
      %v2870 = vpop.permute.xlu0 %2869
      %2871 = vrot.lane.b32.xlu0 %v2565, 120
      %v2872 = vpop.permute.xlu0 %2871
      %2873 = vrot.lane.b32.xlu0 %v2567, 120
      %v2874 = vpop.permute.xlu0 %2873
      %2875 = vrot.lane.b32.xlu0 %v2570, 120
      %v2876 = vpop.permute.xlu0 %2875
      %2877 = vrot.lane.b32.xlu0 %v2572, 120
      %v2878 = vpop.permute.xlu0 %2877
      %2879 = vrot.lane.b32.xlu0 %v2575, 120
      %v2880 = vpop.permute.xlu0 %2879
      %2881 = vrot.lane.b32.xlu0 %v2577, 120
      %v2882 = vpop.permute.xlu0 %2881
      %2883 = vrot.lane.b32.xlu0 %v2580, 120
      %v2884 = vpop.permute.xlu0 %2883
      %2885 = vrot.lane.b32.xlu0 %v2582, 120
      %v2886 = vpop.permute.xlu0 %2885
      %2887 = vrot.lane.b32.xlu0 %v2585, 120
      %v2888 = vpop.permute.xlu0 %2887
      %2889 = vrot.lane.b32.xlu0 %v2587, 120
      %v2890 = vpop.permute.xlu0 %2889
      %2891 = vrot.lane.b32.xlu0 %v2590, 120
      %v2892 = vpop.permute.xlu0 %2891
      %2893 = vrot.lane.b32.xlu0 %v2592, 120
      %v2894 = vpop.permute.xlu0 %2893
      %2895 = vrot.lane.b32.xlu0 %v2595, 120
      %v2896 = vpop.permute.xlu0 %2895
      %2897 = vrot.lane.b32.xlu0 %v2597, 120
      %v2898 = vpop.permute.xlu0 %2897
      %2899 = vrot.lane.b32.xlu0 %v2600, 120
      %v2900 = vpop.permute.xlu0 %2899
      %2901 = vrot.lane.b32.xlu0 %v2602, 120
      %v2902 = vpop.permute.xlu0 %2901
      %2903 = vrot.lane.b32.xlu0 %v2605, 120
      %v2904 = vpop.permute.xlu0 %2903
      %2905 = vrot.lane.b32.xlu0 %v2607, 120
      %v2906 = vpop.permute.xlu0 %2905
      %2907 = vrot.lane.b32.xlu0 %v2610, 120
      %v2908 = vpop.permute.xlu0 %2907
      %2909 = vrot.lane.b32.xlu0 %v2612, 120
      %v2910 = vpop.permute.xlu0 %2909
      %2911 = vrot.lane.b32.xlu0 %v2615, 120
      %v2912 = vpop.permute.xlu0 %2911
      %2913 = vrot.lane.b32.xlu0 %v2617, 120
      %v2914 = vpop.permute.xlu0 %2913
      %2915 = vrot.lane.b32.xlu0 %v2620, 120
      %v2916 = vpop.permute.xlu0 %2915
      %2917 = vrot.lane.b32.xlu0 %v2622, 120
      %v2918 = vpop.permute.xlu0 %2917
      %2919 = vrot.lane.b32.xlu0 %v2625, 120
      %v2920 = vpop.permute.xlu0 %2919
      %2921 = vrot.lane.b32.xlu0 %v2627, 120
      %v2922 = vpop.permute.xlu0 %2921
      %v3021 = vmax.f32 %v2385, %v2728
      %v3022 = vmax.f32 %v2387, %v2730
      %v3023 = vmax.f32 %v2390, %v2732
      %v3024 = vmax.f32 %v2392, %v2734
      %v3025 = vmax.f32 %v2395, %v2736
      %v3026 = vmax.f32 %v2397, %v2738
      %v3027 = vmax.f32 %v2400, %v2740
      %v3028 = vmax.f32 %v2402, %v2742
      %v3029 = vmax.f32 %v2405, %v2744
      %v3030 = vmax.f32 %v2407, %v2746
      %v3031 = vmax.f32 %v2410, %v2748
      %v3032 = vmax.f32 %v2412, %v2750
      %v3033 = vmax.f32 %v2415, %v2752
      %v3034 = vmax.f32 %v2417, %v2754
      %v3035 = vmax.f32 %v2420, %v2756
      %v3036 = vmax.f32 %v2422, %v2758
      %v3037 = vmax.f32 %v2425, %v2760
      %v3038 = vmax.f32 %v2427, %v2762
      %v3039 = vmax.f32 %v2430, %v2764
      %v3040 = vmax.f32 %v2432, %v2766
      %v3041 = vmax.f32 %v2435, %v2768
      %v3042 = vmax.f32 %v2437, %v2770
      %v3043 = vmax.f32 %v2440, %v2772
      %v3044 = vmax.f32 %v2442, %v2774
      %v3045 = vmax.f32 %v2445, %v2776
      %v3046 = vmax.f32 %v2447, %v2778
      %v3047 = vmax.f32 %v2450, %v2780
      %v3048 = vmax.f32 %v2452, %v2782
      %v3049 = vmax.f32 %v2455, %v2784
      %v3050 = vmax.f32 %v2457, %v2786
      %v3051 = vmax.f32 %v2460, %v2788
      %v3052 = vmax.f32 %v2462, %v2790
      %v3053 = vmax.f32 %v2465, %v2792
      %v3054 = vmax.f32 %v2467, %v2794
      %v3055 = vmax.f32 %v2470, %v2796
      %v3056 = vmax.f32 %v2472, %v2798
      %v3057 = vmax.f32 %v2475, %v2800
      %v3058 = vmax.f32 %v2477, %v2802
      %v3059 = vmax.f32 %v2480, %v2804
      %v3060 = vmax.f32 %v2482, %v2806
      %v3061 = vmax.f32 %v2485, %v2808
      %v3062 = vmax.f32 %v2487, %v2810
      %v3063 = vmax.f32 %v2490, %v2812
      %v3064 = vmax.f32 %v2492, %v2814
      %v3065 = vmax.f32 %v2495, %v2816
      %v3066 = vmax.f32 %v2497, %v2818
      %v3067 = vmax.f32 %v2500, %v2820
      %v3068 = vmax.f32 %v2502, %v2822
      %v3069 = vmax.f32 %v2505, %v2824
      %v3070 = vmax.f32 %v2507, %v2826
      %v3071 = vmax.f32 %v2510, %v2828
      %v3072 = vmax.f32 %v2512, %v2830
      %v3073 = vmax.f32 %v2515, %v2832
      %v3074 = vmax.f32 %v2517, %v2834
      %v3075 = vmax.f32 %v2520, %v2836
      %v3076 = vmax.f32 %v2522, %v2838
      %v3077 = vmax.f32 %v2525, %v2840
      %v3078 = vmax.f32 %v2527, %v2842
      %v3079 = vmax.f32 %v2530, %v2844
      %v3080 = vmax.f32 %v2532, %v2846
      %v3081 = vmax.f32 %v2535, %v2848
      %v3082 = vmax.f32 %v2537, %v2850
      %v3083 = vmax.f32 %v2540, %v2852
      %v3084 = vmax.f32 %v2542, %v2854
      %v3085 = vmax.f32 %v2545, %v2856
      %v3086 = vmax.f32 %v2547, %v2858
      %v3087 = vmax.f32 %v2550, %v2860
      %v3088 = vmax.f32 %v2552, %v2862
      %v3089 = vmax.f32 %v2555, %v2864
      %v3090 = vmax.f32 %v2557, %v2866
      %v3091 = vmax.f32 %v2560, %v2868
      %v3092 = vmax.f32 %v2562, %v2870
      %v3093 = vmax.f32 %v2565, %v2872
      %v3094 = vmax.f32 %v2567, %v2874
      %v3095 = vmax.f32 %v2570, %v2876
      %v3096 = vmax.f32 %v2572, %v2878
      %v3097 = vmax.f32 %v2575, %v2880
      %v3098 = vmax.f32 %v2577, %v2882
      %v3099 = vmax.f32 %v2580, %v2884
      %v3100 = vmax.f32 %v2582, %v2886
      %v3101 = vmax.f32 %v2585, %v2888
      %v3102 = vmax.f32 %v2587, %v2890
      %v3103 = vmax.f32 %v2590, %v2892
      %v3104 = vmax.f32 %v2592, %v2894
      %v3105 = vmax.f32 %v2595, %v2896
      %v3106 = vmax.f32 %v2597, %v2898
      %v3107 = vmax.f32 %v2600, %v2900
      %v3108 = vmax.f32 %v2602, %v2902
      %v3109 = vmax.f32 %v2605, %v2904
      %v3110 = vmax.f32 %v2607, %v2906
      %v3111 = vmax.f32 %v2610, %v2908
      %v3112 = vmax.f32 %v2612, %v2910
      %v3113 = vmax.f32 %v2615, %v2912
      %v3114 = vmax.f32 %v2617, %v2914
      %v3115 = vmax.f32 %v2620, %v2916
      %v3116 = vmax.f32 %v2622, %v2918
      %v3117 = vmax.f32 %v2625, %v2920
      %v3118 = vmax.f32 %v2627, %v2922
      %3119 = vrot.lane.b32.xlu0 %v2385, 112
      %v3120 = vpop.permute.xlu0 %3119
      %3121 = vrot.lane.b32.xlu0 %v2387, 112
      %v3122 = vpop.permute.xlu0 %3121
      %3123 = vrot.lane.b32.xlu0 %v2390, 112
      %v3124 = vpop.permute.xlu0 %3123
      %3125 = vrot.lane.b32.xlu0 %v2392, 112
      %v3126 = vpop.permute.xlu0 %3125
      %3127 = vrot.lane.b32.xlu0 %v2395, 112
      %v3128 = vpop.permute.xlu0 %3127
      %3129 = vrot.lane.b32.xlu0 %v2397, 112
      %v3130 = vpop.permute.xlu0 %3129
      %3131 = vrot.lane.b32.xlu0 %v2400, 112
      %v3132 = vpop.permute.xlu0 %3131
      %3133 = vrot.lane.b32.xlu0 %v2402, 112
      %v3134 = vpop.permute.xlu0 %3133
      %3135 = vrot.lane.b32.xlu0 %v2405, 112
      %v3136 = vpop.permute.xlu0 %3135
      %3137 = vrot.lane.b32.xlu0 %v2407, 112
      %v3138 = vpop.permute.xlu0 %3137
      %3139 = vrot.lane.b32.xlu0 %v2410, 112
      %v3140 = vpop.permute.xlu0 %3139
      %3141 = vrot.lane.b32.xlu0 %v2412, 112
      %v3142 = vpop.permute.xlu0 %3141
      %3143 = vrot.lane.b32.xlu0 %v2415, 112
      %v3144 = vpop.permute.xlu0 %3143
      %3145 = vrot.lane.b32.xlu0 %v2417, 112
      %v3146 = vpop.permute.xlu0 %3145
      %3147 = vrot.lane.b32.xlu0 %v2420, 112
      %v3148 = vpop.permute.xlu0 %3147
      %3149 = vrot.lane.b32.xlu0 %v2422, 112
      %v3150 = vpop.permute.xlu0 %3149
      %3151 = vrot.lane.b32.xlu0 %v2425, 112
      %v3152 = vpop.permute.xlu0 %3151
      %3153 = vrot.lane.b32.xlu0 %v2427, 112
      %v3154 = vpop.permute.xlu0 %3153
      %3155 = vrot.lane.b32.xlu0 %v2430, 112
      %v3156 = vpop.permute.xlu0 %3155
      %3157 = vrot.lane.b32.xlu0 %v2432, 112
      %v3158 = vpop.permute.xlu0 %3157
      %3159 = vrot.lane.b32.xlu0 %v2435, 112
      %v3160 = vpop.permute.xlu0 %3159
      %3161 = vrot.lane.b32.xlu0 %v2437, 112
      %v3162 = vpop.permute.xlu0 %3161
      %3163 = vrot.lane.b32.xlu0 %v2440, 112
      %v3164 = vpop.permute.xlu0 %3163
      %3165 = vrot.lane.b32.xlu0 %v2442, 112
      %v3166 = vpop.permute.xlu0 %3165
      %3167 = vrot.lane.b32.xlu0 %v2445, 112
      %v3168 = vpop.permute.xlu0 %3167
      %3169 = vrot.lane.b32.xlu0 %v2447, 112
      %v3170 = vpop.permute.xlu0 %3169
      %3171 = vrot.lane.b32.xlu0 %v2450, 112
      %v3172 = vpop.permute.xlu0 %3171
      %3173 = vrot.lane.b32.xlu0 %v2452, 112
      %v3174 = vpop.permute.xlu0 %3173
      %3175 = vrot.lane.b32.xlu0 %v2455, 112
      %v3176 = vpop.permute.xlu0 %3175
      %3177 = vrot.lane.b32.xlu0 %v2457, 112
      %v3178 = vpop.permute.xlu0 %3177
      %3179 = vrot.lane.b32.xlu0 %v2460, 112
      %v3180 = vpop.permute.xlu0 %3179
      %3181 = vrot.lane.b32.xlu0 %v2462, 112
      %v3182 = vpop.permute.xlu0 %3181
      %3183 = vrot.lane.b32.xlu0 %v2465, 112
      %v3184 = vpop.permute.xlu0 %3183
      %3185 = vrot.lane.b32.xlu0 %v2467, 112
      %v3186 = vpop.permute.xlu0 %3185
      %3187 = vrot.lane.b32.xlu0 %v2470, 112
      %v3188 = vpop.permute.xlu0 %3187
      %3189 = vrot.lane.b32.xlu0 %v2472, 112
      %v3190 = vpop.permute.xlu0 %3189
      %3191 = vrot.lane.b32.xlu0 %v2475, 112
      %v3192 = vpop.permute.xlu0 %3191
      %3193 = vrot.lane.b32.xlu0 %v2477, 112
      %v3194 = vpop.permute.xlu0 %3193
      %3195 = vrot.lane.b32.xlu0 %v2480, 112
      %v3196 = vpop.permute.xlu0 %3195
      %3197 = vrot.lane.b32.xlu0 %v2482, 112
      %v3198 = vpop.permute.xlu0 %3197
      %3199 = vrot.lane.b32.xlu0 %v2485, 112
      %v3200 = vpop.permute.xlu0 %3199
      %3201 = vrot.lane.b32.xlu0 %v2487, 112
      %v3202 = vpop.permute.xlu0 %3201
      %3203 = vrot.lane.b32.xlu0 %v2490, 112
      %v3204 = vpop.permute.xlu0 %3203
      %3205 = vrot.lane.b32.xlu0 %v2492, 112
      %v3206 = vpop.permute.xlu0 %3205
      %3207 = vrot.lane.b32.xlu0 %v2495, 112
      %v3208 = vpop.permute.xlu0 %3207
      %3209 = vrot.lane.b32.xlu0 %v2497, 112
      %v3210 = vpop.permute.xlu0 %3209
      %3211 = vrot.lane.b32.xlu0 %v2500, 112
      %v3212 = vpop.permute.xlu0 %3211
      %3213 = vrot.lane.b32.xlu0 %v2502, 112
      %v3214 = vpop.permute.xlu0 %3213
      %3215 = vrot.lane.b32.xlu0 %v2505, 112
      %v3216 = vpop.permute.xlu0 %3215
      %3217 = vrot.lane.b32.xlu0 %v2507, 112
      %v3218 = vpop.permute.xlu0 %3217
      %3219 = vrot.lane.b32.xlu0 %v2510, 112
      %v3220 = vpop.permute.xlu0 %3219
      %3221 = vrot.lane.b32.xlu0 %v2512, 112
      %v3222 = vpop.permute.xlu0 %3221
      %3223 = vrot.lane.b32.xlu0 %v2515, 112
      %v3224 = vpop.permute.xlu0 %3223
      %3225 = vrot.lane.b32.xlu0 %v2517, 112
      %v3226 = vpop.permute.xlu0 %3225
      %3227 = vrot.lane.b32.xlu0 %v2520, 112
      %v3228 = vpop.permute.xlu0 %3227
      %3229 = vrot.lane.b32.xlu0 %v2522, 112
      %v3230 = vpop.permute.xlu0 %3229
      %3231 = vrot.lane.b32.xlu0 %v2525, 112
      %v3232 = vpop.permute.xlu0 %3231
      %3233 = vrot.lane.b32.xlu0 %v2527, 112
      %v3234 = vpop.permute.xlu0 %3233
      %3235 = vrot.lane.b32.xlu0 %v2530, 112
      %v3236 = vpop.permute.xlu0 %3235
      %3237 = vrot.lane.b32.xlu0 %v2532, 112
      %v3238 = vpop.permute.xlu0 %3237
      %3239 = vrot.lane.b32.xlu0 %v2535, 112
      %v3240 = vpop.permute.xlu0 %3239
      %3241 = vrot.lane.b32.xlu0 %v2537, 112
      %v3242 = vpop.permute.xlu0 %3241
      %3243 = vrot.lane.b32.xlu0 %v2540, 112
      %v3244 = vpop.permute.xlu0 %3243
      %3245 = vrot.lane.b32.xlu0 %v2542, 112
      %v3246 = vpop.permute.xlu0 %3245
      %3247 = vrot.lane.b32.xlu0 %v2545, 112
      %v3248 = vpop.permute.xlu0 %3247
      %3249 = vrot.lane.b32.xlu0 %v2547, 112
      %v3250 = vpop.permute.xlu0 %3249
      %3251 = vrot.lane.b32.xlu0 %v2550, 112
      %v3252 = vpop.permute.xlu0 %3251
      %3253 = vrot.lane.b32.xlu0 %v2552, 112
      %v3254 = vpop.permute.xlu0 %3253
      %3255 = vrot.lane.b32.xlu0 %v2555, 112
      %v3256 = vpop.permute.xlu0 %3255
      %3257 = vrot.lane.b32.xlu0 %v2557, 112
      %v3258 = vpop.permute.xlu0 %3257
      %3259 = vrot.lane.b32.xlu0 %v2560, 112
      %v3260 = vpop.permute.xlu0 %3259
      %3261 = vrot.lane.b32.xlu0 %v2562, 112
      %v3262 = vpop.permute.xlu0 %3261
      %3263 = vrot.lane.b32.xlu0 %v2565, 112
      %v3264 = vpop.permute.xlu0 %3263
      %3265 = vrot.lane.b32.xlu0 %v2567, 112
      %v3266 = vpop.permute.xlu0 %3265
      %3267 = vrot.lane.b32.xlu0 %v2570, 112
      %v3268 = vpop.permute.xlu0 %3267
      %3269 = vrot.lane.b32.xlu0 %v2572, 112
      %v3270 = vpop.permute.xlu0 %3269
      %3271 = vrot.lane.b32.xlu0 %v2575, 112
      %v3272 = vpop.permute.xlu0 %3271
      %3273 = vrot.lane.b32.xlu0 %v2577, 112
      %v3274 = vpop.permute.xlu0 %3273
      %3275 = vrot.lane.b32.xlu0 %v2580, 112
      %v3276 = vpop.permute.xlu0 %3275
      %3277 = vrot.lane.b32.xlu0 %v2582, 112
      %v3278 = vpop.permute.xlu0 %3277
      %3279 = vrot.lane.b32.xlu0 %v2585, 112
      %v3280 = vpop.permute.xlu0 %3279
      %3281 = vrot.lane.b32.xlu0 %v2587, 112
      %v3282 = vpop.permute.xlu0 %3281
      %3283 = vrot.lane.b32.xlu0 %v2590, 112
      %v3284 = vpop.permute.xlu0 %3283
      %3285 = vrot.lane.b32.xlu0 %v2592, 112
      %v3286 = vpop.permute.xlu0 %3285
      %3287 = vrot.lane.b32.xlu0 %v2595, 112
      %v3288 = vpop.permute.xlu0 %3287
      %3289 = vrot.lane.b32.xlu0 %v2597, 112
      %v3290 = vpop.permute.xlu0 %3289
      %3291 = vrot.lane.b32.xlu0 %v2600, 112
      %v3292 = vpop.permute.xlu0 %3291
      %3293 = vrot.lane.b32.xlu0 %v2602, 112
      %v3294 = vpop.permute.xlu0 %3293
      %3295 = vrot.lane.b32.xlu0 %v2605, 112
      %v3296 = vpop.permute.xlu0 %3295
      %3297 = vrot.lane.b32.xlu0 %v2607, 112
      %v3298 = vpop.permute.xlu0 %3297
      %3299 = vrot.lane.b32.xlu0 %v2610, 112
      %v3300 = vpop.permute.xlu0 %3299
      %3301 = vrot.lane.b32.xlu0 %v2612, 112
      %v3302 = vpop.permute.xlu0 %3301
      %3303 = vrot.lane.b32.xlu0 %v2615, 112
      %v3304 = vpop.permute.xlu0 %3303
      %3305 = vrot.lane.b32.xlu0 %v2617, 112
      %v3306 = vpop.permute.xlu0 %3305
      %3307 = vrot.lane.b32.xlu0 %v2620, 112
      %v3308 = vpop.permute.xlu0 %3307
      %3309 = vrot.lane.b32.xlu0 %v2622, 112
      %v3310 = vpop.permute.xlu0 %3309
      %3311 = vrot.lane.b32.xlu0 %v2625, 112
      %v3312 = vpop.permute.xlu0 %3311
      %3313 = vrot.lane.b32.xlu0 %v2627, 112
      %v3314 = vpop.permute.xlu0 %3313
      %v3413 = vmax.f32 %v3021, %v3120
      %v3414 = vmax.f32 %v3022, %v3122
      %v3415 = vmax.f32 %v3023, %v3124
      %v3416 = vmax.f32 %v3024, %v3126
      %v3417 = vmax.f32 %v3025, %v3128
      %v3418 = vmax.f32 %v3026, %v3130
      %v3419 = vmax.f32 %v3027, %v3132
      %v3420 = vmax.f32 %v3028, %v3134
      %v3421 = vmax.f32 %v3029, %v3136
      %v3422 = vmax.f32 %v3030, %v3138
      %v3423 = vmax.f32 %v3031, %v3140
      %v3424 = vmax.f32 %v3032, %v3142
      %v3425 = vmax.f32 %v3033, %v3144
      %v3426 = vmax.f32 %v3034, %v3146
      %v3427 = vmax.f32 %v3035, %v3148
      %v3428 = vmax.f32 %v3036, %v3150
      %v3429 = vmax.f32 %v3037, %v3152
      %v3430 = vmax.f32 %v3038, %v3154
      %v3431 = vmax.f32 %v3039, %v3156
      %v3432 = vmax.f32 %v3040, %v3158
      %v3433 = vmax.f32 %v3041, %v3160
      %v3434 = vmax.f32 %v3042, %v3162
      %v3435 = vmax.f32 %v3043, %v3164
      %v3436 = vmax.f32 %v3044, %v3166
      %v3437 = vmax.f32 %v3045, %v3168
      %v3438 = vmax.f32 %v3046, %v3170
      %v3439 = vmax.f32 %v3047, %v3172
      %v3440 = vmax.f32 %v3048, %v3174
      %v3441 = vmax.f32 %v3049, %v3176
      %v3442 = vmax.f32 %v3050, %v3178
      %v3443 = vmax.f32 %v3051, %v3180
      %v3444 = vmax.f32 %v3052, %v3182
      %v3445 = vmax.f32 %v3053, %v3184
      %v3446 = vmax.f32 %v3054, %v3186
      %v3447 = vmax.f32 %v3055, %v3188
      %v3448 = vmax.f32 %v3056, %v3190
      %v3449 = vmax.f32 %v3057, %v3192
      %v3450 = vmax.f32 %v3058, %v3194
      %v3451 = vmax.f32 %v3059, %v3196
      %v3452 = vmax.f32 %v3060, %v3198
      %v3453 = vmax.f32 %v3061, %v3200
      %v3454 = vmax.f32 %v3062, %v3202
      %v3455 = vmax.f32 %v3063, %v3204
      %v3456 = vmax.f32 %v3064, %v3206
      %v3457 = vmax.f32 %v3065, %v3208
      %v3458 = vmax.f32 %v3066, %v3210
      %v3459 = vmax.f32 %v3067, %v3212
      %v3460 = vmax.f32 %v3068, %v3214
      %v3461 = vmax.f32 %v3069, %v3216
      %v3462 = vmax.f32 %v3070, %v3218
      %v3463 = vmax.f32 %v3071, %v3220
      %v3464 = vmax.f32 %v3072, %v3222
      %v3465 = vmax.f32 %v3073, %v3224
      %v3466 = vmax.f32 %v3074, %v3226
      %v3467 = vmax.f32 %v3075, %v3228
      %v3468 = vmax.f32 %v3076, %v3230
      %v3469 = vmax.f32 %v3077, %v3232
      %v3470 = vmax.f32 %v3078, %v3234
      %v3471 = vmax.f32 %v3079, %v3236
      %v3472 = vmax.f32 %v3080, %v3238
      %v3473 = vmax.f32 %v3081, %v3240
      %v3474 = vmax.f32 %v3082, %v3242
      %v3475 = vmax.f32 %v3083, %v3244
      %v3476 = vmax.f32 %v3084, %v3246
      %v3477 = vmax.f32 %v3085, %v3248
      %v3478 = vmax.f32 %v3086, %v3250
      %v3479 = vmax.f32 %v3087, %v3252
      %v3480 = vmax.f32 %v3088, %v3254
      %v3481 = vmax.f32 %v3089, %v3256
      %v3482 = vmax.f32 %v3090, %v3258
      %v3483 = vmax.f32 %v3091, %v3260
      %v3484 = vmax.f32 %v3092, %v3262
      %v3485 = vmax.f32 %v3093, %v3264
      %v3486 = vmax.f32 %v3094, %v3266
      %v3487 = vmax.f32 %v3095, %v3268
      %v3488 = vmax.f32 %v3096, %v3270
      %v3489 = vmax.f32 %v3097, %v3272
      %v3490 = vmax.f32 %v3098, %v3274
      %v3491 = vmax.f32 %v3099, %v3276
      %v3492 = vmax.f32 %v3100, %v3278
      %v3493 = vmax.f32 %v3101, %v3280
      %v3494 = vmax.f32 %v3102, %v3282
      %v3495 = vmax.f32 %v3103, %v3284
      %v3496 = vmax.f32 %v3104, %v3286
      %v3497 = vmax.f32 %v3105, %v3288
      %v3498 = vmax.f32 %v3106, %v3290
      %v3499 = vmax.f32 %v3107, %v3292
      %v3500 = vmax.f32 %v3108, %v3294
      %v3501 = vmax.f32 %v3109, %v3296
      %v3502 = vmax.f32 %v3110, %v3298
      %v3503 = vmax.f32 %v3111, %v3300
      %v3504 = vmax.f32 %v3112, %v3302
      %v3505 = vmax.f32 %v3113, %v3304
      %v3506 = vmax.f32 %v3114, %v3306
      %v3507 = vmax.f32 %v3115, %v3308
      %v3508 = vmax.f32 %v3116, %v3310
      %v3509 = vmax.f32 %v3117, %v3312
      %v3510 = vmax.f32 %v3118, %v3314
      %3511 = vrot.lane.b32.xlu0 %v2385, 104
      %v3512 = vpop.permute.xlu0 %3511
      %3513 = vrot.lane.b32.xlu0 %v2387, 104
      %v3514 = vpop.permute.xlu0 %3513
      %3515 = vrot.lane.b32.xlu0 %v2390, 104
      %v3516 = vpop.permute.xlu0 %3515
      %3517 = vrot.lane.b32.xlu0 %v2392, 104
      %v3518 = vpop.permute.xlu0 %3517
      %3519 = vrot.lane.b32.xlu0 %v2395, 104
      %v3520 = vpop.permute.xlu0 %3519
      %3521 = vrot.lane.b32.xlu0 %v2397, 104
      %v3522 = vpop.permute.xlu0 %3521
      %3523 = vrot.lane.b32.xlu0 %v2400, 104
      %v3524 = vpop.permute.xlu0 %3523
      %3525 = vrot.lane.b32.xlu0 %v2402, 104
      %v3526 = vpop.permute.xlu0 %3525
      %3527 = vrot.lane.b32.xlu0 %v2405, 104
      %v3528 = vpop.permute.xlu0 %3527
      %3529 = vrot.lane.b32.xlu0 %v2407, 104
      %v3530 = vpop.permute.xlu0 %3529
      %3531 = vrot.lane.b32.xlu0 %v2410, 104
      %v3532 = vpop.permute.xlu0 %3531
      %3533 = vrot.lane.b32.xlu0 %v2412, 104
      %v3534 = vpop.permute.xlu0 %3533
      %3535 = vrot.lane.b32.xlu0 %v2415, 104
      %v3536 = vpop.permute.xlu0 %3535
      %3537 = vrot.lane.b32.xlu0 %v2417, 104
      %v3538 = vpop.permute.xlu0 %3537
      %3539 = vrot.lane.b32.xlu0 %v2420, 104
      %v3540 = vpop.permute.xlu0 %3539
      %3541 = vrot.lane.b32.xlu0 %v2422, 104
      %v3542 = vpop.permute.xlu0 %3541
      %3543 = vrot.lane.b32.xlu0 %v2425, 104
      %v3544 = vpop.permute.xlu0 %3543
      %3545 = vrot.lane.b32.xlu0 %v2427, 104
      %v3546 = vpop.permute.xlu0 %3545
      %3547 = vrot.lane.b32.xlu0 %v2430, 104
      %v3548 = vpop.permute.xlu0 %3547
      %3549 = vrot.lane.b32.xlu0 %v2432, 104
      %v3550 = vpop.permute.xlu0 %3549
      %3551 = vrot.lane.b32.xlu0 %v2435, 104
      %v3552 = vpop.permute.xlu0 %3551
      %3553 = vrot.lane.b32.xlu0 %v2437, 104
      %v3554 = vpop.permute.xlu0 %3553
      %3555 = vrot.lane.b32.xlu0 %v2440, 104
      %v3556 = vpop.permute.xlu0 %3555
      %3557 = vrot.lane.b32.xlu0 %v2442, 104
      %v3558 = vpop.permute.xlu0 %3557
      %3559 = vrot.lane.b32.xlu0 %v2445, 104
      %v3560 = vpop.permute.xlu0 %3559
      %3561 = vrot.lane.b32.xlu0 %v2447, 104
      %v3562 = vpop.permute.xlu0 %3561
      %3563 = vrot.lane.b32.xlu0 %v2450, 104
      %v3564 = vpop.permute.xlu0 %3563
      %3565 = vrot.lane.b32.xlu0 %v2452, 104
      %v3566 = vpop.permute.xlu0 %3565
      %3567 = vrot.lane.b32.xlu0 %v2455, 104
      %v3568 = vpop.permute.xlu0 %3567
      %3569 = vrot.lane.b32.xlu0 %v2457, 104
      %v3570 = vpop.permute.xlu0 %3569
      %3571 = vrot.lane.b32.xlu0 %v2460, 104
      %v3572 = vpop.permute.xlu0 %3571
      %3573 = vrot.lane.b32.xlu0 %v2462, 104
      %v3574 = vpop.permute.xlu0 %3573
      %3575 = vrot.lane.b32.xlu0 %v2465, 104
      %v3576 = vpop.permute.xlu0 %3575
      %3577 = vrot.lane.b32.xlu0 %v2467, 104
      %v3578 = vpop.permute.xlu0 %3577
      %3579 = vrot.lane.b32.xlu0 %v2470, 104
      %v3580 = vpop.permute.xlu0 %3579
      %3581 = vrot.lane.b32.xlu0 %v2472, 104
      %v3582 = vpop.permute.xlu0 %3581
      %3583 = vrot.lane.b32.xlu0 %v2475, 104
      %v3584 = vpop.permute.xlu0 %3583
      %3585 = vrot.lane.b32.xlu0 %v2477, 104
      %v3586 = vpop.permute.xlu0 %3585
      %3587 = vrot.lane.b32.xlu0 %v2480, 104
      %v3588 = vpop.permute.xlu0 %3587
      %3589 = vrot.lane.b32.xlu0 %v2482, 104
      %v3590 = vpop.permute.xlu0 %3589
      %3591 = vrot.lane.b32.xlu0 %v2485, 104
      %v3592 = vpop.permute.xlu0 %3591
      %3593 = vrot.lane.b32.xlu0 %v2487, 104
      %v3594 = vpop.permute.xlu0 %3593
      %3595 = vrot.lane.b32.xlu0 %v2490, 104
      %v3596 = vpop.permute.xlu0 %3595
      %3597 = vrot.lane.b32.xlu0 %v2492, 104
      %v3598 = vpop.permute.xlu0 %3597
      %3599 = vrot.lane.b32.xlu0 %v2495, 104
      %v3600 = vpop.permute.xlu0 %3599
      %3601 = vrot.lane.b32.xlu0 %v2497, 104
      %v3602 = vpop.permute.xlu0 %3601
      %3603 = vrot.lane.b32.xlu0 %v2500, 104
      %v3604 = vpop.permute.xlu0 %3603
      %3605 = vrot.lane.b32.xlu0 %v2502, 104
      %v3606 = vpop.permute.xlu0 %3605
      %3607 = vrot.lane.b32.xlu0 %v2505, 104
      %v3608 = vpop.permute.xlu0 %3607
      %3609 = vrot.lane.b32.xlu0 %v2507, 104
      %v3610 = vpop.permute.xlu0 %3609
      %3611 = vrot.lane.b32.xlu0 %v2510, 104
      %v3612 = vpop.permute.xlu0 %3611
      %3613 = vrot.lane.b32.xlu0 %v2512, 104
      %v3614 = vpop.permute.xlu0 %3613
      %3615 = vrot.lane.b32.xlu0 %v2515, 104
      %v3616 = vpop.permute.xlu0 %3615
      %3617 = vrot.lane.b32.xlu0 %v2517, 104
      %v3618 = vpop.permute.xlu0 %3617
      %3619 = vrot.lane.b32.xlu0 %v2520, 104
      %v3620 = vpop.permute.xlu0 %3619
      %3621 = vrot.lane.b32.xlu0 %v2522, 104
      %v3622 = vpop.permute.xlu0 %3621
      %3623 = vrot.lane.b32.xlu0 %v2525, 104
      %v3624 = vpop.permute.xlu0 %3623
      %3625 = vrot.lane.b32.xlu0 %v2527, 104
      %v3626 = vpop.permute.xlu0 %3625
      %3627 = vrot.lane.b32.xlu0 %v2530, 104
      %v3628 = vpop.permute.xlu0 %3627
      %3629 = vrot.lane.b32.xlu0 %v2532, 104
      %v3630 = vpop.permute.xlu0 %3629
      %3631 = vrot.lane.b32.xlu0 %v2535, 104
      %v3632 = vpop.permute.xlu0 %3631
      %3633 = vrot.lane.b32.xlu0 %v2537, 104
      %v3634 = vpop.permute.xlu0 %3633
      %3635 = vrot.lane.b32.xlu0 %v2540, 104
      %v3636 = vpop.permute.xlu0 %3635
      %3637 = vrot.lane.b32.xlu0 %v2542, 104
      %v3638 = vpop.permute.xlu0 %3637
      %3639 = vrot.lane.b32.xlu0 %v2545, 104
      %v3640 = vpop.permute.xlu0 %3639
      %3641 = vrot.lane.b32.xlu0 %v2547, 104
      %v3642 = vpop.permute.xlu0 %3641
      %3643 = vrot.lane.b32.xlu0 %v2550, 104
      %v3644 = vpop.permute.xlu0 %3643
      %3645 = vrot.lane.b32.xlu0 %v2552, 104
      %v3646 = vpop.permute.xlu0 %3645
      %3647 = vrot.lane.b32.xlu0 %v2555, 104
      %v3648 = vpop.permute.xlu0 %3647
      %3649 = vrot.lane.b32.xlu0 %v2557, 104
      %v3650 = vpop.permute.xlu0 %3649
      %3651 = vrot.lane.b32.xlu0 %v2560, 104
      %v3652 = vpop.permute.xlu0 %3651
      %3653 = vrot.lane.b32.xlu0 %v2562, 104
      %v3654 = vpop.permute.xlu0 %3653
      %3655 = vrot.lane.b32.xlu0 %v2565, 104
      %v3656 = vpop.permute.xlu0 %3655
      %3657 = vrot.lane.b32.xlu0 %v2567, 104
      %v3658 = vpop.permute.xlu0 %3657
      %3659 = vrot.lane.b32.xlu0 %v2570, 104
      %v3660 = vpop.permute.xlu0 %3659
      %3661 = vrot.lane.b32.xlu0 %v2572, 104
      %v3662 = vpop.permute.xlu0 %3661
      %3663 = vrot.lane.b32.xlu0 %v2575, 104
      %v3664 = vpop.permute.xlu0 %3663
      %3665 = vrot.lane.b32.xlu0 %v2577, 104
      %v3666 = vpop.permute.xlu0 %3665
      %3667 = vrot.lane.b32.xlu0 %v2580, 104
      %v3668 = vpop.permute.xlu0 %3667
      %3669 = vrot.lane.b32.xlu0 %v2582, 104
      %v3670 = vpop.permute.xlu0 %3669
      %3671 = vrot.lane.b32.xlu0 %v2585, 104
      %v3672 = vpop.permute.xlu0 %3671
      %3673 = vrot.lane.b32.xlu0 %v2587, 104
      %v3674 = vpop.permute.xlu0 %3673
      %3675 = vrot.lane.b32.xlu0 %v2590, 104
      %v3676 = vpop.permute.xlu0 %3675
      %3677 = vrot.lane.b32.xlu0 %v2592, 104
      %v3678 = vpop.permute.xlu0 %3677
      %3679 = vrot.lane.b32.xlu0 %v2595, 104
      %v3680 = vpop.permute.xlu0 %3679
      %3681 = vrot.lane.b32.xlu0 %v2597, 104
      %v3682 = vpop.permute.xlu0 %3681
      %3683 = vrot.lane.b32.xlu0 %v2600, 104
      %v3684 = vpop.permute.xlu0 %3683
      %3685 = vrot.lane.b32.xlu0 %v2602, 104
      %v3686 = vpop.permute.xlu0 %3685
      %3687 = vrot.lane.b32.xlu0 %v2605, 104
      %v3688 = vpop.permute.xlu0 %3687
      %3689 = vrot.lane.b32.xlu0 %v2607, 104
      %v3690 = vpop.permute.xlu0 %3689
      %3691 = vrot.lane.b32.xlu0 %v2610, 104
      %v3692 = vpop.permute.xlu0 %3691
      %3693 = vrot.lane.b32.xlu0 %v2612, 104
      %v3694 = vpop.permute.xlu0 %3693
      %3695 = vrot.lane.b32.xlu0 %v2615, 104
      %v3696 = vpop.permute.xlu0 %3695
      %3697 = vrot.lane.b32.xlu0 %v2617, 104
      %v3698 = vpop.permute.xlu0 %3697
      %3699 = vrot.lane.b32.xlu0 %v2620, 104
      %v3700 = vpop.permute.xlu0 %3699
      %3701 = vrot.lane.b32.xlu0 %v2622, 104
      %v3702 = vpop.permute.xlu0 %3701
      %3703 = vrot.lane.b32.xlu0 %v2625, 104
      %v3704 = vpop.permute.xlu0 %3703
      %3705 = vrot.lane.b32.xlu0 %v2627, 104
      %v3706 = vpop.permute.xlu0 %3705
      %v3805 = vmax.f32 %v3413, %v3512
      %v3806 = vmax.f32 %v3414, %v3514
      %v3807 = vmax.f32 %v3415, %v3516
      %v3808 = vmax.f32 %v3416, %v3518
      %v3809 = vmax.f32 %v3417, %v3520
      %v3810 = vmax.f32 %v3418, %v3522
      %v3811 = vmax.f32 %v3419, %v3524
      %v3812 = vmax.f32 %v3420, %v3526
      %v3813 = vmax.f32 %v3421, %v3528
      %v3814 = vmax.f32 %v3422, %v3530
      %v3815 = vmax.f32 %v3423, %v3532
      %v3816 = vmax.f32 %v3424, %v3534
      %v3817 = vmax.f32 %v3425, %v3536
      %v3818 = vmax.f32 %v3426, %v3538
      %v3819 = vmax.f32 %v3427, %v3540
      %v3820 = vmax.f32 %v3428, %v3542
      %v3821 = vmax.f32 %v3429, %v3544
      %v3822 = vmax.f32 %v3430, %v3546
      %v3823 = vmax.f32 %v3431, %v3548
      %v3824 = vmax.f32 %v3432, %v3550
      %v3825 = vmax.f32 %v3433, %v3552
      %v3826 = vmax.f32 %v3434, %v3554
      %v3827 = vmax.f32 %v3435, %v3556
      %v3828 = vmax.f32 %v3436, %v3558
      %v3829 = vmax.f32 %v3437, %v3560
      %v3830 = vmax.f32 %v3438, %v3562
      %v3831 = vmax.f32 %v3439, %v3564
      %v3832 = vmax.f32 %v3440, %v3566
      %v3833 = vmax.f32 %v3441, %v3568
      %v3834 = vmax.f32 %v3442, %v3570
      %v3835 = vmax.f32 %v3443, %v3572
      %v3836 = vmax.f32 %v3444, %v3574
      %v3837 = vmax.f32 %v3445, %v3576
      %v3838 = vmax.f32 %v3446, %v3578
      %v3839 = vmax.f32 %v3447, %v3580
      %v3840 = vmax.f32 %v3448, %v3582
      %v3841 = vmax.f32 %v3449, %v3584
      %v3842 = vmax.f32 %v3450, %v3586
      %v3843 = vmax.f32 %v3451, %v3588
      %v3844 = vmax.f32 %v3452, %v3590
      %v3845 = vmax.f32 %v3453, %v3592
      %v3846 = vmax.f32 %v3454, %v3594
      %v3847 = vmax.f32 %v3455, %v3596
      %v3848 = vmax.f32 %v3456, %v3598
      %v3849 = vmax.f32 %v3457, %v3600
      %v3850 = vmax.f32 %v3458, %v3602
      %v3851 = vmax.f32 %v3459, %v3604
      %v3852 = vmax.f32 %v3460, %v3606
      %v3853 = vmax.f32 %v3461, %v3608
      %v3854 = vmax.f32 %v3462, %v3610
      %v3855 = vmax.f32 %v3463, %v3612
      %v3856 = vmax.f32 %v3464, %v3614
      %v3857 = vmax.f32 %v3465, %v3616
      %v3858 = vmax.f32 %v3466, %v3618
      %v3859 = vmax.f32 %v3467, %v3620
      %v3860 = vmax.f32 %v3468, %v3622
      %v3861 = vmax.f32 %v3469, %v3624
      %v3862 = vmax.f32 %v3470, %v3626
      %v3863 = vmax.f32 %v3471, %v3628
      %v3864 = vmax.f32 %v3472, %v3630
      %v3865 = vmax.f32 %v3473, %v3632
      %v3866 = vmax.f32 %v3474, %v3634
      %v3867 = vmax.f32 %v3475, %v3636
      %v3868 = vmax.f32 %v3476, %v3638
      %v3869 = vmax.f32 %v3477, %v3640
      %v3870 = vmax.f32 %v3478, %v3642
      %v3871 = vmax.f32 %v3479, %v3644
      %v3872 = vmax.f32 %v3480, %v3646
      %v3873 = vmax.f32 %v3481, %v3648
      %v3874 = vmax.f32 %v3482, %v3650
      %v3875 = vmax.f32 %v3483, %v3652
      %v3876 = vmax.f32 %v3484, %v3654
      %v3877 = vmax.f32 %v3485, %v3656
      %v3878 = vmax.f32 %v3486, %v3658
      %v3879 = vmax.f32 %v3487, %v3660
      %v3880 = vmax.f32 %v3488, %v3662
      %v3881 = vmax.f32 %v3489, %v3664
      %v3882 = vmax.f32 %v3490, %v3666
      %v3883 = vmax.f32 %v3491, %v3668
      %v3884 = vmax.f32 %v3492, %v3670
      %v3885 = vmax.f32 %v3493, %v3672
      %v3886 = vmax.f32 %v3494, %v3674
      %v3887 = vmax.f32 %v3495, %v3676
      %v3888 = vmax.f32 %v3496, %v3678
      %v3889 = vmax.f32 %v3497, %v3680
      %v3890 = vmax.f32 %v3498, %v3682
      %v3891 = vmax.f32 %v3499, %v3684
      %v3892 = vmax.f32 %v3500, %v3686
      %v3893 = vmax.f32 %v3501, %v3688
      %v3894 = vmax.f32 %v3502, %v3690
      %v3895 = vmax.f32 %v3503, %v3692
      %v3896 = vmax.f32 %v3504, %v3694
      %v3897 = vmax.f32 %v3505, %v3696
      %v3898 = vmax.f32 %v3506, %v3698
      %v3899 = vmax.f32 %v3507, %v3700
      %v3900 = vmax.f32 %v3508, %v3702
      %v3901 = vmax.f32 %v3509, %v3704
      %v3902 = vmax.f32 %v3510, %v3706
      %v3903 = vpack.c.bf16 %v3805, %v3805
      %v3904 = vpack.c.bf16 %v3806, %v3806
      %v3905 = vpack.c.bf16 %v3807, %v3807
      %v3906 = vpack.c.bf16 %v3808, %v3808
      %v3907 = vpack.c.bf16 %v3809, %v3809
      %v3908 = vpack.c.bf16 %v3810, %v3810
      %v3909 = vpack.c.bf16 %v3811, %v3811
      %v3910 = vpack.c.bf16 %v3812, %v3812
      %v3911 = vpack.c.bf16 %v3813, %v3813
      %v3912 = vpack.c.bf16 %v3814, %v3814
      %v3913 = vpack.c.bf16 %v3815, %v3815
      %v3914 = vpack.c.bf16 %v3816, %v3816
      %v3915 = vpack.c.bf16 %v3817, %v3817
      %v3916 = vpack.c.bf16 %v3818, %v3818
      %v3917 = vpack.c.bf16 %v3819, %v3819
      %v3918 = vpack.c.bf16 %v3820, %v3820
      %v3919 = vpack.c.bf16 %v3821, %v3821
      %v3920 = vpack.c.bf16 %v3822, %v3822
      %v3921 = vpack.c.bf16 %v3823, %v3823
      %v3922 = vpack.c.bf16 %v3824, %v3824
      %v3923 = vpack.c.bf16 %v3825, %v3825
      %v3924 = vpack.c.bf16 %v3826, %v3826
      %v3925 = vpack.c.bf16 %v3827, %v3827
      %v3926 = vpack.c.bf16 %v3828, %v3828
      %v3927 = vpack.c.bf16 %v3829, %v3829
      %v3928 = vpack.c.bf16 %v3830, %v3830
      %v3929 = vpack.c.bf16 %v3831, %v3831
      %v3930 = vpack.c.bf16 %v3832, %v3832
      %v3931 = vpack.c.bf16 %v3833, %v3833
      %v3932 = vpack.c.bf16 %v3834, %v3834
      %v3933 = vpack.c.bf16 %v3835, %v3835
      %v3934 = vpack.c.bf16 %v3836, %v3836
      %v3935 = vpack.c.bf16 %v3837, %v3837
      %v3936 = vpack.c.bf16 %v3838, %v3838
      %v3937 = vpack.c.bf16 %v3839, %v3839
      %v3938 = vpack.c.bf16 %v3840, %v3840
      %v3939 = vpack.c.bf16 %v3841, %v3841
      %v3940 = vpack.c.bf16 %v3842, %v3842
      %v3941 = vpack.c.bf16 %v3843, %v3843
      %v3942 = vpack.c.bf16 %v3844, %v3844
      %v3943 = vpack.c.bf16 %v3845, %v3845
      %v3944 = vpack.c.bf16 %v3846, %v3846
      %v3945 = vpack.c.bf16 %v3847, %v3847
      %v3946 = vpack.c.bf16 %v3848, %v3848
      %v3947 = vpack.c.bf16 %v3849, %v3849
      %v3948 = vpack.c.bf16 %v3850, %v3850
      %v3949 = vpack.c.bf16 %v3851, %v3851
      %v3950 = vpack.c.bf16 %v3852, %v3852
      %v3951 = vpack.c.bf16 %v3853, %v3853
      %v3952 = vpack.c.bf16 %v3854, %v3854
      %v3953 = vpack.c.bf16 %v3855, %v3855
      %v3954 = vpack.c.bf16 %v3856, %v3856
      %v3955 = vpack.c.bf16 %v3857, %v3857
      %v3956 = vpack.c.bf16 %v3858, %v3858
      %v3957 = vpack.c.bf16 %v3859, %v3859
      %v3958 = vpack.c.bf16 %v3860, %v3860
      %v3959 = vpack.c.bf16 %v3861, %v3861
      %v3960 = vpack.c.bf16 %v3862, %v3862
      %v3961 = vpack.c.bf16 %v3863, %v3863
      %v3962 = vpack.c.bf16 %v3864, %v3864
      %v3963 = vpack.c.bf16 %v3865, %v3865
      %v3964 = vpack.c.bf16 %v3866, %v3866
      %v3965 = vpack.c.bf16 %v3867, %v3867
      %v3966 = vpack.c.bf16 %v3868, %v3868
      %v3967 = vpack.c.bf16 %v3869, %v3869
      %v3968 = vpack.c.bf16 %v3870, %v3870
      %v3969 = vpack.c.bf16 %v3871, %v3871
      %v3970 = vpack.c.bf16 %v3872, %v3872
      %v3971 = vpack.c.bf16 %v3873, %v3873
      %v3972 = vpack.c.bf16 %v3874, %v3874
      %v3973 = vpack.c.bf16 %v3875, %v3875
      %v3974 = vpack.c.bf16 %v3876, %v3876
      %v3975 = vpack.c.bf16 %v3877, %v3877
      %v3976 = vpack.c.bf16 %v3878, %v3878
      %v3977 = vpack.c.bf16 %v3879, %v3879
      %v3978 = vpack.c.bf16 %v3880, %v3880
      %v3979 = vpack.c.bf16 %v3881, %v3881
      %v3980 = vpack.c.bf16 %v3882, %v3882
      %v3981 = vpack.c.bf16 %v3883, %v3883
      %v3982 = vpack.c.bf16 %v3884, %v3884
      %v3983 = vpack.c.bf16 %v3885, %v3885
      %v3984 = vpack.c.bf16 %v3886, %v3886
      %v3985 = vpack.c.bf16 %v3887, %v3887
      %v3986 = vpack.c.bf16 %v3888, %v3888
      %v3987 = vpack.c.bf16 %v3889, %v3889
      %v3988 = vpack.c.bf16 %v3890, %v3890
      %v3989 = vpack.c.bf16 %v3891, %v3891
      %v3990 = vpack.c.bf16 %v3892, %v3892
      %v3991 = vpack.c.bf16 %v3893, %v3893
      %v3992 = vpack.c.bf16 %v3894, %v3894
      %v3993 = vpack.c.bf16 %v3895, %v3895
      %v3994 = vpack.c.bf16 %v3896, %v3896
      %v3995 = vpack.c.bf16 %v3897, %v3897
      %v3996 = vpack.c.bf16 %v3898, %v3898
      %v3997 = vpack.c.bf16 %v3899, %v3899
      %v3998 = vpack.c.bf16 %v3900, %v3900
      %v3999 = vpack.c.bf16 %v3901, %v3901
      %v4000 = vpack.c.bf16 %v3902, %v3902
      %vm4001 = vcmask 60416
      %4002 = vst.msk [vmem:[%s175] sm:$0xf] %vm4001, %v3903
      %4003 = vst.msk [vmem:[%s175 + $0x4] sm:$0xf] %vm4001, %v3904
      %4004 = vst.msk [vmem:[%s175 + $0x8] sm:$0xf] %vm4001, %v3905
      %4005 = vst.msk [vmem:[%s175 + $0xc] sm:$0xf] %vm4001, %v3906
      %4006 = vst.msk [vmem:[%s175 + $0x10] sm:$0xf] %vm4001, %v3907
      %4007 = vst.msk [vmem:[%s175 + $0x14] sm:$0xf] %vm4001, %v3908
      %4008 = vst.msk [vmem:[%s175 + $0x18] sm:$0xf] %vm4001, %v3909
      %4009 = vst.msk [vmem:[%s175 + $0x1c] sm:$0xf] %vm4001, %v3910
      %4010 = vst.msk [vmem:[%s175 + $0x20] sm:$0xf] %vm4001, %v3911
      %4011 = vst.msk [vmem:[%s175 + $0x24] sm:$0xf] %vm4001, %v3912
      %4012 = vst.msk [vmem:[%s175 + $0x28] sm:$0xf] %vm4001, %v3913
      %4013 = vst.msk [vmem:[%s175 + $0x2c] sm:$0xf] %vm4001, %v3914
      %4014 = vst.msk [vmem:[%s175 + $0x30] sm:$0xf] %vm4001, %v3915
      %4015 = vst.msk [vmem:[%s175 + $0x34] sm:$0xf] %vm4001, %v3916
      %4016 = vst.msk [vmem:[%s175 + $0x38] sm:$0xf] %vm4001, %v3917
      %4017 = vst.msk [vmem:[%s175 + $0x3c] sm:$0xf] %vm4001, %v3918
      %4018 = vst.msk [vmem:[%s175 + $0x40] sm:$0xf] %vm4001, %v3919
      %4019 = vst.msk [vmem:[%s175 + $0x44] sm:$0xf] %vm4001, %v3920
      %4020 = vst.msk [vmem:[%s175 + $0x48] sm:$0xf] %vm4001, %v3921
      %4021 = vst.msk [vmem:[%s175 + $0x4c] sm:$0xf] %vm4001, %v3922
      %4022 = vst.msk [vmem:[%s175 + $0x50] sm:$0xf] %vm4001, %v3923
      %4023 = vst.msk [vmem:[%s175 + $0x54] sm:$0xf] %vm4001, %v3924
      %4024 = vst.msk [vmem:[%s175 + $0x58] sm:$0xf] %vm4001, %v3925
      %4025 = vst.msk [vmem:[%s175 + $0x5c] sm:$0xf] %vm4001, %v3926
      %4026 = vst.msk [vmem:[%s175 + $0x60] sm:$0xf] %vm4001, %v3927
      %4027 = vst.msk [vmem:[%s175 + $0x64] sm:$0xf] %vm4001, %v3928
      %4028 = vst.msk [vmem:[%s175 + $0x68] sm:$0xf] %vm4001, %v3929
      %4029 = vst.msk [vmem:[%s175 + $0x6c] sm:$0xf] %vm4001, %v3930
      %4030 = vst.msk [vmem:[%s175 + $0x70] sm:$0xf] %vm4001, %v3931
      %4031 = vst.msk [vmem:[%s175 + $0x74] sm:$0xf] %vm4001, %v3932
      %4032 = vst.msk [vmem:[%s175 + $0x78] sm:$0xf] %vm4001, %v3933
      %4033 = vst.msk [vmem:[%s175 + $0x7c] sm:$0xf] %vm4001, %v3934
      %4034 = vst.msk [vmem:[%s175 + $0x80] sm:$0xf] %vm4001, %v3935
      %4035 = vst.msk [vmem:[%s175 + $0x84] sm:$0xf] %vm4001, %v3936
      %4036 = vst.msk [vmem:[%s175 + $0x88] sm:$0xf] %vm4001, %v3937
      %4037 = vst.msk [vmem:[%s175 + $0x8c] sm:$0xf] %vm4001, %v3938
      %4038 = vst.msk [vmem:[%s175 + $0x90] sm:$0xf] %vm4001, %v3939
      %4039 = vst.msk [vmem:[%s175 + $0x94] sm:$0xf] %vm4001, %v3940
      %4040 = vst.msk [vmem:[%s175 + $0x98] sm:$0xf] %vm4001, %v3941
      %4041 = vst.msk [vmem:[%s175 + $0x9c] sm:$0xf] %vm4001, %v3942
      %4042 = vst.msk [vmem:[%s175 + $0xa0] sm:$0xf] %vm4001, %v3943
      %4043 = vst.msk [vmem:[%s175 + $0xa4] sm:$0xf] %vm4001, %v3944
      %4044 = vst.msk [vmem:[%s175 + $0xa8] sm:$0xf] %vm4001, %v3945
      %4045 = vst.msk [vmem:[%s175 + $0xac] sm:$0xf] %vm4001, %v3946
      %4046 = vst.msk [vmem:[%s175 + $0xb0] sm:$0xf] %vm4001, %v3947
      %4047 = vst.msk [vmem:[%s175 + $0xb4] sm:$0xf] %vm4001, %v3948
      %4048 = vst.msk [vmem:[%s175 + $0xb8] sm:$0xf] %vm4001, %v3949
      %4049 = vst.msk [vmem:[%s175 + $0xbc] sm:$0xf] %vm4001, %v3950
      %4050 = vst.msk [vmem:[%s175 + $0xc0] sm:$0xf] %vm4001, %v3951
      %4051 = vst.msk [vmem:[%s175 + $0xc4] sm:$0xf] %vm4001, %v3952
      %4052 = vst.msk [vmem:[%s175 + $0xc8] sm:$0xf] %vm4001, %v3953
      %4053 = vst.msk [vmem:[%s175 + $0xcc] sm:$0xf] %vm4001, %v3954
      %4054 = vst.msk [vmem:[%s175 + $0xd0] sm:$0xf] %vm4001, %v3955
      %4055 = vst.msk [vmem:[%s175 + $0xd4] sm:$0xf] %vm4001, %v3956
      %4056 = vst.msk [vmem:[%s175 + $0xd8] sm:$0xf] %vm4001, %v3957
      %4057 = vst.msk [vmem:[%s175 + $0xdc] sm:$0xf] %vm4001, %v3958
      %4058 = vst.msk [vmem:[%s175 + $0xe0] sm:$0xf] %vm4001, %v3959
      %4059 = vst.msk [vmem:[%s175 + $0xe4] sm:$0xf] %vm4001, %v3960
      %4060 = vst.msk [vmem:[%s175 + $0xe8] sm:$0xf] %vm4001, %v3961
      %4061 = vst.msk [vmem:[%s175 + $0xec] sm:$0xf] %vm4001, %v3962
      %4062 = vst.msk [vmem:[%s175 + $0xf0] sm:$0xf] %vm4001, %v3963
      %4063 = vst.msk [vmem:[%s175 + $0xf4] sm:$0xf] %vm4001, %v3964
      %4064 = vst.msk [vmem:[%s175 + $0xf8] sm:$0xf] %vm4001, %v3965
      %4065 = vst.msk [vmem:[%s175 + $0xfc] sm:$0xf] %vm4001, %v3966
      %4066 = vst.msk [vmem:[%s175 + $0x100] sm:$0xf] %vm4001, %v3967
      %4067 = vst.msk [vmem:[%s175 + $0x104] sm:$0xf] %vm4001, %v3968
      %4068 = vst.msk [vmem:[%s175 + $0x108] sm:$0xf] %vm4001, %v3969
      %4069 = vst.msk [vmem:[%s175 + $0x10c] sm:$0xf] %vm4001, %v3970
      %4070 = vst.msk [vmem:[%s175 + $0x110] sm:$0xf] %vm4001, %v3971
      %4071 = vst.msk [vmem:[%s175 + $0x114] sm:$0xf] %vm4001, %v3972
      %4072 = vst.msk [vmem:[%s175 + $0x118] sm:$0xf] %vm4001, %v3973
      %4073 = vst.msk [vmem:[%s175 + $0x11c] sm:$0xf] %vm4001, %v3974
      %4074 = vst.msk [vmem:[%s175 + $0x120] sm:$0xf] %vm4001, %v3975
      %4075 = vst.msk [vmem:[%s175 + $0x124] sm:$0xf] %vm4001, %v3976
      %4076 = vst.msk [vmem:[%s175 + $0x128] sm:$0xf] %vm4001, %v3977
      %4077 = vst.msk [vmem:[%s175 + $0x12c] sm:$0xf] %vm4001, %v3978
      %4078 = vst.msk [vmem:[%s175 + $0x130] sm:$0xf] %vm4001, %v3979
      %4079 = vst.msk [vmem:[%s175 + $0x134] sm:$0xf] %vm4001, %v3980
      %4080 = vst.msk [vmem:[%s175 + $0x138] sm:$0xf] %vm4001, %v3981
      %4081 = vst.msk [vmem:[%s175 + $0x13c] sm:$0xf] %vm4001, %v3982
      %4082 = vst.msk [vmem:[%s175 + $0x140] sm:$0xf] %vm4001, %v3983
      %4083 = vst.msk [vmem:[%s175 + $0x144] sm:$0xf] %vm4001, %v3984
      %4084 = vst.msk [vmem:[%s175 + $0x148] sm:$0xf] %vm4001, %v3985
      %4085 = vst.msk [vmem:[%s175 + $0x14c] sm:$0xf] %vm4001, %v3986
      %4086 = vst.msk [vmem:[%s175 + $0x150] sm:$0xf] %vm4001, %v3987
      %4087 = vst.msk [vmem:[%s175 + $0x154] sm:$0xf] %vm4001, %v3988
      %4088 = vst.msk [vmem:[%s175 + $0x158] sm:$0xf] %vm4001, %v3989
      %4089 = vst.msk [vmem:[%s175 + $0x15c] sm:$0xf] %vm4001, %v3990
      %4090 = vst.msk [vmem:[%s175 + $0x160] sm:$0xf] %vm4001, %v3991
      %4091 = vst.msk [vmem:[%s175 + $0x164] sm:$0xf] %vm4001, %v3992
      %4092 = vst.msk [vmem:[%s175 + $0x168] sm:$0xf] %vm4001, %v3993
      %4093 = vst.msk [vmem:[%s175 + $0x16c] sm:$0xf] %vm4001, %v3994
      %4094 = vst.msk [vmem:[%s175 + $0x170] sm:$0xf] %vm4001, %v3995
      %4095 = vst.msk [vmem:[%s175 + $0x174] sm:$0xf] %vm4001, %v3996
      %4096 = vst.msk [vmem:[%s175 + $0x178] sm:$0xf] %vm4001, %v3997
      %4097 = vst.msk [vmem:[%s175 + $0x17c] sm:$0xf] %vm4001, %v3998
      %4098 = vst.msk [vmem:[%s175 + $0x180] sm:$0xf] %vm4001, %v3999
      %4099 = vst.msk [vmem:[%s175 + $0x184] sm:$0xf] %vm4001, %v4000
      %s4100 = smul.u32 98, %s14
      %p4101 = scmp.lt.s32.totalorder %s4100, 195
      %s4102 = scalar_select %p4101, %s4100, 195
      %s4103 = smul.addr %s4102, 4
      %s4104 = scalar_lea.vmem %s3, %s4103
      // Predicated region
      $region33: #{cnn_forward.4} parent=31 // pred_check
        %p4105 = pneg %p100
      $region34: #{cnn_forward.4} parent=31 // pred_check_branch
        %4107 = sbr.rel (%p4105) target = $region36
      $region35: #{cnn_forward.4} parent=31 // pred_region
        %s4108 = smul.u32 98, %s14
      $region36: #{cnn_forward.4} parent=31 // pred_fallthru
        _
    $region32: #{cnn_forward.4} parent=5 // pred_fallthru
      _
    %p4109 = scmp.le.s32.totalorder 2, %s9
    // Predicated region
    $region37: #{cnn_forward.4} parent=5 // pred_check
      %p4110 = pneg %p4109
    $region38: #{cnn_forward.4} parent=5 // pred_check_branch
      %4112 = sbr.rel (%p4110) target = $region40
    $region39: #{cnn_forward.4} parent=5 // pred_region
      %s4113 = ssub.s32 %s9, 2
      // Predicated region
      $region41: #{cnn_forward.4} parent=39 // pred_check
        %p4114 = pneg %p106
      $region42: #{cnn_forward.4} parent=39 // pred_check_branch
        %4116 = sbr.rel (%p4114) target = $region44
      $region43: #{cnn_forward.4} parent=39 // pred_region
        %s4117 = smul.u32 98, %s15
        %p4118 = scmp.lt.s32.totalorder %s4117, 195
        %s4119 = scalar_select %p4118, %s4117, 195
        %s4120 = smul.addr %s4119, 4
        %s4121 = scalar_lea.vmem %s3, %s4120
      $region44: #{cnn_forward.4} parent=39 // pred_fallthru
        _
    $region40: #{cnn_forward.4} parent=5 // pred_fallthru
      _
  $region6: #{cnn_forward.4} parent=0 // loop_footer
    %s13 = sadd.s32 1, %s9
  $region7: #{cnn_forward.4} parent=0 // loop_footer_branch
    %8 = sbr.rel target = $region3
  $region8: #{cnn_forward.4} parent=0 // loop_exit
    _

// kernel: cnn_forward.5
$region0: #{cnn_forward.5}
  #allocation0 [shape = 'u32[]', space=smem, size = 0x4, offset = 0x4, fixed_abs, tag = 'smem constant byte address 0x4 - core index']
  #allocation1 [shape = 'u32[72,128]{1,0:T(1,128)}', space=vmem, size = 0x9000, scoped, tag = 'internal scratch']
  %s0 = inlined_call_operand.vmem [shape: bf16[1568,128], index: 0, kind: input, shape index: {}]
  %s1 = inlined_call_operand.vmem [shape: bf16[128,4], index: 1, kind: input, shape index: {}]
  %s2 = inlined_call_operand.vmem [shape: f32[1,4], index: 2, kind: input, shape index: {}]
  %s3 = inlined_call_operand.vmem [shape: bf16[784,10], index: 3, kind: input, shape index: {}]
  %s4 = inlined_call_operand.vmem [shape: f32[1,10], index: 4, kind: input, shape index: {}]
  %s5 = inlined_call_operand.hbm [shape: f32[2,1,10], index: 5, kind: output, shape index: {}]
  %s6 = sld [smem:[#allocation0]]
  $region53: #{cnn_forward.5} parent=0
    _
  %s8 = ssub.s32 1, %s6
  %s9 = scalar_select 0, %s8, %s6
  $region1: #{cnn_forward.5} parent=0
    #allocation2 [shape = 'u8[1024]{0}', space=vmem, size = 0x400, scoped, tag = 'output window, operand 0']
    #allocation3 [shape = 's32[2]{0}', space=sflag, size = 0x8, scoped, tag = 'scoped memory for cnn_forward.5']
    %10 = vsyncpa [#allocation3], 0
    %s11 = scalar_lea.sflag [#allocation3], 1
    %12 = vsyncpa %s11, 0
    loop: start=0, step=1, limit=4
    $region2: #{cnn_forward.5} parent=1 // loop_pre_header
      _
    $region3: #{cnn_forward.5} parent=1 // loop_header
      %s14 = sphi 0, %s18
      %p15 = scmp.ge.s32.totalorder %s14, 4
      %s24 = sphi 0, %s26
      %s27 = sphi 0, %s24
      %s28 = sphi 0, %s27
      %s44 = sphi 0, %s28
      %s48 = sphi 0, %s48
      %s50 = sphi 0, %s48
      %s51 = sphi 0, %s50
      %s65 = sphi 0, %s51
      %s69 = sphi 0, %s69
      %s71 = sphi 0, %s69
      %s72 = sphi 0, %s71
      %s86 = sphi 0, %s72
      %s90 = sphi 0, %s90
      %s92 = sphi 0, %s90
      %s93 = sphi 0, %s92
      %s107 = sphi 0, %s93
      %s111 = sphi 0, %s111
      %s113 = sphi 0, %s111
      %s114 = sphi 0, %s113
      %s128 = sphi 0, %s114
      %s134 = sphi 0, %s136
      %s137 = sphi 0, %s134
      %s138 = sphi 0, %s137
      %s154 = sphi 0, %s138
    $region4: #{cnn_forward.5} parent=1 // loop_header_branch
      %17 = sbr.rel (%p15) target = $region8
    $region5: #{cnn_forward.5} parent=1 // loop_body
      %s19 = ssub.s32 %s14, 1
      %s20 = ssub.s32 %s14, 2
      %s21 = sadd.s32 %s14, 1
      %s22 = ssub.s32 %s14, %s21
      %p23 = scmp.eq.s32.totalorder %s22, 0
      %s25 = sadd.s32 %s24, 1
      %s26 = scalar_select %p23, %s24, %s25
      %p29 = pneg %p23
      %p30 = scmp.eq.s32.totalorder %s14, 1
      %p31 = por %p29, %p30
      %p32 = scmp.ne.s32.totalorder %s24, %s27
      %p33 = scmp.eq.s32.totalorder %s14, 0
      %p34 = por %p32, %p33
      %p35 = scmp.ne.s32.totalorder %s24, %s27
      %p36 = scmp.eq.s32.totalorder %s19, 1
      %p37 = por %p35, %p36
      %p38 = scmp.ne.s32.totalorder %s27, %s28
      %p39 = scmp.eq.s32.totalorder %s19, 0
      %p40 = por %p38, %p39
      %p41 = scmp.ne.s32.totalorder %s27, %s28
      %p42 = scmp.eq.s32.totalorder %s20, 1
      %p43 = por %p41, %p42
      %p45 = scmp.ne.s32.totalorder %s28, %s44
      %p46 = scmp.eq.s32.totalorder %s20, 0
      %p47 = por %p45, %p46
      %s49 = sadd.s32 %s48, 1
      %p52 = scmp.eq.s32.totalorder %s14, 1
      %p53 = scmp.ne.s32.totalorder %s48, %s50
      %p54 = scmp.eq.s32.totalorder %s14, 0
      %p55 = por %p53, %p54
      %p56 = scmp.ne.s32.totalorder %s48, %s50
      %p57 = scmp.eq.s32.totalorder %s19, 1
      %p58 = por %p56, %p57
      %p59 = scmp.ne.s32.totalorder %s50, %s51
      %p60 = scmp.eq.s32.totalorder %s19, 0
      %p61 = por %p59, %p60
      %p62 = scmp.ne.s32.totalorder %s50, %s51
      %p63 = scmp.eq.s32.totalorder %s20, 1
      %p64 = por %p62, %p63
      %p66 = scmp.ne.s32.totalorder %s51, %s65
      %p67 = scmp.eq.s32.totalorder %s20, 0
      %p68 = por %p66, %p67
      %s70 = sadd.s32 %s69, 1
      %p73 = scmp.eq.s32.totalorder %s14, 1
      %p74 = scmp.ne.s32.totalorder %s69, %s71
      %p75 = scmp.eq.s32.totalorder %s14, 0
      %p76 = por %p74, %p75
      %p77 = scmp.ne.s32.totalorder %s69, %s71
      %p78 = scmp.eq.s32.totalorder %s19, 1
      %p79 = por %p77, %p78
      %p80 = scmp.ne.s32.totalorder %s71, %s72
      %p81 = scmp.eq.s32.totalorder %s19, 0
      %p82 = por %p80, %p81
      %p83 = scmp.ne.s32.totalorder %s71, %s72
      %p84 = scmp.eq.s32.totalorder %s20, 1
      %p85 = por %p83, %p84
      %p87 = scmp.ne.s32.totalorder %s72, %s86
      %p88 = scmp.eq.s32.totalorder %s20, 0
      %p89 = por %p87, %p88
      %s91 = sadd.s32 %s90, 1
      %p94 = scmp.eq.s32.totalorder %s14, 1
      %p95 = scmp.ne.s32.totalorder %s90, %s92
      %p96 = scmp.eq.s32.totalorder %s14, 0
      %p97 = por %p95, %p96
      %p98 = scmp.ne.s32.totalorder %s90, %s92
      %p99 = scmp.eq.s32.totalorder %s19, 1
      %p100 = por %p98, %p99
      %p101 = scmp.ne.s32.totalorder %s92, %s93
      %p102 = scmp.eq.s32.totalorder %s19, 0
      %p103 = por %p101, %p102
      %p104 = scmp.ne.s32.totalorder %s92, %s93
      %p105 = scmp.eq.s32.totalorder %s20, 1
      %p106 = por %p104, %p105
      %p108 = scmp.ne.s32.totalorder %s93, %s107
      %p109 = scmp.eq.s32.totalorder %s20, 0
      %p110 = por %p108, %p109
      %s112 = sadd.s32 %s111, 1
      %p115 = scmp.eq.s32.totalorder %s14, 1
      %p116 = scmp.ne.s32.totalorder %s111, %s113
      %p117 = scmp.eq.s32.totalorder %s14, 0
      %p118 = por %p116, %p117
      %p119 = scmp.ne.s32.totalorder %s111, %s113
      %p120 = scmp.eq.s32.totalorder %s19, 1
      %p121 = por %p119, %p120
      %p122 = scmp.ne.s32.totalorder %s113, %s114
      %p123 = scmp.eq.s32.totalorder %s19, 0
      %p124 = por %p122, %p123
      %p125 = scmp.ne.s32.totalorder %s113, %s114
      %p126 = scmp.eq.s32.totalorder %s20, 1
      %p127 = por %p125, %p126
      %p129 = scmp.ne.s32.totalorder %s114, %s128
      %p130 = scmp.eq.s32.totalorder %s20, 0
      %p131 = por %p129, %p130
      %s132 = ssub.s32 %s14, %s21
      %p133 = scmp.eq.s32.totalorder %s132, 0
      %s135 = sadd.s32 %s134, 1
      %s136 = scalar_select %p133, %s134, %s135
      %p139 = pneg %p133
      %p140 = scmp.eq.s32.totalorder %s14, 1
      %p141 = por %p139, %p140
      %p142 = scmp.ne.s32.totalorder %s134, %s137
      %p143 = scmp.eq.s32.totalorder %s14, 0
      %p144 = por %p142, %p143
      %p145 = scmp.ne.s32.totalorder %s134, %s137
      %p146 = scmp.eq.s32.totalorder %s19, 1
      %p147 = por %p145, %p146
      %p148 = scmp.ne.s32.totalorder %s137, %s138
      %p149 = scmp.eq.s32.totalorder %s19, 0
      %p150 = por %p148, %p149
      %p151 = scmp.ne.s32.totalorder %s137, %s138
      %p152 = scmp.eq.s32.totalorder %s20, 1
      %p153 = por %p151, %p152
      %p155 = scmp.ne.s32.totalorder %s138, %s154
      %p156 = scmp.eq.s32.totalorder %s20, 0
      %p157 = por %p155, %p156
      %p158 = scmp.le.s32.totalorder 1, %s14
      %p159 = scmp.lt.s32.totalorder %s14, 3
      %p160 = pnand %p158, %p159
      %p161 = pneg %p160
      // Predicated region
      $region9: #{cnn_forward.5} parent=5 // pred_check
        _
      $region10: #{cnn_forward.5} parent=5 // pred_check_branch
        %163 = sbr.rel (%p160) target = $region12
      $region11: #{cnn_forward.5} parent=5 // pred_region
        %s164 = ssub.s32 %s14, 1
        // Predicated region
        $region13: #{cnn_forward.5} parent=11 // pred_check
          %p165 = pneg %p61
        $region14: #{cnn_forward.5} parent=11 // pred_check_branch
          %167 = sbr.rel (%p165) target = $region16
        $region15: #{cnn_forward.5} parent=11 // pred_region
          _
        $region16: #{cnn_forward.5} parent=11 // pred_fallthru
          _
        // Predicated region
        $region17: #{cnn_forward.5} parent=11 // pred_check
          %p168 = pneg %p82
        $region18: #{cnn_forward.5} parent=11 // pred_check_branch
          %170 = sbr.rel (%p168) target = $region20
        $region19: #{cnn_forward.5} parent=11 // pred_region
          _
        $region20: #{cnn_forward.5} parent=11 // pred_fallthru
          _
        // Predicated region
        $region21: #{cnn_forward.5} parent=11 // pred_check
          %p171 = pneg %p103
        $region22: #{cnn_forward.5} parent=11 // pred_check_branch
          %173 = sbr.rel (%p171) target = $region24
        $region23: #{cnn_forward.5} parent=11 // pred_region
          _
        $region24: #{cnn_forward.5} parent=11 // pred_fallthru
          _
        // Predicated region
        $region25: #{cnn_forward.5} parent=11 // pred_check
          %p174 = pneg %p124
        $region26: #{cnn_forward.5} parent=11 // pred_check_branch
          %176 = sbr.rel (%p174) target = $region28
        $region27: #{cnn_forward.5} parent=11 // pred_region
          _
        $region28: #{cnn_forward.5} parent=11 // pred_fallthru
          _
      $region12: #{cnn_forward.5} parent=5 // pred_fallthru
        _
      %p177 = scmp.lt.s32.totalorder %s14, 2
      // Predicated region
      $region29: #{cnn_forward.5} parent=5 // pred_check
        %p178 = pneg %p177
      $region30: #{cnn_forward.5} parent=5 // pred_check_branch
        %180 = sbr.rel (%p178) target = $region32
      $region31: #{cnn_forward.5} parent=5 // pred_region
        // Predicated region
        $region33: #{cnn_forward.5} parent=31 // pred_check
          %p181 = pneg %p34
        $region34: #{cnn_forward.5} parent=31 // pred_check_branch
          %183 = sbr.rel (%p181) target = $region36
        $region35: #{cnn_forward.5} parent=31 // pred_region
          %s184 = smul.u32 98, %s14
          %p185 = scmp.lt.s32.totalorder %s184, 195
          %s186 = scalar_select %p185, %s184, 195
          %s187 = smul.addr %s186, 4
          %s188 = scalar_lea.vmem %s0, %s187
          %s189 = smul.u32 98, %s14
        $region36: #{cnn_forward.5} parent=31 // pred_fallthru
          _
      $region32: #{cnn_forward.5} parent=5 // pred_fallthru
        _
      %p190 = scmp.le.s32.totalorder 1, %s14
      %p191 = scmp.lt.s32.totalorder %s14, 3
      %p192 = pnand %p190, %p191
      %p193 = pneg %p192
      // Predicated region
      $region37: #{cnn_forward.5} parent=5 // pred_check
        _
      $region38: #{cnn_forward.5} parent=5 // pred_check_branch
        %195 = sbr.rel (%p192) target = $region40
      $region39: #{cnn_forward.5} parent=5 // pred_region
        %s196 = ssub.s32 %s14, 1
        %s197 = smul.u32 98, %s19
        %p198 = scmp.lt.s32.totalorder %s197, 195
        %s199 = scalar_select %p198, %s197, 195
        %s200 = smul.addr %s199, 4
        %s201 = scalar_lea.vmem %s0, %s200
        %p202 = pneg %p40
        %p203 = pneg %p37
        %p204 = pneg %p61
        %p205 = pneg %p58
        %p206 = pneg %p82
        %p207 = pneg %p79
        %p208 = pneg %p103
        %p209 = pneg %p100
        %p210 = pneg %p124
        %p211 = pneg %p121
        %p212 = pneg %p150
        %p213 = pneg %p147
        %s214 = sand.u32 %s137, 1
        %s215 = scalar_lea.sflag [#allocation3], %s214
        %s216 = sand.u32 %s137, 1
        %s217 = scalar_lea.vmem [#allocation2], %s216
        %s218 = smul.u32 98, %s19
        %p219 = scmp.lt.s32.totalorder %s218, 195
        %s220 = scalar_select %p219, %s218, 195
        %s221 = smul.addr %s220, 4
        %s222 = scalar_lea.vmem %s0, %s221
        %s223 = smul.u32 98, %s19
        %v224 = vld [vmem:[%s222] sm:$0xf]
        %v225 = vld [vmem:[%s222 + $0x4] sm:$0xf]
        %v226 = vld [vmem:[%s222 + $0x8] sm:$0xf]
        %v227 = vld [vmem:[%s222 + $0xc] sm:$0xf]
        %v228 = vld [vmem:[%s222 + $0x10] sm:$0xf]
        %v229 = vld [vmem:[%s222 + $0x14] sm:$0xf]
        %v230 = vld [vmem:[%s222 + $0x18] sm:$0xf]
        %v231 = vld [vmem:[%s222 + $0x1c] sm:$0xf]
        %v232 = vld [vmem:[%s222 + $0x20] sm:$0xf]
        %v233 = vld [vmem:[%s222 + $0x24] sm:$0xf]
        %v234 = vld [vmem:[%s222 + $0x28] sm:$0xf]
        %v235 = vld [vmem:[%s222 + $0x2c] sm:$0xf]
        %v236 = vld [vmem:[%s222 + $0x30] sm:$0xf]
        %v237 = vld [vmem:[%s222 + $0x34] sm:$0xf]
        %v238 = vld [vmem:[%s222 + $0x38] sm:$0xf]
        %v239 = vld [vmem:[%s222 + $0x3c] sm:$0xf]
        %v240 = vld [vmem:[%s222 + $0x40] sm:$0xf]
        %v241 = vld [vmem:[%s222 + $0x44] sm:$0xf]
        %v242 = vld [vmem:[%s222 + $0x48] sm:$0xf]
        %v243 = vld [vmem:[%s222 + $0x4c] sm:$0xf]
        %v244 = vld [vmem:[%s222 + $0x50] sm:$0xf]
        %v245 = vld [vmem:[%s222 + $0x54] sm:$0xf]
        %v246 = vld [vmem:[%s222 + $0x58] sm:$0xf]
        %v247 = vld [vmem:[%s222 + $0x5c] sm:$0xf]
        %v248 = vld [vmem:[%s222 + $0x60] sm:$0xf]
        %v249 = vld [vmem:[%s222 + $0x64] sm:$0xf]
        %v250 = vld [vmem:[%s222 + $0x68] sm:$0xf]
        %v251 = vld [vmem:[%s222 + $0x6c] sm:$0xf]
        %v252 = vld [vmem:[%s222 + $0x70] sm:$0xf]
        %v253 = vld [vmem:[%s222 + $0x74] sm:$0xf]
        %v254 = vld [vmem:[%s222 + $0x78] sm:$0xf]
        %v255 = vld [vmem:[%s222 + $0x7c] sm:$0xf]
        %v256 = vld [vmem:[%s222 + $0x80] sm:$0xf]
        %v257 = vld [vmem:[%s222 + $0x84] sm:$0xf]
        %v258 = vld [vmem:[%s222 + $0x88] sm:$0xf]
        %v259 = vld [vmem:[%s222 + $0x8c] sm:$0xf]
        %v260 = vld [vmem:[%s222 + $0x90] sm:$0xf]
        %v261 = vld [vmem:[%s222 + $0x94] sm:$0xf]
        %v262 = vld [vmem:[%s222 + $0x98] sm:$0xf]
        %v263 = vld [vmem:[%s222 + $0x9c] sm:$0xf]
        %v264 = vld [vmem:[%s222 + $0xa0] sm:$0xf]
        %v265 = vld [vmem:[%s222 + $0xa4] sm:$0xf]
        %v266 = vld [vmem:[%s222 + $0xa8] sm:$0xf]
        %v267 = vld [vmem:[%s222 + $0xac] sm:$0xf]
        %v268 = vld [vmem:[%s222 + $0xb0] sm:$0xf]
        %v269 = vld [vmem:[%s222 + $0xb4] sm:$0xf]
        %v270 = vld [vmem:[%s222 + $0xb8] sm:$0xf]
        %v271 = vld [vmem:[%s222 + $0xbc] sm:$0xf]
        %v272 = vld [vmem:[%s222 + $0xc0] sm:$0xf]
        %v273 = vld [vmem:[%s222 + $0xc4] sm:$0xf]
        %v274 = vld [vmem:[%s222 + $0xc8] sm:$0xf]
        %v275 = vld [vmem:[%s222 + $0xcc] sm:$0xf]
        %v276 = vld [vmem:[%s222 + $0xd0] sm:$0xf]
        %v277 = vld [vmem:[%s222 + $0xd4] sm:$0xf]
        %v278 = vld [vmem:[%s222 + $0xd8] sm:$0xf]
        %v279 = vld [vmem:[%s222 + $0xdc] sm:$0xf]
        %v280 = vld [vmem:[%s222 + $0xe0] sm:$0xf]
        %v281 = vld [vmem:[%s222 + $0xe4] sm:$0xf]
        %v282 = vld [vmem:[%s222 + $0xe8] sm:$0xf]
        %v283 = vld [vmem:[%s222 + $0xec] sm:$0xf]
        %v284 = vld [vmem:[%s222 + $0xf0] sm:$0xf]
        %v285 = vld [vmem:[%s222 + $0xf4] sm:$0xf]
        %v286 = vld [vmem:[%s222 + $0xf8] sm:$0xf]
        %v287 = vld [vmem:[%s222 + $0xfc] sm:$0xf]
        %v288 = vld [vmem:[%s222 + $0x100] sm:$0xf]
        %v289 = vld [vmem:[%s222 + $0x104] sm:$0xf]
        %v290 = vld [vmem:[%s222 + $0x108] sm:$0xf]
        %v291 = vld [vmem:[%s222 + $0x10c] sm:$0xf]
        %v292 = vld [vmem:[%s222 + $0x110] sm:$0xf]
        %v293 = vld [vmem:[%s222 + $0x114] sm:$0xf]
        %v294 = vld [vmem:[%s222 + $0x118] sm:$0xf]
        %v295 = vld [vmem:[%s222 + $0x11c] sm:$0xf]
        %v296 = vld [vmem:[%s222 + $0x120] sm:$0xf]
        %v297 = vld [vmem:[%s222 + $0x124] sm:$0xf]
        %v298 = vld [vmem:[%s222 + $0x128] sm:$0xf]
        %v299 = vld [vmem:[%s222 + $0x12c] sm:$0xf]
        %v300 = vld [vmem:[%s222 + $0x130] sm:$0xf]
        %v301 = vld [vmem:[%s222 + $0x134] sm:$0xf]
        %v302 = vld [vmem:[%s222 + $0x138] sm:$0xf]
        %v303 = vld [vmem:[%s222 + $0x13c] sm:$0xf]
        %v304 = vld [vmem:[%s222 + $0x140] sm:$0xf]
        %v305 = vld [vmem:[%s222 + $0x144] sm:$0xf]
        %v306 = vld [vmem:[%s222 + $0x148] sm:$0xf]
        %v307 = vld [vmem:[%s222 + $0x14c] sm:$0xf]
        %v308 = vld [vmem:[%s222 + $0x150] sm:$0xf]
        %v309 = vld [vmem:[%s222 + $0x154] sm:$0xf]
        %v310 = vld [vmem:[%s222 + $0x158] sm:$0xf]
        %v311 = vld [vmem:[%s222 + $0x15c] sm:$0xf]
        %v312 = vld [vmem:[%s222 + $0x160] sm:$0xf]
        %v313 = vld [vmem:[%s222 + $0x164] sm:$0xf]
        %v314 = vld [vmem:[%s222 + $0x168] sm:$0xf]
        %v315 = vld [vmem:[%s222 + $0x16c] sm:$0xf]
        %v316 = vld [vmem:[%s222 + $0x170] sm:$0xf]
        %v317 = vld [vmem:[%s222 + $0x174] sm:$0xf]
        %v318 = vld [vmem:[%s222 + $0x178] sm:$0xf]
        %v319 = vld [vmem:[%s222 + $0x17c] sm:$0xf]
        %v320 = vld [vmem:[%s222 + $0x180] sm:$0xf]
        %v321 = vld [vmem:[%s222 + $0x184] sm:$0xf]
        %v322 = vld [vmem:[%s1] sm:$0xf]
        %v323 = vld [vmem:[%s1 + $0x4] sm:$0xf]
        %v324 = vld [vmem:[%s1 + $0x8] sm:$0xf]
        %v325 = vld [vmem:[%s1 + $0xc] sm:$0xf]
        %v326 = vld [vmem:[%s1 + $0x10] sm:$0xf]
        %v327 = vld [vmem:[%s1 + $0x14] sm:$0xf]
        %v328 = vld [vmem:[%s1 + $0x18] sm:$0xf]
        %v329 = vld [vmem:[%s1 + $0x1c] sm:$0xf]
        %v330 = vld [vmem:[%s1 + $0x20] sm:$0xf]
        %v331 = vld [vmem:[%s1 + $0x24] sm:$0xf]
        %v332 = vld [vmem:[%s1 + $0x28] sm:$0xf]
        %v333 = vld [vmem:[%s1 + $0x2c] sm:$0xf]
        %v334 = vld [vmem:[%s1 + $0x30] sm:$0xf]
        %v335 = vld [vmem:[%s1 + $0x34] sm:$0xf]
        %v336 = vld [vmem:[%s1 + $0x38] sm:$0xf]
        %v337 = vld [vmem:[%s1 + $0x3c] sm:$0xf]
        %v338 = vld [vmem:[%s2] sm:$0x1]
        %v340 = vperm.slane %v338, 0
        %v440 = vunpack.c.l.b16 %v224
        %v441 = vunpack.c.l.b16 %v225
        %v442 = vunpack.c.l.b16 %v226
        %v443 = vunpack.c.l.b16 %v227
        %v444 = vunpack.c.l.b16 %v228
        %v445 = vunpack.c.l.b16 %v229
        %v446 = vunpack.c.l.b16 %v230
        %v447 = vunpack.c.l.b16 %v231
        %v448 = vunpack.c.l.b16 %v232
        %v449 = vunpack.c.l.b16 %v233
        %v450 = vunpack.c.l.b16 %v234
        %v451 = vunpack.c.l.b16 %v235
        %v452 = vunpack.c.l.b16 %v236
        %v453 = vunpack.c.l.b16 %v237
        %v454 = vunpack.c.l.b16 %v238
        %v455 = vunpack.c.l.b16 %v239
        %v456 = vunpack.c.l.b16 %v240
        %v457 = vunpack.c.l.b16 %v241
        %v458 = vunpack.c.l.b16 %v242
        %v459 = vunpack.c.l.b16 %v243
        %v460 = vunpack.c.l.b16 %v244
        %v461 = vunpack.c.l.b16 %v245
        %v462 = vunpack.c.l.b16 %v246
        %v463 = vunpack.c.l.b16 %v247
        %v464 = vunpack.c.l.b16 %v248
        %v465 = vunpack.c.l.b16 %v249
        %v466 = vunpack.c.l.b16 %v250
        %v467 = vunpack.c.l.b16 %v251
        %v468 = vunpack.c.l.b16 %v252
        %v469 = vunpack.c.l.b16 %v253
        %v470 = vunpack.c.l.b16 %v254
        %v471 = vunpack.c.l.b16 %v255
        %v472 = vunpack.c.l.b16 %v256
        %v473 = vunpack.c.l.b16 %v257
        %v474 = vunpack.c.l.b16 %v258
        %v475 = vunpack.c.l.b16 %v259
        %v476 = vunpack.c.l.b16 %v260
        %v477 = vunpack.c.l.b16 %v261
        %v478 = vunpack.c.l.b16 %v262
        %v479 = vunpack.c.l.b16 %v263
        %v480 = vunpack.c.l.b16 %v264
        %v481 = vunpack.c.l.b16 %v265
        %v482 = vunpack.c.l.b16 %v266
        %v483 = vunpack.c.l.b16 %v267
        %v484 = vunpack.c.l.b16 %v268
        %v485 = vunpack.c.l.b16 %v269
        %v486 = vunpack.c.l.b16 %v270
        %v487 = vunpack.c.l.b16 %v271
        %v488 = vunpack.c.l.b16 %v272
        %v489 = vunpack.c.l.b16 %v273
        %v490 = vunpack.c.l.b16 %v274
        %v491 = vunpack.c.l.b16 %v275
        %v492 = vunpack.c.l.b16 %v276
        %v493 = vunpack.c.l.b16 %v277
        %v494 = vunpack.c.l.b16 %v278
        %v495 = vunpack.c.l.b16 %v279
        %v496 = vunpack.c.l.b16 %v280
        %v497 = vunpack.c.l.b16 %v281
        %v498 = vunpack.c.l.b16 %v282
        %v499 = vunpack.c.l.b16 %v283
        %v500 = vunpack.c.l.b16 %v284
        %v501 = vunpack.c.l.b16 %v285
        %v502 = vunpack.c.l.b16 %v286
        %v503 = vunpack.c.l.b16 %v287
        %v504 = vunpack.c.l.b16 %v288
        %v505 = vunpack.c.l.b16 %v289
        %v506 = vunpack.c.l.b16 %v290
        %v507 = vunpack.c.l.b16 %v291
        %v508 = vunpack.c.l.b16 %v292
        %v509 = vunpack.c.l.b16 %v293
        %v510 = vunpack.c.l.b16 %v294
        %v511 = vunpack.c.l.b16 %v295
        %v512 = vunpack.c.l.b16 %v296
        %v513 = vunpack.c.l.b16 %v297
        %v514 = vunpack.c.l.b16 %v298
        %v515 = vunpack.c.l.b16 %v299
        %v516 = vunpack.c.l.b16 %v300
        %v517 = vunpack.c.l.b16 %v301
        %v518 = vunpack.c.l.b16 %v302
        %v519 = vunpack.c.l.b16 %v303
        %v520 = vunpack.c.l.b16 %v304
        %v521 = vunpack.c.l.b16 %v305
        %v522 = vunpack.c.l.b16 %v306
        %v523 = vunpack.c.l.b16 %v307
        %v524 = vunpack.c.l.b16 %v308
        %v525 = vunpack.c.l.b16 %v309
        %v526 = vunpack.c.l.b16 %v310
        %v527 = vunpack.c.l.b16 %v311
        %v528 = vunpack.c.l.b16 %v312
        %v529 = vunpack.c.l.b16 %v313
        %v530 = vunpack.c.l.b16 %v314
        %v531 = vunpack.c.l.b16 %v315
        %v532 = vunpack.c.l.b16 %v316
        %v533 = vunpack.c.l.b16 %v317
        %v534 = vunpack.c.l.b16 %v318
        %v535 = vunpack.c.l.b16 %v319
        %v536 = vunpack.c.l.b16 %v320
        %v537 = vunpack.c.l.b16 %v321
        %v538 = vpack.c.b16 %v441, %v440
        %v539 = vpack.c.b16 %v443, %v442
        %v540 = vpack.c.b16 %v445, %v444
        %v541 = vpack.c.b16 %v447, %v446
        %v542 = vpack.c.b16 %v449, %v448
        %v543 = vpack.c.b16 %v451, %v450
        %v544 = vpack.c.b16 %v453, %v452
        %v545 = vpack.c.b16 %v455, %v454
        %v546 = vpack.c.b16 %v457, %v456
        %v547 = vpack.c.b16 %v459, %v458
        %v548 = vpack.c.b16 %v461, %v460
        %v549 = vpack.c.b16 %v463, %v462
        %v550 = vpack.c.b16 %v465, %v464
        %v551 = vpack.c.b16 %v467, %v466
        %v552 = vpack.c.b16 %v469, %v468
        %v553 = vpack.c.b16 %v471, %v470
        %v554 = vpack.c.b16 %v473, %v472
        %v555 = vpack.c.b16 %v475, %v474
        %v556 = vpack.c.b16 %v477, %v476
        %v557 = vpack.c.b16 %v479, %v478
        %v558 = vpack.c.b16 %v481, %v480
        %v559 = vpack.c.b16 %v483, %v482
        %v560 = vpack.c.b16 %v485, %v484
        %v561 = vpack.c.b16 %v487, %v486
        %v562 = vpack.c.b16 %v489, %v488
        %v563 = vpack.c.b16 %v491, %v490
        %v564 = vpack.c.b16 %v493, %v492
        %v565 = vpack.c.b16 %v495, %v494
        %v566 = vpack.c.b16 %v497, %v496
        %v567 = vpack.c.b16 %v499, %v498
        %v568 = vpack.c.b16 %v501, %v500
        %v569 = vpack.c.b16 %v503, %v502
        %v570 = vpack.c.b16 %v505, %v504
        %v571 = vpack.c.b16 %v507, %v506
        %v572 = vpack.c.b16 %v509, %v508
        %v573 = vpack.c.b16 %v511, %v510
        %v574 = vpack.c.b16 %v513, %v512
        %v575 = vpack.c.b16 %v515, %v514
        %v576 = vpack.c.b16 %v517, %v516
        %v577 = vpack.c.b16 %v519, %v518
        %v578 = vpack.c.b16 %v521, %v520
        %v579 = vpack.c.b16 %v523, %v522
        %v580 = vpack.c.b16 %v525, %v524
        %v581 = vpack.c.b16 %v527, %v526
        %v582 = vpack.c.b16 %v529, %v528
        %v583 = vpack.c.b16 %v531, %v530
        %v584 = vpack.c.b16 %v533, %v532
        %v585 = vpack.c.b16 %v535, %v534
        %v586 = vpack.c.b16 %v537, %v536
        %v652 = vunpack.c.l.b16 %v322
        %v653 = vunpack.c.l.b16 %v323
        %v654 = vunpack.c.l.b16 %v324
        %v655 = vunpack.c.l.b16 %v325
        %v656 = vunpack.c.l.b16 %v326
        %v657 = vunpack.c.l.b16 %v327
        %v658 = vunpack.c.l.b16 %v328
        %v659 = vunpack.c.l.b16 %v329
        %v660 = vunpack.c.l.b16 %v330
        %v661 = vunpack.c.l.b16 %v331
        %v662 = vunpack.c.l.b16 %v332
        %v663 = vunpack.c.l.b16 %v333
        %v664 = vunpack.c.l.b16 %v334
        %v665 = vunpack.c.l.b16 %v335
        %v666 = vunpack.c.l.b16 %v336
        %v667 = vunpack.c.l.b16 %v337
        %v668 = vpack.c.b16 %v653, %v652
        %v669 = vpack.c.b16 %v655, %v654
        %v670 = vpack.c.b16 %v657, %v656
        %v671 = vpack.c.b16 %v659, %v658
        %v672 = vpack.c.b16 %v661, %v660
        %v673 = vpack.c.b16 %v663, %v662
        %v674 = vpack.c.b16 %v665, %v664
        %v675 = vpack.c.b16 %v667, %v666
        %684 = vmatpush.bf16.msra.mxu0 %v675
        %685 = vmatpush.bf16.msra.mxu0 %v674
        %686 = vmatpush.bf16.msra.mxu0 %v673
        %687 = vmatpush.bf16.msra.mxu0 %v672
        %688 = vmatpush.bf16.msra.mxu0 %v671
        %689 = vmatpush.bf16.msra.mxu0 %v670
        %690 = vmatpush.bf16.msra.mxu0 %v669
        %691 = vmatpush.bf16.msra.mxu0 %v668
        %692 = vmatmul.bf16.gmra.mxu0 %v538
        %v693 = vpop.f32.mrf.mxu0
        %v694 = vadd.f32 %v340, %v693
        %v695 = vpop.f32.mrf.mxu0
        %v696 = vadd.f32 %v340, %v695
        %697 = vmatmul.bf16.gmra.mxu0 %v539
        %v698 = vpop.f32.mrf.mxu0
        %v699 = vadd.f32 %v340, %v698
        %v700 = vpop.f32.mrf.mxu0
        %v701 = vadd.f32 %v340, %v700
        %702 = vmatmul.bf16.gmra.mxu0 %v540
        %v703 = vpop.f32.mrf.mxu0
        %v704 = vadd.f32 %v340, %v703
        %v705 = vpop.f32.mrf.mxu0
        %v706 = vadd.f32 %v340, %v705
        %707 = vmatmul.bf16.gmra.mxu0 %v541
        %v708 = vpop.f32.mrf.mxu0
        %v709 = vadd.f32 %v340, %v708
        %v710 = vpop.f32.mrf.mxu0
        %v711 = vadd.f32 %v340, %v710
        %712 = vmatmul.bf16.gmra.mxu0 %v542
        %v713 = vpop.f32.mrf.mxu0
        %v714 = vadd.f32 %v340, %v713
        %v715 = vpop.f32.mrf.mxu0
        %v716 = vadd.f32 %v340, %v715
        %717 = vmatmul.bf16.gmra.mxu0 %v543
        %v718 = vpop.f32.mrf.mxu0
        %v719 = vadd.f32 %v340, %v718
        %v720 = vpop.f32.mrf.mxu0
        %v721 = vadd.f32 %v340, %v720
        %722 = vmatmul.bf16.gmra.mxu0 %v544
        %v723 = vpop.f32.mrf.mxu0
        %v724 = vadd.f32 %v340, %v723
        %v725 = vpop.f32.mrf.mxu0
        %v726 = vadd.f32 %v340, %v725
        %727 = vmatmul.bf16.gmra.mxu0 %v545
        %v728 = vpop.f32.mrf.mxu0
        %v729 = vadd.f32 %v340, %v728
        %v730 = vpop.f32.mrf.mxu0
        %v731 = vadd.f32 %v340, %v730
        %732 = vmatmul.bf16.gmra.mxu0 %v546
        %v733 = vpop.f32.mrf.mxu0
        %v734 = vadd.f32 %v340, %v733
        %v735 = vpop.f32.mrf.mxu0
        %v736 = vadd.f32 %v340, %v735
        %737 = vmatmul.bf16.gmra.mxu0 %v547
        %v738 = vpop.f32.mrf.mxu0
        %v739 = vadd.f32 %v340, %v738
        %v740 = vpop.f32.mrf.mxu0
        %v741 = vadd.f32 %v340, %v740
        %742 = vmatmul.bf16.gmra.mxu0 %v548
        %v743 = vpop.f32.mrf.mxu0
        %v744 = vadd.f32 %v340, %v743
        %v745 = vpop.f32.mrf.mxu0
        %v746 = vadd.f32 %v340, %v745
        %747 = vmatmul.bf16.gmra.mxu0 %v549
        %v748 = vpop.f32.mrf.mxu0
        %v749 = vadd.f32 %v340, %v748
        %v750 = vpop.f32.mrf.mxu0
        %v751 = vadd.f32 %v340, %v750
        %752 = vmatmul.bf16.gmra.mxu0 %v550
        %v753 = vpop.f32.mrf.mxu0
        %v754 = vadd.f32 %v340, %v753
        %v755 = vpop.f32.mrf.mxu0
        %v756 = vadd.f32 %v340, %v755
        %757 = vmatmul.bf16.gmra.mxu0 %v551
        %v758 = vpop.f32.mrf.mxu0
        %v759 = vadd.f32 %v340, %v758
        %v760 = vpop.f32.mrf.mxu0
        %v761 = vadd.f32 %v340, %v760
        %762 = vmatmul.bf16.gmra.mxu0 %v552
        %v763 = vpop.f32.mrf.mxu0
        %v764 = vadd.f32 %v340, %v763
        %v765 = vpop.f32.mrf.mxu0
        %v766 = vadd.f32 %v340, %v765
        %767 = vmatmul.bf16.gmra.mxu0 %v553
        %v768 = vpop.f32.mrf.mxu0
        %v769 = vadd.f32 %v340, %v768
        %v770 = vpop.f32.mrf.mxu0
        %v771 = vadd.f32 %v340, %v770
        %772 = vmatmul.bf16.gmra.mxu0 %v554
        %v773 = vpop.f32.mrf.mxu0
        %v774 = vadd.f32 %v340, %v773
        %v775 = vpop.f32.mrf.mxu0
        %v776 = vadd.f32 %v340, %v775
        %777 = vmatmul.bf16.gmra.mxu0 %v555
        %v778 = vpop.f32.mrf.mxu0
        %v779 = vadd.f32 %v340, %v778
        %v780 = vpop.f32.mrf.mxu0
        %v781 = vadd.f32 %v340, %v780
        %782 = vmatmul.bf16.gmra.mxu0 %v556
        %v783 = vpop.f32.mrf.mxu0
        %v784 = vadd.f32 %v340, %v783
        %v785 = vpop.f32.mrf.mxu0
        %v786 = vadd.f32 %v340, %v785
        %787 = vmatmul.bf16.gmra.mxu0 %v557
        %v788 = vpop.f32.mrf.mxu0
        %v789 = vadd.f32 %v340, %v788
        %v790 = vpop.f32.mrf.mxu0
        %v791 = vadd.f32 %v340, %v790
        %792 = vmatmul.bf16.gmra.mxu0 %v558
        %v793 = vpop.f32.mrf.mxu0
        %v794 = vadd.f32 %v340, %v793
        %v795 = vpop.f32.mrf.mxu0
        %v796 = vadd.f32 %v340, %v795
        %797 = vmatmul.bf16.gmra.mxu0 %v559
        %v798 = vpop.f32.mrf.mxu0
        %v799 = vadd.f32 %v340, %v798
        %v800 = vpop.f32.mrf.mxu0
        %v801 = vadd.f32 %v340, %v800
        %802 = vmatmul.bf16.gmra.mxu0 %v560
        %v803 = vpop.f32.mrf.mxu0
        %v804 = vadd.f32 %v340, %v803
        %v805 = vpop.f32.mrf.mxu0
        %v806 = vadd.f32 %v340, %v805
        %807 = vmatmul.bf16.gmra.mxu0 %v561
        %v808 = vpop.f32.mrf.mxu0
        %v809 = vadd.f32 %v340, %v808
        %v810 = vpop.f32.mrf.mxu0
        %v811 = vadd.f32 %v340, %v810
        %812 = vmatmul.bf16.gmra.mxu0 %v562
        %v813 = vpop.f32.mrf.mxu0
        %v814 = vadd.f32 %v340, %v813
        %v815 = vpop.f32.mrf.mxu0
        %v816 = vadd.f32 %v340, %v815
        %817 = vmatmul.bf16.gmra.mxu0 %v563
        %v818 = vpop.f32.mrf.mxu0
        %v819 = vadd.f32 %v340, %v818
        %v820 = vpop.f32.mrf.mxu0
        %v821 = vadd.f32 %v340, %v820
        %822 = vmatmul.bf16.gmra.mxu0 %v564
        %v823 = vpop.f32.mrf.mxu0
        %v824 = vadd.f32 %v340, %v823
        %v825 = vpop.f32.mrf.mxu0
        %v826 = vadd.f32 %v340, %v825
        %827 = vmatmul.bf16.gmra.mxu0 %v565
        %v828 = vpop.f32.mrf.mxu0
        %v829 = vadd.f32 %v340, %v828
        %v830 = vpop.f32.mrf.mxu0
        %v831 = vadd.f32 %v340, %v830
        %832 = vmatmul.bf16.gmra.mxu0 %v566
        %v833 = vpop.f32.mrf.mxu0
        %v834 = vadd.f32 %v340, %v833
        %v835 = vpop.f32.mrf.mxu0
        %v836 = vadd.f32 %v340, %v835
        %837 = vmatmul.bf16.gmra.mxu0 %v567
        %v838 = vpop.f32.mrf.mxu0
        %v839 = vadd.f32 %v340, %v838
        %v840 = vpop.f32.mrf.mxu0
        %v841 = vadd.f32 %v340, %v840
        %842 = vmatmul.bf16.gmra.mxu0 %v568
        %v843 = vpop.f32.mrf.mxu0
        %v844 = vadd.f32 %v340, %v843
        %v845 = vpop.f32.mrf.mxu0
        %v846 = vadd.f32 %v340, %v845
        %847 = vmatmul.bf16.gmra.mxu0 %v569
        %v848 = vpop.f32.mrf.mxu0
        %v849 = vadd.f32 %v340, %v848
        %v850 = vpop.f32.mrf.mxu0
        %v851 = vadd.f32 %v340, %v850
        %852 = vmatmul.bf16.gmra.mxu0 %v570
        %v853 = vpop.f32.mrf.mxu0
        %v854 = vadd.f32 %v340, %v853
        %v855 = vpop.f32.mrf.mxu0
        %v856 = vadd.f32 %v340, %v855
        %857 = vmatmul.bf16.gmra.mxu0 %v571
        %v858 = vpop.f32.mrf.mxu0
        %v859 = vadd.f32 %v340, %v858
        %v860 = vpop.f32.mrf.mxu0
        %v861 = vadd.f32 %v340, %v860
        %862 = vmatmul.bf16.gmra.mxu0 %v572
        %v863 = vpop.f32.mrf.mxu0
        %v864 = vadd.f32 %v340, %v863
        %v865 = vpop.f32.mrf.mxu0
        %v866 = vadd.f32 %v340, %v865
        %867 = vmatmul.bf16.gmra.mxu0 %v573
        %v868 = vpop.f32.mrf.mxu0
        %v869 = vadd.f32 %v340, %v868
        %v870 = vpop.f32.mrf.mxu0
        %v871 = vadd.f32 %v340, %v870
        %872 = vmatmul.bf16.gmra.mxu0 %v574
        %v873 = vpop.f32.mrf.mxu0
        %v874 = vadd.f32 %v340, %v873
        %v875 = vpop.f32.mrf.mxu0
        %v876 = vadd.f32 %v340, %v875
        %877 = vmatmul.bf16.gmra.mxu0 %v575
        %v878 = vpop.f32.mrf.mxu0
        %v879 = vadd.f32 %v340, %v878
        %v880 = vpop.f32.mrf.mxu0
        %v881 = vadd.f32 %v340, %v880
        %882 = vmatmul.bf16.gmra.mxu0 %v576
        %v883 = vpop.f32.mrf.mxu0
        %v884 = vadd.f32 %v340, %v883
        %v885 = vpop.f32.mrf.mxu0
        %v886 = vadd.f32 %v340, %v885
        %887 = vmatmul.bf16.gmra.mxu0 %v577
        %v888 = vpop.f32.mrf.mxu0
        %v889 = vadd.f32 %v340, %v888
        %v890 = vpop.f32.mrf.mxu0
        %v891 = vadd.f32 %v340, %v890
        %892 = vmatmul.bf16.gmra.mxu0 %v578
        %v893 = vpop.f32.mrf.mxu0
        %v894 = vadd.f32 %v340, %v893
        %v895 = vpop.f32.mrf.mxu0
        %v896 = vadd.f32 %v340, %v895
        %897 = vmatmul.bf16.gmra.mxu0 %v579
        %v898 = vpop.f32.mrf.mxu0
        %v899 = vadd.f32 %v340, %v898
        %v900 = vpop.f32.mrf.mxu0
        %v901 = vadd.f32 %v340, %v900
        %902 = vmatmul.bf16.gmra.mxu0 %v580
        %v903 = vpop.f32.mrf.mxu0
        %v904 = vadd.f32 %v340, %v903
        %v905 = vpop.f32.mrf.mxu0
        %v906 = vadd.f32 %v340, %v905
        %907 = vmatmul.bf16.gmra.mxu0 %v581
        %v908 = vpop.f32.mrf.mxu0
        %v909 = vadd.f32 %v340, %v908
        %v910 = vpop.f32.mrf.mxu0
        %v911 = vadd.f32 %v340, %v910
        %912 = vmatmul.bf16.gmra.mxu0 %v582
        %v913 = vpop.f32.mrf.mxu0
        %v914 = vadd.f32 %v340, %v913
        %v915 = vpop.f32.mrf.mxu0
        %v916 = vadd.f32 %v340, %v915
        %917 = vmatmul.bf16.gmra.mxu0 %v583
        %v918 = vpop.f32.mrf.mxu0
        %v919 = vadd.f32 %v340, %v918
        %v920 = vpop.f32.mrf.mxu0
        %v921 = vadd.f32 %v340, %v920
        %922 = vmatmul.bf16.gmra.mxu0 %v584
        %v923 = vpop.f32.mrf.mxu0
        %v924 = vadd.f32 %v340, %v923
        %v925 = vpop.f32.mrf.mxu0
        %v926 = vadd.f32 %v340, %v925
        %927 = vmatmul.bf16.gmra.mxu0 %v585
        %v928 = vpop.f32.mrf.mxu0
        %v929 = vadd.f32 %v340, %v928
        %v930 = vpop.f32.mrf.mxu0
        %v931 = vadd.f32 %v340, %v930
        %932 = vmatmul.bf16.gmra.mxu0 %v586
        %v933 = vpop.f32.mrf.mxu0
        %v934 = vadd.f32 %v340, %v933
        %v935 = vpop.f32.mrf.mxu0
        %v936 = vadd.f32 %v340, %v935
        %937 = vdwg.mxu0
        %vm938 = vcmask 31744
        %v939 = vsel %vm938, %v694, -inf
        %940 = vmax.xlane.f32.xlu0 %v939
        %v941 = vpop.xlane.xlu0 %940
        %v942 = vsel %vm938, %v696, -inf
        %943 = vmax.xlane.f32.xlu0 %v942
        %v944 = vpop.xlane.xlu0 %943
        %v945 = vsel %vm938, %v699, -inf
        %946 = vmax.xlane.f32.xlu0 %v945
        %v947 = vpop.xlane.xlu0 %946
        %v948 = vsel %vm938, %v701, -inf
        %949 = vmax.xlane.f32.xlu0 %v948
        %v950 = vpop.xlane.xlu0 %949
        %v951 = vsel %vm938, %v704, -inf
        %952 = vmax.xlane.f32.xlu0 %v951
        %v953 = vpop.xlane.xlu0 %952
        %v954 = vsel %vm938, %v706, -inf
        %955 = vmax.xlane.f32.xlu0 %v954
        %v956 = vpop.xlane.xlu0 %955
        %v957 = vsel %vm938, %v709, -inf
        %958 = vmax.xlane.f32.xlu0 %v957
        %v959 = vpop.xlane.xlu0 %958
        %v960 = vsel %vm938, %v711, -inf
        %961 = vmax.xlane.f32.xlu0 %v960
        %v962 = vpop.xlane.xlu0 %961
        %v963 = vsel %vm938, %v714, -inf
        %964 = vmax.xlane.f32.xlu0 %v963
        %v965 = vpop.xlane.xlu0 %964
        %v966 = vsel %vm938, %v716, -inf
        %967 = vmax.xlane.f32.xlu0 %v966
        %v968 = vpop.xlane.xlu0 %967
        %v969 = vsel %vm938, %v719, -inf
        %970 = vmax.xlane.f32.xlu0 %v969
        %v971 = vpop.xlane.xlu0 %970
        %v972 = vsel %vm938, %v721, -inf
        %973 = vmax.xlane.f32.xlu0 %v972
        %v974 = vpop.xlane.xlu0 %973
        %v975 = vsel %vm938, %v724, -inf
        %976 = vmax.xlane.f32.xlu0 %v975
        %v977 = vpop.xlane.xlu0 %976
        %v978 = vsel %vm938, %v726, -inf
        %979 = vmax.xlane.f32.xlu0 %v978
        %v980 = vpop.xlane.xlu0 %979
        %v981 = vsel %vm938, %v729, -inf
        %982 = vmax.xlane.f32.xlu0 %v981
        %v983 = vpop.xlane.xlu0 %982
        %v984 = vsel %vm938, %v731, -inf
        %985 = vmax.xlane.f32.xlu0 %v984
        %v986 = vpop.xlane.xlu0 %985
        %v987 = vsel %vm938, %v734, -inf
        %988 = vmax.xlane.f32.xlu0 %v987
        %v989 = vpop.xlane.xlu0 %988
        %v990 = vsel %vm938, %v736, -inf
        %991 = vmax.xlane.f32.xlu0 %v990
        %v992 = vpop.xlane.xlu0 %991
        %v993 = vsel %vm938, %v739, -inf
        %994 = vmax.xlane.f32.xlu0 %v993
        %v995 = vpop.xlane.xlu0 %994
        %v996 = vsel %vm938, %v741, -inf
        %997 = vmax.xlane.f32.xlu0 %v996
        %v998 = vpop.xlane.xlu0 %997
        %v999 = vsel %vm938, %v744, -inf
        %1000 = vmax.xlane.f32.xlu0 %v999
        %v1001 = vpop.xlane.xlu0 %1000
        %v1002 = vsel %vm938, %v746, -inf
        %1003 = vmax.xlane.f32.xlu0 %v1002
        %v1004 = vpop.xlane.xlu0 %1003
        %v1005 = vsel %vm938, %v749, -inf
        %1006 = vmax.xlane.f32.xlu0 %v1005
        %v1007 = vpop.xlane.xlu0 %1006
        %v1008 = vsel %vm938, %v751, -inf
        %1009 = vmax.xlane.f32.xlu0 %v1008
        %v1010 = vpop.xlane.xlu0 %1009
        %v1011 = vsel %vm938, %v754, -inf
        %1012 = vmax.xlane.f32.xlu0 %v1011
        %v1013 = vpop.xlane.xlu0 %1012
        %v1014 = vsel %vm938, %v756, -inf
        %1015 = vmax.xlane.f32.xlu0 %v1014
        %v1016 = vpop.xlane.xlu0 %1015
        %v1017 = vsel %vm938, %v759, -inf
        %1018 = vmax.xlane.f32.xlu0 %v1017
        %v1019 = vpop.xlane.xlu0 %1018
        %v1020 = vsel %vm938, %v761, -inf
        %1021 = vmax.xlane.f32.xlu0 %v1020
        %v1022 = vpop.xlane.xlu0 %1021
        %v1023 = vsel %vm938, %v764, -inf
        %1024 = vmax.xlane.f32.xlu0 %v1023
        %v1025 = vpop.xlane.xlu0 %1024
        %v1026 = vsel %vm938, %v766, -inf
        %1027 = vmax.xlane.f32.xlu0 %v1026
        %v1028 = vpop.xlane.xlu0 %1027
        %v1029 = vsel %vm938, %v769, -inf
        %1030 = vmax.xlane.f32.xlu0 %v1029
        %v1031 = vpop.xlane.xlu0 %1030
        %v1032 = vsel %vm938, %v771, -inf
        %1033 = vmax.xlane.f32.xlu0 %v1032
        %v1034 = vpop.xlane.xlu0 %1033
        %v1035 = vsel %vm938, %v774, -inf
        %1036 = vmax.xlane.f32.xlu0 %v1035
        %v1037 = vpop.xlane.xlu0 %1036
        %v1038 = vsel %vm938, %v776, -inf
        %1039 = vmax.xlane.f32.xlu0 %v1038
        %v1040 = vpop.xlane.xlu0 %1039
        %v1041 = vsel %vm938, %v779, -inf
        %1042 = vmax.xlane.f32.xlu0 %v1041
        %v1043 = vpop.xlane.xlu0 %1042
        %v1044 = vsel %vm938, %v781, -inf
        %1045 = vmax.xlane.f32.xlu0 %v1044
        %v1046 = vpop.xlane.xlu0 %1045
        %v1047 = vsel %vm938, %v784, -inf
        %1048 = vmax.xlane.f32.xlu0 %v1047
        %v1049 = vpop.xlane.xlu0 %1048
        %v1050 = vsel %vm938, %v786, -inf
        %1051 = vmax.xlane.f32.xlu0 %v1050
        %v1052 = vpop.xlane.xlu0 %1051
        %v1053 = vsel %vm938, %v789, -inf
        %1054 = vmax.xlane.f32.xlu0 %v1053
        %v1055 = vpop.xlane.xlu0 %1054
        %v1056 = vsel %vm938, %v791, -inf
        %1057 = vmax.xlane.f32.xlu0 %v1056
        %v1058 = vpop.xlane.xlu0 %1057
        %v1059 = vsel %vm938, %v794, -inf
        %1060 = vmax.xlane.f32.xlu0 %v1059
        %v1061 = vpop.xlane.xlu0 %1060
        %v1062 = vsel %vm938, %v796, -inf
        %1063 = vmax.xlane.f32.xlu0 %v1062
        %v1064 = vpop.xlane.xlu0 %1063
        %v1065 = vsel %vm938, %v799, -inf
        %1066 = vmax.xlane.f32.xlu0 %v1065
        %v1067 = vpop.xlane.xlu0 %1066
        %v1068 = vsel %vm938, %v801, -inf
        %1069 = vmax.xlane.f32.xlu0 %v1068
        %v1070 = vpop.xlane.xlu0 %1069
        %v1071 = vsel %vm938, %v804, -inf
        %1072 = vmax.xlane.f32.xlu0 %v1071
        %v1073 = vpop.xlane.xlu0 %1072
        %v1074 = vsel %vm938, %v806, -inf
        %1075 = vmax.xlane.f32.xlu0 %v1074
        %v1076 = vpop.xlane.xlu0 %1075
        %v1077 = vsel %vm938, %v809, -inf
        %1078 = vmax.xlane.f32.xlu0 %v1077
        %v1079 = vpop.xlane.xlu0 %1078
        %v1080 = vsel %vm938, %v811, -inf
        %1081 = vmax.xlane.f32.xlu0 %v1080
        %v1082 = vpop.xlane.xlu0 %1081
        %v1083 = vsel %vm938, %v814, -inf
        %1084 = vmax.xlane.f32.xlu0 %v1083
        %v1085 = vpop.xlane.xlu0 %1084
        %v1086 = vsel %vm938, %v816, -inf
        %1087 = vmax.xlane.f32.xlu0 %v1086
        %v1088 = vpop.xlane.xlu0 %1087
        %v1089 = vsel %vm938, %v819, -inf
        %1090 = vmax.xlane.f32.xlu0 %v1089
        %v1091 = vpop.xlane.xlu0 %1090
        %v1092 = vsel %vm938, %v821, -inf
        %1093 = vmax.xlane.f32.xlu0 %v1092
        %v1094 = vpop.xlane.xlu0 %1093
        %v1095 = vsel %vm938, %v824, -inf
        %1096 = vmax.xlane.f32.xlu0 %v1095
        %v1097 = vpop.xlane.xlu0 %1096
        %v1098 = vsel %vm938, %v826, -inf
        %1099 = vmax.xlane.f32.xlu0 %v1098
        %v1100 = vpop.xlane.xlu0 %1099
        %v1101 = vsel %vm938, %v829, -inf
        %1102 = vmax.xlane.f32.xlu0 %v1101
        %v1103 = vpop.xlane.xlu0 %1102
        %v1104 = vsel %vm938, %v831, -inf
        %1105 = vmax.xlane.f32.xlu0 %v1104
        %v1106 = vpop.xlane.xlu0 %1105
        %v1107 = vsel %vm938, %v834, -inf
        %1108 = vmax.xlane.f32.xlu0 %v1107
        %v1109 = vpop.xlane.xlu0 %1108
        %v1110 = vsel %vm938, %v836, -inf
        %1111 = vmax.xlane.f32.xlu0 %v1110
        %v1112 = vpop.xlane.xlu0 %1111
        %v1113 = vsel %vm938, %v839, -inf
        %1114 = vmax.xlane.f32.xlu0 %v1113
        %v1115 = vpop.xlane.xlu0 %1114
        %v1116 = vsel %vm938, %v841, -inf
        %1117 = vmax.xlane.f32.xlu0 %v1116
        %v1118 = vpop.xlane.xlu0 %1117
        %v1119 = vsel %vm938, %v844, -inf
        %1120 = vmax.xlane.f32.xlu0 %v1119
        %v1121 = vpop.xlane.xlu0 %1120
        %v1122 = vsel %vm938, %v846, -inf
        %1123 = vmax.xlane.f32.xlu0 %v1122
        %v1124 = vpop.xlane.xlu0 %1123
        %v1125 = vsel %vm938, %v849, -inf
        %1126 = vmax.xlane.f32.xlu0 %v1125
        %v1127 = vpop.xlane.xlu0 %1126
        %v1128 = vsel %vm938, %v851, -inf
        %1129 = vmax.xlane.f32.xlu0 %v1128
        %v1130 = vpop.xlane.xlu0 %1129
        %v1131 = vsel %vm938, %v854, -inf
        %1132 = vmax.xlane.f32.xlu0 %v1131
        %v1133 = vpop.xlane.xlu0 %1132
        %v1134 = vsel %vm938, %v856, -inf
        %1135 = vmax.xlane.f32.xlu0 %v1134
        %v1136 = vpop.xlane.xlu0 %1135
        %v1137 = vsel %vm938, %v859, -inf
        %1138 = vmax.xlane.f32.xlu0 %v1137
        %v1139 = vpop.xlane.xlu0 %1138
        %v1140 = vsel %vm938, %v861, -inf
        %1141 = vmax.xlane.f32.xlu0 %v1140
        %v1142 = vpop.xlane.xlu0 %1141
        %v1143 = vsel %vm938, %v864, -inf
        %1144 = vmax.xlane.f32.xlu0 %v1143
        %v1145 = vpop.xlane.xlu0 %1144
        %v1146 = vsel %vm938, %v866, -inf
        %1147 = vmax.xlane.f32.xlu0 %v1146
        %v1148 = vpop.xlane.xlu0 %1147
        %v1149 = vsel %vm938, %v869, -inf
        %1150 = vmax.xlane.f32.xlu0 %v1149
        %v1151 = vpop.xlane.xlu0 %1150
        %v1152 = vsel %vm938, %v871, -inf
        %1153 = vmax.xlane.f32.xlu0 %v1152
        %v1154 = vpop.xlane.xlu0 %1153
        %v1155 = vsel %vm938, %v874, -inf
        %1156 = vmax.xlane.f32.xlu0 %v1155
        %v1157 = vpop.xlane.xlu0 %1156
        %v1158 = vsel %vm938, %v876, -inf
        %1159 = vmax.xlane.f32.xlu0 %v1158
        %v1160 = vpop.xlane.xlu0 %1159
        %v1161 = vsel %vm938, %v879, -inf
        %1162 = vmax.xlane.f32.xlu0 %v1161
        %v1163 = vpop.xlane.xlu0 %1162
        %v1164 = vsel %vm938, %v881, -inf
        %1165 = vmax.xlane.f32.xlu0 %v1164
        %v1166 = vpop.xlane.xlu0 %1165
        %v1167 = vsel %vm938, %v884, -inf
        %1168 = vmax.xlane.f32.xlu0 %v1167
        %v1169 = vpop.xlane.xlu0 %1168
        %v1170 = vsel %vm938, %v886, -inf
        %1171 = vmax.xlane.f32.xlu0 %v1170
        %v1172 = vpop.xlane.xlu0 %1171
        %v1173 = vsel %vm938, %v889, -inf
        %1174 = vmax.xlane.f32.xlu0 %v1173
        %v1175 = vpop.xlane.xlu0 %1174
        %v1176 = vsel %vm938, %v891, -inf
        %1177 = vmax.xlane.f32.xlu0 %v1176
        %v1178 = vpop.xlane.xlu0 %1177
        %v1179 = vsel %vm938, %v894, -inf
        %1180 = vmax.xlane.f32.xlu0 %v1179
        %v1181 = vpop.xlane.xlu0 %1180
        %v1182 = vsel %vm938, %v896, -inf
        %1183 = vmax.xlane.f32.xlu0 %v1182
        %v1184 = vpop.xlane.xlu0 %1183
        %v1185 = vsel %vm938, %v899, -inf
        %1186 = vmax.xlane.f32.xlu0 %v1185
        %v1187 = vpop.xlane.xlu0 %1186
        %v1188 = vsel %vm938, %v901, -inf
        %1189 = vmax.xlane.f32.xlu0 %v1188
        %v1190 = vpop.xlane.xlu0 %1189
        %v1191 = vsel %vm938, %v904, -inf
        %1192 = vmax.xlane.f32.xlu0 %v1191
        %v1193 = vpop.xlane.xlu0 %1192
        %v1194 = vsel %vm938, %v906, -inf
        %1195 = vmax.xlane.f32.xlu0 %v1194
        %v1196 = vpop.xlane.xlu0 %1195
        %v1197 = vsel %vm938, %v909, -inf
        %1198 = vmax.xlane.f32.xlu0 %v1197
        %v1199 = vpop.xlane.xlu0 %1198
        %v1200 = vsel %vm938, %v911, -inf
        %1201 = vmax.xlane.f32.xlu0 %v1200
        %v1202 = vpop.xlane.xlu0 %1201
        %v1203 = vsel %vm938, %v914, -inf
        %1204 = vmax.xlane.f32.xlu0 %v1203
        %v1205 = vpop.xlane.xlu0 %1204
        %v1206 = vsel %vm938, %v916, -inf
        %1207 = vmax.xlane.f32.xlu0 %v1206
        %v1208 = vpop.xlane.xlu0 %1207
        %v1209 = vsel %vm938, %v919, -inf
        %1210 = vmax.xlane.f32.xlu0 %v1209
        %v1211 = vpop.xlane.xlu0 %1210
        %v1212 = vsel %vm938, %v921, -inf
        %1213 = vmax.xlane.f32.xlu0 %v1212
        %v1214 = vpop.xlane.xlu0 %1213
        %v1215 = vsel %vm938, %v924, -inf
        %1216 = vmax.xlane.f32.xlu0 %v1215
        %v1217 = vpop.xlane.xlu0 %1216
        %v1218 = vsel %vm938, %v926, -inf
        %1219 = vmax.xlane.f32.xlu0 %v1218
        %v1220 = vpop.xlane.xlu0 %1219
        %v1221 = vsel %vm938, %v929, -inf
        %1222 = vmax.xlane.f32.xlu0 %v1221
        %v1223 = vpop.xlane.xlu0 %1222
        %v1224 = vsel %vm938, %v931, -inf
        %1225 = vmax.xlane.f32.xlu0 %v1224
        %v1226 = vpop.xlane.xlu0 %1225
        %v1227 = vsel %vm938, %v934, -inf
        %1228 = vmax.xlane.f32.xlu0 %v1227
        %v1229 = vpop.xlane.xlu0 %1228
        %v1230 = vsel %vm938, %v936, -inf
        %1231 = vmax.xlane.f32.xlu0 %v1230
        %v1232 = vpop.xlane.xlu0 %1231
        %v1233 = vld [vmem:[%s3] sm:$0xf]
        %v1234 = vld [vmem:[%s3 + $0x4] sm:$0xf]
        %v1235 = vld [vmem:[%s3 + $0x8] sm:$0xf]
        %v1236 = vld [vmem:[%s3 + $0xc] sm:$0xf]
        %v1237 = vld [vmem:[%s3 + $0x10] sm:$0xf]
        %v1238 = vld [vmem:[%s3 + $0x14] sm:$0xf]
        %v1239 = vld [vmem:[%s3 + $0x18] sm:$0xf]
        %v1240 = vld [vmem:[%s3 + $0x1c] sm:$0xf]
        %v1241 = vld [vmem:[%s3 + $0x20] sm:$0xf]
        %v1242 = vld [vmem:[%s3 + $0x24] sm:$0xf]
        %v1243 = vld [vmem:[%s3 + $0x28] sm:$0xf]
        %v1244 = vld [vmem:[%s3 + $0x2c] sm:$0xf]
        %v1245 = vld [vmem:[%s3 + $0x30] sm:$0xf]
        %v1246 = vld [vmem:[%s3 + $0x34] sm:$0xf]
        %v1247 = vld [vmem:[%s3 + $0x38] sm:$0xf]
        %v1248 = vld [vmem:[%s3 + $0x3c] sm:$0xf]
        %v1249 = vld [vmem:[%s3 + $0x40] sm:$0xf]
        %v1250 = vld [vmem:[%s3 + $0x44] sm:$0xf]
        %v1251 = vld [vmem:[%s3 + $0x48] sm:$0xf]
        %v1252 = vld [vmem:[%s3 + $0x4c] sm:$0xf]
        %v1253 = vld [vmem:[%s3 + $0x50] sm:$0xf]
        %v1254 = vld [vmem:[%s3 + $0x54] sm:$0xf]
        %v1255 = vld [vmem:[%s3 + $0x58] sm:$0xf]
        %v1256 = vld [vmem:[%s3 + $0x5c] sm:$0xf]
        %v1257 = vld [vmem:[%s3 + $0x60] sm:$0xf]
        %v1258 = vld [vmem:[%s3 + $0x64] sm:$0xf]
        %v1259 = vld [vmem:[%s3 + $0x68] sm:$0xf]
        %v1260 = vld [vmem:[%s3 + $0x6c] sm:$0xf]
        %v1261 = vld [vmem:[%s3 + $0x70] sm:$0xf]
        %v1262 = vld [vmem:[%s3 + $0x74] sm:$0xf]
        %v1263 = vld [vmem:[%s3 + $0x78] sm:$0xf]
        %v1264 = vld [vmem:[%s3 + $0x7c] sm:$0xf]
        %v1265 = vld [vmem:[%s3 + $0x80] sm:$0xf]
        %v1266 = vld [vmem:[%s3 + $0x84] sm:$0xf]
        %v1267 = vld [vmem:[%s3 + $0x88] sm:$0xf]
        %v1268 = vld [vmem:[%s3 + $0x8c] sm:$0xf]
        %v1269 = vld [vmem:[%s3 + $0x90] sm:$0xf]
        %v1270 = vld [vmem:[%s3 + $0x94] sm:$0xf]
        %v1271 = vld [vmem:[%s3 + $0x98] sm:$0xf]
        %v1272 = vld [vmem:[%s3 + $0x9c] sm:$0xf]
        %v1273 = vld [vmem:[%s3 + $0xa0] sm:$0xf]
        %v1274 = vld [vmem:[%s3 + $0xa4] sm:$0xf]
        %v1275 = vld [vmem:[%s3 + $0xa8] sm:$0xf]
        %v1276 = vld [vmem:[%s3 + $0xac] sm:$0xf]
        %v1277 = vld [vmem:[%s3 + $0xb0] sm:$0xf]
        %v1278 = vld [vmem:[%s3 + $0xb4] sm:$0xf]
        %v1279 = vld [vmem:[%s3 + $0xb8] sm:$0xf]
        %v1280 = vld [vmem:[%s3 + $0xbc] sm:$0xf]
        %v1281 = vld [vmem:[%s3 + $0xc0] sm:$0xf]
        %v1282 = vld [vmem:[%s3 + $0xc4] sm:$0xf]
        %v1283 = vld [vmem:[%s3 + $0xc8] sm:$0xf]
        %v1284 = vld [vmem:[%s3 + $0xcc] sm:$0xf]
        %v1285 = vld [vmem:[%s3 + $0xd0] sm:$0xf]
        %v1286 = vld [vmem:[%s3 + $0xd4] sm:$0xf]
        %v1287 = vld [vmem:[%s3 + $0xd8] sm:$0xf]
        %v1288 = vld [vmem:[%s3 + $0xdc] sm:$0xf]
        %v1289 = vld [vmem:[%s3 + $0xe0] sm:$0xf]
        %v1290 = vld [vmem:[%s3 + $0xe4] sm:$0xf]
        %v1291 = vld [vmem:[%s3 + $0xe8] sm:$0xf]
        %v1292 = vld [vmem:[%s3 + $0xec] sm:$0xf]
        %v1293 = vld [vmem:[%s3 + $0xf0] sm:$0xf]
        %v1294 = vld [vmem:[%s3 + $0xf4] sm:$0xf]
        %v1295 = vld [vmem:[%s3 + $0xf8] sm:$0xf]
        %v1296 = vld [vmem:[%s3 + $0xfc] sm:$0xf]
        %v1297 = vld [vmem:[%s3 + $0x100] sm:$0xf]
        %v1298 = vld [vmem:[%s3 + $0x104] sm:$0xf]
        %v1299 = vld [vmem:[%s3 + $0x108] sm:$0xf]
        %v1300 = vld [vmem:[%s3 + $0x10c] sm:$0xf]
        %v1301 = vld [vmem:[%s3 + $0x110] sm:$0xf]
        %v1302 = vld [vmem:[%s3 + $0x114] sm:$0xf]
        %v1303 = vld [vmem:[%s3 + $0x118] sm:$0xf]
        %v1304 = vld [vmem:[%s3 + $0x11c] sm:$0xf]
        %v1305 = vld [vmem:[%s3 + $0x120] sm:$0xf]
        %v1306 = vld [vmem:[%s3 + $0x124] sm:$0xf]
        %v1307 = vld [vmem:[%s3 + $0x128] sm:$0xf]
        %v1308 = vld [vmem:[%s3 + $0x12c] sm:$0xf]
        %v1309 = vld [vmem:[%s3 + $0x130] sm:$0xf]
        %v1310 = vld [vmem:[%s3 + $0x134] sm:$0xf]
        %v1311 = vld [vmem:[%s3 + $0x138] sm:$0xf]
        %v1312 = vld [vmem:[%s3 + $0x13c] sm:$0xf]
        %v1313 = vld [vmem:[%s3 + $0x140] sm:$0xf]
        %v1314 = vld [vmem:[%s3 + $0x144] sm:$0xf]
        %v1315 = vld [vmem:[%s3 + $0x148] sm:$0xf]
        %v1316 = vld [vmem:[%s3 + $0x14c] sm:$0xf]
        %v1317 = vld [vmem:[%s3 + $0x150] sm:$0xf]
        %v1318 = vld [vmem:[%s3 + $0x154] sm:$0xf]
        %v1319 = vld [vmem:[%s3 + $0x158] sm:$0xf]
        %v1320 = vld [vmem:[%s3 + $0x15c] sm:$0xf]
        %v1321 = vld [vmem:[%s3 + $0x160] sm:$0xf]
        %v1322 = vld [vmem:[%s3 + $0x164] sm:$0xf]
        %v1323 = vld [vmem:[%s3 + $0x168] sm:$0xf]
        %v1324 = vld [vmem:[%s3 + $0x16c] sm:$0xf]
        %v1325 = vld [vmem:[%s3 + $0x170] sm:$0xf]
        %v1326 = vld [vmem:[%s3 + $0x174] sm:$0xf]
        %v1327 = vld [vmem:[%s3 + $0x178] sm:$0xf]
        %v1328 = vld [vmem:[%s3 + $0x17c] sm:$0xf]
        %v1329 = vld [vmem:[%s3 + $0x180] sm:$0xf]
        %v1330 = vld [vmem:[%s3 + $0x184] sm:$0xf]
        %v1331 = vunpack.c.l.bf16 %v1233
        %v1332 = vunpack.c.l.bf16 %v1234
        %v1333 = vunpack.c.l.bf16 %v1235
        %v1334 = vunpack.c.l.bf16 %v1236
        %v1335 = vunpack.c.l.bf16 %v1237
        %v1336 = vunpack.c.l.bf16 %v1238
        %v1337 = vunpack.c.l.bf16 %v1239
        %v1338 = vunpack.c.l.bf16 %v1240
        %v1339 = vunpack.c.l.bf16 %v1241
        %v1340 = vunpack.c.l.bf16 %v1242
        %v1341 = vunpack.c.l.bf16 %v1243
        %v1342 = vunpack.c.l.bf16 %v1244
        %v1343 = vunpack.c.l.bf16 %v1245
        %v1344 = vunpack.c.l.bf16 %v1246
        %v1345 = vunpack.c.l.bf16 %v1247
        %v1346 = vunpack.c.l.bf16 %v1248
        %v1347 = vunpack.c.l.bf16 %v1249
        %v1348 = vunpack.c.l.bf16 %v1250
        %v1349 = vunpack.c.l.bf16 %v1251
        %v1350 = vunpack.c.l.bf16 %v1252
        %v1351 = vunpack.c.l.bf16 %v1253
        %v1352 = vunpack.c.l.bf16 %v1254
        %v1353 = vunpack.c.l.bf16 %v1255
        %v1354 = vunpack.c.l.bf16 %v1256
        %v1355 = vunpack.c.l.bf16 %v1257
        %v1356 = vunpack.c.l.bf16 %v1258
        %v1357 = vunpack.c.l.bf16 %v1259
        %v1358 = vunpack.c.l.bf16 %v1260
        %v1359 = vunpack.c.l.bf16 %v1261
        %v1360 = vunpack.c.l.bf16 %v1262
        %v1361 = vunpack.c.l.bf16 %v1263
        %v1362 = vunpack.c.l.bf16 %v1264
        %v1363 = vunpack.c.l.bf16 %v1265
        %v1364 = vunpack.c.l.bf16 %v1266
        %v1365 = vunpack.c.l.bf16 %v1267
        %v1366 = vunpack.c.l.bf16 %v1268
        %v1367 = vunpack.c.l.bf16 %v1269
        %v1368 = vunpack.c.l.bf16 %v1270
        %v1369 = vunpack.c.l.bf16 %v1271
        %v1370 = vunpack.c.l.bf16 %v1272
        %v1371 = vunpack.c.l.bf16 %v1273
        %v1372 = vunpack.c.l.bf16 %v1274
        %v1373 = vunpack.c.l.bf16 %v1275
        %v1374 = vunpack.c.l.bf16 %v1276
        %v1375 = vunpack.c.l.bf16 %v1277
        %v1376 = vunpack.c.l.bf16 %v1278
        %v1377 = vunpack.c.l.bf16 %v1279
        %v1378 = vunpack.c.l.bf16 %v1280
        %v1379 = vunpack.c.l.bf16 %v1281
        %v1380 = vunpack.c.l.bf16 %v1282
        %v1381 = vunpack.c.l.bf16 %v1283
        %v1382 = vunpack.c.l.bf16 %v1284
        %v1383 = vunpack.c.l.bf16 %v1285
        %v1384 = vunpack.c.l.bf16 %v1286
        %v1385 = vunpack.c.l.bf16 %v1287
        %v1386 = vunpack.c.l.bf16 %v1288
        %v1387 = vunpack.c.l.bf16 %v1289
        %v1388 = vunpack.c.l.bf16 %v1290
        %v1389 = vunpack.c.l.bf16 %v1291
        %v1390 = vunpack.c.l.bf16 %v1292
        %v1391 = vunpack.c.l.bf16 %v1293
        %v1392 = vunpack.c.l.bf16 %v1294
        %v1393 = vunpack.c.l.bf16 %v1295
        %v1394 = vunpack.c.l.bf16 %v1296
        %v1395 = vunpack.c.l.bf16 %v1297
        %v1396 = vunpack.c.l.bf16 %v1298
        %v1397 = vunpack.c.l.bf16 %v1299
        %v1398 = vunpack.c.l.bf16 %v1300
        %v1399 = vunpack.c.l.bf16 %v1301
        %v1400 = vunpack.c.l.bf16 %v1302
        %v1401 = vunpack.c.l.bf16 %v1303
        %v1402 = vunpack.c.l.bf16 %v1304
        %v1403 = vunpack.c.l.bf16 %v1305
        %v1404 = vunpack.c.l.bf16 %v1306
        %v1405 = vunpack.c.l.bf16 %v1307
        %v1406 = vunpack.c.l.bf16 %v1308
        %v1407 = vunpack.c.l.bf16 %v1309
        %v1408 = vunpack.c.l.bf16 %v1310
        %v1409 = vunpack.c.l.bf16 %v1311
        %v1410 = vunpack.c.l.bf16 %v1312
        %v1411 = vunpack.c.l.bf16 %v1313
        %v1412 = vunpack.c.l.bf16 %v1314
        %v1413 = vunpack.c.l.bf16 %v1315
        %v1414 = vunpack.c.l.bf16 %v1316
        %v1415 = vunpack.c.l.bf16 %v1317
        %v1416 = vunpack.c.l.bf16 %v1318
        %v1417 = vunpack.c.l.bf16 %v1319
        %v1418 = vunpack.c.l.bf16 %v1320
        %v1419 = vunpack.c.l.bf16 %v1321
        %v1420 = vunpack.c.l.bf16 %v1322
        %v1421 = vunpack.c.l.bf16 %v1323
        %v1422 = vunpack.c.l.bf16 %v1324
        %v1423 = vunpack.c.l.bf16 %v1325
        %v1424 = vunpack.c.l.bf16 %v1326
        %v1425 = vunpack.c.l.bf16 %v1327
        %v1426 = vunpack.c.l.bf16 %v1328
        %v1427 = vunpack.c.l.bf16 %v1329
        %v1428 = vunpack.c.l.bf16 %v1330
        %v1429 = vmul.f32 %v941, %v1331
        %v1430 = vmul.f32 %v944, %v1332
        %v1431 = vmul.f32 %v947, %v1333
        %v1432 = vmul.f32 %v950, %v1334
        %v1433 = vmul.f32 %v953, %v1335
        %v1434 = vmul.f32 %v956, %v1336
        %v1435 = vmul.f32 %v959, %v1337
        %v1436 = vmul.f32 %v962, %v1338
        %v1437 = vmul.f32 %v965, %v1339
        %v1438 = vmul.f32 %v968, %v1340
        %v1439 = vmul.f32 %v971, %v1341
        %v1440 = vmul.f32 %v974, %v1342
        %v1441 = vmul.f32 %v977, %v1343
        %v1442 = vmul.f32 %v980, %v1344
        %v1443 = vmul.f32 %v983, %v1345
        %v1444 = vmul.f32 %v986, %v1346
        %v1445 = vmul.f32 %v989, %v1347
        %v1446 = vmul.f32 %v992, %v1348
        %v1447 = vmul.f32 %v995, %v1349
        %v1448 = vmul.f32 %v998, %v1350
        %v1449 = vmul.f32 %v1001, %v1351
        %v1450 = vmul.f32 %v1004, %v1352
        %v1451 = vmul.f32 %v1007, %v1353
        %v1452 = vmul.f32 %v1010, %v1354
        %v1453 = vmul.f32 %v1013, %v1355
        %v1454 = vmul.f32 %v1016, %v1356
        %v1455 = vmul.f32 %v1019, %v1357
        %v1456 = vmul.f32 %v1022, %v1358
        %v1457 = vmul.f32 %v1025, %v1359
        %v1458 = vmul.f32 %v1028, %v1360
        %v1459 = vmul.f32 %v1031, %v1361
        %v1460 = vmul.f32 %v1034, %v1362
        %v1461 = vmul.f32 %v1037, %v1363
        %v1462 = vmul.f32 %v1040, %v1364
        %v1463 = vmul.f32 %v1043, %v1365
        %v1464 = vmul.f32 %v1046, %v1366
        %v1465 = vmul.f32 %v1049, %v1367
        %v1466 = vmul.f32 %v1052, %v1368
        %v1467 = vmul.f32 %v1055, %v1369
        %v1468 = vmul.f32 %v1058, %v1370
        %v1469 = vmul.f32 %v1061, %v1371
        %v1470 = vmul.f32 %v1064, %v1372
        %v1471 = vmul.f32 %v1067, %v1373
        %v1472 = vmul.f32 %v1070, %v1374
        %v1473 = vmul.f32 %v1073, %v1375
        %v1474 = vmul.f32 %v1076, %v1376
        %v1475 = vmul.f32 %v1079, %v1377
        %v1476 = vmul.f32 %v1082, %v1378
        %v1477 = vmul.f32 %v1085, %v1379
        %v1478 = vmul.f32 %v1088, %v1380
        %v1479 = vmul.f32 %v1091, %v1381
        %v1480 = vmul.f32 %v1094, %v1382
        %v1481 = vmul.f32 %v1097, %v1383
        %v1482 = vmul.f32 %v1100, %v1384
        %v1483 = vmul.f32 %v1103, %v1385
        %v1484 = vmul.f32 %v1106, %v1386
        %v1485 = vmul.f32 %v1109, %v1387
        %v1486 = vmul.f32 %v1112, %v1388
        %v1487 = vmul.f32 %v1115, %v1389
        %v1488 = vmul.f32 %v1118, %v1390
        %v1489 = vmul.f32 %v1121, %v1391
        %v1490 = vmul.f32 %v1124, %v1392
        %v1491 = vmul.f32 %v1127, %v1393
        %v1492 = vmul.f32 %v1130, %v1394
        %v1493 = vmul.f32 %v1133, %v1395
        %v1494 = vmul.f32 %v1136, %v1396
        %v1495 = vmul.f32 %v1139, %v1397
        %v1496 = vmul.f32 %v1142, %v1398
        %v1497 = vmul.f32 %v1145, %v1399
        %v1498 = vmul.f32 %v1148, %v1400
        %v1499 = vmul.f32 %v1151, %v1401
        %v1500 = vmul.f32 %v1154, %v1402
        %v1501 = vmul.f32 %v1157, %v1403
        %v1502 = vmul.f32 %v1160, %v1404
        %v1503 = vmul.f32 %v1163, %v1405
        %v1504 = vmul.f32 %v1166, %v1406
        %v1505 = vmul.f32 %v1169, %v1407
        %v1506 = vmul.f32 %v1172, %v1408
        %v1507 = vmul.f32 %v1175, %v1409
        %v1508 = vmul.f32 %v1178, %v1410
        %v1509 = vmul.f32 %v1181, %v1411
        %v1510 = vmul.f32 %v1184, %v1412
        %v1511 = vmul.f32 %v1187, %v1413
        %v1512 = vmul.f32 %v1190, %v1414
        %v1513 = vmul.f32 %v1193, %v1415
        %v1514 = vmul.f32 %v1196, %v1416
        %v1515 = vmul.f32 %v1199, %v1417
        %v1516 = vmul.f32 %v1202, %v1418
        %v1517 = vmul.f32 %v1205, %v1419
        %v1518 = vmul.f32 %v1208, %v1420
        %v1519 = vmul.f32 %v1211, %v1421
        %v1520 = vmul.f32 %v1214, %v1422
        %v1521 = vmul.f32 %v1217, %v1423
        %v1522 = vmul.f32 %v1220, %v1424
        %v1523 = vmul.f32 %v1223, %v1425
        %v1524 = vmul.f32 %v1226, %v1426
        %v1525 = vmul.f32 %v1229, %v1427
        %v1526 = vmul.f32 %v1232, %v1428
        %vm1527 = vcmask 80896
        %v1528 = vsel %vm1527, %v1429, 0.0
        %v1529 = vsel %vm1527, %v1430, 0.0
        %v1530 = vadd.f32 %v1528, %v1529
        %v1531 = vsel %vm1527, %v1431, 0.0
        %v1532 = vadd.f32 %v1530, %v1531
        %v1533 = vsel %vm1527, %v1432, 0.0
        %v1534 = vadd.f32 %v1532, %v1533
        %v1535 = vsel %vm1527, %v1433, 0.0
        %v1536 = vadd.f32 %v1534, %v1535
        %v1537 = vsel %vm1527, %v1434, 0.0
        %v1538 = vadd.f32 %v1536, %v1537
        %v1539 = vsel %vm1527, %v1435, 0.0
        %v1540 = vadd.f32 %v1538, %v1539
        %v1541 = vsel %vm1527, %v1436, 0.0
        %v1542 = vadd.f32 %v1540, %v1541
        %v1543 = vsel %vm1527, %v1437, 0.0
        %v1544 = vadd.f32 %v1542, %v1543
        %v1545 = vsel %vm1527, %v1438, 0.0
        %v1546 = vadd.f32 %v1544, %v1545
        %v1547 = vsel %vm1527, %v1439, 0.0
        %v1548 = vadd.f32 %v1546, %v1547
        %v1549 = vsel %vm1527, %v1440, 0.0
        %v1550 = vadd.f32 %v1548, %v1549
        %v1551 = vsel %vm1527, %v1441, 0.0
        %v1552 = vadd.f32 %v1550, %v1551
        %v1553 = vsel %vm1527, %v1442, 0.0
        %v1554 = vadd.f32 %v1552, %v1553
        %v1555 = vsel %vm1527, %v1443, 0.0
        %v1556 = vadd.f32 %v1554, %v1555
        %v1557 = vsel %vm1527, %v1444, 0.0
        %v1558 = vadd.f32 %v1556, %v1557
        %v1559 = vsel %vm1527, %v1445, 0.0
        %v1560 = vadd.f32 %v1558, %v1559
        %v1561 = vsel %vm1527, %v1446, 0.0
        %v1562 = vadd.f32 %v1560, %v1561
        %v1563 = vsel %vm1527, %v1447, 0.0
        %v1564 = vadd.f32 %v1562, %v1563
        %v1565 = vsel %vm1527, %v1448, 0.0
        %v1566 = vadd.f32 %v1564, %v1565
        %v1567 = vsel %vm1527, %v1449, 0.0
        %v1568 = vadd.f32 %v1566, %v1567
        %v1569 = vsel %vm1527, %v1450, 0.0
        %v1570 = vadd.f32 %v1568, %v1569
        %v1571 = vsel %vm1527, %v1451, 0.0
        %v1572 = vadd.f32 %v1570, %v1571
        %v1573 = vsel %vm1527, %v1452, 0.0
        %v1574 = vadd.f32 %v1572, %v1573
        %v1575 = vsel %vm1527, %v1453, 0.0
        %v1576 = vadd.f32 %v1574, %v1575
        %v1577 = vsel %vm1527, %v1454, 0.0
        %v1578 = vadd.f32 %v1576, %v1577
        %v1579 = vsel %vm1527, %v1455, 0.0
        %v1580 = vadd.f32 %v1578, %v1579
        %v1581 = vsel %vm1527, %v1456, 0.0
        %v1582 = vadd.f32 %v1580, %v1581
        %v1583 = vsel %vm1527, %v1457, 0.0
        %v1584 = vadd.f32 %v1582, %v1583
        %v1585 = vsel %vm1527, %v1458, 0.0
        %v1586 = vadd.f32 %v1584, %v1585
        %v1587 = vsel %vm1527, %v1459, 0.0
        %v1588 = vadd.f32 %v1586, %v1587
        %v1589 = vsel %vm1527, %v1460, 0.0
        %v1590 = vadd.f32 %v1588, %v1589
        %v1591 = vsel %vm1527, %v1461, 0.0
        %v1592 = vadd.f32 %v1590, %v1591
        %v1593 = vsel %vm1527, %v1462, 0.0
        %v1594 = vadd.f32 %v1592, %v1593
        %v1595 = vsel %vm1527, %v1463, 0.0
        %v1596 = vadd.f32 %v1594, %v1595
        %v1597 = vsel %vm1527, %v1464, 0.0
        %v1598 = vadd.f32 %v1596, %v1597
        %v1599 = vsel %vm1527, %v1465, 0.0
        %v1600 = vadd.f32 %v1598, %v1599
        %v1601 = vsel %vm1527, %v1466, 0.0
        %v1602 = vadd.f32 %v1600, %v1601
        %v1603 = vsel %vm1527, %v1467, 0.0
        %v1604 = vadd.f32 %v1602, %v1603
        %v1605 = vsel %vm1527, %v1468, 0.0
        %v1606 = vadd.f32 %v1604, %v1605
        %v1607 = vsel %vm1527, %v1469, 0.0
        %v1608 = vadd.f32 %v1606, %v1607
        %v1609 = vsel %vm1527, %v1470, 0.0
        %v1610 = vadd.f32 %v1608, %v1609
        %v1611 = vsel %vm1527, %v1471, 0.0
        %v1612 = vadd.f32 %v1610, %v1611
        %v1613 = vsel %vm1527, %v1472, 0.0
        %v1614 = vadd.f32 %v1612, %v1613
        %v1615 = vsel %vm1527, %v1473, 0.0
        %v1616 = vadd.f32 %v1614, %v1615
        %v1617 = vsel %vm1527, %v1474, 0.0
        %v1618 = vadd.f32 %v1616, %v1617
        %v1619 = vsel %vm1527, %v1475, 0.0
        %v1620 = vadd.f32 %v1618, %v1619
        %v1621 = vsel %vm1527, %v1476, 0.0
        %v1622 = vadd.f32 %v1620, %v1621
        %v1623 = vsel %vm1527, %v1477, 0.0
        %v1624 = vadd.f32 %v1622, %v1623
        %v1625 = vsel %vm1527, %v1478, 0.0
        %v1626 = vadd.f32 %v1624, %v1625
        %v1627 = vsel %vm1527, %v1479, 0.0
        %v1628 = vadd.f32 %v1626, %v1627
        %v1629 = vsel %vm1527, %v1480, 0.0
        %v1630 = vadd.f32 %v1628, %v1629
        %v1631 = vsel %vm1527, %v1481, 0.0
        %v1632 = vadd.f32 %v1630, %v1631
        %v1633 = vsel %vm1527, %v1482, 0.0
        %v1634 = vadd.f32 %v1632, %v1633
        %v1635 = vsel %vm1527, %v1483, 0.0
        %v1636 = vadd.f32 %v1634, %v1635
        %v1637 = vsel %vm1527, %v1484, 0.0
        %v1638 = vadd.f32 %v1636, %v1637
        %v1639 = vsel %vm1527, %v1485, 0.0
        %v1640 = vadd.f32 %v1638, %v1639
        %v1641 = vsel %vm1527, %v1486, 0.0
        %v1642 = vadd.f32 %v1640, %v1641
        %v1643 = vsel %vm1527, %v1487, 0.0
        %v1644 = vadd.f32 %v1642, %v1643
        %v1645 = vsel %vm1527, %v1488, 0.0
        %v1646 = vadd.f32 %v1644, %v1645
        %v1647 = vsel %vm1527, %v1489, 0.0
        %v1648 = vadd.f32 %v1646, %v1647
        %v1649 = vsel %vm1527, %v1490, 0.0
        %v1650 = vadd.f32 %v1648, %v1649
        %v1651 = vsel %vm1527, %v1491, 0.0
        %v1652 = vadd.f32 %v1650, %v1651
        %v1653 = vsel %vm1527, %v1492, 0.0
        %v1654 = vadd.f32 %v1652, %v1653
        %v1655 = vsel %vm1527, %v1493, 0.0
        %v1656 = vadd.f32 %v1654, %v1655
        %v1657 = vsel %vm1527, %v1494, 0.0
        %v1658 = vadd.f32 %v1656, %v1657
        %v1659 = vsel %vm1527, %v1495, 0.0
        %v1660 = vadd.f32 %v1658, %v1659
        %v1661 = vsel %vm1527, %v1496, 0.0
        %v1662 = vadd.f32 %v1660, %v1661
        %v1663 = vsel %vm1527, %v1497, 0.0
        %v1664 = vadd.f32 %v1662, %v1663
        %v1665 = vsel %vm1527, %v1498, 0.0
        %v1666 = vadd.f32 %v1664, %v1665
        %v1667 = vsel %vm1527, %v1499, 0.0
        %v1668 = vadd.f32 %v1666, %v1667
        %v1669 = vsel %vm1527, %v1500, 0.0
        %v1670 = vadd.f32 %v1668, %v1669
        %v1671 = vsel %vm1527, %v1501, 0.0
        %v1672 = vadd.f32 %v1670, %v1671
        %v1673 = vsel %vm1527, %v1502, 0.0
        %v1674 = vadd.f32 %v1672, %v1673
        %v1675 = vsel %vm1527, %v1503, 0.0
        %v1676 = vadd.f32 %v1674, %v1675
        %v1677 = vsel %vm1527, %v1504, 0.0
        %v1678 = vadd.f32 %v1676, %v1677
        %v1679 = vsel %vm1527, %v1505, 0.0
        %v1680 = vadd.f32 %v1678, %v1679
        %v1681 = vsel %vm1527, %v1506, 0.0
        %v1682 = vadd.f32 %v1680, %v1681
        %v1683 = vsel %vm1527, %v1507, 0.0
        %v1684 = vadd.f32 %v1682, %v1683
        %v1685 = vsel %vm1527, %v1508, 0.0
        %v1686 = vadd.f32 %v1684, %v1685
        %v1687 = vsel %vm1527, %v1509, 0.0
        %v1688 = vadd.f32 %v1686, %v1687
        %v1689 = vsel %vm1527, %v1510, 0.0
        %v1690 = vadd.f32 %v1688, %v1689
        %v1691 = vsel %vm1527, %v1511, 0.0
        %v1692 = vadd.f32 %v1690, %v1691
        %v1693 = vsel %vm1527, %v1512, 0.0
        %v1694 = vadd.f32 %v1692, %v1693
        %v1695 = vsel %vm1527, %v1513, 0.0
        %v1696 = vadd.f32 %v1694, %v1695
        %v1697 = vsel %vm1527, %v1514, 0.0
        %v1698 = vadd.f32 %v1696, %v1697
        %v1699 = vsel %vm1527, %v1515, 0.0
        %v1700 = vadd.f32 %v1698, %v1699
        %v1701 = vsel %vm1527, %v1516, 0.0
        %v1702 = vadd.f32 %v1700, %v1701
        %v1703 = vsel %vm1527, %v1517, 0.0
        %v1704 = vadd.f32 %v1702, %v1703
        %v1705 = vsel %vm1527, %v1518, 0.0
        %v1706 = vadd.f32 %v1704, %v1705
        %v1707 = vsel %vm1527, %v1519, 0.0
        %v1708 = vadd.f32 %v1706, %v1707
        %v1709 = vsel %vm1527, %v1520, 0.0
        %v1710 = vadd.f32 %v1708, %v1709
        %v1711 = vsel %vm1527, %v1521, 0.0
        %v1712 = vadd.f32 %v1710, %v1711
        %v1713 = vsel %vm1527, %v1522, 0.0
        %v1714 = vadd.f32 %v1712, %v1713
        %v1715 = vsel %vm1527, %v1523, 0.0
        %v1716 = vadd.f32 %v1714, %v1715
        %v1717 = vsel %vm1527, %v1524, 0.0
        %v1718 = vadd.f32 %v1716, %v1717
        %v1719 = vsel %vm1527, %v1525, 0.0
        %v1720 = vadd.f32 %v1718, %v1719
        %v1721 = vsel %vm1527, %v1526, 0.0
        %v1722 = vadd.f32 %v1720, %v1721
        %v1723 = vrot.slane %v1722, 4
        %v1724 = vadd.f32 %v1722, %v1723
        %v1725 = vrot.slane %v1724, 2
        %v1726 = vadd.f32 %v1724, %v1725
        %v1727 = vrot.slane %v1726, 1
        %v1728 = vadd.f32 %v1726, %v1727
        %v1729 = vld [vmem:[%s4] sm:$0x1]
        %v1730 = vadd.f32 %v1728, %v1729
        %vm1731 = vcmask 73728
        %1732 = vst.msk [vmem:[%s217] sm:$0x1] %vm1731, %v1730
        %s1733 = sand.u32 %s137, 1
        %s1734 = scalar_lea.sflag [#allocation3], %s1733
        %s1735 = sand.u32 %s137, 1
        %s1736 = scalar_lea.vmem [#allocation2], %s1735
        // Predicated region
        $region41: #{cnn_forward.5} parent=39 // pred_check
          %p1737 = pneg %p147
        $region42: #{cnn_forward.5} parent=39 // pred_check_branch
          %1739 = sbr.rel (%p1737) target = $region44
        $region43: #{cnn_forward.5} parent=39 // pred_region
          %1741 = vsyncadd %s1734, 0
          %s1742 = scalar_lea.hbm %s5, %s19
          %s1744 = sshll.u32 %s1736, 4
          %s1745 = int_to_ptr.vmem [resolvable:$true] %s1744
          %s1746 = sshll.u32 %s1742, 4
          %s1747 = int_to_ptr.hbm [resolvable:$true] %s1746
          %1749 = dma.vmem_to_hbm [thread:$0]  %s1745, 16, %s1747, %s1734
        $region44: #{cnn_forward.5} parent=39 // pred_fallthru
          _
      $region40: #{cnn_forward.5} parent=5 // pred_fallthru
        _
      %p1750 = scmp.le.s32.totalorder 2, %s14
      // Predicated region
      $region45: #{cnn_forward.5} parent=5 // pred_check
        %p1751 = pneg %p1750
      $region46: #{cnn_forward.5} parent=5 // pred_check_branch
        %1753 = sbr.rel (%p1751) target = $region48
      $region47: #{cnn_forward.5} parent=5 // pred_region
        %s1754 = ssub.s32 %s14, 2
        // Predicated region
        $region49: #{cnn_forward.5} parent=47 // pred_check
          %p1755 = pneg %p153
        $region50: #{cnn_forward.5} parent=47 // pred_check_branch
          %1757 = sbr.rel (%p1755) target = $region52
        $region51: #{cnn_forward.5} parent=47 // pred_region
          %s1758 = sand.u32 %s138, 1
          %s1759 = scalar_lea.sflag [#allocation3], %s1758
          %s1760 = sand.u32 %s138, 1
          %s1761 = scalar_lea.vmem [#allocation2], %s1760
          %1763 = dma.done %s1759, 16
        $region52: #{cnn_forward.5} parent=47 // pred_fallthru
          _
      $region48: #{cnn_forward.5} parent=5 // pred_fallthru
        _
    $region6: #{cnn_forward.5} parent=1 // loop_footer
      %s18 = sadd.s32 1, %s14
    $region7: #{cnn_forward.5} parent=1 // loop_footer_branch
      %13 = sbr.rel target = $region3
    $region8: #{cnn_forward.5} parent=1 // loop_exit
      _
    %1764 = vsyncpa [#allocation3], 1
    %s1765 = scalar_lea.sflag [#allocation3], 1
    %1766 = vsyncpa %s1765, 1

</llo_original>
